<compile_context>
chip_gen: v6e
topology: v6e:2x2x1
jax: 0.10.0
libtpu: 0.0.40
codegen_flags: <defaults>
</compile_context>

<pallas_src>
import functools
from typing import NamedTuple

import jax
import jax.numpy as jnp
from jax import lax
from jax.experimental import pallas as pl
from jax.experimental.pallas import tpu as pltpu


class RSABConfig(NamedTuple):
    heads: int
    window_size: int
    dim_head: int
    eps: float = 1e-5


# ----------------------------- small helpers -----------------------------

def _round_up(x, m):
    return (x + m - 1) // m * m


def _query_vmem_budget():
    # Generation-aware working-set budget: ~cap/4, clamped to [8, 28] MiB
    # (128 MiB parts get big tiles, v7x's 64 MiB stays conservative).
    try:
        cap = int(pltpu.get_tpu_info().vmem_capacity_bytes)
    except Exception:
        cap = 64 << 20
    return int(max(8 << 20, min(cap // 4, 28 << 20)))


_VMEM_BUDGET = _query_vmem_budget()
_VMEM_LIMIT = 64 * 1024 * 1024      # explicit Mosaic cap (<= physical on all gens)


def _mosaic_params(*semantics):
    return pltpu.CompilerParams(dimension_semantics=tuple(semantics),
                                vmem_limit_bytes=_VMEM_LIMIT)


def _pick_row_tile(n_rows, k_dim, m_dim, has_res, max_tile=4096):
    """Rows per grid step for rowop: counts x/res/out blocks (double-buffered)
    plus in-kernel f32 temporaries and the resident weight copy."""
    per_row = 4 * (3 * k_dim + (6 if has_res else 4) * m_dim)
    fixed = 8 * k_dim * m_dim
    avail = max(_VMEM_BUDGET - fixed, 1 << 20)
    cap = max(8, (avail // max(per_row, 1)) // 8 * 8)
    tile = min(max_tile, cap, _round_up(n_rows, 8))
    if n_rows > 8 and n_rows <= 2 * tile:
        tile = max(8, _round_up(pl.cdiv(n_rows, 2), 8))   # >=2 grid steps (megacore)
    return int(max(8, min(tile, max_tile)))


def _pick_h_tile(B, H, W, c_in, c_mid, c_dim):
    """Image-row tile for ff_tail (multiple of 8; halo handled separately)."""
    We = W + 2
    per_row = 4 * (We * (24 * c_in + 3 * c_mid) + W * (6 * c_dim + 3 * c_mid))
    fixed = 4 * (16 * We * c_in + 18 * c_in * c_mid + 2 * c_mid * c_dim)
    avail = max(_VMEM_BUDGET - fixed, 1 << 20)
    th = max(8, (avail // max(per_row, 1)) // 8 * 8)
    th = min(th, _round_up(H, 8))
    if B == 1 and H > 8:
        th = min(th, max(8, _round_up(pl.cdiv(H, 2), 8)))  # >=2 steps when B==1
    return int(max(8, th))


_SQRT1_2 = 0.7071067811865476


def _erf_approx(x):
    # Abramowitz & Stegun 7.1.26 rational approximation, |err| <= 1.5e-7.
    p = 0.3275911
    a1, a2, a3, a4, a5 = (0.254829592, -0.284496736, 1.421413741,
                          -1.453152027, 1.061405429)
    ax = jnp.abs(x)
    t = 1.0 / (1.0 + p * ax)
    poly = ((((a5 * t + a4) * t + a3) * t + a2) * t + a1) * t
    y = 1.0 - poly * jnp.exp(-ax * ax)
    return jnp.where(x < 0, -y, y)


def _gelu_exact(x):
    return 0.5 * x * (1.0 + _erf_approx(x * _SQRT1_2))


# ----------------------------- fused row-op kernel -----------------------------
# y = [LN](x) @ w [+ bias] [+ residual] [+ x], rows tiled over the grid.

def _make_rowop_kernel(*, do_ln, has_bias, has_res, add_input, eps):
    def kernel(*refs):
        refs = list(refs)
        x_ref = refs.pop(0)
        g_ref = refs.pop(0) if do_ln else None
        lb_ref = refs.pop(0) if do_ln else None
        w_ref = refs.pop(0)
        b_ref = refs.pop(0) if has_bias else None
        r_ref = refs.pop(0) if has_res else None
        o_ref = refs.pop(0)

        x0 = x_ref[...].astype(jnp.float32)
        x = x0
        if do_ln:
            mean = jnp.mean(x, axis=-1, keepdims=True)
            var = jnp.mean(jnp.square(x - mean), axis=-1, keepdims=True)
            # PyTorch-module LayerNorm semantics: (x - mean) / (sqrt(var) + eps)
            x = (x - mean) / (jnp.sqrt(var) + eps)
            x = x * g_ref[...].astype(jnp.float32) + lb_ref[...].astype(jnp.float32)
        acc = jnp.dot(x, w_ref[...].astype(jnp.float32),
                      preferred_element_type=jnp.float32)
        if has_bias:
            acc = acc + b_ref[...].astype(jnp.float32)
        if has_res:
            acc = acc + r_ref[...].astype(jnp.float32)
        if add_input:
            acc = acc + x0            # residual == this kernel's own input block
        o_ref[...] = acc.astype(o_ref.dtype)

    return kernel


def rowop(x, w, *, bias=None, ln=None, residual=None, add_input=False):
    """x: (N, K) channels-last; w: (K, M); ln = (gamma, beta, eps)."""
    N, K = x.shape
    M = w.shape[1]
    tn = _pick_row_tile(N, K, M, residual is not None)
    grid = (pl.cdiv(N, tn),)          # edge block is masked (no wrapper pad/slice)

    inputs = [x]
    in_specs = [pl.BlockSpec((tn, K), lambda i: (i, 0))]
    if ln is not None:
        g, lb, _ = ln
        inputs += [g.reshape(1, K), lb.reshape(1, K)]
        in_specs += [pl.BlockSpec((1, K), lambda i: (0, 0)),
                     pl.BlockSpec((1, K), lambda i: (0, 0))]
    inputs.append(w)
    in_specs.append(pl.BlockSpec((K, M), lambda i: (0, 0)))
    if bias is not None:
        inputs.append(bias.reshape(1, M))
        in_specs.append(pl.BlockSpec((1, M), lambda i: (0, 0)))
    if residual is not None:
        inputs.append(residual)
        in_specs.append(pl.BlockSpec((tn, M), lambda i: (i, 0)))

    kernel = _make_rowop_kernel(do_ln=ln is not None, has_bias=bias is not None,
                                has_res=residual is not None, add_input=add_input,
                                eps=(ln[2] if ln is not None else 0.0))
    return pl.pallas_call(
        kernel,
        out_shape=jax.ShapeDtypeStruct((N, M), x.dtype),
        grid=grid,
        in_specs=in_specs,
        out_specs=pl.BlockSpec((tn, M), lambda i: (i, 0)),
        compiler_params=_mosaic_params("parallel"),
    )(*inputs)


# ----------------------------- fused windowed attention -----------------------------
# One window (all heads) per grid step; the window gather/scatter is done by the
# BlockSpec DMA on a (B*nx, win, ny, win, C) *view* of the flat activations, so
# no XLA-side transposes are needed.

def _make_window_attn_kernel(*, heads, dh, win, scale, has_skip):
    inner = heads * dh
    n = win * win

    def kernel(*refs):
        if has_skip:
            qkv_ref, skv_ref, o_ref = refs
        else:
            (qkv_ref, o_ref), skv_ref = refs, None
        x = qkv_ref[...].astype(jnp.float32).reshape(n, 3 * inner)
        q = x[:, :inner]
        k = x[:, inner:2 * inner]
        v = x[:, 2 * inner:]
        if has_skip:
            s = skv_ref[...].astype(jnp.float32).reshape(n, 2 * inner)
            k = jnp.concatenate([k, s[:, :inner]], axis=0)     # [x ; skip] order
            v = jnp.concatenate([v, s[:, inner:]], axis=0)
        outs = []
        # TODO(synk): for large `heads`, batch heads into one 3-D einsum
        # (head-major relayout) instead of this static per-head loop.
        for h in range(heads):
            sl = slice(h * dh, (h + 1) * dh)
            qh, kh, vh = q[:, sl], k[:, sl], v[:, sl]
            sim = jnp.einsum('qd,kd->qk', qh, kh,
                             preferred_element_type=jnp.float32) * scale
            sim = sim - jnp.max(sim, axis=-1, keepdims=True)
            p = jnp.exp(sim)
            p = p * pl.reciprocal(jnp.sum(p, axis=-1, keepdims=True), approx=True)
            outs.append(jnp.einsum('qk,kd->qd', p, vh,
                                   preferred_element_type=jnp.float32))
        out = jnp.concatenate(outs, axis=-1)                   # (n, inner)
        o_ref[...] = out.reshape(win, win, inner).astype(o_ref.dtype)

    return kernel


def windowed_attention(qkv_flat, skipkv_flat, cfg, B, H, W):
    heads, win, dh = cfg.heads, cfg.window_size, cfg.dim_head
    inner = heads * dh
    nx, ny = H // win, W // win
    scale = dh ** (-0.5)

    # Free reshapes: (B*H*W, C) == (B*nx, win, ny, win, C) in row-major order.
    qkv5 = qkv_flat.reshape(B * nx, win, ny, win, 3 * inner)
    inputs = [qkv5]
    in_specs = [pl.BlockSpec((None, win, None, win, 3 * inner),
                             lambda bi, j: (bi, 0, j, 0, 0))]
    if skipkv_flat is not None:
        inputs.append(skipkv_flat.reshape(B * nx, win, ny, win, 2 * inner))
        in_specs.append(pl.BlockSpec((None, win, None, win, 2 * inner),
                                     lambda bi, j: (bi, 0, j, 0, 0)))

    kernel = _make_window_attn_kernel(heads=heads, dh=dh, win=win, scale=scale,
                                      has_skip=skipkv_flat is not None)
    out = pl.pallas_call(
        kernel,
        out_shape=jax.ShapeDtypeStruct((B * nx, win, ny, win, inner),
                                       qkv_flat.dtype),
        grid=(B * nx, ny),
        in_specs=in_specs,
        out_specs=pl.BlockSpec((None, win, None, win, inner),
                               lambda bi, j: (bi, 0, j, 0, 0)),
        compiler_params=_mosaic_params("parallel", "parallel"),
    )(*inputs)
    return out.reshape(B * H * W, inner)                       # free reshape back


# ----------------------------- fused FF tail -----------------------------
# conv3x3(SAME) + bias + exact GELU + 1x1 project_out + bias + residual,
# H-tiled with an 8-row halo; single im2col matmul with K = 9*Cin.

def _ff_tail_kernel(body_ref, halo_ref, w3_ref, b3_ref, wp_ref, bp_ref, r_ref,
                    o_ref, *, th, W, We):
    c_in = body_ref.shape[-1]
    c_mid = w3_ref.shape[-1]
    Re = th * We
    # Padded-input slab for this H-tile: (th + 8) extended rows, already flat.
    slab = jnp.concatenate([body_ref[...], halo_ref[...]],
                           axis=0).astype(jnp.float32)          # ((th+8)*We, Cin)
    # In-VMEM im2col over the 9 taps -> ONE MXU matmul with K = 9*Cin.
    cols = [slab[di * We + dj: di * We + dj + Re, :]
            for di in range(3) for dj in range(3)]
    im2col = jnp.concatenate(cols, axis=-1)                     # (Re, 9*Cin)
    acc = jnp.dot(im2col, w3_ref[...].astype(jnp.float32),
                  preferred_element_type=jnp.float32)           # (Re, Cmid)
    # Drop the 2 junk columns of every extended row -> compact (th*W, Cmid).
    acc = acc.reshape(th, We, c_mid)[:, :W, :].reshape(th * W, c_mid)
    acc = _gelu_exact(acc + b3_ref[...].astype(jnp.float32))
    y = jnp.dot(acc, wp_ref[...].astype(jnp.float32),
                preferred_element_type=jnp.float32)
    y = y + bp_ref[...].astype(jnp.float32) + r_ref[...].astype(jnp.float32)
    o_ref[...] = y.astype(o_ref.dtype)


def ff_tail(y1f, w3col, b3, wp, bp, resf, B, H, W):
    """y1f = project_in(LN(x)) flat (N, Cin); returns (N, dim) with residual."""
    Cin = y1f.shape[1]
    Cmid = w3col.shape[1]
    Cdim = wp.shape[1]
    We = W + 2
    th = _pick_h_tile(B, H, W, Cin, Cmid, Cdim)
    n_t = pl.cdiv(H, th)

    # One small pad pass builds the zero halo ring around the Cin-wide input;
    # residual and output stay compact.
    # TODO(synk): fold this pad into the project_in rowop's output layout.
    xp = jnp.pad(y1f.reshape(B, H, W, Cin),
                 ((0, 0), (1, n_t * th + 8 - H - 1), (1, 1), (0, 0)))
    xp = xp.reshape(B, (n_t * th + 8) * We, Cin)
    res3 = resf.reshape(B, H * W, Cdim)

    kernel = functools.partial(_ff_tail_kernel, th=th, W=W, We=We)
    out = pl.pallas_call(
        kernel,
        out_shape=jax.ShapeDtypeStruct((B, H * W, Cdim), y1f.dtype),
        grid=(B, n_t),
        in_specs=[
            # body: th padded-image rows starting at t*th (flat, th*We rows)
            pl.BlockSpec((None, th * We, Cin), lambda b, t: (b, t, 0)),
            # halo: the 8 padded-image rows directly below the body
            pl.BlockSpec((None, 8 * We, Cin),
                         lambda b, t: (b, (t + 1) * (th // 8), 0)),
            pl.BlockSpec((9 * Cin, Cmid), lambda b, t: (0, 0)),
            pl.BlockSpec((1, Cmid), lambda b, t: (0, 0)),
            pl.BlockSpec((Cmid, Cdim), lambda b, t: (0, 0)),
            pl.BlockSpec((1, Cdim), lambda b, t: (0, 0)),
            pl.BlockSpec((None, th * W, Cdim), lambda b, t: (b, t, 0)),
        ],
        out_specs=pl.BlockSpec((None, th * W, Cdim), lambda b, t: (b, t, 0)),
        compiler_params=_mosaic_params("parallel", "parallel"),
    )(xp, xp, w3col, b3.reshape(1, Cmid), wp, bp.reshape(1, Cdim), res3)
    return out.reshape(B * H * W, Cdim)


# ----------------------------- module forward (channels-last, flat) -----------------------------

def attention_flat(xf, skipf, lp, cfg, B, H, W):
    ap = lp["attn"]
    # fused LayerNorm + (to_q | to_kv) projection: one HBM pass over x
    qkv = rowop(xf, ap["w_qkv"], ln=(lp["attn_norm_g"], lp["attn_norm_b"], cfg.eps))
    skipkv = None
    if skipf is not None:
        skipkv = rowop(skipf, ap["w_kv"])        # skip is NOT normalized (PreNorm)
    of = windowed_attention(qkv, skipkv, cfg, B, H, W)
    # fused to_out projection + bias + residual
    return rowop(of, ap["w_out"], bias=ap["b_out"], residual=xf)


def feedforward_flat(xf, lp, cfg, B, H, W):
    ffp = lp["ff"]
    # fused LayerNorm + project_in (1x1)
    y1 = rowop(xf, ffp["w_pin"], bias=ffp["b_pin"],
               ln=(lp["ff_norm_g"], lp["ff_norm_b"], cfg.eps))
    # fused conv3x3 + bias + GELU + project_out + bias + residual
    return ff_tail(y1, ffp["w3col"], ffp["b3"], ffp["w_pout"], ffp["b_pout"],
                   xf, B, H, W)


@functools.partial(jax.jit, static_argnums=(2,))
def rsab_forward(prepped, x_nchw, cfg, skip=None):
    B, C, H, W = x_nchw.shape
    assert H % cfg.window_size == 0 and W % cfg.window_size == 0
    xf = jnp.transpose(x_nchw, (0, 2, 3, 1)).reshape(B * H * W, C)   # NCHW->NHWC once
    skipf = None
    if skip is not None:
        skipf = jnp.transpose(skip, (0, 2, 3, 1)).reshape(B * H * W, C)
    for li, lp in enumerate(prepped["layers"]):
        xf = attention_flat(xf, skipf if li == 0 else None, lp, cfg, B, H, W)
        xf = feedforward_flat(xf, lp, cfg, B, H, W)
    # outer 1x1 conv + residual; residual re-uses the already-loaded x block
    xf = rowop(xf, prepped["outer_w"], bias=prepped["outer_b"], add_input=True)
    return jnp.transpose(xf.reshape(B, H, W, C), (0, 3, 1, 2))       # NHWC->NCHW once


# ----------------------------- one-time weight preparation -----------------------------

def prepare_params(params):
    """Convert PyTorch-layout weights to kernel layout once (hoisted out of the
    jitted forward: qkv concat, transposes, conv3x3 -> tap-major im2col)."""
    prepped = {"layers": [],
               "outer_w": jnp.transpose(params["outer_w"]),
               "outer_b": params["outer_b"]}
    for lp in params["layers"]:
        ap, ffp = lp["attn"], lp["ff"]
        cmid, cin = ffp["c3_w"].shape[0], ffp["c3_w"].shape[1]
        prepped["layers"].append({
            "attn_norm_g": lp["attn_norm_g"], "attn_norm_b": lp["attn_norm_b"],
            "ff_norm_g": lp["ff_norm_g"], "ff_norm_b": lp["ff_norm_b"],
            "attn": {
                "w_qkv": jnp.transpose(
                    jnp.concatenate([ap["to_q_w"], ap["to_kv_w"]], axis=0)),
                "w_kv": jnp.transpose(ap["to_kv_w"]),
                "w_out": jnp.transpose(ap["to_out_w"]),
                "b_out": ap["to_out_b"],
            },
            "ff": {
                "w_pin": jnp.transpose(ffp["pin_w"]), "b_pin": ffp["pin_b"],
                # rows ordered tap-major: row = (di*3+dj)*Cin + cin
                "w3col": jnp.transpose(ffp["c3_w"], (2, 3, 1, 0)).reshape(9 * cin, cmid),
                "b3": ffp["c3_b"],
                "w_pout": jnp.transpose(ffp["pout_w"]), "b_pout": ffp["pout_b"],
            },
        })
    return prepped


# ----------------------------- pure-JAX reference (for verification) -----------------------------

def ref_conv1x1(x, w, b=None):
    y = jnp.einsum('bchw,oc->bohw', x, w)
    return y if b is None else y + b[None, :, None, None]


def ref_conv3x3(x, w, b):
    y = lax.conv_general_dilated(x, w, (1, 1), 'SAME',
                                 dimension_numbers=('NCHW', 'OIHW', 'NCHW'))
    return y + b[None, :, None, None]


def ref_layernorm(x, g, b, eps=1e-5):
    mean = jnp.mean(x, axis=1, keepdims=True)
    var = jnp.mean((x - mean) ** 2, axis=1, keepdims=True)
    return (x - mean) / (jnp.sqrt(var) + eps) * g[None, :, None, None] + b[None, :, None, None]


def _ref_to_windows(t, heads, w):
    B, HC, X, Y = t.shape
    c = HC // heads
    nx, ny = X // w, Y // w
    t = t.reshape(B, heads, c, nx, w, ny, w)
    t = jnp.transpose(t, (0, 1, 3, 5, 4, 6, 2))
    return t.reshape(B * heads * nx * ny, w * w, c)


def _ref_from_windows(t, B, heads, X, Y, w):
    c = t.shape[-1]
    nx, ny = X // w, Y // w
    t = t.reshape(B, heads, nx, ny, w, w, c)
    t = jnp.transpose(t, (0, 1, 6, 2, 4, 3, 5))
    return t.reshape(B, heads * c, X, Y)


def ref_attention(x, p, cfg, skip=None):
    B, C, H, W = x.shape
    heads, w, dim_head = cfg.heads, cfg.window_size, cfg.dim_head
    scale = dim_head ** (-0.5)
    inner = heads * dim_head
    q = ref_conv1x1(x, p["to_q_w"])
    kv_in = x if skip is None else jnp.concatenate([x, skip], axis=0)
    kv = ref_conv1x1(kv_in, p["to_kv_w"])
    k, v = kv[:, :inner], kv[:, inner:]
    qw, kw, vw = (_ref_to_windows(t, heads, w) for t in (q, k, v))
    if skip is not None:
        Bw, n = qw.shape[0], w * w
        kw = jnp.transpose(kw.reshape(2, Bw, n, dim_head), (1, 0, 2, 3)).reshape(Bw, 2 * n, dim_head)
        vw = jnp.transpose(vw.reshape(2, Bw, n, dim_head), (1, 0, 2, 3)).reshape(Bw, 2 * n, dim_head)
    sim = jnp.einsum('bid,bjd->bij', qw, kw) * scale
    attn = jax.nn.softmax(sim, axis=-1)
    ow = jnp.einsum('bij,bjd->bid', attn, vw)
    out = _ref_from_windows(ow, B, heads, H, W, w)
    return ref_conv1x1(out, p["to_out_w"], p["to_out_b"])


def ref_feedforward(x, p):
    x = ref_conv1x1(x, p["pin_w"], p["pin_b"])
    y = ref_conv3x3(x, p["c3_w"], p["c3_b"])
    y = jax.nn.gelu(y, approximate=False)
    return ref_conv1x1(y, p["pout_w"], p["pout_b"])


def ref_rsab(params, x, cfg, skip=None):
    for li, lp in enumerate(params["layers"]):
        xn = ref_layernorm(x, lp["attn_norm_g"], lp["attn_norm_b"], cfg.eps)
        x = ref_attention(xn, lp["attn"], cfg, skip=skip if li == 0 else None) + x
        xn = ref_layernorm(x, lp["ff_norm_g"], lp["ff_norm_b"], cfg.eps)
        x = ref_feedforward(xn, lp["ff"]) + x
    return ref_conv1x1(x, params["outer_w"], params["outer_b"]) + x


# ----------------------------- deterministic parameter init -----------------------------

def init_params(key, dim, depth, out_dim, dim_head, heads):
    inner = dim_head * heads
    state = {"key": key}

    def nxt():
        state["key"], sub = jax.random.split(state["key"])
        return sub

    layers = []
    for _ in range(depth):
        layers.append({
            "attn_norm_g": jnp.ones((dim,), jnp.float32),
            "attn_norm_b": jnp.zeros((dim,), jnp.float32),
            "attn": {
                "to_q_w": 0.1 * jax.random.normal(nxt(), (inner, dim), jnp.float32),
                "to_kv_w": 0.1 * jax.random.normal(nxt(), (inner * 2, dim), jnp.float32),
                "to_out_w": 0.1 * jax.random.normal(nxt(), (dim, inner), jnp.float32),
                "to_out_b": 0.1 * jax.random.normal(nxt(), (dim,), jnp.float32),
            },
            "ff_norm_g": jnp.ones((dim,), jnp.float32),
            "ff_norm_b": jnp.zeros((dim,), jnp.float32),
            "ff": {
                "pin_w": 0.1 * jax.random.normal(nxt(), (dim, dim), jnp.float32),
                "pin_b": 0.1 * jax.random.normal(nxt(), (dim,), jnp.float32),
                "c3_w": 0.1 * jax.random.normal(nxt(), (out_dim, dim, 3, 3), jnp.float32),
                "c3_b": 0.1 * jax.random.normal(nxt(), (out_dim,), jnp.float32),
                "pout_w": 0.1 * jax.random.normal(nxt(), (dim, out_dim), jnp.float32),
                "pout_b": 0.1 * jax.random.normal(nxt(), (dim,), jnp.float32),
            },
        })
    return {
        "layers": layers,
        "outer_w": 0.1 * jax.random.normal(nxt(), (dim, dim), jnp.float32),
        "outer_b": 0.1 * jax.random.normal(nxt(), (dim,), jnp.float32),
    }


# ----------------------------- demo -----------------------------

if __name__ == "__main__":
    dim, depth, out_dim, dim_head, heads, window_size = 8, 2, 16, 4, 2, 4
    B, H, W = 2, 8, 8
    cfg = RSABConfig(heads=heads, window_size=window_size, dim_head=dim_head, eps=1e-5)

    key = jax.random.PRNGKey(0)
    kx, ks, kp = jax.random.split(key, 3)
    x = jax.random.normal(kx, (B, dim, H, W), jnp.float32)
    skip = jax.random.normal(ks, (B, dim, H, W), jnp.float32)
    params = init_params(kp, dim, depth, out_dim, dim_head, heads)
    prepped = prepare_params(params)          # one-time weight re-layout

    out = jax.block_until_ready(rsab_forward(prepped, x, cfg, skip=skip))
    ref = jax.block_until_ready(ref_rsab(params, x, cfg, skip=skip))

    assert out.shape == (B, dim, H, W)
    max_err = float(jnp.max(jnp.abs(out - ref)))
    assert jnp.allclose(out, ref, atol=2e-3, rtol=2e-3), f"max_err={max_err}"
    print("KERNEL_OK")
</pallas_src>

<mosaic_0001>
module attributes {stable_mosaic.version = 11 : i64} {
  func.func @kernel(%arg0: i32, %arg1: memref<64x8xf32, #tpu.memory_space<vmem>>, %arg2: memref<1x8xf32, #tpu.memory_space<vmem>>, %arg3: memref<1x8xf32, #tpu.memory_space<vmem>>, %arg4: memref<8x24xf32, #tpu.memory_space<vmem>>, %arg5: memref<64x24xf32, #tpu.memory_space<vmem>>) attributes {dimension_semantics = [#tpu.dimension_semantics<parallel>], iteration_bounds = array<i64: 2>, scalar_prefetch = 0 : i64, scratch_operands = 0 : i64, tpu.core_type = #tpu.core_type<tc>, window_params = [{transform_indices = @transform_0, window_bounds = array<i64: 64, 8>}, {pipeline_mode = #tpu.pipeline_mode<synchronous>, transform_indices = @transform_1, window_bounds = array<i64: 1, 8>}, {pipeline_mode = #tpu.pipeline_mode<synchronous>, transform_indices = @transform_2, window_bounds = array<i64: 1, 8>}, {pipeline_mode = #tpu.pipeline_mode<synchronous>, transform_indices = @transform_3, window_bounds = array<i64: 8, 24>}, {transform_indices = @transform_4, window_bounds = array<i64: 64, 24>}]} {
    %c0 = arith.constant 0 : index
    %c0_0 = arith.constant 0 : index
    %0 = vector.load %arg1[%c0, %c0_0] : memref<64x8xf32, #tpu.memory_space<vmem>>, vector<64x8xf32>
    %cst = arith.constant dense<0.000000e+00> : vector<64xf32>
    %1 = vector.multi_reduction <add>, %0, %cst [1] : vector<64x8xf32> to vector<64xf32>
    %2 = vector.shape_cast %1 : vector<64xf32> to vector<64x1xf32>
    %cst_1 = arith.constant 8.000000e+00 : f32
    %3 = vector.broadcast %cst_1 : f32 to vector<64x1xf32>
    %4 = arith.divf %2, %3 : vector<64x1xf32>
    %5 = vector.broadcast %4 : vector<64x1xf32> to vector<64x8xf32>
    %6 = arith.subf %0, %5 : vector<64x8xf32>
    %7 = arith.mulf %6, %6 : vector<64x8xf32>
    %cst_2 = arith.constant dense<0.000000e+00> : vector<64xf32>
    %8 = vector.multi_reduction <add>, %7, %cst_2 [1] : vector<64x8xf32> to vector<64xf32>
    %9 = vector.shape_cast %8 : vector<64xf32> to vector<64x1xf32>
    %cst_3 = arith.constant 8.000000e+00 : f32
    %10 = vector.broadcast %cst_3 : f32 to vector<64x1xf32>
    %11 = arith.divf %9, %10 : vector<64x1xf32>
    %12 = vector.broadcast %4 : vector<64x1xf32> to vector<64x8xf32>
    %13 = arith.subf %0, %12 : vector<64x8xf32>
    %14 = math.sqrt %11 : vector<64x1xf32>
    %cst_4 = arith.constant 9.99999974E-6 : f32
    %15 = vector.broadcast %cst_4 : f32 to vector<64x1xf32>
    %16 = arith.addf %14, %15 : vector<64x1xf32>
    %17 = vector.broadcast %16 : vector<64x1xf32> to vector<64x8xf32>
    %18 = arith.divf %13, %17 : vector<64x8xf32>
    %c0_5 = arith.constant 0 : index
    %c0_6 = arith.constant 0 : index
    %19 = vector.load %arg2[%c0_5, %c0_6] : memref<1x8xf32, #tpu.memory_space<vmem>>, vector<1x8xf32>
    %20 = vector.broadcast %19 : vector<1x8xf32> to vector<64x8xf32>
    %21 = arith.mulf %18, %20 : vector<64x8xf32>
    %c0_7 = arith.constant 0 : index
    %c0_8 = arith.constant 0 : index
    %22 = vector.load %arg3[%c0_7, %c0_8] : memref<1x8xf32, #tpu.memory_space<vmem>>, vector<1x8xf32>
    %23 = vector.broadcast %22 : vector<1x8xf32> to vector<64x8xf32>
    %24 = arith.addf %21, %23 : vector<64x8xf32>
    %c0_9 = arith.constant 0 : index
    %c0_10 = arith.constant 0 : index
    %25 = vector.load %arg4[%c0_9, %c0_10] : memref<8x24xf32, #tpu.memory_space<vmem>>, vector<8x24xf32>
    %cst_11 = arith.constant dense<0.000000e+00> : vector<64x24xf32>
    %26 = tpu.matmul %24, %25, %cst_11 {dimension_numbers = #tpu.dot_dimension_numbers<[1], [0], [0], [1], [0, 0, 1, 1], [], []>} : vector<64x8xf32>, vector<8x24xf32>, vector<64x24xf32> -> vector<64x24xf32>
    %c0_12 = arith.constant 0 : index
    %c0_13 = arith.constant 0 : index
    %27 = vector.load %arg5[%c0_12, %c0_13] : memref<64x24xf32, #tpu.memory_space<vmem>>, vector<64x24xf32>
    tpu.vector_store %arg5[%c0_12, %c0_13], %26 {strides = array<i32>} : memref<64x24xf32, #tpu.memory_space<vmem>>, vector<64x24xf32>,
    return
  }
  func.func @transform_0(%arg0: i32) -> (i32, i32) {
    %c0_i32 = arith.constant 0 : i32
    %c0_i32_0 = arith.constant 0 : i32
    return %arg0, %c0_i32 : i32, i32
  }
  func.func @transform_1(%arg0: i32) -> (i32, i32) {
    %c0_i32 = arith.constant 0 : i32
    %c0_i32_0 = arith.constant 0 : i32
    %c0_i32_1 = arith.constant 0 : i32
    return %c0_i32, %c0_i32_0 : i32, i32
  }
  func.func @transform_2(%arg0: i32) -> (i32, i32) {
    %c0_i32 = arith.constant 0 : i32
    %c0_i32_0 = arith.constant 0 : i32
    %c0_i32_1 = arith.constant 0 : i32
    return %c0_i32, %c0_i32_0 : i32, i32
  }
  func.func @transform_3(%arg0: i32) -> (i32, i32) {
    %c0_i32 = arith.constant 0 : i32
    %c0_i32_0 = arith.constant 0 : i32
    %c0_i32_1 = arith.constant 0 : i32
    return %c0_i32, %c0_i32_0 : i32, i32
  }
  func.func @transform_4(%arg0: i32) -> (i32, i32) {
    %c0_i32 = arith.constant 0 : i32
    %c0_i32_0 = arith.constant 0 : i32
    return %arg0, %c0_i32 : i32, i32
  }
}

module attributes {stable_mosaic.version = 11 : i64} {
  func.func @kernel(%arg0: i32, %arg1: memref<64x8xf32, #tpu.memory_space<vmem>>, %arg2: memref<8x16xf32, #tpu.memory_space<vmem>>, %arg3: memref<64x16xf32, #tpu.memory_space<vmem>>) attributes {dimension_semantics = [#tpu.dimension_semantics<parallel>], iteration_bounds = array<i64: 2>, scalar_prefetch = 0 : i64, scratch_operands = 0 : i64, tpu.core_type = #tpu.core_type<tc>, window_params = [{transform_indices = @transform_0, window_bounds = array<i64: 64, 8>}, {pipeline_mode = #tpu.pipeline_mode<synchronous>, transform_indices = @transform_1, window_bounds = array<i64: 8, 16>}, {transform_indices = @transform_2, window_bounds = array<i64: 64, 16>}]} {
    %c0 = arith.constant 0 : index
    %c0_0 = arith.constant 0 : index
    %0 = vector.load %arg1[%c0, %c0_0] : memref<64x8xf32, #tpu.memory_space<vmem>>, vector<64x8xf32>
    %c0_1 = arith.constant 0 : index
    %c0_2 = arith.constant 0 : index
    %1 = vector.load %arg2[%c0_1, %c0_2] : memref<8x16xf32, #tpu.memory_space<vmem>>, vector<8x16xf32>
    %cst = arith.constant dense<0.000000e+00> : vector<64x16xf32>
    %2 = tpu.matmul %0, %1, %cst {dimension_numbers = #tpu.dot_dimension_numbers<[1], [0], [0], [1], [0, 0, 1, 1], [], []>} : vector<64x8xf32>, vector<8x16xf32>, vector<64x16xf32> -> vector<64x16xf32>
    %c0_3 = arith.constant 0 : index
    %c0_4 = arith.constant 0 : index
    %3 = vector.load %arg3[%c0_3, %c0_4] : memref<64x16xf32, #tpu.memory_space<vmem>>, vector<64x16xf32>
    tpu.vector_store %arg3[%c0_3, %c0_4], %2 {strides = array<i32>} : memref<64x16xf32, #tpu.memory_space<vmem>>, vector<64x16xf32>,
    return
  }
  func.func @transform_0(%arg0: i32) -> (i32, i32) {
    %c0_i32 = arith.constant 0 : i32
    %c0_i32_0 = arith.constant 0 : i32
    return %arg0, %c0_i32 : i32, i32
  }
  func.func @transform_1(%arg0: i32) -> (i32, i32) {
    %c0_i32 = arith.constant 0 : i32
    %c0_i32_0 = arith.constant 0 : i32
    %c0_i32_1 = arith.constant 0 : i32
    return %c0_i32, %c0_i32_0 : i32, i32
  }
  func.func @transform_2(%arg0: i32) -> (i32, i32) {
    %c0_i32 = arith.constant 0 : i32
    %c0_i32_0 = arith.constant 0 : i32
    return %arg0, %c0_i32 : i32, i32
  }
}

module attributes {stable_mosaic.version = 11 : i64} {
  func.func @kernel(%arg0: i32, %arg1: i32, %arg2: memref<1x4x1x4x24xf32, #tpu.memory_space<vmem>>, %arg3: memref<1x4x1x4x16xf32, #tpu.memory_space<vmem>>, %arg4: memref<1x4x1x4x8xf32, #tpu.memory_space<vmem>>) attributes {dimension_semantics = [#tpu.dimension_semantics<parallel>, #tpu.dimension_semantics<parallel>], iteration_bounds = array<i64: 4, 2>, scalar_prefetch = 0 : i64, scratch_operands = 0 : i64, tpu.core_type = #tpu.core_type<tc>, window_params = [{transform_indices = @transform_0, window_bounds = array<i64: 1, 4, 1, 4, 24>}, {transform_indices = @transform_1, window_bounds = array<i64: 1, 4, 1, 4, 16>}, {transform_indices = @transform_2, window_bounds = array<i64: 1, 4, 1, 4, 8>}]} {
    %c0 = arith.constant 0 : index
    %c0_0 = arith.constant 0 : index
    %c0_1 = arith.constant 0 : index
    %c0_2 = arith.constant 0 : index
    %c0_3 = arith.constant 0 : index
    %0 = vector.load %arg2[%c0, %c0_0, %c0_1, %c0_2, %c0_3] : memref<1x4x1x4x24xf32, #tpu.memory_space<vmem>>, vector<1x4x1x4x24xf32>
    %1 = vector.shape_cast %0 : vector<1x4x1x4x24xf32> to vector<4x4x24xf32>
    %2 = vector.shape_cast %1 : vector<4x4x24xf32> to vector<16x24xf32>
    %3 = vector.extract_strided_slice %2 {offsets = [0, 0], sizes = [16, 8], strides = [1, 1]} : vector<16x24xf32> to vector<16x8xf32>
    %4 = vector.extract_strided_slice %2 {offsets = [0, 8], sizes = [16, 8], strides = [1, 1]} : vector<16x24xf32> to vector<16x8xf32>
    %5 = vector.extract_strided_slice %2 {offsets = [0, 16], sizes = [16, 8], strides = [1, 1]} : vector<16x24xf32> to vector<16x8xf32>
    %c0_4 = arith.constant 0 : index
    %c0_5 = arith.constant 0 : index
    %c0_6 = arith.constant 0 : index
    %c0_7 = arith.constant 0 : index
    %c0_8 = arith.constant 0 : index
    %6 = vector.load %arg3[%c0_4, %c0_5, %c0_6, %c0_7, %c0_8] : memref<1x4x1x4x16xf32, #tpu.memory_space<vmem>>, vector<1x4x1x4x16xf32>
    %7 = vector.shape_cast %6 : vector<1x4x1x4x16xf32> to vector<4x4x16xf32>
    %8 = vector.shape_cast %7 : vector<4x4x16xf32> to vector<16x16xf32>
    %9 = vector.extract_strided_slice %8 {offsets = [0, 0], sizes = [16, 8], strides = [1, 1]} : vector<16x16xf32> to vector<16x8xf32>
    %10 = tpu.concatenate %4, %9 in 0 : vector<16x8xf32>, vector<16x8xf32> -> vector<32x8xf32>
    %11 = vector.extract_strided_slice %8 {offsets = [0, 8], sizes = [16, 8], strides = [1, 1]} : vector<16x16xf32> to vector<16x8xf32>
    %12 = tpu.concatenate %5, %11 in 0 : vector<16x8xf32>, vector<16x8xf32> -> vector<32x8xf32>
    %13 = vector.extract_strided_slice %3 {offsets = [0, 0], sizes = [16, 4], strides = [1, 1]} : vector<16x8xf32> to vector<16x4xf32>
    %14 = vector.extract_strided_slice %10 {offsets = [0, 0], sizes = [32, 4], strides = [1, 1]} : vector<32x8xf32> to vector<32x4xf32>
    %15 = vector.extract_strided_slice %12 {offsets = [0, 0], sizes = [32, 4], strides = [1, 1]} : vector<32x8xf32> to vector<32x4xf32>
    "tpu.trace_start"() <{level = 10 : i32, message = "qd,kd->qk"}> : () -> ()
    %cst = arith.constant dense<0.000000e+00> : vector<16x32xf32>
    %16 = tpu.matmul %13, %14, %cst {dimension_numbers = #tpu.dot_dimension_numbers<[1], [1], [0], [0], [0, 0, 1, 0], [], []>} : vector<16x4xf32>, vector<32x4xf32>, vector<16x32xf32> -> vector<16x32xf32>
    "tpu.trace_stop"() : () -> ()
    %cst_9 = arith.constant 5.000000e-01 : f32
    %17 = vector.broadcast %cst_9 : f32 to vector<16x32xf32>
    %18 = arith.mulf %16, %17 : vector<16x32xf32>
    %cst_10 = arith.constant dense<0xFF800000> : vector<16xf32>
    %19 = vector.multi_reduction <maximumf>, %18, %cst_10 [1] : vector<16x32xf32> to vector<16xf32>
    %20 = vector.shape_cast %19 : vector<16xf32> to vector<16x1xf32>
    %21 = vector.broadcast %20 : vector<16x1xf32> to vector<16x32xf32>
    %22 = arith.subf %18, %21 : vector<16x32xf32>
    %23 = math.exp %22 : vector<16x32xf32>
    %cst_11 = arith.constant dense<0.000000e+00> : vector<16xf32>
    %24 = vector.multi_reduction <add>, %23, %cst_11 [1] : vector<16x32xf32> to vector<16xf32>
    %25 = vector.shape_cast %24 : vector<16xf32> to vector<16x1xf32>
    %26 = tpu.reciprocal %25 {approx = true} : vector<16x1xf32> -> vector<16x1xf32>
    %27 = vector.broadcast %26 : vector<16x1xf32> to vector<16x32xf32>
    %28 = arith.mulf %23, %27 : vector<16x32xf32>
    "tpu.trace_start"() <{level = 10 : i32, message = "qk,kd->qd"}> : () -> ()
    %cst_12 = arith.constant dense<0.000000e+00> : vector<16x4xf32>
    %29 = tpu.matmul %28, %15, %cst_12 {dimension_numbers = #tpu.dot_dimension_numbers<[1], [0], [0], [1], [0, 0, 1, 1], [], []>} : vector<16x32xf32>, vector<32x4xf32>, vector<16x4xf32> -> vector<16x4xf32>
    "tpu.trace_stop"() : () -> ()
    %30 = vector.extract_strided_slice %3 {offsets = [0, 4], sizes = [16, 4], strides = [1, 1]} : vector<16x8xf32> to vector<16x4xf32>
    %31 = vector.extract_strided_slice %10 {offsets = [0, 4], sizes = [32, 4], strides = [1, 1]} : vector<32x8xf32> to vector<32x4xf32>
    %32 = vector.extract_strided_slice %12 {offsets = [0, 4], sizes = [32, 4], strides = [1, 1]} : vector<32x8xf32> to vector<32x4xf32>
    "tpu.trace_start"() <{level = 10 : i32, message = "qd,kd->qk"}> : () -> ()
    %cst_13 = arith.constant dense<0.000000e+00> : vector<16x32xf32>
    %33 = tpu.matmul %30, %31, %cst_13 {dimension_numbers = #tpu.dot_dimension_numbers<[1], [1], [0], [0], [0, 0, 1, 0], [], []>} : vector<16x4xf32>, vector<32x4xf32>, vector<16x32xf32> -> vector<16x32xf32>
    "tpu.trace_stop"() : () -> ()
    %cst_14 = arith.constant 5.000000e-01 : f32
    %34 = vector.broadcast %cst_14 : f32 to vector<16x32xf32>
    %35 = arith.mulf %33, %34 : vector<16x32xf32>
    %cst_15 = arith.constant dense<0xFF800000> : vector<16xf32>
    %36 = vector.multi_reduction <maximumf>, %35, %cst_15 [1] : vector<16x32xf32> to vector<16xf32>
    %37 = vector.shape_cast %36 : vector<16xf32> to vector<16x1xf32>
    %38 = vector.broadcast %37 : vector<16x1xf32> to vector<16x32xf32>
    %39 = arith.subf %35, %38 : vector<16x32xf32>
    %40 = math.exp %39 : vector<16x32xf32>
    %cst_16 = arith.constant dense<0.000000e+00> : vector<16xf32>
    %41 = vector.multi_reduction <add>, %40, %cst_16 [1] : vector<16x32xf32> to vector<16xf32>
    %42 = vector.shape_cast %41 : vector<16xf32> to vector<16x1xf32>
    %43 = tpu.reciprocal %42 {approx = true} : vector<16x1xf32> -> vector<16x1xf32>
    %44 = vector.broadcast %43 : vector<16x1xf32> to vector<16x32xf32>
    %45 = arith.mulf %40, %44 : vector<16x32xf32>
    "tpu.trace_start"() <{level = 10 : i32, message = "qk,kd->qd"}> : () -> ()
    %cst_17 = arith.constant dense<0.000000e+00> : vector<16x4xf32>
    %46 = tpu.matmul %45, %32, %cst_17 {dimension_numbers = #tpu.dot_dimension_numbers<[1], [0], [0], [1], [0, 0, 1, 1], [], []>} : vector<16x32xf32>, vector<32x4xf32>, vector<16x4xf32> -> vector<16x4xf32>
    "tpu.trace_stop"() : () -> ()
    %47 = tpu.concatenate %29, %46 in 1 : vector<16x4xf32>, vector<16x4xf32> -> vector<16x8xf32>
    %48 = vector.shape_cast %47 : vector<16x8xf32> to vector<4x4x8xf32>
    %c0_18 = arith.constant 0 : index
    %c0_19 = arith.constant 0 : index
    %c0_20 = arith.constant 0 : index
    %c0_21 = arith.constant 0 : index
    %c0_22 = arith.constant 0 : index
    %49 = vector.load %arg4[%c0_18, %c0_19, %c0_20, %c0_21, %c0_22] : memref<1x4x1x4x8xf32, #tpu.memory_space<vmem>>, vector<1x4x1x4x8xf32>
    %50 = vector.shape_cast %49 : vector<1x4x1x4x8xf32> to vector<4x4x8xf32>
    %51 = vector.shape_cast %48 : vector<4x4x8xf32> to vector<1x4x1x4x8xf32>
    tpu.vector_store %arg4[%c0_18, %c0_19, %c0_20, %c0_21, %c0_22], %51 {strides = array<i32>} : memref<1x4x1x4x8xf32, #tpu.memory_space<vmem>>, vector<1x4x1x4x8xf32>,
    return
  }
  func.func @transform_0(%arg0: i32, %arg1: i32) -> (i32, i32, i32, i32, i32) {
    %c0_i32 = arith.constant 0 : i32
    %c0_i32_0 = arith.constant 0 : i32
    %c0_i32_1 = arith.constant 0 : i32
    %c0_i32_2 = arith.constant 0 : i32
    return %arg0, %c0_i32, %arg1, %c0_i32_0, %c0_i32_1 : i32, i32, i32, i32, i32
  }
  func.func @transform_1(%arg0: i32, %arg1: i32) -> (i32, i32, i32, i32, i32) {
    %c0_i32 = arith.constant 0 : i32
    %c0_i32_0 = arith.constant 0 : i32
    %c0_i32_1 = arith.constant 0 : i32
    %c0_i32_2 = arith.constant 0 : i32
    return %arg0, %c0_i32, %arg1, %c0_i32_0, %c0_i32_1 : i32, i32, i32, i32, i32
  }
  func.func @transform_2(%arg0: i32, %arg1: i32) -> (i32, i32, i32, i32, i32) {
    %c0_i32 = arith.constant 0 : i32
    %c0_i32_0 = arith.constant 0 : i32
    %c0_i32_1 = arith.constant 0 : i32
    %c0_i32_2 = arith.constant 0 : i32
    return %arg0, %c0_i32, %arg1, %c0_i32_0, %c0_i32_1 : i32, i32, i32, i32, i32
  }
}

module attributes {stable_mosaic.version = 11 : i64} {
  func.func @kernel(%arg0: i32, %arg1: memref<64x8xf32, #tpu.memory_space<vmem>>, %arg2: memref<8x8xf32, #tpu.memory_space<vmem>>, %arg3: memref<1x8xf32, #tpu.memory_space<vmem>>, %arg4: memref<64x8xf32, #tpu.memory_space<vmem>>, %arg5: memref<64x8xf32, #tpu.memory_space<vmem>>) attributes {dimension_semantics = [#tpu.dimension_semantics<parallel>], iteration_bounds = array<i64: 2>, scalar_prefetch = 0 : i64, scratch_operands = 0 : i64, tpu.core_type = #tpu.core_type<tc>, window_params = [{transform_indices = @transform_0, window_bounds = array<i64: 64, 8>}, {pipeline_mode = #tpu.pipeline_mode<synchronous>, transform_indices = @transform_1, window_bounds = array<i64: 8, 8>}, {pipeline_mode = #tpu.pipeline_mode<synchronous>, transform_indices = @transform_2, window_bounds = array<i64: 1, 8>}, {transform_indices = @transform_3, window_bounds = array<i64: 64, 8>}, {transform_indices = @transform_4, window_bounds = array<i64: 64, 8>}]} {
    %c0 = arith.constant 0 : index
    %c0_0 = arith.constant 0 : index
    %0 = vector.load %arg1[%c0, %c0_0] : memref<64x8xf32, #tpu.memory_space<vmem>>, vector<64x8xf32>
    %c0_1 = arith.constant 0 : index
    %c0_2 = arith.constant 0 : index
    %1 = vector.load %arg2[%c0_1, %c0_2] : memref<8x8xf32, #tpu.memory_space<vmem>>, vector<8x8xf32>
    %cst = arith.constant dense<0.000000e+00> : vector<64x8xf32>
    %2 = tpu.matmul %0, %1, %cst {dimension_numbers = #tpu.dot_dimension_numbers<[1], [0], [0], [1], [0, 0, 1, 1], [], []>} : vector<64x8xf32>, vector<8x8xf32>, vector<64x8xf32> -> vector<64x8xf32>
    %c0_3 = arith.constant 0 : index
    %c0_4 = arith.constant 0 : index
    %3 = vector.load %arg3[%c0_3, %c0_4] : memref<1x8xf32, #tpu.memory_space<vmem>>, vector<1x8xf32>
    %4 = vector.broadcast %3 : vector<1x8xf32> to vector<64x8xf32>
    %5 = arith.addf %2, %4 : vector<64x8xf32>
    %c0_5 = arith.constant 0 : index
    %c0_6 = arith.constant 0 : index
    %6 = vector.load %arg4[%c0_5, %c0_6] : memref<64x8xf32, #tpu.memory_space<vmem>>, vector<64x8xf32>
    %7 = arith.addf %5, %6 : vector<64x8xf32>
    %c0_7 = arith.constant 0 : index
    %c0_8 = arith.constant 0 : index
    %8 = vector.load %arg5[%c0_7, %c0_8] : memref<64x8xf32, #tpu.memory_space<vmem>>, vector<64x8xf32>
    tpu.vector_store %arg5[%c0_7, %c0_8], %7 {strides = array<i32>} : memref<64x8xf32, #tpu.memory_space<vmem>>, vector<64x8xf32>,
    return
  }
  func.func @transform_0(%arg0: i32) -> (i32, i32) {
    %c0_i32 = arith.constant 0 : i32
    %c0_i32_0 = arith.constant 0 : i32
    return %arg0, %c0_i32 : i32, i32
  }
  func.func @transform_1(%arg0: i32) -> (i32, i32) {
    %c0_i32 = arith.constant 0 : i32
    %c0_i32_0 = arith.constant 0 : i32
    %c0_i32_1 = arith.constant 0 : i32
    return %c0_i32, %c0_i32_0 : i32, i32
  }
  func.func @transform_2(%arg0: i32) -> (i32, i32) {
    %c0_i32 = arith.constant 0 : i32
    %c0_i32_0 = arith.constant 0 : i32
    %c0_i32_1 = arith.constant 0 : i32
    return %c0_i32, %c0_i32_0 : i32, i32
  }
  func.func @transform_3(%arg0: i32) -> (i32, i32) {
    %c0_i32 = arith.constant 0 : i32
    %c0_i32_0 = arith.constant 0 : i32
    return %arg0, %c0_i32 : i32, i32
  }
  func.func @transform_4(%arg0: i32) -> (i32, i32) {
    %c0_i32 = arith.constant 0 : i32
    %c0_i32_0 = arith.constant 0 : i32
    return %arg0, %c0_i32 : i32, i32
  }
}

module attributes {stable_mosaic.version = 11 : i64} {
  func.func @kernel(%arg0: i32, %arg1: memref<64x8xf32, #tpu.memory_space<vmem>>, %arg2: memref<1x8xf32, #tpu.memory_space<vmem>>, %arg3: memref<1x8xf32, #tpu.memory_space<vmem>>, %arg4: memref<8x8xf32, #tpu.memory_space<vmem>>, %arg5: memref<1x8xf32, #tpu.memory_space<vmem>>, %arg6: memref<64x8xf32, #tpu.memory_space<vmem>>) attributes {dimension_semantics = [#tpu.dimension_semantics<parallel>], iteration_bounds = array<i64: 2>, scalar_prefetch = 0 : i64, scratch_operands = 0 : i64, tpu.core_type = #tpu.core_type<tc>, window_params = [{transform_indices = @transform_0, window_bounds = array<i64: 64, 8>}, {pipeline_mode = #tpu.pipeline_mode<synchronous>, transform_indices = @transform_1, window_bounds = array<i64: 1, 8>}, {pipeline_mode = #tpu.pipeline_mode<synchronous>, transform_indices = @transform_2, window_bounds = array<i64: 1, 8>}, {pipeline_mode = #tpu.pipeline_mode<synchronous>, transform_indices = @transform_3, window_bounds = array<i64: 8, 8>}, {pipeline_mode = #tpu.pipeline_mode<synchronous>, transform_indices = @transform_4, window_bounds = array<i64: 1, 8>}, {transform_indices = @transform_5, window_bounds = array<i64: 64, 8>}]} {
    %c0 = arith.constant 0 : index
    %c0_0 = arith.constant 0 : index
    %0 = vector.load %arg1[%c0, %c0_0] : memref<64x8xf32, #tpu.memory_space<vmem>>, vector<64x8xf32>
    %cst = arith.constant dense<0.000000e+00> : vector<64xf32>
    %1 = vector.multi_reduction <add>, %0, %cst [1] : vector<64x8xf32> to vector<64xf32>
    %2 = vector.shape_cast %1 : vector<64xf32> to vector<64x1xf32>
    %cst_1 = arith.constant 8.000000e+00 : f32
    %3 = vector.broadcast %cst_1 : f32 to vector<64x1xf32>
    %4 = arith.divf %2, %3 : vector<64x1xf32>
    %5 = vector.broadcast %4 : vector<64x1xf32> to vector<64x8xf32>
    %6 = arith.subf %0, %5 : vector<64x8xf32>
    %7 = arith.mulf %6, %6 : vector<64x8xf32>
    %cst_2 = arith.constant dense<0.000000e+00> : vector<64xf32>
    %8 = vector.multi_reduction <add>, %7, %cst_2 [1] : vector<64x8xf32> to vector<64xf32>
    %9 = vector.shape_cast %8 : vector<64xf32> to vector<64x1xf32>
    %cst_3 = arith.constant 8.000000e+00 : f32
    %10 = vector.broadcast %cst_3 : f32 to vector<64x1xf32>
    %11 = arith.divf %9, %10 : vector<64x1xf32>
    %12 = vector.broadcast %4 : vector<64x1xf32> to vector<64x8xf32>
    %13 = arith.subf %0, %12 : vector<64x8xf32>
    %14 = math.sqrt %11 : vector<64x1xf32>
    %cst_4 = arith.constant 9.99999974E-6 : f32
    %15 = vector.broadcast %cst_4 : f32 to vector<64x1xf32>
    %16 = arith.addf %14, %15 : vector<64x1xf32>
    %17 = vector.broadcast %16 : vector<64x1xf32> to vector<64x8xf32>
    %18 = arith.divf %13, %17 : vector<64x8xf32>
    %c0_5 = arith.constant 0 : index
    %c0_6 = arith.constant 0 : index
    %19 = vector.load %arg2[%c0_5, %c0_6] : memref<1x8xf32, #tpu.memory_space<vmem>>, vector<1x8xf32>
    %20 = vector.broadcast %19 : vector<1x8xf32> to vector<64x8xf32>
    %21 = arith.mulf %18, %20 : vector<64x8xf32>
    %c0_7 = arith.constant 0 : index
    %c0_8 = arith.constant 0 : index
    %22 = vector.load %arg3[%c0_7, %c0_8] : memref<1x8xf32, #tpu.memory_space<vmem>>, vector<1x8xf32>
    %23 = vector.broadcast %22 : vector<1x8xf32> to vector<64x8xf32>
    %24 = arith.addf %21, %23 : vector<64x8xf32>
    %c0_9 = arith.constant 0 : index
    %c0_10 = arith.constant 0 : index
    %25 = vector.load %arg4[%c0_9, %c0_10] : memref<8x8xf32, #tpu.memory_space<vmem>>, vector<8x8xf32>
    %cst_11 = arith.constant dense<0.000000e+00> : vector<64x8xf32>
    %26 = tpu.matmul %24, %25, %cst_11 {dimension_numbers = #tpu.dot_dimension_numbers<[1], [0], [0], [1], [0, 0, 1, 1], [], []>} : vector<64x8xf32>, vector<8x8xf32>, vector<64x8xf32> -> vector<64x8xf32>
    %c0_12 = arith.constant 0 : index
    %c0_13 = arith.constant 0 : index
    %27 = vector.load %arg5[%c0_12, %c0_13] : memref<1x8xf32, #tpu.memory_space<vmem>>, vector<1x8xf32>
    %28 = vector.broadcast %27 : vector<1x8xf32> to vector<64x8xf32>
    %29 = arith.addf %26, %28 : vector<64x8xf32>
    %c0_14 = arith.constant 0 : index
    %c0_15 = arith.constant 0 : index
    %30 = vector.load %arg6[%c0_14, %c0_15] : memref<64x8xf32, #tpu.memory_space<vmem>>, vector<64x8xf32>
    tpu.vector_store %arg6[%c0_14, %c0_15], %29 {strides = array<i32>} : memref<64x8xf32, #tpu.memory_space<vmem>>, vector<64x8xf32>,
    return
  }
  func.func @transform_0(%arg0: i32) -> (i32, i32) {
    %c0_i32 = arith.constant 0 : i32
    %c0_i32_0 = arith.constant 0 : i32
    return %arg0, %c0_i32 : i32, i32
  }
  func.func @transform_1(%arg0: i32) -> (i32, i32) {
    %c0_i32 = arith.constant 0 : i32
    %c0_i32_0 = arith.constant 0 : i32
    %c0_i32_1 = arith.constant 0 : i32
    return %c0_i32, %c0_i32_0 : i32, i32
  }
  func.func @transform_2(%arg0: i32) -> (i32, i32) {
    %c0_i32 = arith.constant 0 : i32
    %c0_i32_0 = arith.constant 0 : i32
    %c0_i32_1 = arith.constant 0 : i32
    return %c0_i32, %c0_i32_0 : i32, i32
  }
  func.func @transform_3(%arg0: i32) -> (i32, i32) {
    %c0_i32 = arith.constant 0 : i32
    %c0_i32_0 = arith.constant 0 : i32
    %c0_i32_1 = arith.constant 0 : i32
    return %c0_i32, %c0_i32_0 : i32, i32
  }
  func.func @transform_4(%arg0: i32) -> (i32, i32) {
    %c0_i32 = arith.constant 0 : i32
    %c0_i32_0 = arith.constant 0 : i32
    %c0_i32_1 = arith.constant 0 : i32
    return %c0_i32, %c0_i32_0 : i32, i32
  }
  func.func @transform_5(%arg0: i32) -> (i32, i32) {
    %c0_i32 = arith.constant 0 : i32
    %c0_i32_0 = arith.constant 0 : i32
    return %arg0, %c0_i32 : i32, i32
  }
}

module attributes {stable_mosaic.version = 11 : i64} {
  func.func @kernel(%arg0: i32, %arg1: memref<64x8xf32, #tpu.memory_space<vmem>>, %arg2: memref<8x8xf32, #tpu.memory_space<vmem>>, %arg3: memref<1x8xf32, #tpu.memory_space<vmem>>, %arg4: memref<64x8xf32, #tpu.memory_space<vmem>>) attributes {dimension_semantics = [#tpu.dimension_semantics<parallel>], iteration_bounds = array<i64: 2>, scalar_prefetch = 0 : i64, scratch_operands = 0 : i64, tpu.core_type = #tpu.core_type<tc>, window_params = [{transform_indices = @transform_0, window_bounds = array<i64: 64, 8>}, {pipeline_mode = #tpu.pipeline_mode<synchronous>, transform_indices = @transform_1, window_bounds = array<i64: 8, 8>}, {pipeline_mode = #tpu.pipeline_mode<synchronous>, transform_indices = @transform_2, window_bounds = array<i64: 1, 8>}, {transform_indices = @transform_3, window_bounds = array<i64: 64, 8>}]} {
    %c0 = arith.constant 0 : index
    %c0_0 = arith.constant 0 : index
    %0 = vector.load %arg1[%c0, %c0_0] : memref<64x8xf32, #tpu.memory_space<vmem>>, vector<64x8xf32>
    %c0_1 = arith.constant 0 : index
    %c0_2 = arith.constant 0 : index
    %1 = vector.load %arg2[%c0_1, %c0_2] : memref<8x8xf32, #tpu.memory_space<vmem>>, vector<8x8xf32>
    %cst = arith.constant dense<0.000000e+00> : vector<64x8xf32>
    %2 = tpu.matmul %0, %1, %cst {dimension_numbers = #tpu.dot_dimension_numbers<[1], [0], [0], [1], [0, 0, 1, 1], [], []>} : vector<64x8xf32>, vector<8x8xf32>, vector<64x8xf32> -> vector<64x8xf32>
    %c0_3 = arith.constant 0 : index
    %c0_4 = arith.constant 0 : index
    %3 = vector.load %arg3[%c0_3, %c0_4] : memref<1x8xf32, #tpu.memory_space<vmem>>, vector<1x8xf32>
    %4 = vector.broadcast %3 : vector<1x8xf32> to vector<64x8xf32>
    %5 = arith.addf %2, %4 : vector<64x8xf32>
    %6 = arith.addf %5, %0 : vector<64x8xf32>
    %c0_5 = arith.constant 0 : index
    %c0_6 = arith.constant 0 : index
    %7 = vector.load %arg4[%c0_5, %c0_6] : memref<64x8xf32, #tpu.memory_space<vmem>>, vector<64x8xf32>
    tpu.vector_store %arg4[%c0_5, %c0_6], %6 {strides = array<i32>} : memref<64x8xf32, #tpu.memory_space<vmem>>, vector<64x8xf32>,
    return
  }
  func.func @transform_0(%arg0: i32) -> (i32, i32) {
    %c0_i32 = arith.constant 0 : i32
    %c0_i32_0 = arith.constant 0 : i32
    return %arg0, %c0_i32 : i32, i32
  }
  func.func @transform_1(%arg0: i32) -> (i32, i32) {
    %c0_i32 = arith.constant 0 : i32
    %c0_i32_0 = arith.constant 0 : i32
    %c0_i32_1 = arith.constant 0 : i32
    return %c0_i32, %c0_i32_0 : i32, i32
  }
  func.func @transform_2(%arg0: i32) -> (i32, i32) {
    %c0_i32 = arith.constant 0 : i32
    %c0_i32_0 = arith.constant 0 : i32
    %c0_i32_1 = arith.constant 0 : i32
    return %c0_i32, %c0_i32_0 : i32, i32
  }
  func.func @transform_3(%arg0: i32) -> (i32, i32) {
    %c0_i32 = arith.constant 0 : i32
    %c0_i32_0 = arith.constant 0 : i32
    return %arg0, %c0_i32 : i32, i32
  }
}

module attributes {stable_mosaic.version = 11 : i64} {
  func.func @_ff_tail_kernel(%arg0: i32, %arg1: i32, %arg2: memref<1x80x8xf32, #tpu.memory_space<vmem>>, %arg3: memref<1x80x8xf32, #tpu.memory_space<vmem>>, %arg4: memref<72x16xf32, #tpu.memory_space<vmem>>, %arg5: memref<1x16xf32, #tpu.memory_space<vmem>>, %arg6: memref<16x8xf32, #tpu.memory_space<vmem>>, %arg7: memref<1x8xf32, #tpu.memory_space<vmem>>, %arg8: memref<1x64x8xf32, #tpu.memory_space<vmem>>, %arg9: memref<1x64x8xf32, #tpu.memory_space<vmem>>) attributes {dimension_semantics = [#tpu.dimension_semantics<parallel>, #tpu.dimension_semantics<parallel>], iteration_bounds = array<i64: 2, 1>, scalar_prefetch = 0 : i64, scratch_operands = 0 : i64, tpu.core_type = #tpu.core_type<tc>, window_params = [{transform_indices = @transform_0, window_bounds = array<i64: 1, 80, 8>}, {transform_indices = @transform_1, window_bounds = array<i64: 1, 80, 8>}, {pipeline_mode = #tpu.pipeline_mode<synchronous>, transform_indices = @transform_2, window_bounds = array<i64: 72, 16>}, {pipeline_mode = #tpu.pipeline_mode<synchronous>, transform_indices = @transform_3, window_bounds = array<i64: 1, 16>}, {pipeline_mode = #tpu.pipeline_mode<synchronous>, transform_indices = @transform_4, window_bounds = array<i64: 16, 8>}, {pipeline_mode = #tpu.pipeline_mode<synchronous>, transform_indices = @transform_5, window_bounds = array<i64: 1, 8>}, {transform_indices = @transform_6, window_bounds = array<i64: 1, 64, 8>}, {transform_indices = @transform_7, window_bounds = array<i64: 1, 64, 8>}]} {
    %c0 = arith.constant 0 : index
    %c0_0 = arith.constant 0 : index
    %c0_1 = arith.constant 0 : index
    %0 = vector.load %arg2[%c0, %c0_0, %c0_1] : memref<1x80x8xf32, #tpu.memory_space<vmem>>, vector<1x80x8xf32>
    %1 = vector.shape_cast %0 : vector<1x80x8xf32> to vector<80x8xf32>
    %c0_2 = arith.constant 0 : index
    %c0_3 = arith.constant 0 : index
    %c0_4 = arith.constant 0 : index
    %2 = vector.load %arg3[%c0_2, %c0_3, %c0_4] : memref<1x80x8xf32, #tpu.memory_space<vmem>>, vector<1x80x8xf32>
    %3 = vector.shape_cast %2 : vector<1x80x8xf32> to vector<80x8xf32>
    %4 = tpu.concatenate %1, %3 in 0 : vector<80x8xf32>, vector<80x8xf32> -> vector<160x8xf32>
    %5 = vector.extract_strided_slice %4 {offsets = [0, 0], sizes = [80, 8], strides = [1, 1]} : vector<160x8xf32> to vector<80x8xf32>
    %6 = vector.extract_strided_slice %4 {offsets = [1, 0], sizes = [80, 8], strides = [1, 1]} : vector<160x8xf32> to vector<80x8xf32>
    %7 = vector.extract_strided_slice %4 {offsets = [2, 0], sizes = [80, 8], strides = [1, 1]} : vector<160x8xf32> to vector<80x8xf32>
    %8 = vector.extract_strided_slice %4 {offsets = [10, 0], sizes = [80, 8], strides = [1, 1]} : vector<160x8xf32> to vector<80x8xf32>
    %9 = vector.extract_strided_slice %4 {offsets = [11, 0], sizes = [80, 8], strides = [1, 1]} : vector<160x8xf32> to vector<80x8xf32>
    %10 = vector.extract_strided_slice %4 {offsets = [12, 0], sizes = [80, 8], strides = [1, 1]} : vector<160x8xf32> to vector<80x8xf32>
    %11 = vector.extract_strided_slice %4 {offsets = [20, 0], sizes = [80, 8], strides = [1, 1]} : vector<160x8xf32> to vector<80x8xf32>
    %12 = vector.extract_strided_slice %4 {offsets = [21, 0], sizes = [80, 8], strides = [1, 1]} : vector<160x8xf32> to vector<80x8xf32>
    %13 = vector.extract_strided_slice %4 {offsets = [22, 0], sizes = [80, 8], strides = [1, 1]} : vector<160x8xf32> to vector<80x8xf32>
    %14 = tpu.concatenate %5, %6, %7, %8, %9, %10, %11, %12, %13 in 1 : vector<80x8xf32>, vector<80x8xf32>, vector<80x8xf32>, vector<80x8xf32>, vector<80x8xf32>, vector<80x8xf32>, vector<80x8xf32>, vector<80x8xf32>, vector<80x8xf32> -> vector<80x72xf32>
    %c0_5 = arith.constant 0 : index
    %c0_6 = arith.constant 0 : index
    %15 = vector.load %arg4[%c0_5, %c0_6] : memref<72x16xf32, #tpu.memory_space<vmem>>, vector<72x16xf32>
    %cst = arith.constant dense<0.000000e+00> : vector<80x16xf32>
    %16 = tpu.matmul %14, %15, %cst {dimension_numbers = #tpu.dot_dimension_numbers<[1], [0], [0], [1], [0, 0, 1, 1], [], []>} : vector<80x72xf32>, vector<72x16xf32>, vector<80x16xf32> -> vector<80x16xf32>
    %17 = vector.shape_cast %16 : vector<80x16xf32> to vector<8x10x16xf32>
    %18 = vector.extract_strided_slice %17 {offsets = [0, 0, 0], sizes = [8, 8, 16], strides = [1, 1, 1]} : vector<8x10x16xf32> to vector<8x8x16xf32>
    %19 = vector.shape_cast %18 : vector<8x8x16xf32> to vector<64x16xf32>
    %c0_7 = arith.constant 0 : index
    %c0_8 = arith.constant 0 : index
    %20 = vector.load %arg5[%c0_7, %c0_8] : memref<1x16xf32, #tpu.memory_space<vmem>>, vector<1x16xf32>
    %21 = vector.broadcast %20 : vector<1x16xf32> to vector<64x16xf32>
    %22 = arith.addf %19, %21 : vector<64x16xf32>
    %cst_9 = arith.constant 5.000000e-01 : f32
    %23 = vector.broadcast %cst_9 : f32 to vector<64x16xf32>
    %24 = arith.mulf %23, %22 : vector<64x16xf32>
    %cst_10 = arith.constant 0.707106769 : f32
    %25 = vector.broadcast %cst_10 : f32 to vector<64x16xf32>
    %26 = arith.mulf %22, %25 : vector<64x16xf32>
    %27 = math.absf %26 : vector<64x16xf32>
    %cst_11 = arith.constant 0.327591091 : f32
    %28 = vector.broadcast %cst_11 : f32 to vector<64x16xf32>
    %29 = arith.mulf %28, %27 : vector<64x16xf32>
    %cst_12 = arith.constant 1.000000e+00 : f32
    %30 = vector.broadcast %cst_12 : f32 to vector<64x16xf32>
    %31 = arith.addf %30, %29 : vector<64x16xf32>
    %cst_13 = arith.constant 1.000000e+00 : f32
    %32 = vector.broadcast %cst_13 : f32 to vector<64x16xf32>
    %33 = arith.divf %32, %31 : vector<64x16xf32>
    %cst_14 = arith.constant 1.06140542 : f32
    %34 = vector.broadcast %cst_14 : f32 to vector<64x16xf32>
    %35 = arith.mulf %34, %33 : vector<64x16xf32>
    %cst_15 = arith.constant -1.45315206 : f32
    %36 = vector.broadcast %cst_15 : f32 to vector<64x16xf32>
    %37 = arith.addf %35, %36 : vector<64x16xf32>
    %38 = arith.mulf %37, %33 : vector<64x16xf32>
    %cst_16 = arith.constant 1.42141378 : f32
    %39 = vector.broadcast %cst_16 : f32 to vector<64x16xf32>
    %40 = arith.addf %38, %39 : vector<64x16xf32>
    %41 = arith.mulf %40, %33 : vector<64x16xf32>
    %cst_17 = arith.constant -0.284496725 : f32
    %42 = vector.broadcast %cst_17 : f32 to vector<64x16xf32>
    %43 = arith.addf %41, %42 : vector<64x16xf32>
    %44 = arith.mulf %43, %33 : vector<64x16xf32>
    %cst_18 = arith.constant 0.254829586 : f32
    %45 = vector.broadcast %cst_18 : f32 to vector<64x16xf32>
    %46 = arith.addf %44, %45 : vector<64x16xf32>
    %47 = arith.mulf %46, %33 : vector<64x16xf32>
    %cst_19 = arith.constant 0.000000e+00 : f32
    %48 = vector.broadcast %cst_19 : f32 to vector<64x16xf32>
    %49 = arith.subf %48, %27 : vector<64x16xf32>
    %50 = arith.mulf %49, %27 : vector<64x16xf32>
    %51 = math.exp %50 : vector<64x16xf32>
    %52 = arith.mulf %47, %51 : vector<64x16xf32>
    %cst_20 = arith.constant 1.000000e+00 : f32
    %53 = vector.broadcast %cst_20 : f32 to vector<64x16xf32>
    %54 = arith.subf %53, %52 : vector<64x16xf32>
    %cst_21 = arith.constant 0.000000e+00 : f32
    %55 = vector.broadcast %cst_21 : f32 to vector<64x16xf32>
    %56 = arith.cmpf olt, %26, %55 : vector<64x16xf32>
    %cst_22 = arith.constant 0.000000e+00 : f32
    %57 = vector.broadcast %cst_22 : f32 to vector<64x16xf32>
    %58 = arith.subf %57, %54 : vector<64x16xf32>
    %59 = arith.select %56, %58, %54 : vector<64x16xi1>, vector<64x16xf32>
    %cst_23 = arith.constant 1.000000e+00 : f32
    %60 = vector.broadcast %cst_23 : f32 to vector<64x16xf32>
    %61 = arith.addf %60, %59 : vector<64x16xf32>
    %62 = arith.mulf %24, %61 : vector<64x16xf32>
    %c0_24 = arith.constant 0 : index
    %c0_25 = arith.constant 0 : index
    %63 = vector.load %arg6[%c0_24, %c0_25] : memref<16x8xf32, #tpu.memory_space<vmem>>, vector<16x8xf32>
    %cst_26 = arith.constant dense<0.000000e+00> : vector<64x8xf32>
    %64 = tpu.matmul %62, %63, %cst_26 {dimension_numbers = #tpu.dot_dimension_numbers<[1], [0], [0], [1], [0, 0, 1, 1], [], []>} : vector<64x16xf32>, vector<16x8xf32>, vector<64x8xf32> -> vector<64x8xf32>
    %c0_27 = arith.constant 0 : index
    %c0_28 = arith.constant 0 : index
    %65 = vector.load %arg7[%c0_27, %c0_28] : memref<1x8xf32, #tpu.memory_space<vmem>>, vector<1x8xf32>
    %66 = vector.broadcast %65 : vector<1x8xf32> to vector<64x8xf32>
    %67 = arith.addf %64, %66 : vector<64x8xf32>
    %c0_29 = arith.constant 0 : index
    %c0_30 = arith.constant 0 : index
    %c0_31 = arith.constant 0 : index
    %68 = vector.load %arg8[%c0_29, %c0_30, %c0_31] : memref<1x64x8xf32, #tpu.memory_space<vmem>>, vector<1x64x8xf32>
    %69 = vector.shape_cast %68 : vector<1x64x8xf32> to vector<64x8xf32>
    %70 = arith.addf %67, %69 : vector<64x8xf32>
    %c0_32 = arith.constant 0 : index
    %c0_33 = arith.constant 0 : index
    %c0_34 = arith.constant 0 : index
    %71 = vector.load %arg9[%c0_32, %c0_33, %c0_34] : memref<1x64x8xf32, #tpu.memory_space<vmem>>, vector<1x64x8xf32>
    %72 = vector.shape_cast %71 : vector<1x64x8xf32> to vector<64x8xf32>
    %73 = vector.shape_cast %70 : vector<64x8xf32> to vector<1x64x8xf32>
    tpu.vector_store %arg9[%c0_32, %c0_33, %c0_34], %73 {strides = array<i32>} : memref<1x64x8xf32, #tpu.memory_space<vmem>>, vector<1x64x8xf32>,
    return
  }
  func.func @transform_0(%arg0: i32, %arg1: i32) -> (i32, i32, i32) {
    %c0_i32 = arith.constant 0 : i32
    %c0_i32_0 = arith.constant 0 : i32
    return %arg0, %arg1, %c0_i32 : i32, i32, i32
  }
  func.func @transform_1(%arg0: i32, %arg1: i32) -> (i32, i32, i32) {
    %c1_i32 = arith.constant 1 : i32
    %0 = arith.addi %arg1, %c1_i32 : i32
    %c1_i32_0 = arith.constant 1 : i32
    %1 = arith.muli %0, %c1_i32_0 : i32
    %c0_i32 = arith.constant 0 : i32
    %c0_i32_1 = arith.constant 0 : i32
    return %arg0, %1, %c0_i32 : i32, i32, i32
  }
  func.func @transform_2(%arg0: i32, %arg1: i32) -> (i32, i32) {
    %c0_i32 = arith.constant 0 : i32
    %c0_i32_0 = arith.constant 0 : i32
    %c0_i32_1 = arith.constant 0 : i32
    return %c0_i32, %c0_i32_0 : i32, i32
  }
  func.func @transform_3(%arg0: i32, %arg1: i32) -> (i32, i32) {
    %c0_i32 = arith.constant 0 : i32
    %c0_i32_0 = arith.constant 0 : i32
    %c0_i32_1 = arith.constant 0 : i32
    return %c0_i32, %c0_i32_0 : i32, i32
  }
  func.func @transform_4(%arg0: i32, %arg1: i32) -> (i32, i32) {
    %c0_i32 = arith.constant 0 : i32
    %c0_i32_0 = arith.constant 0 : i32
    %c0_i32_1 = arith.constant 0 : i32
    return %c0_i32, %c0_i32_0 : i32, i32
  }
  func.func @transform_5(%arg0: i32, %arg1: i32) -> (i32, i32) {
    %c0_i32 = arith.constant 0 : i32
    %c0_i32_0 = arith.constant 0 : i32
    %c0_i32_1 = arith.constant 0 : i32
    return %c0_i32, %c0_i32_0 : i32, i32
  }
  func.func @transform_6(%arg0: i32, %arg1: i32) -> (i32, i32, i32) {
    %c0_i32 = arith.constant 0 : i32
    %c0_i32_0 = arith.constant 0 : i32
    return %arg0, %arg1, %c0_i32 : i32, i32, i32
  }
  func.func @transform_7(%arg0: i32, %arg1: i32) -> (i32, i32, i32) {
    %c0_i32 = arith.constant 0 : i32
    %c0_i32_0 = arith.constant 0 : i32
    return %arg0, %arg1, %c0_i32 : i32, i32, i32
  }
}

module attributes {stable_mosaic.version = 11 : i64} {
  func.func @kernel(%arg0: i32, %arg1: i32, %arg2: memref<1x4x1x4x24xf32, #tpu.memory_space<vmem>>, %arg3: memref<1x4x1x4x8xf32, #tpu.memory_space<vmem>>) attributes {dimension_semantics = [#tpu.dimension_semantics<parallel>, #tpu.dimension_semantics<parallel>], iteration_bounds = array<i64: 4, 2>, scalar_prefetch = 0 : i64, scratch_operands = 0 : i64, tpu.core_type = #tpu.core_type<tc>, window_params = [{transform_indices = @transform_0, window_bounds = array<i64: 1, 4, 1, 4, 24>}, {transform_indices = @transform_1, window_bounds = array<i64: 1, 4, 1, 4, 8>}]} {
    %c0 = arith.constant 0 : index
    %c0_0 = arith.constant 0 : index
    %c0_1 = arith.constant 0 : index
    %c0_2 = arith.constant 0 : index
    %c0_3 = arith.constant 0 : index
    %0 = vector.load %arg2[%c0, %c0_0, %c0_1, %c0_2, %c0_3] : memref<1x4x1x4x24xf32, #tpu.memory_space<vmem>>, vector<1x4x1x4x24xf32>
    %1 = vector.shape_cast %0 : vector<1x4x1x4x24xf32> to vector<4x4x24xf32>
    %2 = vector.shape_cast %1 : vector<4x4x24xf32> to vector<16x24xf32>
    %3 = vector.extract_strided_slice %2 {offsets = [0, 0], sizes = [16, 8], strides = [1, 1]} : vector<16x24xf32> to vector<16x8xf32>
    %4 = vector.extract_strided_slice %2 {offsets = [0, 8], sizes = [16, 8], strides = [1, 1]} : vector<16x24xf32> to vector<16x8xf32>
    %5 = vector.extract_strided_slice %2 {offsets = [0, 16], sizes = [16, 8], strides = [1, 1]} : vector<16x24xf32> to vector<16x8xf32>
    %6 = vector.extract_strided_slice %3 {offsets = [0, 0], sizes = [16, 4], strides = [1, 1]} : vector<16x8xf32> to vector<16x4xf32>
    %7 = vector.extract_strided_slice %4 {offsets = [0, 0], sizes = [16, 4], strides = [1, 1]} : vector<16x8xf32> to vector<16x4xf32>
    %8 = vector.extract_strided_slice %5 {offsets = [0, 0], sizes = [16, 4], strides = [1, 1]} : vector<16x8xf32> to vector<16x4xf32>
    "tpu.trace_start"() <{level = 10 : i32, message = "qd,kd->qk"}> : () -> ()
    %cst = arith.constant dense<0.000000e+00> : vector<16x16xf32>
    %9 = tpu.matmul %6, %7, %cst {dimension_numbers = #tpu.dot_dimension_numbers<[1], [1], [0], [0], [0, 0, 1, 0], [], []>} : vector<16x4xf32>, vector<16x4xf32>, vector<16x16xf32> -> vector<16x16xf32>
    "tpu.trace_stop"() : () -> ()
    %cst_4 = arith.constant 5.000000e-01 : f32
    %10 = vector.broadcast %cst_4 : f32 to vector<16x16xf32>
    %11 = arith.mulf %9, %10 : vector<16x16xf32>
    %cst_5 = arith.constant dense<0xFF800000> : vector<16xf32>
    %12 = vector.multi_reduction <maximumf>, %11, %cst_5 [1] : vector<16x16xf32> to vector<16xf32>
    %13 = vector.shape_cast %12 : vector<16xf32> to vector<16x1xf32>
    %14 = vector.broadcast %13 : vector<16x1xf32> to vector<16x16xf32>
    %15 = arith.subf %11, %14 : vector<16x16xf32>
    %16 = math.exp %15 : vector<16x16xf32>
    %cst_6 = arith.constant dense<0.000000e+00> : vector<16xf32>
    %17 = vector.multi_reduction <add>, %16, %cst_6 [1] : vector<16x16xf32> to vector<16xf32>
    %18 = vector.shape_cast %17 : vector<16xf32> to vector<16x1xf32>
    %19 = tpu.reciprocal %18 {approx = true} : vector<16x1xf32> -> vector<16x1xf32>
    %20 = vector.broadcast %19 : vector<16x1xf32> to vector<16x16xf32>
    %21 = arith.mulf %16, %20 : vector<16x16xf32>
    "tpu.trace_start"() <{level = 10 : i32, message = "qk,kd->qd"}> : () -> ()
    %cst_7 = arith.constant dense<0.000000e+00> : vector<16x4xf32>
    %22 = tpu.matmul %21, %8, %cst_7 {dimension_numbers = #tpu.dot_dimension_numbers<[1], [0], [0], [1], [0, 0, 1, 1], [], []>} : vector<16x16xf32>, vector<16x4xf32>, vector<16x4xf32> -> vector<16x4xf32>
    "tpu.trace_stop"() : () -> ()
    %23 = vector.extract_strided_slice %3 {offsets = [0, 4], sizes = [16, 4], strides = [1, 1]} : vector<16x8xf32> to vector<16x4xf32>
    %24 = vector.extract_strided_slice %4 {offsets = [0, 4], sizes = [16, 4], strides = [1, 1]} : vector<16x8xf32> to vector<16x4xf32>
    %25 = vector.extract_strided_slice %5 {offsets = [0, 4], sizes = [16, 4], strides = [1, 1]} : vector<16x8xf32> to vector<16x4xf32>
    "tpu.trace_start"() <{level = 10 : i32, message = "qd,kd->qk"}> : () -> ()
    %cst_8 = arith.constant dense<0.000000e+00> : vector<16x16xf32>
    %26 = tpu.matmul %23, %24, %cst_8 {dimension_numbers = #tpu.dot_dimension_numbers<[1], [1], [0], [0], [0, 0, 1, 0], [], []>} : vector<16x4xf32>, vector<16x4xf32>, vector<16x16xf32> -> vector<16x16xf32>
    "tpu.trace_stop"() : () -> ()
    %cst_9 = arith.constant 5.000000e-01 : f32
    %27 = vector.broadcast %cst_9 : f32 to vector<16x16xf32>
    %28 = arith.mulf %26, %27 : vector<16x16xf32>
    %cst_10 = arith.constant dense<0xFF800000> : vector<16xf32>
    %29 = vector.multi_reduction <maximumf>, %28, %cst_10 [1] : vector<16x16xf32> to vector<16xf32>
    %30 = vector.shape_cast %29 : vector<16xf32> to vector<16x1xf32>
    %31 = vector.broadcast %30 : vector<16x1xf32> to vector<16x16xf32>
    %32 = arith.subf %28, %31 : vector<16x16xf32>
    %33 = math.exp %32 : vector<16x16xf32>
    %cst_11 = arith.constant dense<0.000000e+00> : vector<16xf32>
    %34 = vector.multi_reduction <add>, %33, %cst_11 [1] : vector<16x16xf32> to vector<16xf32>
    %35 = vector.shape_cast %34 : vector<16xf32> to vector<16x1xf32>
    %36 = tpu.reciprocal %35 {approx = true} : vector<16x1xf32> -> vector<16x1xf32>
    %37 = vector.broadcast %36 : vector<16x1xf32> to vector<16x16xf32>
    %38 = arith.mulf %33, %37 : vector<16x16xf32>
    "tpu.trace_start"() <{level = 10 : i32, message = "qk,kd->qd"}> : () -> ()
    %cst_12 = arith.constant dense<0.000000e+00> : vector<16x4xf32>
    %39 = tpu.matmul %38, %25, %cst_12 {dimension_numbers = #tpu.dot_dimension_numbers<[1], [0], [0], [1], [0, 0, 1, 1], [], []>} : vector<16x16xf32>, vector<16x4xf32>, vector<16x4xf32> -> vector<16x4xf32>
    "tpu.trace_stop"() : () -> ()
    %40 = tpu.concatenate %22, %39 in 1 : vector<16x4xf32>, vector<16x4xf32> -> vector<16x8xf32>
    %41 = vector.shape_cast %40 : vector<16x8xf32> to vector<4x4x8xf32>
    %c0_13 = arith.constant 0 : index
    %c0_14 = arith.constant 0 : index
    %c0_15 = arith.constant 0 : index
    %c0_16 = arith.constant 0 : index
    %c0_17 = arith.constant 0 : index
    %42 = vector.load %arg3[%c0_13, %c0_14, %c0_15, %c0_16, %c0_17] : memref<1x4x1x4x8xf32, #tpu.memory_space<vmem>>, vector<1x4x1x4x8xf32>
    %43 = vector.shape_cast %42 : vector<1x4x1x4x8xf32> to vector<4x4x8xf32>
    %44 = vector.shape_cast %41 : vector<4x4x8xf32> to vector<1x4x1x4x8xf32>
    tpu.vector_store %arg3[%c0_13, %c0_14, %c0_15, %c0_16, %c0_17], %44 {strides = array<i32>} : memref<1x4x1x4x8xf32, #tpu.memory_space<vmem>>, vector<1x4x1x4x8xf32>,
    return
  }
  func.func @transform_0(%arg0: i32, %arg1: i32) -> (i32, i32, i32, i32, i32) {
    %c0_i32 = arith.constant 0 : i32
    %c0_i32_0 = arith.constant 0 : i32
    %c0_i32_1 = arith.constant 0 : i32
    %c0_i32_2 = arith.constant 0 : i32
    return %arg0, %c0_i32, %arg1, %c0_i32_0, %c0_i32_1 : i32, i32, i32, i32, i32
  }
  func.func @transform_1(%arg0: i32, %arg1: i32) -> (i32, i32, i32, i32, i32) {
    %c0_i32 = arith.constant 0 : i32
    %c0_i32_0 = arith.constant 0 : i32
    %c0_i32_1 = arith.constant 0 : i32
    %c0_i32_2 = arith.constant 0 : i32
    return %arg0, %c0_i32, %arg1, %c0_i32_0, %c0_i32_1 : i32, i32, i32, i32, i32
  }
}

</mosaic_0001>

<llo_original>
// kernel: rsab_forward.13
$region0: #{rsab_forward.13}
  #allocation0 [shape = 'u32[]', space=smem, size = 0x4, offset = 0x4, fixed_abs, tag = 'smem constant byte address 0x4 - core index']
  #allocation1 [shape = 'u32[144,128]{1,0:T(1,128)}', space=vmem, size = 0x12000, scoped, tag = 'internal scratch']
  %s0 = inlined_call_operand.vmem [shape: f32[128,8], index: 0, kind: input, shape index: {}]
  %s1 = inlined_call_operand.vmem [shape: f32[8,16], index: 1, kind: input, shape index: {}]
  %s2 = inlined_call_operand.vmem [shape: f32[128,16], index: 2, kind: output, shape index: {}]
  %s3 = sld [smem:[#allocation0]]
  $region41: #{rsab_forward.13} parent=0
    _
  %s5 = ssub.s32 1, %s3
  %s6 = scalar_select 0, %s5, %s3
  loop: start=0, step=1, limit=4
  $region2: #{rsab_forward.13} parent=0 // loop_pre_header
    _
  $region3: #{rsab_forward.13} parent=0 // loop_header
    %s8 = sphi 0, %s12
    %p9 = scmp.ge.s32.totalorder %s8, 4
    %s18 = sphi 0, %s20
    %s21 = sphi 0, %s18
    %s22 = sphi 0, %s21
    %s38 = sphi 0, %s22
    %s42 = sphi 0, %s42
    %s44 = sphi 0, %s42
    %s45 = sphi 0, %s44
    %s59 = sphi 0, %s45
    %s65 = sphi 0, %s67
    %s68 = sphi 0, %s65
    %s69 = sphi 0, %s68
    %s85 = sphi 0, %s69
  $region4: #{rsab_forward.13} parent=0 // loop_header_branch
    %11 = sbr.rel (%p9) target = $region8
  $region5: #{rsab_forward.13} parent=0 // loop_body
    %s13 = ssub.s32 %s8, 1
    %s14 = ssub.s32 %s8, 2
    %s15 = sadd.s32 %s8, 1
    %s16 = ssub.s32 %s8, %s15
    %p17 = scmp.eq.s32.totalorder %s16, 0
    %s19 = sadd.s32 %s18, 1
    %s20 = scalar_select %p17, %s18, %s19
    %p23 = pneg %p17
    %p24 = scmp.eq.s32.totalorder %s8, 1
    %p25 = por %p23, %p24
    %p26 = scmp.ne.s32.totalorder %s18, %s21
    %p27 = scmp.eq.s32.totalorder %s8, 0
    %p28 = por %p26, %p27
    %p29 = scmp.ne.s32.totalorder %s18, %s21
    %p30 = scmp.eq.s32.totalorder %s13, 1
    %p31 = por %p29, %p30
    %p32 = scmp.ne.s32.totalorder %s21, %s22
    %p33 = scmp.eq.s32.totalorder %s13, 0
    %p34 = por %p32, %p33
    %p35 = scmp.ne.s32.totalorder %s21, %s22
    %p36 = scmp.eq.s32.totalorder %s14, 1
    %p37 = por %p35, %p36
    %p39 = scmp.ne.s32.totalorder %s22, %s38
    %p40 = scmp.eq.s32.totalorder %s14, 0
    %p41 = por %p39, %p40
    %s43 = sadd.s32 %s42, 1
    %p46 = scmp.eq.s32.totalorder %s8, 1
    %p47 = scmp.ne.s32.totalorder %s42, %s44
    %p48 = scmp.eq.s32.totalorder %s8, 0
    %p49 = por %p47, %p48
    %p50 = scmp.ne.s32.totalorder %s42, %s44
    %p51 = scmp.eq.s32.totalorder %s13, 1
    %p52 = por %p50, %p51
    %p53 = scmp.ne.s32.totalorder %s44, %s45
    %p54 = scmp.eq.s32.totalorder %s13, 0
    %p55 = por %p53, %p54
    %p56 = scmp.ne.s32.totalorder %s44, %s45
    %p57 = scmp.eq.s32.totalorder %s14, 1
    %p58 = por %p56, %p57
    %p60 = scmp.ne.s32.totalorder %s45, %s59
    %p61 = scmp.eq.s32.totalorder %s14, 0
    %p62 = por %p60, %p61
    %s63 = ssub.s32 %s8, %s15
    %p64 = scmp.eq.s32.totalorder %s63, 0
    %s66 = sadd.s32 %s65, 1
    %s67 = scalar_select %p64, %s65, %s66
    %p70 = pneg %p64
    %p71 = scmp.eq.s32.totalorder %s8, 1
    %p72 = por %p70, %p71
    %p73 = scmp.ne.s32.totalorder %s65, %s68
    %p74 = scmp.eq.s32.totalorder %s8, 0
    %p75 = por %p73, %p74
    %p76 = scmp.ne.s32.totalorder %s65, %s68
    %p77 = scmp.eq.s32.totalorder %s13, 1
    %p78 = por %p76, %p77
    %p79 = scmp.ne.s32.totalorder %s68, %s69
    %p80 = scmp.eq.s32.totalorder %s13, 0
    %p81 = por %p79, %p80
    %p82 = scmp.ne.s32.totalorder %s68, %s69
    %p83 = scmp.eq.s32.totalorder %s14, 1
    %p84 = por %p82, %p83
    %p86 = scmp.ne.s32.totalorder %s69, %s85
    %p87 = scmp.eq.s32.totalorder %s14, 0
    %p88 = por %p86, %p87
    %p89 = scmp.le.s32.totalorder 1, %s8
    %p90 = scmp.lt.s32.totalorder %s8, 3
    %p91 = pnand %p89, %p90
    %p92 = pneg %p91
    // Predicated region
    $region9: #{rsab_forward.13} parent=5 // pred_check
      _
    $region10: #{rsab_forward.13} parent=5 // pred_check_branch
      %94 = sbr.rel (%p91) target = $region12
    $region11: #{rsab_forward.13} parent=5 // pred_region
      %s95 = ssub.s32 %s8, 1
      // Predicated region
      $region13: #{rsab_forward.13} parent=11 // pred_check
        %p96 = pneg %p55
      $region14: #{rsab_forward.13} parent=11 // pred_check_branch
        %98 = sbr.rel (%p96) target = $region16
      $region15: #{rsab_forward.13} parent=11 // pred_region
        _
      $region16: #{rsab_forward.13} parent=11 // pred_fallthru
        _
    $region12: #{rsab_forward.13} parent=5 // pred_fallthru
      _
    %p99 = scmp.lt.s32.totalorder %s8, 2
    // Predicated region
    $region17: #{rsab_forward.13} parent=5 // pred_check
      %p100 = pneg %p99
    $region18: #{rsab_forward.13} parent=5 // pred_check_branch
      %102 = sbr.rel (%p100) target = $region20
    $region19: #{rsab_forward.13} parent=5 // pred_region
      // Predicated region
      $region21: #{rsab_forward.13} parent=19 // pred_check
        %p103 = pneg %p28
      $region22: #{rsab_forward.13} parent=19 // pred_check_branch
        %105 = sbr.rel (%p103) target = $region24
      $region23: #{rsab_forward.13} parent=19 // pred_region
        %s106 = smul.u32 8, %s8
        %p107 = scmp.lt.s32.totalorder %s106, 15
        %s108 = scalar_select %p107, %s106, 15
        %s109 = smul.addr %s108, 8
        %s110 = scalar_lea.vmem %s0, %s109
        %s111 = smul.u32 8, %s8
      $region24: #{rsab_forward.13} parent=19 // pred_fallthru
        _
    $region20: #{rsab_forward.13} parent=5 // pred_fallthru
      _
    %p112 = scmp.le.s32.totalorder 1, %s8
    %p113 = scmp.lt.s32.totalorder %s8, 3
    %p114 = pnand %p112, %p113
    %p115 = pneg %p114
    // Predicated region
    $region25: #{rsab_forward.13} parent=5 // pred_check
      _
    $region26: #{rsab_forward.13} parent=5 // pred_check_branch
      %117 = sbr.rel (%p114) target = $region28
    $region27: #{rsab_forward.13} parent=5 // pred_region
      %s118 = ssub.s32 %s8, 1
      %s119 = smul.u32 8, %s13
      %p120 = scmp.lt.s32.totalorder %s119, 15
      %s121 = scalar_select %p120, %s119, 15
      %s122 = smul.addr %s121, 8
      %s123 = scalar_lea.vmem %s0, %s122
      %p124 = pneg %p34
      %p125 = pneg %p31
      %p126 = pneg %p55
      %p127 = pneg %p52
      %p128 = pneg %p81
      %p129 = pneg %p78
      %s130 = smul.u32 8, %s13
      %p131 = scmp.lt.s32.totalorder %s130, 15
      %s132 = scalar_select %p131, %s130, 15
      %s133 = smul.addr %s132, 8
      %s134 = scalar_lea.vmem %s2, %s133
      %s135 = smul.u32 8, %s13
      %p136 = scmp.lt.s32.totalorder %s135, 15
      %s137 = scalar_select %p136, %s135, 15
      %s138 = smul.addr %s137, 8
      %s139 = scalar_lea.vmem %s0, %s138
      %s140 = smul.u32 8, %s13
      %s141 = smul.u32 8, %s13
      %p142 = scmp.lt.s32.totalorder %s141, 15
      %s143 = scalar_select %p142, %s141, 15
      %s144 = smul.addr %s143, 8
      %s145 = scalar_lea.vmem %s2, %s144
      %s146 = smul.u32 8, %s13
      %v147 = vld [vmem:[%s139] sm:$0xff]
      %v148 = vld [vmem:[%s139 + $0x8] sm:$0xff]
      %v149 = vld [vmem:[%s139 + $0x10] sm:$0xff]
      %v150 = vld [vmem:[%s139 + $0x18] sm:$0xff]
      %v151 = vld [vmem:[%s139 + $0x20] sm:$0xff]
      %v152 = vld [vmem:[%s139 + $0x28] sm:$0xff]
      %v153 = vld [vmem:[%s139 + $0x30] sm:$0xff]
      %v154 = vld [vmem:[%s139 + $0x38] sm:$0xff]
      %v155 = vld [vmem:[%s1] sm:$0xff]
      %vm156 = vcmask 64512
      %v158 = vsel %vm156, %v147, 0
      %v161 = vsel %vm156, %v148, 0
      %v164 = vsel %vm156, %v149, 0
      %v167 = vsel %vm156, %v150, 0
      %v170 = vsel %vm156, %v151, 0
      %v173 = vsel %vm156, %v152, 0
      %v176 = vsel %vm156, %v153, 0
      %v179 = vsel %vm156, %v154, 0
      %181 = vmatprep.subr.mxu0 0.0
      %182 = vmatpush1.msra.mxu0 0.0
      %183 = vmatprep.subr.mxu0 0.0
      %184 = vmatpush1.msra.mxu0 0.0
      %185 = vmatprep.subr.mxu0 0.0
      %186 = vmatpush1.msra.mxu0 0.0
      %187 = vmatprep.subr.mxu0 0.0
      %188 = vmatpush1.msra.mxu0 0.0
      %189 = vmatprep.subr.mxu0 0.0
      %190 = vmatpush1.msra.mxu0 0.0
      %191 = vmatprep.subr.mxu0 0.0
      %192 = vmatpush1.msra.mxu0 0.0
      %193 = vmatprep.subr.mxu0 0.0
      %194 = vmatpush1.msra.mxu0 0.0
      %195 = vmatprep.subr.mxu0 0.0
      %196 = vmatpush1.msra.mxu0 0.0
      %197 = vmatprep.subr.mxu0 0.0
      %198 = vmatpush1.msra.mxu0 0.0
      %199 = vmatprep.subr.mxu0 0.0
      %200 = vmatpush1.msra.mxu0 0.0
      %201 = vmatprep.subr.mxu0 0.0
      %202 = vmatpush1.msra.mxu0 0.0
      %203 = vmatprep.subr.mxu0 0.0
      %204 = vmatpush1.msra.mxu0 0.0
      %205 = vmatprep.subr.mxu0 0.0
      %206 = vmatpush1.msra.mxu0 0.0
      %207 = vmatprep.subr.mxu0 0.0
      %208 = vmatpush1.msra.mxu0 0.0
      %209 = vmatprep.subr.mxu0 0.0
      %210 = vmatpush1.msra.mxu0 0.0
      %211 = vmatprep.subr.mxu0 0.0
      %212 = vmatpush1.msra.mxu0 %v155
      %213 = vmatprep.subr.mxu0 0.0
      %214 = vmatpush2.msra.mxu0 0.0
      %215 = vmatprep.subr.mxu0 0.0
      %216 = vmatpush2.msra.mxu0 0.0
      %217 = vmatprep.subr.mxu0 0.0
      %218 = vmatpush2.msra.mxu0 0.0
      %219 = vmatprep.subr.mxu0 0.0
      %220 = vmatpush2.msra.mxu0 0.0
      %221 = vmatprep.subr.mxu0 0.0
      %222 = vmatpush2.msra.mxu0 0.0
      %223 = vmatprep.subr.mxu0 0.0
      %224 = vmatpush2.msra.mxu0 0.0
      %225 = vmatprep.subr.mxu0 0.0
      %226 = vmatpush2.msra.mxu0 0.0
      %227 = vmatprep.subr.mxu0 0.0
      %228 = vmatpush2.msra.mxu0 0.0
      %229 = vmatprep.subr.mxu0 0.0
      %230 = vmatpush2.msra.mxu0 0.0
      %231 = vmatprep.subr.mxu0 0.0
      %232 = vmatpush2.msra.mxu0 0.0
      %233 = vmatprep.subr.mxu0 0.0
      %234 = vmatpush2.msra.mxu0 0.0
      %235 = vmatprep.subr.mxu0 0.0
      %236 = vmatpush2.msra.mxu0 0.0
      %237 = vmatprep.subr.mxu0 0.0
      %238 = vmatpush2.msra.mxu0 0.0
      %239 = vmatprep.subr.mxu0 0.0
      %240 = vmatpush2.msra.mxu0 0.0
      %241 = vmatprep.subr.mxu0 0.0
      %242 = vmatpush2.msra.mxu0 0.0
      %243 = vmatprep.subr.mxu0 0.0
      %244 = vmatpush2.msra.mxu0 0.0
      %245 = vmatprep.mubr.f32.mxu0 0.0
      %246 = vmatmul.mubr.f32.gmra.mxu0 %v158
      %v247 = vpop.f32.mrf.mxu0
      %v248 = vadd.f32 0.0, %v247
      %v249 = vpop.f32.mrf.mxu0
      %250 = vmatprep.mubr.f32.mxu0 0.0
      %251 = vmatmul.mubr.f32.gmra.mxu0 %v161
      %v252 = vpop.f32.mrf.mxu0
      %v253 = vadd.f32 0.0, %v252
      %v254 = vpop.f32.mrf.mxu0
      %255 = vmatprep.mubr.f32.mxu0 0.0
      %256 = vmatmul.mubr.f32.gmra.mxu0 %v164
      %v257 = vpop.f32.mrf.mxu0
      %v258 = vadd.f32 0.0, %v257
      %v259 = vpop.f32.mrf.mxu0
      %260 = vmatprep.mubr.f32.mxu0 0.0
      %261 = vmatmul.mubr.f32.gmra.mxu0 %v167
      %v262 = vpop.f32.mrf.mxu0
      %v263 = vadd.f32 0.0, %v262
      %v264 = vpop.f32.mrf.mxu0
      %265 = vmatprep.mubr.f32.mxu0 0.0
      %266 = vmatmul.mubr.f32.gmra.mxu0 %v170
      %v267 = vpop.f32.mrf.mxu0
      %v268 = vadd.f32 0.0, %v267
      %v269 = vpop.f32.mrf.mxu0
      %270 = vmatprep.mubr.f32.mxu0 0.0
      %271 = vmatmul.mubr.f32.gmra.mxu0 %v173
      %v272 = vpop.f32.mrf.mxu0
      %v273 = vadd.f32 0.0, %v272
      %v274 = vpop.f32.mrf.mxu0
      %275 = vmatprep.mubr.f32.mxu0 0.0
      %276 = vmatmul.mubr.f32.gmra.mxu0 %v176
      %v277 = vpop.f32.mrf.mxu0
      %v278 = vadd.f32 0.0, %v277
      %v279 = vpop.f32.mrf.mxu0
      %280 = vmatprep.mubr.f32.mxu0 0.0
      %281 = vmatmul.mubr.f32.gmra.mxu0 %v179
      %v282 = vpop.f32.mrf.mxu0
      %v283 = vadd.f32 0.0, %v282
      %v284 = vpop.f32.mrf.mxu0
      %285 = vdwg.mxu0
      %vm286 = vcmask 130048
      %287 = vst.msk [vmem:[%s145] sm:$0xff] %vm286, %v248
      %288 = vst.msk [vmem:[%s145 + $0x8] sm:$0xff] %vm286, %v253
      %289 = vst.msk [vmem:[%s145 + $0x10] sm:$0xff] %vm286, %v258
      %290 = vst.msk [vmem:[%s145 + $0x18] sm:$0xff] %vm286, %v263
      %291 = vst.msk [vmem:[%s145 + $0x20] sm:$0xff] %vm286, %v268
      %292 = vst.msk [vmem:[%s145 + $0x28] sm:$0xff] %vm286, %v273
      %293 = vst.msk [vmem:[%s145 + $0x30] sm:$0xff] %vm286, %v278
      %294 = vst.msk [vmem:[%s145 + $0x38] sm:$0xff] %vm286, %v283
      %s295 = smul.u32 8, %s13
      %p296 = scmp.lt.s32.totalorder %s295, 15
      %s297 = scalar_select %p296, %s295, 15
      %s298 = smul.addr %s297, 8
      %s299 = scalar_lea.vmem %s2, %s298
      // Predicated region
      $region29: #{rsab_forward.13} parent=27 // pred_check
        %p300 = pneg %p78
      $region30: #{rsab_forward.13} parent=27 // pred_check_branch
        %302 = sbr.rel (%p300) target = $region32
      $region31: #{rsab_forward.13} parent=27 // pred_region
        %s303 = smul.u32 8, %s13
      $region32: #{rsab_forward.13} parent=27 // pred_fallthru
        _
    $region28: #{rsab_forward.13} parent=5 // pred_fallthru
      _
    %p304 = scmp.le.s32.totalorder 2, %s8
    // Predicated region
    $region33: #{rsab_forward.13} parent=5 // pred_check
      %p305 = pneg %p304
    $region34: #{rsab_forward.13} parent=5 // pred_check_branch
      %307 = sbr.rel (%p305) target = $region36
    $region35: #{rsab_forward.13} parent=5 // pred_region
      %s308 = ssub.s32 %s8, 2
      // Predicated region
      $region37: #{rsab_forward.13} parent=35 // pred_check
        %p309 = pneg %p84
      $region38: #{rsab_forward.13} parent=35 // pred_check_branch
        %311 = sbr.rel (%p309) target = $region40
      $region39: #{rsab_forward.13} parent=35 // pred_region
        %s312 = smul.u32 8, %s14
        %p313 = scmp.lt.s32.totalorder %s312, 15
        %s314 = scalar_select %p313, %s312, 15
        %s315 = smul.addr %s314, 8
        %s316 = scalar_lea.vmem %s2, %s315
      $region40: #{rsab_forward.13} parent=35 // pred_fallthru
        _
    $region36: #{rsab_forward.13} parent=5 // pred_fallthru
      _
  $region6: #{rsab_forward.13} parent=0 // loop_footer
    %s12 = sadd.s32 1, %s8
  $region7: #{rsab_forward.13} parent=0 // loop_footer_branch
    %7 = sbr.rel target = $region3
  $region8: #{rsab_forward.13} parent=0 // loop_exit
    _

// kernel: rsab_forward.12
$region0: #{rsab_forward.12}
  #allocation0 [shape = 'u32[]', space=smem, size = 0x4, offset = 0x4, fixed_abs, tag = 'smem constant byte address 0x4 - core index']
  #allocation1 [shape = 'u32[144,128]{1,0:T(1,128)}', space=vmem, size = 0x12000, scoped, tag = 'internal scratch']
  %s0 = inlined_call_operand.vmem [shape: f32[128,8], index: 0, kind: input, shape index: {}]
  %s1 = inlined_call_operand.vmem [shape: f32[1,8], index: 1, kind: input, shape index: {}]
  %s2 = inlined_call_operand.vmem [shape: f32[1,8], index: 2, kind: input, shape index: {}]
  %s3 = inlined_call_operand.vmem [shape: f32[8,24], index: 3, kind: input, shape index: {}]
  %s4 = inlined_call_operand.vmem [shape: f32[128,24], index: 4, kind: output, shape index: {}]
  %s5 = sld [smem:[#allocation0]]
  $region49: #{rsab_forward.12} parent=0
    _
  %s7 = ssub.s32 1, %s5
  %s8 = scalar_select 0, %s7, %s5
  loop: start=0, step=1, limit=4
  $region2: #{rsab_forward.12} parent=0 // loop_pre_header
    _
  $region3: #{rsab_forward.12} parent=0 // loop_header
    %s10 = sphi 0, %s14
    %p11 = scmp.ge.s32.totalorder %s10, 4
    %s20 = sphi 0, %s22
    %s23 = sphi 0, %s20
    %s24 = sphi 0, %s23
    %s40 = sphi 0, %s24
    %s44 = sphi 0, %s44
    %s46 = sphi 0, %s44
    %s47 = sphi 0, %s46
    %s61 = sphi 0, %s47
    %s65 = sphi 0, %s65
    %s67 = sphi 0, %s65
    %s68 = sphi 0, %s67
    %s82 = sphi 0, %s68
    %s86 = sphi 0, %s86
    %s88 = sphi 0, %s86
    %s89 = sphi 0, %s88
    %s103 = sphi 0, %s89
    %s109 = sphi 0, %s111
    %s112 = sphi 0, %s109
    %s113 = sphi 0, %s112
    %s129 = sphi 0, %s113
  $region4: #{rsab_forward.12} parent=0 // loop_header_branch
    %13 = sbr.rel (%p11) target = $region8
  $region5: #{rsab_forward.12} parent=0 // loop_body
    %s15 = ssub.s32 %s10, 1
    %s16 = ssub.s32 %s10, 2
    %s17 = sadd.s32 %s10, 1
    %s18 = ssub.s32 %s10, %s17
    %p19 = scmp.eq.s32.totalorder %s18, 0
    %s21 = sadd.s32 %s20, 1
    %s22 = scalar_select %p19, %s20, %s21
    %p25 = pneg %p19
    %p26 = scmp.eq.s32.totalorder %s10, 1
    %p27 = por %p25, %p26
    %p28 = scmp.ne.s32.totalorder %s20, %s23
    %p29 = scmp.eq.s32.totalorder %s10, 0
    %p30 = por %p28, %p29
    %p31 = scmp.ne.s32.totalorder %s20, %s23
    %p32 = scmp.eq.s32.totalorder %s15, 1
    %p33 = por %p31, %p32
    %p34 = scmp.ne.s32.totalorder %s23, %s24
    %p35 = scmp.eq.s32.totalorder %s15, 0
    %p36 = por %p34, %p35
    %p37 = scmp.ne.s32.totalorder %s23, %s24
    %p38 = scmp.eq.s32.totalorder %s16, 1
    %p39 = por %p37, %p38
    %p41 = scmp.ne.s32.totalorder %s24, %s40
    %p42 = scmp.eq.s32.totalorder %s16, 0
    %p43 = por %p41, %p42
    %s45 = sadd.s32 %s44, 1
    %p48 = scmp.eq.s32.totalorder %s10, 1
    %p49 = scmp.ne.s32.totalorder %s44, %s46
    %p50 = scmp.eq.s32.totalorder %s10, 0
    %p51 = por %p49, %p50
    %p52 = scmp.ne.s32.totalorder %s44, %s46
    %p53 = scmp.eq.s32.totalorder %s15, 1
    %p54 = por %p52, %p53
    %p55 = scmp.ne.s32.totalorder %s46, %s47
    %p56 = scmp.eq.s32.totalorder %s15, 0
    %p57 = por %p55, %p56
    %p58 = scmp.ne.s32.totalorder %s46, %s47
    %p59 = scmp.eq.s32.totalorder %s16, 1
    %p60 = por %p58, %p59
    %p62 = scmp.ne.s32.totalorder %s47, %s61
    %p63 = scmp.eq.s32.totalorder %s16, 0
    %p64 = por %p62, %p63
    %s66 = sadd.s32 %s65, 1
    %p69 = scmp.eq.s32.totalorder %s10, 1
    %p70 = scmp.ne.s32.totalorder %s65, %s67
    %p71 = scmp.eq.s32.totalorder %s10, 0
    %p72 = por %p70, %p71
    %p73 = scmp.ne.s32.totalorder %s65, %s67
    %p74 = scmp.eq.s32.totalorder %s15, 1
    %p75 = por %p73, %p74
    %p76 = scmp.ne.s32.totalorder %s67, %s68
    %p77 = scmp.eq.s32.totalorder %s15, 0
    %p78 = por %p76, %p77
    %p79 = scmp.ne.s32.totalorder %s67, %s68
    %p80 = scmp.eq.s32.totalorder %s16, 1
    %p81 = por %p79, %p80
    %p83 = scmp.ne.s32.totalorder %s68, %s82
    %p84 = scmp.eq.s32.totalorder %s16, 0
    %p85 = por %p83, %p84
    %s87 = sadd.s32 %s86, 1
    %p90 = scmp.eq.s32.totalorder %s10, 1
    %p91 = scmp.ne.s32.totalorder %s86, %s88
    %p92 = scmp.eq.s32.totalorder %s10, 0
    %p93 = por %p91, %p92
    %p94 = scmp.ne.s32.totalorder %s86, %s88
    %p95 = scmp.eq.s32.totalorder %s15, 1
    %p96 = por %p94, %p95
    %p97 = scmp.ne.s32.totalorder %s88, %s89
    %p98 = scmp.eq.s32.totalorder %s15, 0
    %p99 = por %p97, %p98
    %p100 = scmp.ne.s32.totalorder %s88, %s89
    %p101 = scmp.eq.s32.totalorder %s16, 1
    %p102 = por %p100, %p101
    %p104 = scmp.ne.s32.totalorder %s89, %s103
    %p105 = scmp.eq.s32.totalorder %s16, 0
    %p106 = por %p104, %p105
    %s107 = ssub.s32 %s10, %s17
    %p108 = scmp.eq.s32.totalorder %s107, 0
    %s110 = sadd.s32 %s109, 1
    %s111 = scalar_select %p108, %s109, %s110
    %p114 = pneg %p108
    %p115 = scmp.eq.s32.totalorder %s10, 1
    %p116 = por %p114, %p115
    %p117 = scmp.ne.s32.totalorder %s109, %s112
    %p118 = scmp.eq.s32.totalorder %s10, 0
    %p119 = por %p117, %p118
    %p120 = scmp.ne.s32.totalorder %s109, %s112
    %p121 = scmp.eq.s32.totalorder %s15, 1
    %p122 = por %p120, %p121
    %p123 = scmp.ne.s32.totalorder %s112, %s113
    %p124 = scmp.eq.s32.totalorder %s15, 0
    %p125 = por %p123, %p124
    %p126 = scmp.ne.s32.totalorder %s112, %s113
    %p127 = scmp.eq.s32.totalorder %s16, 1
    %p128 = por %p126, %p127
    %p130 = scmp.ne.s32.totalorder %s113, %s129
    %p131 = scmp.eq.s32.totalorder %s16, 0
    %p132 = por %p130, %p131
    %p133 = scmp.le.s32.totalorder 1, %s10
    %p134 = scmp.lt.s32.totalorder %s10, 3
    %p135 = pnand %p133, %p134
    %p136 = pneg %p135
    // Predicated region
    $region9: #{rsab_forward.12} parent=5 // pred_check
      _
    $region10: #{rsab_forward.12} parent=5 // pred_check_branch
      %138 = sbr.rel (%p135) target = $region12
    $region11: #{rsab_forward.12} parent=5 // pred_region
      %s139 = ssub.s32 %s10, 1
      // Predicated region
      $region13: #{rsab_forward.12} parent=11 // pred_check
        %p140 = pneg %p57
      $region14: #{rsab_forward.12} parent=11 // pred_check_branch
        %142 = sbr.rel (%p140) target = $region16
      $region15: #{rsab_forward.12} parent=11 // pred_region
        _
      $region16: #{rsab_forward.12} parent=11 // pred_fallthru
        _
      // Predicated region
      $region17: #{rsab_forward.12} parent=11 // pred_check
        %p143 = pneg %p78
      $region18: #{rsab_forward.12} parent=11 // pred_check_branch
        %145 = sbr.rel (%p143) target = $region20
      $region19: #{rsab_forward.12} parent=11 // pred_region
        _
      $region20: #{rsab_forward.12} parent=11 // pred_fallthru
        _
      // Predicated region
      $region21: #{rsab_forward.12} parent=11 // pred_check
        %p146 = pneg %p99
      $region22: #{rsab_forward.12} parent=11 // pred_check_branch
        %148 = sbr.rel (%p146) target = $region24
      $region23: #{rsab_forward.12} parent=11 // pred_region
        _
      $region24: #{rsab_forward.12} parent=11 // pred_fallthru
        _
    $region12: #{rsab_forward.12} parent=5 // pred_fallthru
      _
    %p149 = scmp.lt.s32.totalorder %s10, 2
    // Predicated region
    $region25: #{rsab_forward.12} parent=5 // pred_check
      %p150 = pneg %p149
    $region26: #{rsab_forward.12} parent=5 // pred_check_branch
      %152 = sbr.rel (%p150) target = $region28
    $region27: #{rsab_forward.12} parent=5 // pred_region
      // Predicated region
      $region29: #{rsab_forward.12} parent=27 // pred_check
        %p153 = pneg %p30
      $region30: #{rsab_forward.12} parent=27 // pred_check_branch
        %155 = sbr.rel (%p153) target = $region32
      $region31: #{rsab_forward.12} parent=27 // pred_region
        %s156 = smul.u32 8, %s10
        %p157 = scmp.lt.s32.totalorder %s156, 15
        %s158 = scalar_select %p157, %s156, 15
        %s159 = smul.addr %s158, 8
        %s160 = scalar_lea.vmem %s0, %s159
        %s161 = smul.u32 8, %s10
      $region32: #{rsab_forward.12} parent=27 // pred_fallthru
        _
    $region28: #{rsab_forward.12} parent=5 // pred_fallthru
      _
    %p162 = scmp.le.s32.totalorder 1, %s10
    %p163 = scmp.lt.s32.totalorder %s10, 3
    %p164 = pnand %p162, %p163
    %p165 = pneg %p164
    // Predicated region
    $region33: #{rsab_forward.12} parent=5 // pred_check
      _
    $region34: #{rsab_forward.12} parent=5 // pred_check_branch
      %167 = sbr.rel (%p164) target = $region36
    $region35: #{rsab_forward.12} parent=5 // pred_region
      %s168 = ssub.s32 %s10, 1
      %s169 = smul.u32 8, %s15
      %p170 = scmp.lt.s32.totalorder %s169, 15
      %s171 = scalar_select %p170, %s169, 15
      %s172 = smul.addr %s171, 8
      %s173 = scalar_lea.vmem %s0, %s172
      %p174 = pneg %p36
      %p175 = pneg %p33
      %p176 = pneg %p57
      %p177 = pneg %p54
      %p178 = pneg %p78
      %p179 = pneg %p75
      %p180 = pneg %p99
      %p181 = pneg %p96
      %p182 = pneg %p125
      %p183 = pneg %p122
      %s184 = smul.u32 8, %s15
      %p185 = scmp.lt.s32.totalorder %s184, 15
      %s186 = scalar_select %p185, %s184, 15
      %s187 = smul.addr %s186, 8
      %s188 = scalar_lea.vmem %s4, %s187
      %s189 = smul.u32 8, %s15
      %p190 = scmp.lt.s32.totalorder %s189, 15
      %s191 = scalar_select %p190, %s189, 15
      %s192 = smul.addr %s191, 8
      %s193 = scalar_lea.vmem %s0, %s192
      %s194 = smul.u32 8, %s15
      %s195 = smul.u32 8, %s15
      %p196 = scmp.lt.s32.totalorder %s195, 15
      %s197 = scalar_select %p196, %s195, 15
      %s198 = smul.addr %s197, 8
      %s199 = scalar_lea.vmem %s4, %s198
      %s200 = smul.u32 8, %s15
      %v201 = vld [vmem:[%s193] sm:$0xff]
      %v202 = vld [vmem:[%s193 + $0x8] sm:$0xff]
      %v203 = vld [vmem:[%s193 + $0x10] sm:$0xff]
      %v204 = vld [vmem:[%s193 + $0x18] sm:$0xff]
      %v205 = vld [vmem:[%s193 + $0x20] sm:$0xff]
      %v206 = vld [vmem:[%s193 + $0x28] sm:$0xff]
      %v207 = vld [vmem:[%s193 + $0x30] sm:$0xff]
      %v208 = vld [vmem:[%s193 + $0x38] sm:$0xff]
      %vm209 = vcmask 64512
      %v210 = vsel %vm209, %v201, 0.0
      %211 = vadd.xlane.f32.xlu0 %v210
      %v212 = vpop.xlane.xlu0 %211
      %v213 = vsel %vm209, %v202, 0.0
      %214 = vadd.xlane.f32.xlu0 %v213
      %v215 = vpop.xlane.xlu0 %214
      %v216 = vsel %vm209, %v203, 0.0
      %217 = vadd.xlane.f32.xlu0 %v216
      %v218 = vpop.xlane.xlu0 %217
      %v219 = vsel %vm209, %v204, 0.0
      %220 = vadd.xlane.f32.xlu0 %v219
      %v221 = vpop.xlane.xlu0 %220
      %v222 = vsel %vm209, %v205, 0.0
      %223 = vadd.xlane.f32.xlu0 %v222
      %v224 = vpop.xlane.xlu0 %223
      %v225 = vsel %vm209, %v206, 0.0
      %226 = vadd.xlane.f32.xlu0 %v225
      %v227 = vpop.xlane.xlu0 %226
      %v228 = vsel %vm209, %v207, 0.0
      %229 = vadd.xlane.f32.xlu0 %v228
      %v230 = vpop.xlane.xlu0 %229
      %v231 = vsel %vm209, %v208, 0.0
      %232 = vadd.xlane.f32.xlu0 %v231
      %v233 = vpop.xlane.xlu0 %232
      %v234 = vrcp.pop 8.0
      %v235 = vmul.f32 %v212, %v234
      %v236 = vmul.f32 %v215, %v234
      %v237 = vmul.f32 %v218, %v234
      %v238 = vmul.f32 %v221, %v234
      %v239 = vmul.f32 %v224, %v234
      %v240 = vmul.f32 %v227, %v234
      %v241 = vmul.f32 %v230, %v234
      %v242 = vmul.f32 %v233, %v234
      %v243 = vsub.f32 %v201, %v235
      %v244 = vsub.f32 %v202, %v236
      %v245 = vsub.f32 %v203, %v237
      %v246 = vsub.f32 %v204, %v238
      %v247 = vsub.f32 %v205, %v239
      %v248 = vsub.f32 %v206, %v240
      %v249 = vsub.f32 %v207, %v241
      %v250 = vsub.f32 %v208, %v242
      %v251 = vmul.f32 %v243, %v243
      %v252 = vmul.f32 %v244, %v244
      %v253 = vmul.f32 %v245, %v245
      %v254 = vmul.f32 %v246, %v246
      %v255 = vmul.f32 %v247, %v247
      %v256 = vmul.f32 %v248, %v248
      %v257 = vmul.f32 %v249, %v249
      %v258 = vmul.f32 %v250, %v250
      %v259 = vsel %vm209, %v251, 0.0
      %260 = vadd.xlane.f32.xlu0 %v259
      %v261 = vpop.xlane.xlu0 %260
      %v262 = vsel %vm209, %v252, 0.0
      %263 = vadd.xlane.f32.xlu0 %v262
      %v264 = vpop.xlane.xlu0 %263
      %v265 = vsel %vm209, %v253, 0.0
      %266 = vadd.xlane.f32.xlu0 %v265
      %v267 = vpop.xlane.xlu0 %266
      %v268 = vsel %vm209, %v254, 0.0
      %269 = vadd.xlane.f32.xlu0 %v268
      %v270 = vpop.xlane.xlu0 %269
      %v271 = vsel %vm209, %v255, 0.0
      %272 = vadd.xlane.f32.xlu0 %v271
      %v273 = vpop.xlane.xlu0 %272
      %v274 = vsel %vm209, %v256, 0.0
      %275 = vadd.xlane.f32.xlu0 %v274
      %v276 = vpop.xlane.xlu0 %275
      %v277 = vsel %vm209, %v257, 0.0
      %278 = vadd.xlane.f32.xlu0 %v277
      %v279 = vpop.xlane.xlu0 %278
      %v280 = vsel %vm209, %v258, 0.0
      %281 = vadd.xlane.f32.xlu0 %v280
      %v282 = vpop.xlane.xlu0 %281
      %v283 = vmul.f32 %v261, %v234
      %v284 = vmul.f32 %v264, %v234
      %v285 = vmul.f32 %v267, %v234
      %v286 = vmul.f32 %v270, %v234
      %v287 = vmul.f32 %v273, %v234
      %v288 = vmul.f32 %v276, %v234
      %v289 = vmul.f32 %v279, %v234
      %v290 = vmul.f32 %v282, %v234
      %v291 = vrsqrt.pop %v283
      %v292 = vmul.f32 %v283, %v291
      %vm293 = vcmp.eq.f32.partialorder %v283, inf
      %v294 = vsel %vm293, %v283, %v292
      %vm295 = vcmp.eq.f32.partialorder %v283, 0.0
      %v296 = vand.u32 %v283, 2147483648
      %v297 = vsel %vm295, %v296, %v294
      %v298 = vrsqrt.pop %v284
      %v299 = vmul.f32 %v284, %v298
      %vm300 = vcmp.eq.f32.partialorder %v284, inf
      %v301 = vsel %vm300, %v284, %v299
      %vm302 = vcmp.eq.f32.partialorder %v284, 0.0
      %v303 = vand.u32 %v284, 2147483648
      %v304 = vsel %vm302, %v303, %v301
      %v305 = vrsqrt.pop %v285
      %v306 = vmul.f32 %v285, %v305
      %vm307 = vcmp.eq.f32.partialorder %v285, inf
      %v308 = vsel %vm307, %v285, %v306
      %vm309 = vcmp.eq.f32.partialorder %v285, 0.0
      %v310 = vand.u32 %v285, 2147483648
      %v311 = vsel %vm309, %v310, %v308
      %v312 = vrsqrt.pop %v286
      %v313 = vmul.f32 %v286, %v312
      %vm314 = vcmp.eq.f32.partialorder %v286, inf
      %v315 = vsel %vm314, %v286, %v313
      %vm316 = vcmp.eq.f32.partialorder %v286, 0.0
      %v317 = vand.u32 %v286, 2147483648
      %v318 = vsel %vm316, %v317, %v315
      %v319 = vrsqrt.pop %v287
      %v320 = vmul.f32 %v287, %v319
      %vm321 = vcmp.eq.f32.partialorder %v287, inf
      %v322 = vsel %vm321, %v287, %v320
      %vm323 = vcmp.eq.f32.partialorder %v287, 0.0
      %v324 = vand.u32 %v287, 2147483648
      %v325 = vsel %vm323, %v324, %v322
      %v326 = vrsqrt.pop %v288
      %v327 = vmul.f32 %v288, %v326
      %vm328 = vcmp.eq.f32.partialorder %v288, inf
      %v329 = vsel %vm328, %v288, %v327
      %vm330 = vcmp.eq.f32.partialorder %v288, 0.0
      %v331 = vand.u32 %v288, 2147483648
      %v332 = vsel %vm330, %v331, %v329
      %v333 = vrsqrt.pop %v289
      %v334 = vmul.f32 %v289, %v333
      %vm335 = vcmp.eq.f32.partialorder %v289, inf
      %v336 = vsel %vm335, %v289, %v334
      %vm337 = vcmp.eq.f32.partialorder %v289, 0.0
      %v338 = vand.u32 %v289, 2147483648
      %v339 = vsel %vm337, %v338, %v336
      %v340 = vrsqrt.pop %v290
      %v341 = vmul.f32 %v290, %v340
      %vm342 = vcmp.eq.f32.partialorder %v290, inf
      %v343 = vsel %vm342, %v290, %v341
      %vm344 = vcmp.eq.f32.partialorder %v290, 0.0
      %v345 = vand.u32 %v290, 2147483648
      %v346 = vsel %vm344, %v345, %v343
      %v347 = vadd.f32 %v297, 1e-05
      %v348 = vadd.f32 %v304, 1e-05
      %v349 = vadd.f32 %v311, 1e-05
      %v350 = vadd.f32 %v318, 1e-05
      %v351 = vadd.f32 %v325, 1e-05
      %v352 = vadd.f32 %v332, 1e-05
      %v353 = vadd.f32 %v339, 1e-05
      %v354 = vadd.f32 %v346, 1e-05
      %v355 = vrcp.pop %v347
      %v356 = vmul.f32 %v243, %v355
      %v357 = vrcp.pop %v348
      %v358 = vmul.f32 %v244, %v357
      %v359 = vrcp.pop %v349
      %v360 = vmul.f32 %v245, %v359
      %v361 = vrcp.pop %v350
      %v362 = vmul.f32 %v246, %v361
      %v363 = vrcp.pop %v351
      %v364 = vmul.f32 %v247, %v363
      %v365 = vrcp.pop %v352
      %v366 = vmul.f32 %v248, %v365
      %v367 = vrcp.pop %v353
      %v368 = vmul.f32 %v249, %v367
      %v369 = vrcp.pop %v354
      %v370 = vmul.f32 %v250, %v369
      %v371 = vld [vmem:[%s1] sm:$0x1]
      %v373 = vlaneseq
      %v374 = vshrl.u32 %v373, 7
      %v375 = vsub.s32 0, %v374
      %v376 = vrot.slane %v371, %v375
      %v378 = vmul.f32 %v356, %v376
      %v379 = vmul.f32 %v358, %v376
      %v380 = vmul.f32 %v360, %v376
      %v381 = vmul.f32 %v362, %v376
      %v382 = vmul.f32 %v364, %v376
      %v383 = vmul.f32 %v366, %v376
      %v384 = vmul.f32 %v368, %v376
      %v385 = vmul.f32 %v370, %v376
      %v386 = vld [vmem:[%s2] sm:$0x1]
      %v388 = vlaneseq
      %v389 = vshrl.u32 %v388, 7
      %v390 = vsub.s32 0, %v389
      %v391 = vrot.slane %v386, %v390
      %v393 = vadd.f32 %v378, %v391
      %v394 = vadd.f32 %v379, %v391
      %v395 = vadd.f32 %v380, %v391
      %v396 = vadd.f32 %v381, %v391
      %v397 = vadd.f32 %v382, %v391
      %v398 = vadd.f32 %v383, %v391
      %v399 = vadd.f32 %v384, %v391
      %v400 = vadd.f32 %v385, %v391
      %v401 = vld [vmem:[%s3] sm:$0xff]
      %v403 = vsel %vm209, %v393, 0
      %v406 = vsel %vm209, %v394, 0
      %v409 = vsel %vm209, %v395, 0
      %v412 = vsel %vm209, %v396, 0
      %v415 = vsel %vm209, %v397, 0
      %v418 = vsel %vm209, %v398, 0
      %v421 = vsel %vm209, %v399, 0
      %v424 = vsel %vm209, %v400, 0
      %426 = vmatprep.subr.mxu0 0.0
      %427 = vmatpush1.msra.mxu0 0.0
      %428 = vmatprep.subr.mxu0 0.0
      %429 = vmatpush1.msra.mxu0 0.0
      %430 = vmatprep.subr.mxu0 0.0
      %431 = vmatpush1.msra.mxu0 0.0
      %432 = vmatprep.subr.mxu0 0.0
      %433 = vmatpush1.msra.mxu0 0.0
      %434 = vmatprep.subr.mxu0 0.0
      %435 = vmatpush1.msra.mxu0 0.0
      %436 = vmatprep.subr.mxu0 0.0
      %437 = vmatpush1.msra.mxu0 0.0
      %438 = vmatprep.subr.mxu0 0.0
      %439 = vmatpush1.msra.mxu0 0.0
      %440 = vmatprep.subr.mxu0 0.0
      %441 = vmatpush1.msra.mxu0 0.0
      %442 = vmatprep.subr.mxu0 0.0
      %443 = vmatpush1.msra.mxu0 0.0
      %444 = vmatprep.subr.mxu0 0.0
      %445 = vmatpush1.msra.mxu0 0.0
      %446 = vmatprep.subr.mxu0 0.0
      %447 = vmatpush1.msra.mxu0 0.0
      %448 = vmatprep.subr.mxu0 0.0
      %449 = vmatpush1.msra.mxu0 0.0
      %450 = vmatprep.subr.mxu0 0.0
      %451 = vmatpush1.msra.mxu0 0.0
      %452 = vmatprep.subr.mxu0 0.0
      %453 = vmatpush1.msra.mxu0 0.0
      %454 = vmatprep.subr.mxu0 0.0
      %455 = vmatpush1.msra.mxu0 0.0
      %456 = vmatprep.subr.mxu0 0.0
      %457 = vmatpush1.msra.mxu0 %v401
      %458 = vmatprep.subr.mxu0 0.0
      %459 = vmatpush2.msra.mxu0 0.0
      %460 = vmatprep.subr.mxu0 0.0
      %461 = vmatpush2.msra.mxu0 0.0
      %462 = vmatprep.subr.mxu0 0.0
      %463 = vmatpush2.msra.mxu0 0.0
      %464 = vmatprep.subr.mxu0 0.0
      %465 = vmatpush2.msra.mxu0 0.0
      %466 = vmatprep.subr.mxu0 0.0
      %467 = vmatpush2.msra.mxu0 0.0
      %468 = vmatprep.subr.mxu0 0.0
      %469 = vmatpush2.msra.mxu0 0.0
      %470 = vmatprep.subr.mxu0 0.0
      %471 = vmatpush2.msra.mxu0 0.0
      %472 = vmatprep.subr.mxu0 0.0
      %473 = vmatpush2.msra.mxu0 0.0
      %474 = vmatprep.subr.mxu0 0.0
      %475 = vmatpush2.msra.mxu0 0.0
      %476 = vmatprep.subr.mxu0 0.0
      %477 = vmatpush2.msra.mxu0 0.0
      %478 = vmatprep.subr.mxu0 0.0
      %479 = vmatpush2.msra.mxu0 0.0
      %480 = vmatprep.subr.mxu0 0.0
      %481 = vmatpush2.msra.mxu0 0.0
      %482 = vmatprep.subr.mxu0 0.0
      %483 = vmatpush2.msra.mxu0 0.0
      %484 = vmatprep.subr.mxu0 0.0
      %485 = vmatpush2.msra.mxu0 0.0
      %486 = vmatprep.subr.mxu0 0.0
      %487 = vmatpush2.msra.mxu0 0.0
      %488 = vmatprep.subr.mxu0 0.0
      %489 = vmatpush2.msra.mxu0 0.0
      %490 = vmatprep.mubr.f32.mxu0 0.0
      %491 = vmatmul.mubr.f32.gmra.mxu0 %v403
      %v492 = vpop.f32.mrf.mxu0
      %v493 = vadd.f32 0.0, %v492
      %v494 = vpop.f32.mrf.mxu0
      %495 = vmatprep.mubr.f32.mxu0 0.0
      %496 = vmatmul.mubr.f32.gmra.mxu0 %v406
      %v497 = vpop.f32.mrf.mxu0
      %v498 = vadd.f32 0.0, %v497
      %v499 = vpop.f32.mrf.mxu0
      %500 = vmatprep.mubr.f32.mxu0 0.0
      %501 = vmatmul.mubr.f32.gmra.mxu0 %v409
      %v502 = vpop.f32.mrf.mxu0
      %v503 = vadd.f32 0.0, %v502
      %v504 = vpop.f32.mrf.mxu0
      %505 = vmatprep.mubr.f32.mxu0 0.0
      %506 = vmatmul.mubr.f32.gmra.mxu0 %v412
      %v507 = vpop.f32.mrf.mxu0
      %v508 = vadd.f32 0.0, %v507
      %v509 = vpop.f32.mrf.mxu0
      %510 = vmatprep.mubr.f32.mxu0 0.0
      %511 = vmatmul.mubr.f32.gmra.mxu0 %v415
      %v512 = vpop.f32.mrf.mxu0
      %v513 = vadd.f32 0.0, %v512
      %v514 = vpop.f32.mrf.mxu0
      %515 = vmatprep.mubr.f32.mxu0 0.0
      %516 = vmatmul.mubr.f32.gmra.mxu0 %v418
      %v517 = vpop.f32.mrf.mxu0
      %v518 = vadd.f32 0.0, %v517
      %v519 = vpop.f32.mrf.mxu0
      %520 = vmatprep.mubr.f32.mxu0 0.0
      %521 = vmatmul.mubr.f32.gmra.mxu0 %v421
      %v522 = vpop.f32.mrf.mxu0
      %v523 = vadd.f32 0.0, %v522
      %v524 = vpop.f32.mrf.mxu0
      %525 = vmatprep.mubr.f32.mxu0 0.0
      %526 = vmatmul.mubr.f32.gmra.mxu0 %v424
      %v527 = vpop.f32.mrf.mxu0
      %v528 = vadd.f32 0.0, %v527
      %v529 = vpop.f32.mrf.mxu0
      %530 = vdwg.mxu0
      %vm531 = vcmask 195584
      %532 = vst.msk [vmem:[%s199] sm:$0xff] %vm531, %v493
      %533 = vst.msk [vmem:[%s199 + $0x8] sm:$0xff] %vm531, %v498
      %534 = vst.msk [vmem:[%s199 + $0x10] sm:$0xff] %vm531, %v503
      %535 = vst.msk [vmem:[%s199 + $0x18] sm:$0xff] %vm531, %v508
      %536 = vst.msk [vmem:[%s199 + $0x20] sm:$0xff] %vm531, %v513
      %537 = vst.msk [vmem:[%s199 + $0x28] sm:$0xff] %vm531, %v518
      %538 = vst.msk [vmem:[%s199 + $0x30] sm:$0xff] %vm531, %v523
      %539 = vst.msk [vmem:[%s199 + $0x38] sm:$0xff] %vm531, %v528
      %s540 = smul.u32 8, %s15
      %p541 = scmp.lt.s32.totalorder %s540, 15
      %s542 = scalar_select %p541, %s540, 15
      %s543 = smul.addr %s542, 8
      %s544 = scalar_lea.vmem %s4, %s543
      // Predicated region
      $region37: #{rsab_forward.12} parent=35 // pred_check
        %p545 = pneg %p122
      $region38: #{rsab_forward.12} parent=35 // pred_check_branch
        %547 = sbr.rel (%p545) target = $region40
      $region39: #{rsab_forward.12} parent=35 // pred_region
        %s548 = smul.u32 8, %s15
      $region40: #{rsab_forward.12} parent=35 // pred_fallthru
        _
    $region36: #{rsab_forward.12} parent=5 // pred_fallthru
      _
    %p549 = scmp.le.s32.totalorder 2, %s10
    // Predicated region
    $region41: #{rsab_forward.12} parent=5 // pred_check
      %p550 = pneg %p549
    $region42: #{rsab_forward.12} parent=5 // pred_check_branch
      %552 = sbr.rel (%p550) target = $region44
    $region43: #{rsab_forward.12} parent=5 // pred_region
      %s553 = ssub.s32 %s10, 2
      // Predicated region
      $region45: #{rsab_forward.12} parent=43 // pred_check
        %p554 = pneg %p128
      $region46: #{rsab_forward.12} parent=43 // pred_check_branch
        %556 = sbr.rel (%p554) target = $region48
      $region47: #{rsab_forward.12} parent=43 // pred_region
        %s557 = smul.u32 8, %s16
        %p558 = scmp.lt.s32.totalorder %s557, 15
        %s559 = scalar_select %p558, %s557, 15
        %s560 = smul.addr %s559, 8
        %s561 = scalar_lea.vmem %s4, %s560
      $region48: #{rsab_forward.12} parent=43 // pred_fallthru
        _
    $region44: #{rsab_forward.12} parent=5 // pred_fallthru
      _
  $region6: #{rsab_forward.12} parent=0 // loop_footer
    %s14 = sadd.s32 1, %s10
  $region7: #{rsab_forward.12} parent=0 // loop_footer_branch
    %9 = sbr.rel target = $region3
  $region8: #{rsab_forward.12} parent=0 // loop_exit
    _

// kernel: rsab_forward.15
$region0: #{rsab_forward.15}
  #allocation0 [shape = 'u32[]', space=smem, size = 0x4, offset = 0x4, fixed_abs, tag = 'smem constant byte address 0x4 - core index']
  #allocation1 [shape = 'u32[144,128]{1,0:T(1,128)}', space=vmem, size = 0x12000, scoped, tag = 'internal scratch']
  %s0 = inlined_call_operand.vmem [shape: f32[128,8], index: 0, kind: input, shape index: {}]
  %s1 = inlined_call_operand.vmem [shape: f32[8,8], index: 1, kind: input, shape index: {}]
  %s2 = inlined_call_operand.vmem [shape: f32[1,8], index: 2, kind: input, shape index: {}]
  %s3 = inlined_call_operand.vmem [shape: f32[128,8], index: 3, kind: input, shape index: {}]
  %s4 = inlined_call_operand.vmem [shape: f32[128,8], index: 4, kind: output, shape index: {}]
  %s5 = sld [smem:[#allocation0]]
  $region49: #{rsab_forward.15} parent=0
    _
  %s7 = ssub.s32 1, %s5
  %s8 = scalar_select 0, %s7, %s5
  loop: start=0, step=1, limit=4
  $region2: #{rsab_forward.15} parent=0 // loop_pre_header
    _
  $region3: #{rsab_forward.15} parent=0 // loop_header
    %s10 = sphi 0, %s14
    %p11 = scmp.ge.s32.totalorder %s10, 4
    %s20 = sphi 0, %s22
    %s23 = sphi 0, %s20
    %s24 = sphi 0, %s23
    %s40 = sphi 0, %s24
    %s44 = sphi 0, %s44
    %s46 = sphi 0, %s44
    %s47 = sphi 0, %s46
    %s61 = sphi 0, %s47
    %s65 = sphi 0, %s65
    %s67 = sphi 0, %s65
    %s68 = sphi 0, %s67
    %s82 = sphi 0, %s68
    %s88 = sphi 0, %s90
    %s91 = sphi 0, %s88
    %s92 = sphi 0, %s91
    %s108 = sphi 0, %s92
    %s114 = sphi 0, %s116
    %s117 = sphi 0, %s114
    %s118 = sphi 0, %s117
    %s134 = sphi 0, %s118
  $region4: #{rsab_forward.15} parent=0 // loop_header_branch
    %13 = sbr.rel (%p11) target = $region8
  $region5: #{rsab_forward.15} parent=0 // loop_body
    %s15 = ssub.s32 %s10, 1
    %s16 = ssub.s32 %s10, 2
    %s17 = sadd.s32 %s10, 1
    %s18 = ssub.s32 %s10, %s17
    %p19 = scmp.eq.s32.totalorder %s18, 0
    %s21 = sadd.s32 %s20, 1
    %s22 = scalar_select %p19, %s20, %s21
    %p25 = pneg %p19
    %p26 = scmp.eq.s32.totalorder %s10, 1
    %p27 = por %p25, %p26
    %p28 = scmp.ne.s32.totalorder %s20, %s23
    %p29 = scmp.eq.s32.totalorder %s10, 0
    %p30 = por %p28, %p29
    %p31 = scmp.ne.s32.totalorder %s20, %s23
    %p32 = scmp.eq.s32.totalorder %s15, 1
    %p33 = por %p31, %p32
    %p34 = scmp.ne.s32.totalorder %s23, %s24
    %p35 = scmp.eq.s32.totalorder %s15, 0
    %p36 = por %p34, %p35
    %p37 = scmp.ne.s32.totalorder %s23, %s24
    %p38 = scmp.eq.s32.totalorder %s16, 1
    %p39 = por %p37, %p38
    %p41 = scmp.ne.s32.totalorder %s24, %s40
    %p42 = scmp.eq.s32.totalorder %s16, 0
    %p43 = por %p41, %p42
    %s45 = sadd.s32 %s44, 1
    %p48 = scmp.eq.s32.totalorder %s10, 1
    %p49 = scmp.ne.s32.totalorder %s44, %s46
    %p50 = scmp.eq.s32.totalorder %s10, 0
    %p51 = por %p49, %p50
    %p52 = scmp.ne.s32.totalorder %s44, %s46
    %p53 = scmp.eq.s32.totalorder %s15, 1
    %p54 = por %p52, %p53
    %p55 = scmp.ne.s32.totalorder %s46, %s47
    %p56 = scmp.eq.s32.totalorder %s15, 0
    %p57 = por %p55, %p56
    %p58 = scmp.ne.s32.totalorder %s46, %s47
    %p59 = scmp.eq.s32.totalorder %s16, 1
    %p60 = por %p58, %p59
    %p62 = scmp.ne.s32.totalorder %s47, %s61
    %p63 = scmp.eq.s32.totalorder %s16, 0
    %p64 = por %p62, %p63
    %s66 = sadd.s32 %s65, 1
    %p69 = scmp.eq.s32.totalorder %s10, 1
    %p70 = scmp.ne.s32.totalorder %s65, %s67
    %p71 = scmp.eq.s32.totalorder %s10, 0
    %p72 = por %p70, %p71
    %p73 = scmp.ne.s32.totalorder %s65, %s67
    %p74 = scmp.eq.s32.totalorder %s15, 1
    %p75 = por %p73, %p74
    %p76 = scmp.ne.s32.totalorder %s67, %s68
    %p77 = scmp.eq.s32.totalorder %s15, 0
    %p78 = por %p76, %p77
    %p79 = scmp.ne.s32.totalorder %s67, %s68
    %p80 = scmp.eq.s32.totalorder %s16, 1
    %p81 = por %p79, %p80
    %p83 = scmp.ne.s32.totalorder %s68, %s82
    %p84 = scmp.eq.s32.totalorder %s16, 0
    %p85 = por %p83, %p84
    %s86 = ssub.s32 %s10, %s17
    %p87 = scmp.eq.s32.totalorder %s86, 0
    %s89 = sadd.s32 %s88, 1
    %s90 = scalar_select %p87, %s88, %s89
    %p93 = pneg %p87
    %p94 = scmp.eq.s32.totalorder %s10, 1
    %p95 = por %p93, %p94
    %p96 = scmp.ne.s32.totalorder %s88, %s91
    %p97 = scmp.eq.s32.totalorder %s10, 0
    %p98 = por %p96, %p97
    %p99 = scmp.ne.s32.totalorder %s88, %s91
    %p100 = scmp.eq.s32.totalorder %s15, 1
    %p101 = por %p99, %p100
    %p102 = scmp.ne.s32.totalorder %s91, %s92
    %p103 = scmp.eq.s32.totalorder %s15, 0
    %p104 = por %p102, %p103
    %p105 = scmp.ne.s32.totalorder %s91, %s92
    %p106 = scmp.eq.s32.totalorder %s16, 1
    %p107 = por %p105, %p106
    %p109 = scmp.ne.s32.totalorder %s92, %s108
    %p110 = scmp.eq.s32.totalorder %s16, 0
    %p111 = por %p109, %p110
    %s112 = ssub.s32 %s10, %s17
    %p113 = scmp.eq.s32.totalorder %s112, 0
    %s115 = sadd.s32 %s114, 1
    %s116 = scalar_select %p113, %s114, %s115
    %p119 = pneg %p113
    %p120 = scmp.eq.s32.totalorder %s10, 1
    %p121 = por %p119, %p120
    %p122 = scmp.ne.s32.totalorder %s114, %s117
    %p123 = scmp.eq.s32.totalorder %s10, 0
    %p124 = por %p122, %p123
    %p125 = scmp.ne.s32.totalorder %s114, %s117
    %p126 = scmp.eq.s32.totalorder %s15, 1
    %p127 = por %p125, %p126
    %p128 = scmp.ne.s32.totalorder %s117, %s118
    %p129 = scmp.eq.s32.totalorder %s15, 0
    %p130 = por %p128, %p129
    %p131 = scmp.ne.s32.totalorder %s117, %s118
    %p132 = scmp.eq.s32.totalorder %s16, 1
    %p133 = por %p131, %p132
    %p135 = scmp.ne.s32.totalorder %s118, %s134
    %p136 = scmp.eq.s32.totalorder %s16, 0
    %p137 = por %p135, %p136
    %p138 = scmp.le.s32.totalorder 1, %s10
    %p139 = scmp.lt.s32.totalorder %s10, 3
    %p140 = pnand %p138, %p139
    %p141 = pneg %p140
    // Predicated region
    $region9: #{rsab_forward.15} parent=5 // pred_check
      _
    $region10: #{rsab_forward.15} parent=5 // pred_check_branch
      %143 = sbr.rel (%p140) target = $region12
    $region11: #{rsab_forward.15} parent=5 // pred_region
      %s144 = ssub.s32 %s10, 1
      // Predicated region
      $region13: #{rsab_forward.15} parent=11 // pred_check
        %p145 = pneg %p57
      $region14: #{rsab_forward.15} parent=11 // pred_check_branch
        %147 = sbr.rel (%p145) target = $region16
      $region15: #{rsab_forward.15} parent=11 // pred_region
        _
      $region16: #{rsab_forward.15} parent=11 // pred_fallthru
        _
      // Predicated region
      $region17: #{rsab_forward.15} parent=11 // pred_check
        %p148 = pneg %p78
      $region18: #{rsab_forward.15} parent=11 // pred_check_branch
        %150 = sbr.rel (%p148) target = $region20
      $region19: #{rsab_forward.15} parent=11 // pred_region
        _
      $region20: #{rsab_forward.15} parent=11 // pred_fallthru
        _
    $region12: #{rsab_forward.15} parent=5 // pred_fallthru
      _
    %p151 = scmp.lt.s32.totalorder %s10, 2
    // Predicated region
    $region21: #{rsab_forward.15} parent=5 // pred_check
      %p152 = pneg %p151
    $region22: #{rsab_forward.15} parent=5 // pred_check_branch
      %154 = sbr.rel (%p152) target = $region24
    $region23: #{rsab_forward.15} parent=5 // pred_region
      // Predicated region
      $region25: #{rsab_forward.15} parent=23 // pred_check
        %p155 = pneg %p30
      $region26: #{rsab_forward.15} parent=23 // pred_check_branch
        %157 = sbr.rel (%p155) target = $region28
      $region27: #{rsab_forward.15} parent=23 // pred_region
        %s158 = smul.u32 8, %s10
        %p159 = scmp.lt.s32.totalorder %s158, 15
        %s160 = scalar_select %p159, %s158, 15
        %s161 = smul.addr %s160, 8
        %s162 = scalar_lea.vmem %s0, %s161
        %s163 = smul.u32 8, %s10
      $region28: #{rsab_forward.15} parent=23 // pred_fallthru
        _
      // Predicated region
      $region29: #{rsab_forward.15} parent=23 // pred_check
        %p164 = pneg %p98
      $region30: #{rsab_forward.15} parent=23 // pred_check_branch
        %166 = sbr.rel (%p164) target = $region32
      $region31: #{rsab_forward.15} parent=23 // pred_region
        %s167 = smul.u32 8, %s10
        %p168 = scmp.lt.s32.totalorder %s167, 15
        %s169 = scalar_select %p168, %s167, 15
        %s170 = smul.addr %s169, 8
        %s171 = scalar_lea.vmem %s3, %s170
        %s172 = smul.u32 8, %s10
      $region32: #{rsab_forward.15} parent=23 // pred_fallthru
        _
    $region24: #{rsab_forward.15} parent=5 // pred_fallthru
      _
    %p173 = scmp.le.s32.totalorder 1, %s10
    %p174 = scmp.lt.s32.totalorder %s10, 3
    %p175 = pnand %p173, %p174
    %p176 = pneg %p175
    // Predicated region
    $region33: #{rsab_forward.15} parent=5 // pred_check
      _
    $region34: #{rsab_forward.15} parent=5 // pred_check_branch
      %178 = sbr.rel (%p175) target = $region36
    $region35: #{rsab_forward.15} parent=5 // pred_region
      %s179 = ssub.s32 %s10, 1
      %s180 = smul.u32 8, %s15
      %p181 = scmp.lt.s32.totalorder %s180, 15
      %s182 = scalar_select %p181, %s180, 15
      %s183 = smul.addr %s182, 8
      %s184 = scalar_lea.vmem %s0, %s183
      %p185 = pneg %p36
      %p186 = pneg %p33
      %p187 = pneg %p57
      %p188 = pneg %p54
      %p189 = pneg %p78
      %p190 = pneg %p75
      %s191 = smul.u32 8, %s15
      %p192 = scmp.lt.s32.totalorder %s191, 15
      %s193 = scalar_select %p192, %s191, 15
      %s194 = smul.addr %s193, 8
      %s195 = scalar_lea.vmem %s3, %s194
      %p196 = pneg %p104
      %p197 = pneg %p101
      %p198 = pneg %p130
      %p199 = pneg %p127
      %s200 = smul.u32 8, %s15
      %p201 = scmp.lt.s32.totalorder %s200, 15
      %s202 = scalar_select %p201, %s200, 15
      %s203 = smul.addr %s202, 8
      %s204 = scalar_lea.vmem %s4, %s203
      %s205 = smul.u32 8, %s15
      %p206 = scmp.lt.s32.totalorder %s205, 15
      %s207 = scalar_select %p206, %s205, 15
      %s208 = smul.addr %s207, 8
      %s209 = scalar_lea.vmem %s0, %s208
      %s210 = smul.u32 8, %s15
      %s211 = smul.u32 8, %s15
      %p212 = scmp.lt.s32.totalorder %s211, 15
      %s213 = scalar_select %p212, %s211, 15
      %s214 = smul.addr %s213, 8
      %s215 = scalar_lea.vmem %s3, %s214
      %s216 = smul.u32 8, %s15
      %s217 = smul.u32 8, %s15
      %p218 = scmp.lt.s32.totalorder %s217, 15
      %s219 = scalar_select %p218, %s217, 15
      %s220 = smul.addr %s219, 8
      %s221 = scalar_lea.vmem %s4, %s220
      %s222 = smul.u32 8, %s15
      %v223 = vld [vmem:[%s209] sm:$0xff]
      %v224 = vld [vmem:[%s209 + $0x8] sm:$0xff]
      %v225 = vld [vmem:[%s209 + $0x10] sm:$0xff]
      %v226 = vld [vmem:[%s209 + $0x18] sm:$0xff]
      %v227 = vld [vmem:[%s209 + $0x20] sm:$0xff]
      %v228 = vld [vmem:[%s209 + $0x28] sm:$0xff]
      %v229 = vld [vmem:[%s209 + $0x30] sm:$0xff]
      %v230 = vld [vmem:[%s209 + $0x38] sm:$0xff]
      %v231 = vld [vmem:[%s1] sm:$0xff]
      %v232 = vld [vmem:[%s2] sm:$0x1]
      %v234 = vlaneseq
      %v235 = vshrl.u32 %v234, 7
      %v236 = vsub.s32 0, %v235
      %v237 = vrot.slane %v232, %v236
      %vm239 = vcmask 64512
      %v241 = vsel %vm239, %v223, 0
      %v244 = vsel %vm239, %v224, 0
      %v247 = vsel %vm239, %v225, 0
      %v250 = vsel %vm239, %v226, 0
      %v253 = vsel %vm239, %v227, 0
      %v256 = vsel %vm239, %v228, 0
      %v259 = vsel %vm239, %v229, 0
      %v262 = vsel %vm239, %v230, 0
      %264 = vmatprep.subr.mxu0 0.0
      %265 = vmatpush1.msra.mxu0 0.0
      %266 = vmatprep.subr.mxu0 0.0
      %267 = vmatpush1.msra.mxu0 0.0
      %268 = vmatprep.subr.mxu0 0.0
      %269 = vmatpush1.msra.mxu0 0.0
      %270 = vmatprep.subr.mxu0 0.0
      %271 = vmatpush1.msra.mxu0 0.0
      %272 = vmatprep.subr.mxu0 0.0
      %273 = vmatpush1.msra.mxu0 0.0
      %274 = vmatprep.subr.mxu0 0.0
      %275 = vmatpush1.msra.mxu0 0.0
      %276 = vmatprep.subr.mxu0 0.0
      %277 = vmatpush1.msra.mxu0 0.0
      %278 = vmatprep.subr.mxu0 0.0
      %279 = vmatpush1.msra.mxu0 0.0
      %280 = vmatprep.subr.mxu0 0.0
      %281 = vmatpush1.msra.mxu0 0.0
      %282 = vmatprep.subr.mxu0 0.0
      %283 = vmatpush1.msra.mxu0 0.0
      %284 = vmatprep.subr.mxu0 0.0
      %285 = vmatpush1.msra.mxu0 0.0
      %286 = vmatprep.subr.mxu0 0.0
      %287 = vmatpush1.msra.mxu0 0.0
      %288 = vmatprep.subr.mxu0 0.0
      %289 = vmatpush1.msra.mxu0 0.0
      %290 = vmatprep.subr.mxu0 0.0
      %291 = vmatpush1.msra.mxu0 0.0
      %292 = vmatprep.subr.mxu0 0.0
      %293 = vmatpush1.msra.mxu0 0.0
      %294 = vmatprep.subr.mxu0 0.0
      %295 = vmatpush1.msra.mxu0 %v231
      %296 = vmatprep.subr.mxu0 0.0
      %297 = vmatpush2.msra.mxu0 0.0
      %298 = vmatprep.subr.mxu0 0.0
      %299 = vmatpush2.msra.mxu0 0.0
      %300 = vmatprep.subr.mxu0 0.0
      %301 = vmatpush2.msra.mxu0 0.0
      %302 = vmatprep.subr.mxu0 0.0
      %303 = vmatpush2.msra.mxu0 0.0
      %304 = vmatprep.subr.mxu0 0.0
      %305 = vmatpush2.msra.mxu0 0.0
      %306 = vmatprep.subr.mxu0 0.0
      %307 = vmatpush2.msra.mxu0 0.0
      %308 = vmatprep.subr.mxu0 0.0
      %309 = vmatpush2.msra.mxu0 0.0
      %310 = vmatprep.subr.mxu0 0.0
      %311 = vmatpush2.msra.mxu0 0.0
      %312 = vmatprep.subr.mxu0 0.0
      %313 = vmatpush2.msra.mxu0 0.0
      %314 = vmatprep.subr.mxu0 0.0
      %315 = vmatpush2.msra.mxu0 0.0
      %316 = vmatprep.subr.mxu0 0.0
      %317 = vmatpush2.msra.mxu0 0.0
      %318 = vmatprep.subr.mxu0 0.0
      %319 = vmatpush2.msra.mxu0 0.0
      %320 = vmatprep.subr.mxu0 0.0
      %321 = vmatpush2.msra.mxu0 0.0
      %322 = vmatprep.subr.mxu0 0.0
      %323 = vmatpush2.msra.mxu0 0.0
      %324 = vmatprep.subr.mxu0 0.0
      %325 = vmatpush2.msra.mxu0 0.0
      %326 = vmatprep.subr.mxu0 0.0
      %327 = vmatpush2.msra.mxu0 0.0
      %328 = vmatprep.mubr.f32.mxu0 0.0
      %329 = vmatmul.mubr.f32.gmra.mxu0 %v241
      %v330 = vpop.f32.mrf.mxu0
      %v331 = vadd.f32 %v237, %v330
      %v332 = vpop.f32.mrf.mxu0
      %333 = vmatprep.mubr.f32.mxu0 0.0
      %334 = vmatmul.mubr.f32.gmra.mxu0 %v244
      %v335 = vpop.f32.mrf.mxu0
      %v336 = vadd.f32 %v237, %v335
      %v337 = vpop.f32.mrf.mxu0
      %338 = vmatprep.mubr.f32.mxu0 0.0
      %339 = vmatmul.mubr.f32.gmra.mxu0 %v247
      %v340 = vpop.f32.mrf.mxu0
      %v341 = vadd.f32 %v237, %v340
      %v342 = vpop.f32.mrf.mxu0
      %343 = vmatprep.mubr.f32.mxu0 0.0
      %344 = vmatmul.mubr.f32.gmra.mxu0 %v250
      %v345 = vpop.f32.mrf.mxu0
      %v346 = vadd.f32 %v237, %v345
      %v347 = vpop.f32.mrf.mxu0
      %348 = vmatprep.mubr.f32.mxu0 0.0
      %349 = vmatmul.mubr.f32.gmra.mxu0 %v253
      %v350 = vpop.f32.mrf.mxu0
      %v351 = vadd.f32 %v237, %v350
      %v352 = vpop.f32.mrf.mxu0
      %353 = vmatprep.mubr.f32.mxu0 0.0
      %354 = vmatmul.mubr.f32.gmra.mxu0 %v256
      %v355 = vpop.f32.mrf.mxu0
      %v356 = vadd.f32 %v237, %v355
      %v357 = vpop.f32.mrf.mxu0
      %358 = vmatprep.mubr.f32.mxu0 0.0
      %359 = vmatmul.mubr.f32.gmra.mxu0 %v259
      %v360 = vpop.f32.mrf.mxu0
      %v361 = vadd.f32 %v237, %v360
      %v362 = vpop.f32.mrf.mxu0
      %363 = vmatprep.mubr.f32.mxu0 0.0
      %364 = vmatmul.mubr.f32.gmra.mxu0 %v262
      %v365 = vpop.f32.mrf.mxu0
      %v366 = vadd.f32 %v237, %v365
      %v367 = vpop.f32.mrf.mxu0
      %368 = vdwg.mxu0
      %v369 = vld [vmem:[%s215] sm:$0xff]
      %v370 = vld [vmem:[%s215 + $0x8] sm:$0xff]
      %v371 = vld [vmem:[%s215 + $0x10] sm:$0xff]
      %v372 = vld [vmem:[%s215 + $0x18] sm:$0xff]
      %v373 = vld [vmem:[%s215 + $0x20] sm:$0xff]
      %v374 = vld [vmem:[%s215 + $0x28] sm:$0xff]
      %v375 = vld [vmem:[%s215 + $0x30] sm:$0xff]
      %v376 = vld [vmem:[%s215 + $0x38] sm:$0xff]
      %v377 = vadd.f32 %v331, %v369
      %v378 = vadd.f32 %v336, %v370
      %v379 = vadd.f32 %v341, %v371
      %v380 = vadd.f32 %v346, %v372
      %v381 = vadd.f32 %v351, %v373
      %v382 = vadd.f32 %v356, %v374
      %v383 = vadd.f32 %v361, %v375
      %v384 = vadd.f32 %v366, %v376
      %385 = vst.msk [vmem:[%s221] sm:$0xff] %vm239, %v377
      %386 = vst.msk [vmem:[%s221 + $0x8] sm:$0xff] %vm239, %v378
      %387 = vst.msk [vmem:[%s221 + $0x10] sm:$0xff] %vm239, %v379
      %388 = vst.msk [vmem:[%s221 + $0x18] sm:$0xff] %vm239, %v380
      %389 = vst.msk [vmem:[%s221 + $0x20] sm:$0xff] %vm239, %v381
      %390 = vst.msk [vmem:[%s221 + $0x28] sm:$0xff] %vm239, %v382
      %391 = vst.msk [vmem:[%s221 + $0x30] sm:$0xff] %vm239, %v383
      %392 = vst.msk [vmem:[%s221 + $0x38] sm:$0xff] %vm239, %v384
      %s393 = smul.u32 8, %s15
      %p394 = scmp.lt.s32.totalorder %s393, 15
      %s395 = scalar_select %p394, %s393, 15
      %s396 = smul.addr %s395, 8
      %s397 = scalar_lea.vmem %s4, %s396
      // Predicated region
      $region37: #{rsab_forward.15} parent=35 // pred_check
        %p398 = pneg %p127
      $region38: #{rsab_forward.15} parent=35 // pred_check_branch
        %400 = sbr.rel (%p398) target = $region40
      $region39: #{rsab_forward.15} parent=35 // pred_region
        %s401 = smul.u32 8, %s15
      $region40: #{rsab_forward.15} parent=35 // pred_fallthru
        _
    $region36: #{rsab_forward.15} parent=5 // pred_fallthru
      _
    %p402 = scmp.le.s32.totalorder 2, %s10
    // Predicated region
    $region41: #{rsab_forward.15} parent=5 // pred_check
      %p403 = pneg %p402
    $region42: #{rsab_forward.15} parent=5 // pred_check_branch
      %405 = sbr.rel (%p403) target = $region44
    $region43: #{rsab_forward.15} parent=5 // pred_region
      %s406 = ssub.s32 %s10, 2
      // Predicated region
      $region45: #{rsab_forward.15} parent=43 // pred_check
        %p407 = pneg %p133
      $region46: #{rsab_forward.15} parent=43 // pred_check_branch
        %409 = sbr.rel (%p407) target = $region48
      $region47: #{rsab_forward.15} parent=43 // pred_region
        %s410 = smul.u32 8, %s16
        %p411 = scmp.lt.s32.totalorder %s410, 15
        %s412 = scalar_select %p411, %s410, 15
        %s413 = smul.addr %s412, 8
        %s414 = scalar_lea.vmem %s4, %s413
      $region48: #{rsab_forward.15} parent=43 // pred_fallthru
        _
    $region44: #{rsab_forward.15} parent=5 // pred_fallthru
      _
  $region6: #{rsab_forward.15} parent=0 // loop_footer
    %s14 = sadd.s32 1, %s10
  $region7: #{rsab_forward.15} parent=0 // loop_footer_branch
    %9 = sbr.rel target = $region3
  $region8: #{rsab_forward.15} parent=0 // loop_exit
    _

// kernel: rsab_forward.14
$region0: #{rsab_forward.14}
  #allocation0 [shape = 'u32[]', space=smem, size = 0x4, offset = 0x4, fixed_abs, tag = 'smem constant byte address 0x4 - core index']
  #allocation1 [shape = 'u32[144,128]{1,0:T(1,128)}', space=vmem, size = 0x12000, scoped, tag = 'internal scratch']
  %s0 = inlined_call_operand.vmem [shape: f32[4,4,2,4,24], index: 0, kind: input, shape index: {}]
  %s1 = inlined_call_operand.vmem [shape: f32[4,4,2,4,16], index: 1, kind: input, shape index: {}]
  %s2 = inlined_call_operand.vmem [shape: f32[4,4,2,4,8], index: 2, kind: output, shape index: {}]
  %s3 = sld [smem:[#allocation0]]
  $region160: #{rsab_forward.14} parent=0
    _
  %s5 = ssub.s32 1, %s3
  %s6 = scalar_select 0, %s5, %s3
  $region1: #{rsab_forward.14} parent=0
    #allocation2 [shape = 'u8[16384]{0}', space=vmem, size = 0x4000, scoped, tag = 'input window, operand 0']
    #allocation3 [shape = 'u8[16384]{0}', space=vmem, size = 0x4000, scoped, tag = 'input window, operand 1']
    #allocation4 [shape = 'u8[16384]{0}', space=vmem, size = 0x4000, scoped, tag = 'output window, operand 0']
    loop: start=0, step=1, limit=10
    $region2: #{rsab_forward.14} parent=1 // loop_pre_header
      _
    $region3: #{rsab_forward.14} parent=1 // loop_header
      %s8 = sphi 0, %s12
      %p9 = scmp.ge.s32.totalorder %s8, 10
      %s15 = sphi 0, %s27
      %s16 = sphi 0, %s23
      %s17 = sphi 0, %s15
      %s18 = sphi 0, %s16
      %s19 = sphi 0, %s17
      %s20 = sphi 0, %s18
      %s32 = sphi 0, %s34
      %s35 = sphi 0, %s32
      %s36 = sphi 0, %s35
      %s52 = sphi 0, %s36
      %s60 = sphi 0, %s62
      %s63 = sphi 0, %s60
      %s64 = sphi 0, %s63
      %s80 = sphi 0, %s64
      %s88 = sphi 0, %s90
      %s91 = sphi 0, %s88
      %s92 = sphi 0, %s91
      %s108 = sphi 0, %s92
    $region4: #{rsab_forward.14} parent=1 // loop_header_branch
      %11 = sbr.rel (%p9) target = $region8
    $region5: #{rsab_forward.14} parent=1 // loop_body
      %s13 = ssub.s32 %s8, 1
      %s14 = ssub.s32 %s8, 2
      %s21 = sadd.s32 1, %s16
      %p22 = scmp.ge.s32.totalorder %s21, 2
      %s23 = scalar_select %p22, 0, %s21
      %s24 = sadd.s32 1, %s15
      %s25 = scalar_select %p22, %s24, %s15
      %p26 = scmp.ge.s32.totalorder %s25, 4
      %s27 = scalar_select %p26, 0, %s25
      %s28 = ssub.s32 %s15, %s27
      %s29 = ssub.s32 %s16, %s23
      %s30 = sor.u32 %s28, %s29
      %p31 = scmp.eq.s32.totalorder %s30, 0
      %s33 = sadd.s32 %s32, 1
      %s34 = scalar_select %p31, %s32, %s33
      %p37 = pneg %p31
      %p38 = scmp.eq.s32.totalorder %s8, 7
      %p39 = por %p37, %p38
      %p40 = scmp.ne.s32.totalorder %s32, %s35
      %p41 = scmp.eq.s32.totalorder %s8, 0
      %p42 = por %p40, %p41
      %p43 = scmp.ne.s32.totalorder %s32, %s35
      %p44 = scmp.eq.s32.totalorder %s13, 7
      %p45 = por %p43, %p44
      %p46 = scmp.ne.s32.totalorder %s35, %s36
      %p47 = scmp.eq.s32.totalorder %s13, 0
      %p48 = por %p46, %p47
      %p49 = scmp.ne.s32.totalorder %s35, %s36
      %p50 = scmp.eq.s32.totalorder %s14, 7
      %p51 = por %p49, %p50
      %p53 = scmp.ne.s32.totalorder %s36, %s52
      %p54 = scmp.eq.s32.totalorder %s14, 0
      %p55 = por %p53, %p54
      %s56 = ssub.s32 %s15, %s27
      %s57 = ssub.s32 %s16, %s23
      %s58 = sor.u32 %s56, %s57
      %p59 = scmp.eq.s32.totalorder %s58, 0
      %s61 = sadd.s32 %s60, 1
      %s62 = scalar_select %p59, %s60, %s61
      %p65 = pneg %p59
      %p66 = scmp.eq.s32.totalorder %s8, 7
      %p67 = por %p65, %p66
      %p68 = scmp.ne.s32.totalorder %s60, %s63
      %p69 = scmp.eq.s32.totalorder %s8, 0
      %p70 = por %p68, %p69
      %p71 = scmp.ne.s32.totalorder %s60, %s63
      %p72 = scmp.eq.s32.totalorder %s13, 7
      %p73 = por %p71, %p72
      %p74 = scmp.ne.s32.totalorder %s63, %s64
      %p75 = scmp.eq.s32.totalorder %s13, 0
      %p76 = por %p74, %p75
      %p77 = scmp.ne.s32.totalorder %s63, %s64
      %p78 = scmp.eq.s32.totalorder %s14, 7
      %p79 = por %p77, %p78
      %p81 = scmp.ne.s32.totalorder %s64, %s80
      %p82 = scmp.eq.s32.totalorder %s14, 0
      %p83 = por %p81, %p82
      %s84 = ssub.s32 %s15, %s27
      %s85 = ssub.s32 %s16, %s23
      %s86 = sor.u32 %s84, %s85
      %p87 = scmp.eq.s32.totalorder %s86, 0
      %s89 = sadd.s32 %s88, 1
      %s90 = scalar_select %p87, %s88, %s89
      %p93 = pneg %p87
      %p94 = scmp.eq.s32.totalorder %s8, 7
      %p95 = por %p93, %p94
      %p96 = scmp.ne.s32.totalorder %s88, %s91
      %p97 = scmp.eq.s32.totalorder %s8, 0
      %p98 = por %p96, %p97
      %p99 = scmp.ne.s32.totalorder %s88, %s91
      %p100 = scmp.eq.s32.totalorder %s13, 7
      %p101 = por %p99, %p100
      %p102 = scmp.ne.s32.totalorder %s91, %s92
      %p103 = scmp.eq.s32.totalorder %s13, 0
      %p104 = por %p102, %p103
      %p105 = scmp.ne.s32.totalorder %s91, %s92
      %p106 = scmp.eq.s32.totalorder %s14, 7
      %p107 = por %p105, %p106
      %p109 = scmp.ne.s32.totalorder %s92, %s108
      %p110 = scmp.eq.s32.totalorder %s14, 0
      %p111 = por %p109, %p110
      %p112 = scmp.le.s32.totalorder 1, %s8
      %p113 = scmp.lt.s32.totalorder %s8, 9
      %p114 = pnand %p112, %p113
      %p115 = pneg %p114
      // Predicated region
      $region9: #{rsab_forward.14} parent=5 // pred_check
        _
      $region10: #{rsab_forward.14} parent=5 // pred_check_branch
        %117 = sbr.rel (%p114) target = $region12
      $region11: #{rsab_forward.14} parent=5 // pred_region
        %s118 = ssub.s32 %s8, 1
      $region12: #{rsab_forward.14} parent=5 // pred_fallthru
        _
      %p119 = scmp.lt.s32.totalorder %s8, 8
      // Predicated region
      $region13: #{rsab_forward.14} parent=5 // pred_check
        %p120 = pneg %p119
      $region14: #{rsab_forward.14} parent=5 // pred_check_branch
        %122 = sbr.rel (%p120) target = $region16
      $region15: #{rsab_forward.14} parent=5 // pred_region
        // Predicated region
        $region17: #{rsab_forward.14} parent=15 // pred_check
          %p123 = pneg %p42
        $region18: #{rsab_forward.14} parent=15 // pred_check_branch
          %125 = sbr.rel (%p123) target = $region20
        $region19: #{rsab_forward.14} parent=15 // pred_region
          %s126 = sand.u32 %s32, 1
          %s127 = sand.u32 %s32, 1
          %s128 = smul.addr %s127, 16
          %s129 = scalar_lea.vmem [#allocation2], %s128
          %s130 = smul.addr %s15, 8
          %s131 = sadd.s32 %s16, %s130
          %s132 = smul.addr %s131, 4
          %s133 = scalar_lea.vmem %s0, %s132
          // Predicated region
          $region21: #{rsab_forward.14} parent=19 // pred_check
            _
          $region22: #{rsab_forward.14} parent=19 // pred_check_branch
            %135 = sbr.rel (0) target = $region24
          $region23: #{rsab_forward.14} parent=19 // pred_region
            // Predicated region
            $region25: #{rsab_forward.14} parent=23 // pred_check
              _
            $region26: #{rsab_forward.14} parent=23 // pred_check_branch
              %137 = sbr.rel target = $region28
            $region27: #{rsab_forward.14} parent=23 // pred_region
              // Predicated region
              $region40: #{rsab_forward.14} parent=27 // pred_check
                _
              $region41: #{rsab_forward.14} parent=27 // pred_check_branch
                %159 = sbr.rel (0) target = $region43
              $region42: #{rsab_forward.14} parent=27 // pred_region
                loop: start=0, step=1, limit=1
                $region44: #{rsab_forward.14} parent=42 // loop_pre_header
                  _
                $region45: #{rsab_forward.14} parent=42 // loop_header
                  %s161 = sphi 0, %s165
                  %p162 = scmp.ge.s32.totalorder %s161, 1
                  %s166 = sphi %s133, %s133
                  %s167 = sphi %s129, %s129
                $region46: #{rsab_forward.14} parent=42 // loop_header_branch
                  %164 = sbr.rel (%p162) target = $region50
                $region47: #{rsab_forward.14} parent=42 // loop_body
                  _
                $region48: #{rsab_forward.14} parent=42 // loop_footer
                  %s165 = sadd.s32 1, %s161
                $region49: #{rsab_forward.14} parent=42 // loop_footer_branch
                  %160 = sbr.rel target = $region45
                $region50: #{rsab_forward.14} parent=42 // loop_exit
                  _
                %s169 = ssub.s32 16, 1
                loop: start=0, step=1, limit=1
                $region51: #{rsab_forward.14} parent=42 // loop_pre_header
                  _
                $region52: #{rsab_forward.14} parent=42 // loop_header
                  %s171 = sphi 0, %s175
                  %p172 = scmp.ge.s32.totalorder %s171, 1
                  %s176 = sphi %s133, %s133
                  %s177 = sphi %s129, %s129
                $region53: #{rsab_forward.14} parent=42 // loop_header_branch
                  %174 = sbr.rel (%p172) target = $region57
                $region54: #{rsab_forward.14} parent=42 // loop_body
                  %v178 = vld [vmem:[%s176] sm:%s169]
                  %179 = vst [vmem:[%s177] sm:%s169] %v178
                  %v180 = vld [vmem:[%s176 + $0x8] sm:%s169]
                  %181 = vst [vmem:[%s177 + $0x4] sm:%s169] %v180
                  %v182 = vld [vmem:[%s176 + $0x10] sm:%s169]
                  %183 = vst [vmem:[%s177 + $0x8] sm:%s169] %v182
                  %v184 = vld [vmem:[%s176 + $0x18] sm:%s169]
                  %185 = vst [vmem:[%s177 + $0xc] sm:%s169] %v184
                $region55: #{rsab_forward.14} parent=42 // loop_footer
                  %s175 = sadd.s32 1, %s171
                $region56: #{rsab_forward.14} parent=42 // loop_footer_branch
                  %170 = sbr.rel target = $region52
                $region57: #{rsab_forward.14} parent=42 // loop_exit
                  _
              $region43: #{rsab_forward.14} parent=27 // pred_fallthru
                _
            $region28: #{rsab_forward.14} parent=23 // pred_fallthru
              _
            // Predicated region
            $region29: #{rsab_forward.14} parent=23 // pred_check
              _
            $region30: #{rsab_forward.14} parent=23 // pred_check_branch
              %139 = sbr.rel (0) target = $region32
            $region31: #{rsab_forward.14} parent=23 // pred_region
              %s141 = ssub.s32 16, 1
              loop: start=0, step=1, limit=1
              $region33: #{rsab_forward.14} parent=31 // loop_pre_header
                _
              $region34: #{rsab_forward.14} parent=31 // loop_header
                %s143 = sphi 0, %s147
                %p144 = scmp.ge.s32.totalorder %s143, 1
                %s148 = sphi %s133, %s133
                %s149 = sphi %s129, %s129
              $region35: #{rsab_forward.14} parent=31 // loop_header_branch
                %146 = sbr.rel (%p144) target = $region39
              $region36: #{rsab_forward.14} parent=31 // loop_body
                %v150 = vld [vmem:[%s148] sm:%s141]
                %151 = vst [vmem:[%s149] sm:%s141] %v150
                %v152 = vld [vmem:[%s148 + $0x8] sm:%s141]
                %153 = vst [vmem:[%s149 + $0x4] sm:%s141] %v152
                %v154 = vld [vmem:[%s148 + $0x10] sm:%s141]
                %155 = vst [vmem:[%s149 + $0x8] sm:%s141] %v154
                %v156 = vld [vmem:[%s148 + $0x18] sm:%s141]
                %157 = vst [vmem:[%s149 + $0xc] sm:%s141] %v156
              $region37: #{rsab_forward.14} parent=31 // loop_footer
                %s147 = sadd.s32 1, %s143
              $region38: #{rsab_forward.14} parent=31 // loop_footer_branch
                %142 = sbr.rel target = $region34
              $region39: #{rsab_forward.14} parent=31 // loop_exit
                _
            $region32: #{rsab_forward.14} parent=23 // pred_fallthru
              _
          $region24: #{rsab_forward.14} parent=19 // pred_fallthru
            _
          %186 = vnop
        $region20: #{rsab_forward.14} parent=15 // pred_fallthru
          _
        // Predicated region
        $region58: #{rsab_forward.14} parent=15 // pred_check
          %p187 = pneg %p70
        $region59: #{rsab_forward.14} parent=15 // pred_check_branch
          %189 = sbr.rel (%p187) target = $region61
        $region60: #{rsab_forward.14} parent=15 // pred_region
          %s190 = sand.u32 %s60, 1
          %s191 = sand.u32 %s60, 1
          %s192 = smul.addr %s191, 16
          %s193 = scalar_lea.vmem [#allocation3], %s192
          %s194 = smul.addr %s15, 8
          %s195 = sadd.s32 %s16, %s194
          %s196 = smul.addr %s195, 4
          %s197 = scalar_lea.vmem %s1, %s196
          // Predicated region
          $region62: #{rsab_forward.14} parent=60 // pred_check
            _
          $region63: #{rsab_forward.14} parent=60 // pred_check_branch
            %199 = sbr.rel (0) target = $region65
          $region64: #{rsab_forward.14} parent=60 // pred_region
            // Predicated region
            $region66: #{rsab_forward.14} parent=64 // pred_check
              _
            $region67: #{rsab_forward.14} parent=64 // pred_check_branch
              %201 = sbr.rel target = $region69
            $region68: #{rsab_forward.14} parent=64 // pred_region
              // Predicated region
              $region81: #{rsab_forward.14} parent=68 // pred_check
                _
              $region82: #{rsab_forward.14} parent=68 // pred_check_branch
                %223 = sbr.rel (0) target = $region84
              $region83: #{rsab_forward.14} parent=68 // pred_region
                loop: start=0, step=1, limit=1
                $region85: #{rsab_forward.14} parent=83 // loop_pre_header
                  _
                $region86: #{rsab_forward.14} parent=83 // loop_header
                  %s225 = sphi 0, %s229
                  %p226 = scmp.ge.s32.totalorder %s225, 1
                  %s230 = sphi %s197, %s197
                  %s231 = sphi %s193, %s193
                $region87: #{rsab_forward.14} parent=83 // loop_header_branch
                  %228 = sbr.rel (%p226) target = $region91
                $region88: #{rsab_forward.14} parent=83 // loop_body
                  _
                $region89: #{rsab_forward.14} parent=83 // loop_footer
                  %s229 = sadd.s32 1, %s225
                $region90: #{rsab_forward.14} parent=83 // loop_footer_branch
                  %224 = sbr.rel target = $region86
                $region91: #{rsab_forward.14} parent=83 // loop_exit
                  _
                %s233 = ssub.s32 16, 1
                loop: start=0, step=1, limit=1
                $region92: #{rsab_forward.14} parent=83 // loop_pre_header
                  _
                $region93: #{rsab_forward.14} parent=83 // loop_header
                  %s235 = sphi 0, %s239
                  %p236 = scmp.ge.s32.totalorder %s235, 1
                  %s240 = sphi %s197, %s197
                  %s241 = sphi %s193, %s193
                $region94: #{rsab_forward.14} parent=83 // loop_header_branch
                  %238 = sbr.rel (%p236) target = $region98
                $region95: #{rsab_forward.14} parent=83 // loop_body
                  %v242 = vld [vmem:[%s240] sm:%s233]
                  %243 = vst [vmem:[%s241] sm:%s233] %v242
                  %v244 = vld [vmem:[%s240 + $0x8] sm:%s233]
                  %245 = vst [vmem:[%s241 + $0x4] sm:%s233] %v244
                  %v246 = vld [vmem:[%s240 + $0x10] sm:%s233]
                  %247 = vst [vmem:[%s241 + $0x8] sm:%s233] %v246
                  %v248 = vld [vmem:[%s240 + $0x18] sm:%s233]
                  %249 = vst [vmem:[%s241 + $0xc] sm:%s233] %v248
                $region96: #{rsab_forward.14} parent=83 // loop_footer
                  %s239 = sadd.s32 1, %s235
                $region97: #{rsab_forward.14} parent=83 // loop_footer_branch
                  %234 = sbr.rel target = $region93
                $region98: #{rsab_forward.14} parent=83 // loop_exit
                  _
              $region84: #{rsab_forward.14} parent=68 // pred_fallthru
                _
            $region69: #{rsab_forward.14} parent=64 // pred_fallthru
              _
            // Predicated region
            $region70: #{rsab_forward.14} parent=64 // pred_check
              _
            $region71: #{rsab_forward.14} parent=64 // pred_check_branch
              %203 = sbr.rel (0) target = $region73
            $region72: #{rsab_forward.14} parent=64 // pred_region
              %s205 = ssub.s32 16, 1
              loop: start=0, step=1, limit=1
              $region74: #{rsab_forward.14} parent=72 // loop_pre_header
                _
              $region75: #{rsab_forward.14} parent=72 // loop_header
                %s207 = sphi 0, %s211
                %p208 = scmp.ge.s32.totalorder %s207, 1
                %s212 = sphi %s197, %s197
                %s213 = sphi %s193, %s193
              $region76: #{rsab_forward.14} parent=72 // loop_header_branch
                %210 = sbr.rel (%p208) target = $region80
              $region77: #{rsab_forward.14} parent=72 // loop_body
                %v214 = vld [vmem:[%s212] sm:%s205]
                %215 = vst [vmem:[%s213] sm:%s205] %v214
                %v216 = vld [vmem:[%s212 + $0x8] sm:%s205]
                %217 = vst [vmem:[%s213 + $0x4] sm:%s205] %v216
                %v218 = vld [vmem:[%s212 + $0x10] sm:%s205]
                %219 = vst [vmem:[%s213 + $0x8] sm:%s205] %v218
                %v220 = vld [vmem:[%s212 + $0x18] sm:%s205]
                %221 = vst [vmem:[%s213 + $0xc] sm:%s205] %v220
              $region78: #{rsab_forward.14} parent=72 // loop_footer
                %s211 = sadd.s32 1, %s207
              $region79: #{rsab_forward.14} parent=72 // loop_footer_branch
                %206 = sbr.rel target = $region75
              $region80: #{rsab_forward.14} parent=72 // loop_exit
                _
            $region73: #{rsab_forward.14} parent=64 // pred_fallthru
              _
          $region65: #{rsab_forward.14} parent=60 // pred_fallthru
            _
          %250 = vnop
        $region61: #{rsab_forward.14} parent=15 // pred_fallthru
          _
      $region16: #{rsab_forward.14} parent=5 // pred_fallthru
        _
      %p251 = scmp.le.s32.totalorder 1, %s8
      %p252 = scmp.lt.s32.totalorder %s8, 9
      %p253 = pnand %p251, %p252
      %p254 = pneg %p253
      // Predicated region
      $region99: #{rsab_forward.14} parent=5 // pred_check
        _
      $region100: #{rsab_forward.14} parent=5 // pred_check_branch
        %256 = sbr.rel (%p253) target = $region102
      $region101: #{rsab_forward.14} parent=5 // pred_region
        %s257 = ssub.s32 %s8, 1
        %s258 = sand.u32 %s35, 1
        %s259 = sand.u32 %s35, 1
        %s260 = smul.addr %s259, 16
        %s261 = scalar_lea.vmem [#allocation2], %s260
        // Predicated region
        $region103: #{rsab_forward.14} parent=101 // pred_check
          %p262 = pneg %p48
        $region104: #{rsab_forward.14} parent=101 // pred_check_branch
          %264 = sbr.rel (%p262) target = $region106
        $region105: #{rsab_forward.14} parent=101 // pred_region
          _
        $region106: #{rsab_forward.14} parent=101 // pred_fallthru
          _
        %s265 = sand.u32 %s63, 1
        %s266 = sand.u32 %s63, 1
        %s267 = smul.addr %s266, 16
        %s268 = scalar_lea.vmem [#allocation3], %s267
        // Predicated region
        $region107: #{rsab_forward.14} parent=101 // pred_check
          %p269 = pneg %p76
        $region108: #{rsab_forward.14} parent=101 // pred_check_branch
          %271 = sbr.rel (%p269) target = $region110
        $region109: #{rsab_forward.14} parent=101 // pred_region
          _
        $region110: #{rsab_forward.14} parent=101 // pred_fallthru
          _
        %s272 = sand.u32 %s35, 1
        %s273 = sand.u32 %s35, 1
        %s274 = smul.addr %s273, 16
        %s275 = scalar_lea.vmem [#allocation2], %s274
        %p276 = pneg %p48
        %p277 = pneg %p45
        %s278 = sand.u32 %s63, 1
        %s279 = sand.u32 %s63, 1
        %s280 = smul.addr %s279, 16
        %s281 = scalar_lea.vmem [#allocation3], %s280
        %p282 = pneg %p76
        %p283 = pneg %p73
        %p284 = pneg %p104
        %p285 = pneg %p101
        %s286 = sand.u32 %s91, 1
        %s287 = sand.u32 %s91, 1
        %s288 = smul.addr %s287, 16
        %s289 = scalar_lea.vmem [#allocation4], %s288
        %v290 = vld [vmem:[%s261] sm:$0xf]
        %v291 = vld [vmem:[%s261 + $0x4] sm:$0xf]
        %v292 = vld [vmem:[%s261 + $0x8] sm:$0xf]
        %v293 = vld [vmem:[%s261 + $0xc] sm:$0xf]
        %v294 = vld [vmem:[%s268] sm:$0xf]
        %v295 = vld [vmem:[%s268 + $0x4] sm:$0xf]
        %v296 = vld [vmem:[%s268 + $0x8] sm:$0xf]
        %v297 = vld [vmem:[%s268 + $0xc] sm:$0xf]
        %v302 = vcombine.low %v290, %v291
        %v303 = vcombine.low %v292, %v293
        %v308 = vcombine.low %v294, %v295
        %v309 = vcombine.low %v296, %v297
        %310 = vrot.lane.b32.xlu0 %v308, 8
        %v311 = vpop.permute.xlu0 %310
        %312 = vrot.lane.b32.xlu0 %v309, 8
        %v313 = vpop.permute.xlu0 %312
        %314 = vrot.lane.b32.xlu0 %v302, 120
        %v315 = vpop.permute.xlu0 %314
        %316 = vrot.lane.b32.xlu0 %v303, 120
        %v317 = vpop.permute.xlu0 %316
        %318 = vrot.lane.b32.xlu0 %v311, 120
        %v319 = vpop.permute.xlu0 %318
        %320 = vrot.lane.b32.xlu0 %v313, 120
        %v321 = vpop.permute.xlu0 %320
        %vm322 = vcmask 31744
        %v323 = vsel %vm322, %v302, 0
        %v325 = vsel %vm322, %v303, 0
        %v327 = vsel %vm322, %v315, 0
        %v329 = vsel %vm322, %v317, 0
        %v331 = vsel %vm322, %v319, 0
        %v333 = vsel %vm322, %v321, 0
        %335 = vmatprep.subr.mxu0 0.0
        %336 = vmatpush1.xpose.msra.mxu0 0.0
        %337 = vmatprep.subr.mxu0 0.0
        %338 = vmatpush1.xpose.msra.mxu0 0.0
        %339 = vmatprep.subr.mxu0 0.0
        %340 = vmatpush1.xpose.msra.mxu0 0.0
        %341 = vmatprep.subr.mxu0 0.0
        %342 = vmatpush1.xpose.msra.mxu0 0.0
        %343 = vmatprep.subr.mxu0 0.0
        %344 = vmatpush1.xpose.msra.mxu0 0.0
        %345 = vmatprep.subr.mxu0 0.0
        %346 = vmatpush1.xpose.msra.mxu0 0.0
        %347 = vmatprep.subr.mxu0 0.0
        %348 = vmatpush1.xpose.msra.mxu0 0.0
        %349 = vmatprep.subr.mxu0 0.0
        %350 = vmatpush1.xpose.msra.mxu0 0.0
        %351 = vmatprep.subr.mxu0 0.0
        %352 = vmatpush1.xpose.msra.mxu0 0.0
        %353 = vmatprep.subr.mxu0 0.0
        %354 = vmatpush1.xpose.msra.mxu0 0.0
        %355 = vmatprep.subr.mxu0 0.0
        %356 = vmatpush1.xpose.msra.mxu0 0.0
        %357 = vmatprep.subr.mxu0 0.0
        %358 = vmatpush1.xpose.msra.mxu0 0.0
        %359 = vmatprep.subr.mxu0 0.0
        %360 = vmatpush1.xpose.msra.mxu0 %v333
        %361 = vmatprep.subr.mxu0 0.0
        %362 = vmatpush1.xpose.msra.mxu0 %v331
        %363 = vmatprep.subr.mxu0 0.0
        %364 = vmatpush1.xpose.msra.mxu0 %v329
        %365 = vmatprep.subr.mxu0 0.0
        %366 = vmatpush1.xpose.msra.mxu0 %v327
        %367 = vmatprep.subr.mxu0 0.0
        %368 = vmatpush2.xpose.msra.mxu0 0.0
        %369 = vmatprep.subr.mxu0 0.0
        %370 = vmatpush2.xpose.msra.mxu0 0.0
        %371 = vmatprep.subr.mxu0 0.0
        %372 = vmatpush2.xpose.msra.mxu0 0.0
        %373 = vmatprep.subr.mxu0 0.0
        %374 = vmatpush2.xpose.msra.mxu0 0.0
        %375 = vmatprep.subr.mxu0 0.0
        %376 = vmatpush2.xpose.msra.mxu0 0.0
        %377 = vmatprep.subr.mxu0 0.0
        %378 = vmatpush2.xpose.msra.mxu0 0.0
        %379 = vmatprep.subr.mxu0 0.0
        %380 = vmatpush2.xpose.msra.mxu0 0.0
        %381 = vmatprep.subr.mxu0 0.0
        %382 = vmatpush2.xpose.msra.mxu0 0.0
        %383 = vmatprep.subr.mxu0 0.0
        %384 = vmatpush2.xpose.msra.mxu0 0.0
        %385 = vmatprep.subr.mxu0 0.0
        %386 = vmatpush2.xpose.msra.mxu0 0.0
        %387 = vmatprep.subr.mxu0 0.0
        %388 = vmatpush2.xpose.msra.mxu0 0.0
        %389 = vmatprep.subr.mxu0 0.0
        %390 = vmatpush2.xpose.msra.mxu0 0.0
        %391 = vmatprep.subr.mxu0 0.0
        %392 = vmatpush2.xpose.msra.mxu0 0.0
        %393 = vmatprep.subr.mxu0 0.0
        %394 = vmatpush2.xpose.msra.mxu0 0.0
        %395 = vmatprep.subr.mxu0 0.0
        %396 = vmatpush2.xpose.msra.mxu0 0.0
        %397 = vmatprep.subr.mxu0 0.0
        %398 = vmatpush2.xpose.msra.mxu0 0.0
        %399 = vmatprep.mubr.f32.mxu0 0.0
        %400 = vmatmul.mubr.f32.gmra.mxu0 %v323
        %v401 = vpop.f32.mrf.mxu0
        %v402 = vadd.f32 0.0, %v401
        %v403 = vpop.f32.mrf.mxu0
        %404 = vmatprep.mubr.f32.mxu0 0.0
        %405 = vmatmul.mubr.f32.gmra.mxu0 %v325
        %v406 = vpop.f32.mrf.mxu0
        %v407 = vadd.f32 0.0, %v406
        %v408 = vpop.f32.mrf.mxu0
        %409 = vdwg.mxu0
        %v410 = vmul.f32 %v402, 0.5
        %v411 = vmul.f32 %v407, 0.5
        %vm412 = vcmask 261120
        %v413 = vsel %vm412, %v410, -inf
        %414 = vmax.xlane.f32.xlu0 %v413
        %v415 = vpop.xlane.xlu0 %414
        %v416 = vsel %vm412, %v411, -inf
        %417 = vmax.xlane.f32.xlu0 %v416
        %v418 = vpop.xlane.xlu0 %417
        %v419 = vsub.f32 %v410, %v415
        %v420 = vsub.f32 %v411, %v418
        %v421 = vmul.f32 %v419, 1.442695
        %v422 = vpow.pop %v421
        %v423 = vmul.f32 %v420, 1.442695
        %v424 = vpow.pop %v423
        %v425 = vsel %vm412, %v422, 0.0
        %426 = vadd.xlane.f32.xlu0 %v425
        %v427 = vpop.xlane.xlu0 %426
        %v428 = vsel %vm412, %v424, 0.0
        %429 = vadd.xlane.f32.xlu0 %v428
        %v430 = vpop.xlane.xlu0 %429
        %v431 = vrcp.pop %v427
        %v432 = vrcp.pop %v430
        %v433 = vmul.f32 %v422, %v431
        %v434 = vmul.f32 %v424, %v432
        %435 = vrot.lane.b32.xlu0 %v302, 112
        %v436 = vpop.permute.xlu0 %435
        %437 = vrot.lane.b32.xlu0 %v303, 112
        %v438 = vpop.permute.xlu0 %437
        %439 = vrot.lane.b32.xlu0 %v311, 112
        %v440 = vpop.permute.xlu0 %439
        %441 = vrot.lane.b32.xlu0 %v313, 112
        %v442 = vpop.permute.xlu0 %441
        %v448 = vsel %vm412, %v433, 0
        %v451 = vsel %vm412, %v434, 0
        %453 = vmatprep.subr.mxu0 0.0
        %454 = vmatpush1.msra.mxu0 0.0
        %455 = vmatprep.subr.mxu0 0.0
        %456 = vmatpush1.msra.mxu0 0.0
        %457 = vmatprep.subr.mxu0 0.0
        %458 = vmatpush1.msra.mxu0 0.0
        %459 = vmatprep.subr.mxu0 0.0
        %460 = vmatpush1.msra.mxu0 0.0
        %461 = vmatprep.subr.mxu0 0.0
        %462 = vmatpush1.msra.mxu0 0.0
        %463 = vmatprep.subr.mxu0 0.0
        %464 = vmatpush1.msra.mxu0 0.0
        %465 = vmatprep.subr.mxu0 0.0
        %466 = vmatpush1.msra.mxu0 0.0
        %467 = vmatprep.subr.mxu0 0.0
        %468 = vmatpush1.msra.mxu0 0.0
        %469 = vmatprep.subr.mxu0 0.0
        %470 = vmatpush1.msra.mxu0 0.0
        %471 = vmatprep.subr.mxu0 0.0
        %472 = vmatpush1.msra.mxu0 0.0
        %473 = vmatprep.subr.mxu0 0.0
        %474 = vmatpush1.msra.mxu0 0.0
        %475 = vmatprep.subr.mxu0 0.0
        %476 = vmatpush1.msra.mxu0 0.0
        %477 = vmatprep.subr.mxu0 0.0
        %478 = vmatpush1.msra.mxu0 %v442
        %479 = vmatprep.subr.mxu0 0.0
        %480 = vmatpush1.msra.mxu0 %v440
        %481 = vmatprep.subr.mxu0 0.0
        %482 = vmatpush1.msra.mxu0 %v438
        %483 = vmatprep.subr.mxu0 0.0
        %484 = vmatpush1.msra.mxu0 %v436
        %485 = vmatprep.subr.mxu0 0.0
        %486 = vmatpush2.msra.mxu0 0.0
        %487 = vmatprep.subr.mxu0 0.0
        %488 = vmatpush2.msra.mxu0 0.0
        %489 = vmatprep.subr.mxu0 0.0
        %490 = vmatpush2.msra.mxu0 0.0
        %491 = vmatprep.subr.mxu0 0.0
        %492 = vmatpush2.msra.mxu0 0.0
        %493 = vmatprep.subr.mxu0 0.0
        %494 = vmatpush2.msra.mxu0 0.0
        %495 = vmatprep.subr.mxu0 0.0
        %496 = vmatpush2.msra.mxu0 0.0
        %497 = vmatprep.subr.mxu0 0.0
        %498 = vmatpush2.msra.mxu0 0.0
        %499 = vmatprep.subr.mxu0 0.0
        %500 = vmatpush2.msra.mxu0 0.0
        %501 = vmatprep.subr.mxu0 0.0
        %502 = vmatpush2.msra.mxu0 0.0
        %503 = vmatprep.subr.mxu0 0.0
        %504 = vmatpush2.msra.mxu0 0.0
        %505 = vmatprep.subr.mxu0 0.0
        %506 = vmatpush2.msra.mxu0 0.0
        %507 = vmatprep.subr.mxu0 0.0
        %508 = vmatpush2.msra.mxu0 0.0
        %509 = vmatprep.subr.mxu0 0.0
        %510 = vmatpush2.msra.mxu0 0.0
        %511 = vmatprep.subr.mxu0 0.0
        %512 = vmatpush2.msra.mxu0 0.0
        %513 = vmatprep.subr.mxu0 0.0
        %514 = vmatpush2.msra.mxu0 0.0
        %515 = vmatprep.subr.mxu0 0.0
        %516 = vmatpush2.msra.mxu0 0.0
        %517 = vmatprep.mubr.f32.mxu0 0.0
        %518 = vmatmul.mubr.f32.gmra.mxu0 %v448
        %v519 = vpop.f32.mrf.mxu0
        %v520 = vadd.f32 0.0, %v519
        %v521 = vpop.f32.mrf.mxu0
        %522 = vmatprep.mubr.f32.mxu0 0.0
        %523 = vmatmul.mubr.f32.gmra.mxu0 %v451
        %v524 = vpop.f32.mrf.mxu0
        %v525 = vadd.f32 0.0, %v524
        %v526 = vpop.f32.mrf.mxu0
        %527 = vdwg.mxu0
        %528 = vrot.lane.b32.xlu0 %v302, 124
        %v529 = vpop.permute.xlu0 %528
        %530 = vrot.lane.b32.xlu0 %v303, 124
        %v531 = vpop.permute.xlu0 %530
        %532 = vrot.lane.b32.xlu0 %v302, 116
        %v533 = vpop.permute.xlu0 %532
        %534 = vrot.lane.b32.xlu0 %v303, 116
        %v535 = vpop.permute.xlu0 %534
        %536 = vrot.lane.b32.xlu0 %v311, 116
        %v537 = vpop.permute.xlu0 %536
        %538 = vrot.lane.b32.xlu0 %v313, 116
        %v539 = vpop.permute.xlu0 %538
        %v540 = vsel %vm322, %v529, 0
        %v542 = vsel %vm322, %v531, 0
        %v544 = vsel %vm322, %v533, 0
        %v546 = vsel %vm322, %v535, 0
        %v548 = vsel %vm322, %v537, 0
        %v550 = vsel %vm322, %v539, 0
        %552 = vmatprep.subr.mxu0 0.0
        %553 = vmatpush1.xpose.msra.mxu0 0.0
        %554 = vmatprep.subr.mxu0 0.0
        %555 = vmatpush1.xpose.msra.mxu0 0.0
        %556 = vmatprep.subr.mxu0 0.0
        %557 = vmatpush1.xpose.msra.mxu0 0.0
        %558 = vmatprep.subr.mxu0 0.0
        %559 = vmatpush1.xpose.msra.mxu0 0.0
        %560 = vmatprep.subr.mxu0 0.0
        %561 = vmatpush1.xpose.msra.mxu0 0.0
        %562 = vmatprep.subr.mxu0 0.0
        %563 = vmatpush1.xpose.msra.mxu0 0.0
        %564 = vmatprep.subr.mxu0 0.0
        %565 = vmatpush1.xpose.msra.mxu0 0.0
        %566 = vmatprep.subr.mxu0 0.0
        %567 = vmatpush1.xpose.msra.mxu0 0.0
        %568 = vmatprep.subr.mxu0 0.0
        %569 = vmatpush1.xpose.msra.mxu0 0.0
        %570 = vmatprep.subr.mxu0 0.0
        %571 = vmatpush1.xpose.msra.mxu0 0.0
        %572 = vmatprep.subr.mxu0 0.0
        %573 = vmatpush1.xpose.msra.mxu0 0.0
        %574 = vmatprep.subr.mxu0 0.0
        %575 = vmatpush1.xpose.msra.mxu0 0.0
        %576 = vmatprep.subr.mxu0 0.0
        %577 = vmatpush1.xpose.msra.mxu0 %v550
        %578 = vmatprep.subr.mxu0 0.0
        %579 = vmatpush1.xpose.msra.mxu0 %v548
        %580 = vmatprep.subr.mxu0 0.0
        %581 = vmatpush1.xpose.msra.mxu0 %v546
        %582 = vmatprep.subr.mxu0 0.0
        %583 = vmatpush1.xpose.msra.mxu0 %v544
        %584 = vmatprep.subr.mxu0 0.0
        %585 = vmatpush2.xpose.msra.mxu0 0.0
        %586 = vmatprep.subr.mxu0 0.0
        %587 = vmatpush2.xpose.msra.mxu0 0.0
        %588 = vmatprep.subr.mxu0 0.0
        %589 = vmatpush2.xpose.msra.mxu0 0.0
        %590 = vmatprep.subr.mxu0 0.0
        %591 = vmatpush2.xpose.msra.mxu0 0.0
        %592 = vmatprep.subr.mxu0 0.0
        %593 = vmatpush2.xpose.msra.mxu0 0.0
        %594 = vmatprep.subr.mxu0 0.0
        %595 = vmatpush2.xpose.msra.mxu0 0.0
        %596 = vmatprep.subr.mxu0 0.0
        %597 = vmatpush2.xpose.msra.mxu0 0.0
        %598 = vmatprep.subr.mxu0 0.0
        %599 = vmatpush2.xpose.msra.mxu0 0.0
        %600 = vmatprep.subr.mxu0 0.0
        %601 = vmatpush2.xpose.msra.mxu0 0.0
        %602 = vmatprep.subr.mxu0 0.0
        %603 = vmatpush2.xpose.msra.mxu0 0.0
        %604 = vmatprep.subr.mxu0 0.0
        %605 = vmatpush2.xpose.msra.mxu0 0.0
        %606 = vmatprep.subr.mxu0 0.0
        %607 = vmatpush2.xpose.msra.mxu0 0.0
        %608 = vmatprep.subr.mxu0 0.0
        %609 = vmatpush2.xpose.msra.mxu0 0.0
        %610 = vmatprep.subr.mxu0 0.0
        %611 = vmatpush2.xpose.msra.mxu0 0.0
        %612 = vmatprep.subr.mxu0 0.0
        %613 = vmatpush2.xpose.msra.mxu0 0.0
        %614 = vmatprep.subr.mxu0 0.0
        %615 = vmatpush2.xpose.msra.mxu0 0.0
        %616 = vmatprep.mubr.f32.mxu0 0.0
        %617 = vmatmul.mubr.f32.gmra.mxu0 %v540
        %v618 = vpop.f32.mrf.mxu0
        %v619 = vadd.f32 0.0, %v618
        %v620 = vpop.f32.mrf.mxu0
        %621 = vmatprep.mubr.f32.mxu0 0.0
        %622 = vmatmul.mubr.f32.gmra.mxu0 %v542
        %v623 = vpop.f32.mrf.mxu0
        %v624 = vadd.f32 0.0, %v623
        %v625 = vpop.f32.mrf.mxu0
        %626 = vdwg.mxu0
        %v627 = vmul.f32 %v619, 0.5
        %v628 = vmul.f32 %v624, 0.5
        %v629 = vsel %vm412, %v627, -inf
        %630 = vmax.xlane.f32.xlu0 %v629
        %v631 = vpop.xlane.xlu0 %630
        %v632 = vsel %vm412, %v628, -inf
        %633 = vmax.xlane.f32.xlu0 %v632
        %v634 = vpop.xlane.xlu0 %633
        %v635 = vsub.f32 %v627, %v631
        %v636 = vsub.f32 %v628, %v634
        %v637 = vmul.f32 %v635, 1.442695
        %v638 = vpow.pop %v637
        %v639 = vmul.f32 %v636, 1.442695
        %v640 = vpow.pop %v639
        %v641 = vsel %vm412, %v638, 0.0
        %642 = vadd.xlane.f32.xlu0 %v641
        %v643 = vpop.xlane.xlu0 %642
        %v644 = vsel %vm412, %v640, 0.0
        %645 = vadd.xlane.f32.xlu0 %v644
        %v646 = vpop.xlane.xlu0 %645
        %v647 = vrcp.pop %v643
        %v648 = vrcp.pop %v646
        %v649 = vmul.f32 %v638, %v647
        %v650 = vmul.f32 %v640, %v648
        %651 = vrot.lane.b32.xlu0 %v302, 108
        %v652 = vpop.permute.xlu0 %651
        %653 = vrot.lane.b32.xlu0 %v303, 108
        %v654 = vpop.permute.xlu0 %653
        %655 = vrot.lane.b32.xlu0 %v311, 108
        %v656 = vpop.permute.xlu0 %655
        %657 = vrot.lane.b32.xlu0 %v313, 108
        %v658 = vpop.permute.xlu0 %657
        %v664 = vsel %vm412, %v649, 0
        %v667 = vsel %vm412, %v650, 0
        %669 = vmatprep.subr.mxu0 0.0
        %670 = vmatpush1.msra.mxu0 0.0
        %671 = vmatprep.subr.mxu0 0.0
        %672 = vmatpush1.msra.mxu0 0.0
        %673 = vmatprep.subr.mxu0 0.0
        %674 = vmatpush1.msra.mxu0 0.0
        %675 = vmatprep.subr.mxu0 0.0
        %676 = vmatpush1.msra.mxu0 0.0
        %677 = vmatprep.subr.mxu0 0.0
        %678 = vmatpush1.msra.mxu0 0.0
        %679 = vmatprep.subr.mxu0 0.0
        %680 = vmatpush1.msra.mxu0 0.0
        %681 = vmatprep.subr.mxu0 0.0
        %682 = vmatpush1.msra.mxu0 0.0
        %683 = vmatprep.subr.mxu0 0.0
        %684 = vmatpush1.msra.mxu0 0.0
        %685 = vmatprep.subr.mxu0 0.0
        %686 = vmatpush1.msra.mxu0 0.0
        %687 = vmatprep.subr.mxu0 0.0
        %688 = vmatpush1.msra.mxu0 0.0
        %689 = vmatprep.subr.mxu0 0.0
        %690 = vmatpush1.msra.mxu0 0.0
        %691 = vmatprep.subr.mxu0 0.0
        %692 = vmatpush1.msra.mxu0 0.0
        %693 = vmatprep.subr.mxu0 0.0
        %694 = vmatpush1.msra.mxu0 %v658
        %695 = vmatprep.subr.mxu0 0.0
        %696 = vmatpush1.msra.mxu0 %v656
        %697 = vmatprep.subr.mxu0 0.0
        %698 = vmatpush1.msra.mxu0 %v654
        %699 = vmatprep.subr.mxu0 0.0
        %700 = vmatpush1.msra.mxu0 %v652
        %701 = vmatprep.subr.mxu0 0.0
        %702 = vmatpush2.msra.mxu0 0.0
        %703 = vmatprep.subr.mxu0 0.0
        %704 = vmatpush2.msra.mxu0 0.0
        %705 = vmatprep.subr.mxu0 0.0
        %706 = vmatpush2.msra.mxu0 0.0
        %707 = vmatprep.subr.mxu0 0.0
        %708 = vmatpush2.msra.mxu0 0.0
        %709 = vmatprep.subr.mxu0 0.0
        %710 = vmatpush2.msra.mxu0 0.0
        %711 = vmatprep.subr.mxu0 0.0
        %712 = vmatpush2.msra.mxu0 0.0
        %713 = vmatprep.subr.mxu0 0.0
        %714 = vmatpush2.msra.mxu0 0.0
        %715 = vmatprep.subr.mxu0 0.0
        %716 = vmatpush2.msra.mxu0 0.0
        %717 = vmatprep.subr.mxu0 0.0
        %718 = vmatpush2.msra.mxu0 0.0
        %719 = vmatprep.subr.mxu0 0.0
        %720 = vmatpush2.msra.mxu0 0.0
        %721 = vmatprep.subr.mxu0 0.0
        %722 = vmatpush2.msra.mxu0 0.0
        %723 = vmatprep.subr.mxu0 0.0
        %724 = vmatpush2.msra.mxu0 0.0
        %725 = vmatprep.subr.mxu0 0.0
        %726 = vmatpush2.msra.mxu0 0.0
        %727 = vmatprep.subr.mxu0 0.0
        %728 = vmatpush2.msra.mxu0 0.0
        %729 = vmatprep.subr.mxu0 0.0
        %730 = vmatpush2.msra.mxu0 0.0
        %731 = vmatprep.subr.mxu0 0.0
        %732 = vmatpush2.msra.mxu0 0.0
        %733 = vmatprep.mubr.f32.mxu0 0.0
        %734 = vmatmul.mubr.f32.gmra.mxu0 %v664
        %v735 = vpop.f32.mrf.mxu0
        %v736 = vadd.f32 0.0, %v735
        %v737 = vpop.f32.mrf.mxu0
        %738 = vmatprep.mubr.f32.mxu0 0.0
        %739 = vmatmul.mubr.f32.gmra.mxu0 %v667
        %v740 = vpop.f32.mrf.mxu0
        %v741 = vadd.f32 0.0, %v740
        %v742 = vpop.f32.mrf.mxu0
        %743 = vdwg.mxu0
        %746 = vrot.lane.b32.xlu0 %v736, 4
        %v747 = vpop.permute.xlu0 %746
        %748 = vrot.lane.b32.xlu0 %v741, 4
        %v749 = vpop.permute.xlu0 %748
        %v752 = vsel %vm322, %v520, %v747
        %v753 = vsel %vm322, %v525, %v749
        %v756 = vcombine.high %v752, %v752
        %v757 = vcombine.high %v753, %v753
        %vm760 = vcmask 60416
        %761 = vst.msk [vmem:[%s289] sm:$0xf] %vm760, %v752
        %762 = vst.msk [vmem:[%s289 + $0x4] sm:$0xf] %vm760, %v756
        %763 = vst.msk [vmem:[%s289 + $0x8] sm:$0xf] %vm760, %v753
        %764 = vst.msk [vmem:[%s289 + $0xc] sm:$0xf] %vm760, %v757
        %s765 = sand.u32 %s91, 1
        %s766 = sand.u32 %s91, 1
        %s767 = smul.addr %s766, 16
        %s768 = scalar_lea.vmem [#allocation4], %s767
        // Predicated region
        $region111: #{rsab_forward.14} parent=101 // pred_check
          %p769 = pneg %p101
        $region112: #{rsab_forward.14} parent=101 // pred_check_branch
          %771 = sbr.rel (%p769) target = $region114
        $region113: #{rsab_forward.14} parent=101 // pred_region
          %s772 = smul.addr %s17, 8
          %s773 = sadd.s32 %s18, %s772
          %s774 = smul.addr %s773, 4
          %s775 = scalar_lea.vmem %s2, %s774
          // Predicated region
          $region115: #{rsab_forward.14} parent=113 // pred_check
            _
          $region116: #{rsab_forward.14} parent=113 // pred_check_branch
            %777 = sbr.rel (0) target = $region118
          $region117: #{rsab_forward.14} parent=113 // pred_region
            // Predicated region
            $region119: #{rsab_forward.14} parent=117 // pred_check
              _
            $region120: #{rsab_forward.14} parent=117 // pred_check_branch
              %779 = sbr.rel target = $region122
            $region121: #{rsab_forward.14} parent=117 // pred_region
              // Predicated region
              $region134: #{rsab_forward.14} parent=121 // pred_check
                _
              $region135: #{rsab_forward.14} parent=121 // pred_check_branch
                %801 = sbr.rel (0) target = $region137
              $region136: #{rsab_forward.14} parent=121 // pred_region
                loop: start=0, step=1, limit=1
                $region138: #{rsab_forward.14} parent=136 // loop_pre_header
                  _
                $region139: #{rsab_forward.14} parent=136 // loop_header
                  %s803 = sphi 0, %s807
                  %p804 = scmp.ge.s32.totalorder %s803, 1
                  %s808 = sphi %s768, %s768
                  %s809 = sphi %s775, %s775
                $region140: #{rsab_forward.14} parent=136 // loop_header_branch
                  %806 = sbr.rel (%p804) target = $region144
                $region141: #{rsab_forward.14} parent=136 // loop_body
                  _
                $region142: #{rsab_forward.14} parent=136 // loop_footer
                  %s807 = sadd.s32 1, %s803
                $region143: #{rsab_forward.14} parent=136 // loop_footer_branch
                  %802 = sbr.rel target = $region139
                $region144: #{rsab_forward.14} parent=136 // loop_exit
                  _
                %s811 = ssub.s32 16, 1
                loop: start=0, step=1, limit=1
                $region145: #{rsab_forward.14} parent=136 // loop_pre_header
                  _
                $region146: #{rsab_forward.14} parent=136 // loop_header
                  %s813 = sphi 0, %s817
                  %p814 = scmp.ge.s32.totalorder %s813, 1
                  %s818 = sphi %s768, %s768
                  %s819 = sphi %s775, %s775
                $region147: #{rsab_forward.14} parent=136 // loop_header_branch
                  %816 = sbr.rel (%p814) target = $region151
                $region148: #{rsab_forward.14} parent=136 // loop_body
                  %v820 = vld [vmem:[%s818] sm:%s811]
                  %821 = vst [vmem:[%s819] sm:%s811] %v820
                  %v822 = vld [vmem:[%s818 + $0x4] sm:%s811]
                  %823 = vst [vmem:[%s819 + $0x8] sm:%s811] %v822
                  %v824 = vld [vmem:[%s818 + $0x8] sm:%s811]
                  %825 = vst [vmem:[%s819 + $0x10] sm:%s811] %v824
                  %v826 = vld [vmem:[%s818 + $0xc] sm:%s811]
                  %827 = vst [vmem:[%s819 + $0x18] sm:%s811] %v826
                $region149: #{rsab_forward.14} parent=136 // loop_footer
                  %s817 = sadd.s32 1, %s813
                $region150: #{rsab_forward.14} parent=136 // loop_footer_branch
                  %812 = sbr.rel target = $region146
                $region151: #{rsab_forward.14} parent=136 // loop_exit
                  _
              $region137: #{rsab_forward.14} parent=121 // pred_fallthru
                _
            $region122: #{rsab_forward.14} parent=117 // pred_fallthru
              _
            // Predicated region
            $region123: #{rsab_forward.14} parent=117 // pred_check
              _
            $region124: #{rsab_forward.14} parent=117 // pred_check_branch
              %781 = sbr.rel (0) target = $region126
            $region125: #{rsab_forward.14} parent=117 // pred_region
              %s783 = ssub.s32 16, 1
              loop: start=0, step=1, limit=1
              $region127: #{rsab_forward.14} parent=125 // loop_pre_header
                _
              $region128: #{rsab_forward.14} parent=125 // loop_header
                %s785 = sphi 0, %s789
                %p786 = scmp.ge.s32.totalorder %s785, 1
                %s790 = sphi %s768, %s768
                %s791 = sphi %s775, %s775
              $region129: #{rsab_forward.14} parent=125 // loop_header_branch
                %788 = sbr.rel (%p786) target = $region133
              $region130: #{rsab_forward.14} parent=125 // loop_body
                %v792 = vld [vmem:[%s790] sm:%s783]
                %793 = vst [vmem:[%s791] sm:%s783] %v792
                %v794 = vld [vmem:[%s790 + $0x4] sm:%s783]
                %795 = vst [vmem:[%s791 + $0x8] sm:%s783] %v794
                %v796 = vld [vmem:[%s790 + $0x8] sm:%s783]
                %797 = vst [vmem:[%s791 + $0x10] sm:%s783] %v796
                %v798 = vld [vmem:[%s790 + $0xc] sm:%s783]
                %799 = vst [vmem:[%s791 + $0x18] sm:%s783] %v798
              $region131: #{rsab_forward.14} parent=125 // loop_footer
                %s789 = sadd.s32 1, %s785
              $region132: #{rsab_forward.14} parent=125 // loop_footer_branch
                %784 = sbr.rel target = $region128
              $region133: #{rsab_forward.14} parent=125 // loop_exit
                _
            $region126: #{rsab_forward.14} parent=117 // pred_fallthru
              _
          $region118: #{rsab_forward.14} parent=113 // pred_fallthru
            _
          %828 = vnop
        $region114: #{rsab_forward.14} parent=101 // pred_fallthru
          _
      $region102: #{rsab_forward.14} parent=5 // pred_fallthru
        _
      %p829 = scmp.le.s32.totalorder 2, %s8
      // Predicated region
      $region152: #{rsab_forward.14} parent=5 // pred_check
        %p830 = pneg %p829
      $region153: #{rsab_forward.14} parent=5 // pred_check_branch
        %832 = sbr.rel (%p830) target = $region155
      $region154: #{rsab_forward.14} parent=5 // pred_region
        %s833 = ssub.s32 %s8, 2
        // Predicated region
        $region156: #{rsab_forward.14} parent=154 // pred_check
          %p834 = pneg %p107
        $region157: #{rsab_forward.14} parent=154 // pred_check_branch
          %836 = sbr.rel (%p834) target = $region159
        $region158: #{rsab_forward.14} parent=154 // pred_region
          %s837 = sand.u32 %s92, 1
          %s838 = sand.u32 %s92, 1
          %s839 = smul.addr %s838, 16
          %s840 = scalar_lea.vmem [#allocation4], %s839
        $region159: #{rsab_forward.14} parent=154 // pred_fallthru
          _
      $region155: #{rsab_forward.14} parent=5 // pred_fallthru
        _
    $region6: #{rsab_forward.14} parent=1 // loop_footer
      %s12 = sadd.s32 1, %s8
    $region7: #{rsab_forward.14} parent=1 // loop_footer_branch
      %7 = sbr.rel target = $region3
    $region8: #{rsab_forward.14} parent=1 // loop_exit
      _

// kernel: rsab_forward.16
$region0: #{rsab_forward.16}
  #allocation0 [shape = 'u32[]', space=smem, size = 0x4, offset = 0x4, fixed_abs, tag = 'smem constant byte address 0x4 - core index']
  #allocation1 [shape = 'u32[144,128]{1,0:T(1,128)}', space=vmem, size = 0x12000, scoped, tag = 'internal scratch']
  %s0 = inlined_call_operand.vmem [shape: f32[128,8], index: 0, kind: input, shape index: {}]
  %s1 = inlined_call_operand.vmem [shape: f32[1,8], index: 1, kind: input, shape index: {}]
  %s2 = inlined_call_operand.vmem [shape: f32[1,8], index: 2, kind: input, shape index: {}]
  %s3 = inlined_call_operand.vmem [shape: f32[8,8], index: 3, kind: input, shape index: {}]
  %s4 = inlined_call_operand.vmem [shape: f32[1,8], index: 4, kind: input, shape index: {}]
  %s5 = inlined_call_operand.vmem [shape: f32[128,8], index: 5, kind: output, shape index: {}]
  %s6 = sld [smem:[#allocation0]]
  $region53: #{rsab_forward.16} parent=0
    _
  %s8 = ssub.s32 1, %s6
  %s9 = scalar_select 0, %s8, %s6
  loop: start=0, step=1, limit=4
  $region2: #{rsab_forward.16} parent=0 // loop_pre_header
    _
  $region3: #{rsab_forward.16} parent=0 // loop_header
    %s11 = sphi 0, %s15
    %p12 = scmp.ge.s32.totalorder %s11, 4
    %s21 = sphi 0, %s23
    %s24 = sphi 0, %s21
    %s25 = sphi 0, %s24
    %s41 = sphi 0, %s25
    %s45 = sphi 0, %s45
    %s47 = sphi 0, %s45
    %s48 = sphi 0, %s47
    %s62 = sphi 0, %s48
    %s66 = sphi 0, %s66
    %s68 = sphi 0, %s66
    %s69 = sphi 0, %s68
    %s83 = sphi 0, %s69
    %s87 = sphi 0, %s87
    %s89 = sphi 0, %s87
    %s90 = sphi 0, %s89
    %s104 = sphi 0, %s90
    %s108 = sphi 0, %s108
    %s110 = sphi 0, %s108
    %s111 = sphi 0, %s110
    %s125 = sphi 0, %s111
    %s131 = sphi 0, %s133
    %s134 = sphi 0, %s131
    %s135 = sphi 0, %s134
    %s151 = sphi 0, %s135
  $region4: #{rsab_forward.16} parent=0 // loop_header_branch
    %14 = sbr.rel (%p12) target = $region8
  $region5: #{rsab_forward.16} parent=0 // loop_body
    %s16 = ssub.s32 %s11, 1
    %s17 = ssub.s32 %s11, 2
    %s18 = sadd.s32 %s11, 1
    %s19 = ssub.s32 %s11, %s18
    %p20 = scmp.eq.s32.totalorder %s19, 0
    %s22 = sadd.s32 %s21, 1
    %s23 = scalar_select %p20, %s21, %s22
    %p26 = pneg %p20
    %p27 = scmp.eq.s32.totalorder %s11, 1
    %p28 = por %p26, %p27
    %p29 = scmp.ne.s32.totalorder %s21, %s24
    %p30 = scmp.eq.s32.totalorder %s11, 0
    %p31 = por %p29, %p30
    %p32 = scmp.ne.s32.totalorder %s21, %s24
    %p33 = scmp.eq.s32.totalorder %s16, 1
    %p34 = por %p32, %p33
    %p35 = scmp.ne.s32.totalorder %s24, %s25
    %p36 = scmp.eq.s32.totalorder %s16, 0
    %p37 = por %p35, %p36
    %p38 = scmp.ne.s32.totalorder %s24, %s25
    %p39 = scmp.eq.s32.totalorder %s17, 1
    %p40 = por %p38, %p39
    %p42 = scmp.ne.s32.totalorder %s25, %s41
    %p43 = scmp.eq.s32.totalorder %s17, 0
    %p44 = por %p42, %p43
    %s46 = sadd.s32 %s45, 1
    %p49 = scmp.eq.s32.totalorder %s11, 1
    %p50 = scmp.ne.s32.totalorder %s45, %s47
    %p51 = scmp.eq.s32.totalorder %s11, 0
    %p52 = por %p50, %p51
    %p53 = scmp.ne.s32.totalorder %s45, %s47
    %p54 = scmp.eq.s32.totalorder %s16, 1
    %p55 = por %p53, %p54
    %p56 = scmp.ne.s32.totalorder %s47, %s48
    %p57 = scmp.eq.s32.totalorder %s16, 0
    %p58 = por %p56, %p57
    %p59 = scmp.ne.s32.totalorder %s47, %s48
    %p60 = scmp.eq.s32.totalorder %s17, 1
    %p61 = por %p59, %p60
    %p63 = scmp.ne.s32.totalorder %s48, %s62
    %p64 = scmp.eq.s32.totalorder %s17, 0
    %p65 = por %p63, %p64
    %s67 = sadd.s32 %s66, 1
    %p70 = scmp.eq.s32.totalorder %s11, 1
    %p71 = scmp.ne.s32.totalorder %s66, %s68
    %p72 = scmp.eq.s32.totalorder %s11, 0
    %p73 = por %p71, %p72
    %p74 = scmp.ne.s32.totalorder %s66, %s68
    %p75 = scmp.eq.s32.totalorder %s16, 1
    %p76 = por %p74, %p75
    %p77 = scmp.ne.s32.totalorder %s68, %s69
    %p78 = scmp.eq.s32.totalorder %s16, 0
    %p79 = por %p77, %p78
    %p80 = scmp.ne.s32.totalorder %s68, %s69
    %p81 = scmp.eq.s32.totalorder %s17, 1
    %p82 = por %p80, %p81
    %p84 = scmp.ne.s32.totalorder %s69, %s83
    %p85 = scmp.eq.s32.totalorder %s17, 0
    %p86 = por %p84, %p85
    %s88 = sadd.s32 %s87, 1
    %p91 = scmp.eq.s32.totalorder %s11, 1
    %p92 = scmp.ne.s32.totalorder %s87, %s89
    %p93 = scmp.eq.s32.totalorder %s11, 0
    %p94 = por %p92, %p93
    %p95 = scmp.ne.s32.totalorder %s87, %s89
    %p96 = scmp.eq.s32.totalorder %s16, 1
    %p97 = por %p95, %p96
    %p98 = scmp.ne.s32.totalorder %s89, %s90
    %p99 = scmp.eq.s32.totalorder %s16, 0
    %p100 = por %p98, %p99
    %p101 = scmp.ne.s32.totalorder %s89, %s90
    %p102 = scmp.eq.s32.totalorder %s17, 1
    %p103 = por %p101, %p102
    %p105 = scmp.ne.s32.totalorder %s90, %s104
    %p106 = scmp.eq.s32.totalorder %s17, 0
    %p107 = por %p105, %p106
    %s109 = sadd.s32 %s108, 1
    %p112 = scmp.eq.s32.totalorder %s11, 1
    %p113 = scmp.ne.s32.totalorder %s108, %s110
    %p114 = scmp.eq.s32.totalorder %s11, 0
    %p115 = por %p113, %p114
    %p116 = scmp.ne.s32.totalorder %s108, %s110
    %p117 = scmp.eq.s32.totalorder %s16, 1
    %p118 = por %p116, %p117
    %p119 = scmp.ne.s32.totalorder %s110, %s111
    %p120 = scmp.eq.s32.totalorder %s16, 0
    %p121 = por %p119, %p120
    %p122 = scmp.ne.s32.totalorder %s110, %s111
    %p123 = scmp.eq.s32.totalorder %s17, 1
    %p124 = por %p122, %p123
    %p126 = scmp.ne.s32.totalorder %s111, %s125
    %p127 = scmp.eq.s32.totalorder %s17, 0
    %p128 = por %p126, %p127
    %s129 = ssub.s32 %s11, %s18
    %p130 = scmp.eq.s32.totalorder %s129, 0
    %s132 = sadd.s32 %s131, 1
    %s133 = scalar_select %p130, %s131, %s132
    %p136 = pneg %p130
    %p137 = scmp.eq.s32.totalorder %s11, 1
    %p138 = por %p136, %p137
    %p139 = scmp.ne.s32.totalorder %s131, %s134
    %p140 = scmp.eq.s32.totalorder %s11, 0
    %p141 = por %p139, %p140
    %p142 = scmp.ne.s32.totalorder %s131, %s134
    %p143 = scmp.eq.s32.totalorder %s16, 1
    %p144 = por %p142, %p143
    %p145 = scmp.ne.s32.totalorder %s134, %s135
    %p146 = scmp.eq.s32.totalorder %s16, 0
    %p147 = por %p145, %p146
    %p148 = scmp.ne.s32.totalorder %s134, %s135
    %p149 = scmp.eq.s32.totalorder %s17, 1
    %p150 = por %p148, %p149
    %p152 = scmp.ne.s32.totalorder %s135, %s151
    %p153 = scmp.eq.s32.totalorder %s17, 0
    %p154 = por %p152, %p153
    %p155 = scmp.le.s32.totalorder 1, %s11
    %p156 = scmp.lt.s32.totalorder %s11, 3
    %p157 = pnand %p155, %p156
    %p158 = pneg %p157
    // Predicated region
    $region9: #{rsab_forward.16} parent=5 // pred_check
      _
    $region10: #{rsab_forward.16} parent=5 // pred_check_branch
      %160 = sbr.rel (%p157) target = $region12
    $region11: #{rsab_forward.16} parent=5 // pred_region
      %s161 = ssub.s32 %s11, 1
      // Predicated region
      $region13: #{rsab_forward.16} parent=11 // pred_check
        %p162 = pneg %p58
      $region14: #{rsab_forward.16} parent=11 // pred_check_branch
        %164 = sbr.rel (%p162) target = $region16
      $region15: #{rsab_forward.16} parent=11 // pred_region
        _
      $region16: #{rsab_forward.16} parent=11 // pred_fallthru
        _
      // Predicated region
      $region17: #{rsab_forward.16} parent=11 // pred_check
        %p165 = pneg %p79
      $region18: #{rsab_forward.16} parent=11 // pred_check_branch
        %167 = sbr.rel (%p165) target = $region20
      $region19: #{rsab_forward.16} parent=11 // pred_region
        _
      $region20: #{rsab_forward.16} parent=11 // pred_fallthru
        _
      // Predicated region
      $region21: #{rsab_forward.16} parent=11 // pred_check
        %p168 = pneg %p100
      $region22: #{rsab_forward.16} parent=11 // pred_check_branch
        %170 = sbr.rel (%p168) target = $region24
      $region23: #{rsab_forward.16} parent=11 // pred_region
        _
      $region24: #{rsab_forward.16} parent=11 // pred_fallthru
        _
      // Predicated region
      $region25: #{rsab_forward.16} parent=11 // pred_check
        %p171 = pneg %p121
      $region26: #{rsab_forward.16} parent=11 // pred_check_branch
        %173 = sbr.rel (%p171) target = $region28
      $region27: #{rsab_forward.16} parent=11 // pred_region
        _
      $region28: #{rsab_forward.16} parent=11 // pred_fallthru
        _
    $region12: #{rsab_forward.16} parent=5 // pred_fallthru
      _
    %p174 = scmp.lt.s32.totalorder %s11, 2
    // Predicated region
    $region29: #{rsab_forward.16} parent=5 // pred_check
      %p175 = pneg %p174
    $region30: #{rsab_forward.16} parent=5 // pred_check_branch
      %177 = sbr.rel (%p175) target = $region32
    $region31: #{rsab_forward.16} parent=5 // pred_region
      // Predicated region
      $region33: #{rsab_forward.16} parent=31 // pred_check
        %p178 = pneg %p31
      $region34: #{rsab_forward.16} parent=31 // pred_check_branch
        %180 = sbr.rel (%p178) target = $region36
      $region35: #{rsab_forward.16} parent=31 // pred_region
        %s181 = smul.u32 8, %s11
        %p182 = scmp.lt.s32.totalorder %s181, 15
        %s183 = scalar_select %p182, %s181, 15
        %s184 = smul.addr %s183, 8
        %s185 = scalar_lea.vmem %s0, %s184
        %s186 = smul.u32 8, %s11
      $region36: #{rsab_forward.16} parent=31 // pred_fallthru
        _
    $region32: #{rsab_forward.16} parent=5 // pred_fallthru
      _
    %p187 = scmp.le.s32.totalorder 1, %s11
    %p188 = scmp.lt.s32.totalorder %s11, 3
    %p189 = pnand %p187, %p188
    %p190 = pneg %p189
    // Predicated region
    $region37: #{rsab_forward.16} parent=5 // pred_check
      _
    $region38: #{rsab_forward.16} parent=5 // pred_check_branch
      %192 = sbr.rel (%p189) target = $region40
    $region39: #{rsab_forward.16} parent=5 // pred_region
      %s193 = ssub.s32 %s11, 1
      %s194 = smul.u32 8, %s16
      %p195 = scmp.lt.s32.totalorder %s194, 15
      %s196 = scalar_select %p195, %s194, 15
      %s197 = smul.addr %s196, 8
      %s198 = scalar_lea.vmem %s0, %s197
      %p199 = pneg %p37
      %p200 = pneg %p34
      %p201 = pneg %p58
      %p202 = pneg %p55
      %p203 = pneg %p79
      %p204 = pneg %p76
      %p205 = pneg %p100
      %p206 = pneg %p97
      %p207 = pneg %p121
      %p208 = pneg %p118
      %p209 = pneg %p147
      %p210 = pneg %p144
      %s211 = smul.u32 8, %s16
      %p212 = scmp.lt.s32.totalorder %s211, 15
      %s213 = scalar_select %p212, %s211, 15
      %s214 = smul.addr %s213, 8
      %s215 = scalar_lea.vmem %s5, %s214
      %s216 = smul.u32 8, %s16
      %p217 = scmp.lt.s32.totalorder %s216, 15
      %s218 = scalar_select %p217, %s216, 15
      %s219 = smul.addr %s218, 8
      %s220 = scalar_lea.vmem %s0, %s219
      %s221 = smul.u32 8, %s16
      %s222 = smul.u32 8, %s16
      %p223 = scmp.lt.s32.totalorder %s222, 15
      %s224 = scalar_select %p223, %s222, 15
      %s225 = smul.addr %s224, 8
      %s226 = scalar_lea.vmem %s5, %s225
      %s227 = smul.u32 8, %s16
      %v228 = vld [vmem:[%s220] sm:$0xff]
      %v229 = vld [vmem:[%s220 + $0x8] sm:$0xff]
      %v230 = vld [vmem:[%s220 + $0x10] sm:$0xff]
      %v231 = vld [vmem:[%s220 + $0x18] sm:$0xff]
      %v232 = vld [vmem:[%s220 + $0x20] sm:$0xff]
      %v233 = vld [vmem:[%s220 + $0x28] sm:$0xff]
      %v234 = vld [vmem:[%s220 + $0x30] sm:$0xff]
      %v235 = vld [vmem:[%s220 + $0x38] sm:$0xff]
      %vm236 = vcmask 64512
      %v237 = vsel %vm236, %v228, 0.0
      %238 = vadd.xlane.f32.xlu0 %v237
      %v239 = vpop.xlane.xlu0 %238
      %v240 = vsel %vm236, %v229, 0.0
      %241 = vadd.xlane.f32.xlu0 %v240
      %v242 = vpop.xlane.xlu0 %241
      %v243 = vsel %vm236, %v230, 0.0
      %244 = vadd.xlane.f32.xlu0 %v243
      %v245 = vpop.xlane.xlu0 %244
      %v246 = vsel %vm236, %v231, 0.0
      %247 = vadd.xlane.f32.xlu0 %v246
      %v248 = vpop.xlane.xlu0 %247
      %v249 = vsel %vm236, %v232, 0.0
      %250 = vadd.xlane.f32.xlu0 %v249
      %v251 = vpop.xlane.xlu0 %250
      %v252 = vsel %vm236, %v233, 0.0
      %253 = vadd.xlane.f32.xlu0 %v252
      %v254 = vpop.xlane.xlu0 %253
      %v255 = vsel %vm236, %v234, 0.0
      %256 = vadd.xlane.f32.xlu0 %v255
      %v257 = vpop.xlane.xlu0 %256
      %v258 = vsel %vm236, %v235, 0.0
      %259 = vadd.xlane.f32.xlu0 %v258
      %v260 = vpop.xlane.xlu0 %259
      %v261 = vrcp.pop 8.0
      %v262 = vmul.f32 %v239, %v261
      %v263 = vmul.f32 %v242, %v261
      %v264 = vmul.f32 %v245, %v261
      %v265 = vmul.f32 %v248, %v261
      %v266 = vmul.f32 %v251, %v261
      %v267 = vmul.f32 %v254, %v261
      %v268 = vmul.f32 %v257, %v261
      %v269 = vmul.f32 %v260, %v261
      %v270 = vsub.f32 %v228, %v262
      %v271 = vsub.f32 %v229, %v263
      %v272 = vsub.f32 %v230, %v264
      %v273 = vsub.f32 %v231, %v265
      %v274 = vsub.f32 %v232, %v266
      %v275 = vsub.f32 %v233, %v267
      %v276 = vsub.f32 %v234, %v268
      %v277 = vsub.f32 %v235, %v269
      %v278 = vmul.f32 %v270, %v270
      %v279 = vmul.f32 %v271, %v271
      %v280 = vmul.f32 %v272, %v272
      %v281 = vmul.f32 %v273, %v273
      %v282 = vmul.f32 %v274, %v274
      %v283 = vmul.f32 %v275, %v275
      %v284 = vmul.f32 %v276, %v276
      %v285 = vmul.f32 %v277, %v277
      %v286 = vsel %vm236, %v278, 0.0
      %287 = vadd.xlane.f32.xlu0 %v286
      %v288 = vpop.xlane.xlu0 %287
      %v289 = vsel %vm236, %v279, 0.0
      %290 = vadd.xlane.f32.xlu0 %v289
      %v291 = vpop.xlane.xlu0 %290
      %v292 = vsel %vm236, %v280, 0.0
      %293 = vadd.xlane.f32.xlu0 %v292
      %v294 = vpop.xlane.xlu0 %293
      %v295 = vsel %vm236, %v281, 0.0
      %296 = vadd.xlane.f32.xlu0 %v295
      %v297 = vpop.xlane.xlu0 %296
      %v298 = vsel %vm236, %v282, 0.0
      %299 = vadd.xlane.f32.xlu0 %v298
      %v300 = vpop.xlane.xlu0 %299
      %v301 = vsel %vm236, %v283, 0.0
      %302 = vadd.xlane.f32.xlu0 %v301
      %v303 = vpop.xlane.xlu0 %302
      %v304 = vsel %vm236, %v284, 0.0
      %305 = vadd.xlane.f32.xlu0 %v304
      %v306 = vpop.xlane.xlu0 %305
      %v307 = vsel %vm236, %v285, 0.0
      %308 = vadd.xlane.f32.xlu0 %v307
      %v309 = vpop.xlane.xlu0 %308
      %v310 = vmul.f32 %v288, %v261
      %v311 = vmul.f32 %v291, %v261
      %v312 = vmul.f32 %v294, %v261
      %v313 = vmul.f32 %v297, %v261
      %v314 = vmul.f32 %v300, %v261
      %v315 = vmul.f32 %v303, %v261
      %v316 = vmul.f32 %v306, %v261
      %v317 = vmul.f32 %v309, %v261
      %v318 = vrsqrt.pop %v310
      %v319 = vmul.f32 %v310, %v318
      %vm320 = vcmp.eq.f32.partialorder %v310, inf
      %v321 = vsel %vm320, %v310, %v319
      %vm322 = vcmp.eq.f32.partialorder %v310, 0.0
      %v323 = vand.u32 %v310, 2147483648
      %v324 = vsel %vm322, %v323, %v321
      %v325 = vrsqrt.pop %v311
      %v326 = vmul.f32 %v311, %v325
      %vm327 = vcmp.eq.f32.partialorder %v311, inf
      %v328 = vsel %vm327, %v311, %v326
      %vm329 = vcmp.eq.f32.partialorder %v311, 0.0
      %v330 = vand.u32 %v311, 2147483648
      %v331 = vsel %vm329, %v330, %v328
      %v332 = vrsqrt.pop %v312
      %v333 = vmul.f32 %v312, %v332
      %vm334 = vcmp.eq.f32.partialorder %v312, inf
      %v335 = vsel %vm334, %v312, %v333
      %vm336 = vcmp.eq.f32.partialorder %v312, 0.0
      %v337 = vand.u32 %v312, 2147483648
      %v338 = vsel %vm336, %v337, %v335
      %v339 = vrsqrt.pop %v313
      %v340 = vmul.f32 %v313, %v339
      %vm341 = vcmp.eq.f32.partialorder %v313, inf
      %v342 = vsel %vm341, %v313, %v340
      %vm343 = vcmp.eq.f32.partialorder %v313, 0.0
      %v344 = vand.u32 %v313, 2147483648
      %v345 = vsel %vm343, %v344, %v342
      %v346 = vrsqrt.pop %v314
      %v347 = vmul.f32 %v314, %v346
      %vm348 = vcmp.eq.f32.partialorder %v314, inf
      %v349 = vsel %vm348, %v314, %v347
      %vm350 = vcmp.eq.f32.partialorder %v314, 0.0
      %v351 = vand.u32 %v314, 2147483648
      %v352 = vsel %vm350, %v351, %v349
      %v353 = vrsqrt.pop %v315
      %v354 = vmul.f32 %v315, %v353
      %vm355 = vcmp.eq.f32.partialorder %v315, inf
      %v356 = vsel %vm355, %v315, %v354
      %vm357 = vcmp.eq.f32.partialorder %v315, 0.0
      %v358 = vand.u32 %v315, 2147483648
      %v359 = vsel %vm357, %v358, %v356
      %v360 = vrsqrt.pop %v316
      %v361 = vmul.f32 %v316, %v360
      %vm362 = vcmp.eq.f32.partialorder %v316, inf
      %v363 = vsel %vm362, %v316, %v361
      %vm364 = vcmp.eq.f32.partialorder %v316, 0.0
      %v365 = vand.u32 %v316, 2147483648
      %v366 = vsel %vm364, %v365, %v363
      %v367 = vrsqrt.pop %v317
      %v368 = vmul.f32 %v317, %v367
      %vm369 = vcmp.eq.f32.partialorder %v317, inf
      %v370 = vsel %vm369, %v317, %v368
      %vm371 = vcmp.eq.f32.partialorder %v317, 0.0
      %v372 = vand.u32 %v317, 2147483648
      %v373 = vsel %vm371, %v372, %v370
      %v374 = vadd.f32 %v324, 1e-05
      %v375 = vadd.f32 %v331, 1e-05
      %v376 = vadd.f32 %v338, 1e-05
      %v377 = vadd.f32 %v345, 1e-05
      %v378 = vadd.f32 %v352, 1e-05
      %v379 = vadd.f32 %v359, 1e-05
      %v380 = vadd.f32 %v366, 1e-05
      %v381 = vadd.f32 %v373, 1e-05
      %v382 = vrcp.pop %v374
      %v383 = vmul.f32 %v270, %v382
      %v384 = vrcp.pop %v375
      %v385 = vmul.f32 %v271, %v384
      %v386 = vrcp.pop %v376
      %v387 = vmul.f32 %v272, %v386
      %v388 = vrcp.pop %v377
      %v389 = vmul.f32 %v273, %v388
      %v390 = vrcp.pop %v378
      %v391 = vmul.f32 %v274, %v390
      %v392 = vrcp.pop %v379
      %v393 = vmul.f32 %v275, %v392
      %v394 = vrcp.pop %v380
      %v395 = vmul.f32 %v276, %v394
      %v396 = vrcp.pop %v381
      %v397 = vmul.f32 %v277, %v396
      %v398 = vld [vmem:[%s1] sm:$0x1]
      %v400 = vlaneseq
      %v401 = vshrl.u32 %v400, 7
      %v402 = vsub.s32 0, %v401
      %v403 = vrot.slane %v398, %v402
      %v405 = vmul.f32 %v383, %v403
      %v406 = vmul.f32 %v385, %v403
      %v407 = vmul.f32 %v387, %v403
      %v408 = vmul.f32 %v389, %v403
      %v409 = vmul.f32 %v391, %v403
      %v410 = vmul.f32 %v393, %v403
      %v411 = vmul.f32 %v395, %v403
      %v412 = vmul.f32 %v397, %v403
      %v413 = vld [vmem:[%s2] sm:$0x1]
      %v415 = vlaneseq
      %v416 = vshrl.u32 %v415, 7
      %v417 = vsub.s32 0, %v416
      %v418 = vrot.slane %v413, %v417
      %v420 = vadd.f32 %v405, %v418
      %v421 = vadd.f32 %v406, %v418
      %v422 = vadd.f32 %v407, %v418
      %v423 = vadd.f32 %v408, %v418
      %v424 = vadd.f32 %v409, %v418
      %v425 = vadd.f32 %v410, %v418
      %v426 = vadd.f32 %v411, %v418
      %v427 = vadd.f32 %v412, %v418
      %v428 = vld [vmem:[%s3] sm:$0xff]
      %v429 = vld [vmem:[%s4] sm:$0x1]
      %v431 = vlaneseq
      %v432 = vshrl.u32 %v431, 7
      %v433 = vsub.s32 0, %v432
      %v434 = vrot.slane %v429, %v433
      %v437 = vsel %vm236, %v420, 0
      %v440 = vsel %vm236, %v421, 0
      %v443 = vsel %vm236, %v422, 0
      %v446 = vsel %vm236, %v423, 0
      %v449 = vsel %vm236, %v424, 0
      %v452 = vsel %vm236, %v425, 0
      %v455 = vsel %vm236, %v426, 0
      %v458 = vsel %vm236, %v427, 0
      %460 = vmatprep.subr.mxu0 0.0
      %461 = vmatpush1.msra.mxu0 0.0
      %462 = vmatprep.subr.mxu0 0.0
      %463 = vmatpush1.msra.mxu0 0.0
      %464 = vmatprep.subr.mxu0 0.0
      %465 = vmatpush1.msra.mxu0 0.0
      %466 = vmatprep.subr.mxu0 0.0
      %467 = vmatpush1.msra.mxu0 0.0
      %468 = vmatprep.subr.mxu0 0.0
      %469 = vmatpush1.msra.mxu0 0.0
      %470 = vmatprep.subr.mxu0 0.0
      %471 = vmatpush1.msra.mxu0 0.0
      %472 = vmatprep.subr.mxu0 0.0
      %473 = vmatpush1.msra.mxu0 0.0
      %474 = vmatprep.subr.mxu0 0.0
      %475 = vmatpush1.msra.mxu0 0.0
      %476 = vmatprep.subr.mxu0 0.0
      %477 = vmatpush1.msra.mxu0 0.0
      %478 = vmatprep.subr.mxu0 0.0
      %479 = vmatpush1.msra.mxu0 0.0
      %480 = vmatprep.subr.mxu0 0.0
      %481 = vmatpush1.msra.mxu0 0.0
      %482 = vmatprep.subr.mxu0 0.0
      %483 = vmatpush1.msra.mxu0 0.0
      %484 = vmatprep.subr.mxu0 0.0
      %485 = vmatpush1.msra.mxu0 0.0
      %486 = vmatprep.subr.mxu0 0.0
      %487 = vmatpush1.msra.mxu0 0.0
      %488 = vmatprep.subr.mxu0 0.0
      %489 = vmatpush1.msra.mxu0 0.0
      %490 = vmatprep.subr.mxu0 0.0
      %491 = vmatpush1.msra.mxu0 %v428
      %492 = vmatprep.subr.mxu0 0.0
      %493 = vmatpush2.msra.mxu0 0.0
      %494 = vmatprep.subr.mxu0 0.0
      %495 = vmatpush2.msra.mxu0 0.0
      %496 = vmatprep.subr.mxu0 0.0
      %497 = vmatpush2.msra.mxu0 0.0
      %498 = vmatprep.subr.mxu0 0.0
      %499 = vmatpush2.msra.mxu0 0.0
      %500 = vmatprep.subr.mxu0 0.0
      %501 = vmatpush2.msra.mxu0 0.0
      %502 = vmatprep.subr.mxu0 0.0
      %503 = vmatpush2.msra.mxu0 0.0
      %504 = vmatprep.subr.mxu0 0.0
      %505 = vmatpush2.msra.mxu0 0.0
      %506 = vmatprep.subr.mxu0 0.0
      %507 = vmatpush2.msra.mxu0 0.0
      %508 = vmatprep.subr.mxu0 0.0
      %509 = vmatpush2.msra.mxu0 0.0
      %510 = vmatprep.subr.mxu0 0.0
      %511 = vmatpush2.msra.mxu0 0.0
      %512 = vmatprep.subr.mxu0 0.0
      %513 = vmatpush2.msra.mxu0 0.0
      %514 = vmatprep.subr.mxu0 0.0
      %515 = vmatpush2.msra.mxu0 0.0
      %516 = vmatprep.subr.mxu0 0.0
      %517 = vmatpush2.msra.mxu0 0.0
      %518 = vmatprep.subr.mxu0 0.0
      %519 = vmatpush2.msra.mxu0 0.0
      %520 = vmatprep.subr.mxu0 0.0
      %521 = vmatpush2.msra.mxu0 0.0
      %522 = vmatprep.subr.mxu0 0.0
      %523 = vmatpush2.msra.mxu0 0.0
      %524 = vmatprep.mubr.f32.mxu0 0.0
      %525 = vmatmul.mubr.f32.gmra.mxu0 %v437
      %v526 = vpop.f32.mrf.mxu0
      %v527 = vadd.f32 %v434, %v526
      %v528 = vpop.f32.mrf.mxu0
      %529 = vmatprep.mubr.f32.mxu0 0.0
      %530 = vmatmul.mubr.f32.gmra.mxu0 %v440
      %v531 = vpop.f32.mrf.mxu0
      %v532 = vadd.f32 %v434, %v531
      %v533 = vpop.f32.mrf.mxu0
      %534 = vmatprep.mubr.f32.mxu0 0.0
      %535 = vmatmul.mubr.f32.gmra.mxu0 %v443
      %v536 = vpop.f32.mrf.mxu0
      %v537 = vadd.f32 %v434, %v536
      %v538 = vpop.f32.mrf.mxu0
      %539 = vmatprep.mubr.f32.mxu0 0.0
      %540 = vmatmul.mubr.f32.gmra.mxu0 %v446
      %v541 = vpop.f32.mrf.mxu0
      %v542 = vadd.f32 %v434, %v541
      %v543 = vpop.f32.mrf.mxu0
      %544 = vmatprep.mubr.f32.mxu0 0.0
      %545 = vmatmul.mubr.f32.gmra.mxu0 %v449
      %v546 = vpop.f32.mrf.mxu0
      %v547 = vadd.f32 %v434, %v546
      %v548 = vpop.f32.mrf.mxu0
      %549 = vmatprep.mubr.f32.mxu0 0.0
      %550 = vmatmul.mubr.f32.gmra.mxu0 %v452
      %v551 = vpop.f32.mrf.mxu0
      %v552 = vadd.f32 %v434, %v551
      %v553 = vpop.f32.mrf.mxu0
      %554 = vmatprep.mubr.f32.mxu0 0.0
      %555 = vmatmul.mubr.f32.gmra.mxu0 %v455
      %v556 = vpop.f32.mrf.mxu0
      %v557 = vadd.f32 %v434, %v556
      %v558 = vpop.f32.mrf.mxu0
      %559 = vmatprep.mubr.f32.mxu0 0.0
      %560 = vmatmul.mubr.f32.gmra.mxu0 %v458
      %v561 = vpop.f32.mrf.mxu0
      %v562 = vadd.f32 %v434, %v561
      %v563 = vpop.f32.mrf.mxu0
      %564 = vdwg.mxu0
      %565 = vst.msk [vmem:[%s226] sm:$0xff] %vm236, %v527
      %566 = vst.msk [vmem:[%s226 + $0x8] sm:$0xff] %vm236, %v532
      %567 = vst.msk [vmem:[%s226 + $0x10] sm:$0xff] %vm236, %v537
      %568 = vst.msk [vmem:[%s226 + $0x18] sm:$0xff] %vm236, %v542
      %569 = vst.msk [vmem:[%s226 + $0x20] sm:$0xff] %vm236, %v547
      %570 = vst.msk [vmem:[%s226 + $0x28] sm:$0xff] %vm236, %v552
      %571 = vst.msk [vmem:[%s226 + $0x30] sm:$0xff] %vm236, %v557
      %572 = vst.msk [vmem:[%s226 + $0x38] sm:$0xff] %vm236, %v562
      %s573 = smul.u32 8, %s16
      %p574 = scmp.lt.s32.totalorder %s573, 15
      %s575 = scalar_select %p574, %s573, 15
      %s576 = smul.addr %s575, 8
      %s577 = scalar_lea.vmem %s5, %s576
      // Predicated region
      $region41: #{rsab_forward.16} parent=39 // pred_check
        %p578 = pneg %p144
      $region42: #{rsab_forward.16} parent=39 // pred_check_branch
        %580 = sbr.rel (%p578) target = $region44
      $region43: #{rsab_forward.16} parent=39 // pred_region
        %s581 = smul.u32 8, %s16
      $region44: #{rsab_forward.16} parent=39 // pred_fallthru
        _
    $region40: #{rsab_forward.16} parent=5 // pred_fallthru
      _
    %p582 = scmp.le.s32.totalorder 2, %s11
    // Predicated region
    $region45: #{rsab_forward.16} parent=5 // pred_check
      %p583 = pneg %p582
    $region46: #{rsab_forward.16} parent=5 // pred_check_branch
      %585 = sbr.rel (%p583) target = $region48
    $region47: #{rsab_forward.16} parent=5 // pred_region
      %s586 = ssub.s32 %s11, 2
      // Predicated region
      $region49: #{rsab_forward.16} parent=47 // pred_check
        %p587 = pneg %p150
      $region50: #{rsab_forward.16} parent=47 // pred_check_branch
        %589 = sbr.rel (%p587) target = $region52
      $region51: #{rsab_forward.16} parent=47 // pred_region
        %s590 = smul.u32 8, %s17
        %p591 = scmp.lt.s32.totalorder %s590, 15
        %s592 = scalar_select %p591, %s590, 15
        %s593 = smul.addr %s592, 8
        %s594 = scalar_lea.vmem %s5, %s593
      $region52: #{rsab_forward.16} parent=47 // pred_fallthru
        _
    $region48: #{rsab_forward.16} parent=5 // pred_fallthru
      _
  $region6: #{rsab_forward.16} parent=0 // loop_footer
    %s15 = sadd.s32 1, %s11
  $region7: #{rsab_forward.16} parent=0 // loop_footer_branch
    %10 = sbr.rel target = $region3
  $region8: #{rsab_forward.16} parent=0 // loop_exit
    _

// kernel: rsab_forward.23
$region0: #{rsab_forward.23}
  #allocation0 [shape = 'u32[]', space=smem, size = 0x4, offset = 0x4, fixed_abs, tag = 'smem constant byte address 0x4 - core index']
  #allocation1 [shape = 'u32[144,128]{1,0:T(1,128)}', space=vmem, size = 0x12000, scoped, tag = 'internal scratch']
  %s0 = inlined_call_operand.vmem [shape: f32[128,8], index: 0, kind: input, shape index: {}]
  %s1 = inlined_call_operand.vmem [shape: f32[8,8], index: 1, kind: input, shape index: {}]
  %s2 = inlined_call_operand.vmem [shape: f32[1,8], index: 2, kind: input, shape index: {}]
  %s3 = inlined_call_operand.vmem [shape: f32[128,8], index: 3, kind: output, shape index: {}]
  %s4 = sld [smem:[#allocation0]]
  $region45: #{rsab_forward.23} parent=0
    _
  %s6 = ssub.s32 1, %s4
  %s7 = scalar_select 0, %s6, %s4
  loop: start=0, step=1, limit=4
  $region2: #{rsab_forward.23} parent=0 // loop_pre_header
    _
  $region3: #{rsab_forward.23} parent=0 // loop_header
    %s9 = sphi 0, %s13
    %p10 = scmp.ge.s32.totalorder %s9, 4
    %s19 = sphi 0, %s21
    %s22 = sphi 0, %s19
    %s23 = sphi 0, %s22
    %s39 = sphi 0, %s23
    %s43 = sphi 0, %s43
    %s45 = sphi 0, %s43
    %s46 = sphi 0, %s45
    %s60 = sphi 0, %s46
    %s64 = sphi 0, %s64
    %s66 = sphi 0, %s64
    %s67 = sphi 0, %s66
    %s81 = sphi 0, %s67
    %s87 = sphi 0, %s89
    %s90 = sphi 0, %s87
    %s91 = sphi 0, %s90
    %s107 = sphi 0, %s91
  $region4: #{rsab_forward.23} parent=0 // loop_header_branch
    %12 = sbr.rel (%p10) target = $region8
  $region5: #{rsab_forward.23} parent=0 // loop_body
    %s14 = ssub.s32 %s9, 1
    %s15 = ssub.s32 %s9, 2
    %s16 = sadd.s32 %s9, 1
    %s17 = ssub.s32 %s9, %s16
    %p18 = scmp.eq.s32.totalorder %s17, 0
    %s20 = sadd.s32 %s19, 1
    %s21 = scalar_select %p18, %s19, %s20
    %p24 = pneg %p18
    %p25 = scmp.eq.s32.totalorder %s9, 1
    %p26 = por %p24, %p25
    %p27 = scmp.ne.s32.totalorder %s19, %s22
    %p28 = scmp.eq.s32.totalorder %s9, 0
    %p29 = por %p27, %p28
    %p30 = scmp.ne.s32.totalorder %s19, %s22
    %p31 = scmp.eq.s32.totalorder %s14, 1
    %p32 = por %p30, %p31
    %p33 = scmp.ne.s32.totalorder %s22, %s23
    %p34 = scmp.eq.s32.totalorder %s14, 0
    %p35 = por %p33, %p34
    %p36 = scmp.ne.s32.totalorder %s22, %s23
    %p37 = scmp.eq.s32.totalorder %s15, 1
    %p38 = por %p36, %p37
    %p40 = scmp.ne.s32.totalorder %s23, %s39
    %p41 = scmp.eq.s32.totalorder %s15, 0
    %p42 = por %p40, %p41
    %s44 = sadd.s32 %s43, 1
    %p47 = scmp.eq.s32.totalorder %s9, 1
    %p48 = scmp.ne.s32.totalorder %s43, %s45
    %p49 = scmp.eq.s32.totalorder %s9, 0
    %p50 = por %p48, %p49
    %p51 = scmp.ne.s32.totalorder %s43, %s45
    %p52 = scmp.eq.s32.totalorder %s14, 1
    %p53 = por %p51, %p52
    %p54 = scmp.ne.s32.totalorder %s45, %s46
    %p55 = scmp.eq.s32.totalorder %s14, 0
    %p56 = por %p54, %p55
    %p57 = scmp.ne.s32.totalorder %s45, %s46
    %p58 = scmp.eq.s32.totalorder %s15, 1
    %p59 = por %p57, %p58
    %p61 = scmp.ne.s32.totalorder %s46, %s60
    %p62 = scmp.eq.s32.totalorder %s15, 0
    %p63 = por %p61, %p62
    %s65 = sadd.s32 %s64, 1
    %p68 = scmp.eq.s32.totalorder %s9, 1
    %p69 = scmp.ne.s32.totalorder %s64, %s66
    %p70 = scmp.eq.s32.totalorder %s9, 0
    %p71 = por %p69, %p70
    %p72 = scmp.ne.s32.totalorder %s64, %s66
    %p73 = scmp.eq.s32.totalorder %s14, 1
    %p74 = por %p72, %p73
    %p75 = scmp.ne.s32.totalorder %s66, %s67
    %p76 = scmp.eq.s32.totalorder %s14, 0
    %p77 = por %p75, %p76
    %p78 = scmp.ne.s32.totalorder %s66, %s67
    %p79 = scmp.eq.s32.totalorder %s15, 1
    %p80 = por %p78, %p79
    %p82 = scmp.ne.s32.totalorder %s67, %s81
    %p83 = scmp.eq.s32.totalorder %s15, 0
    %p84 = por %p82, %p83
    %s85 = ssub.s32 %s9, %s16
    %p86 = scmp.eq.s32.totalorder %s85, 0
    %s88 = sadd.s32 %s87, 1
    %s89 = scalar_select %p86, %s87, %s88
    %p92 = pneg %p86
    %p93 = scmp.eq.s32.totalorder %s9, 1
    %p94 = por %p92, %p93
    %p95 = scmp.ne.s32.totalorder %s87, %s90
    %p96 = scmp.eq.s32.totalorder %s9, 0
    %p97 = por %p95, %p96
    %p98 = scmp.ne.s32.totalorder %s87, %s90
    %p99 = scmp.eq.s32.totalorder %s14, 1
    %p100 = por %p98, %p99
    %p101 = scmp.ne.s32.totalorder %s90, %s91
    %p102 = scmp.eq.s32.totalorder %s14, 0
    %p103 = por %p101, %p102
    %p104 = scmp.ne.s32.totalorder %s90, %s91
    %p105 = scmp.eq.s32.totalorder %s15, 1
    %p106 = por %p104, %p105
    %p108 = scmp.ne.s32.totalorder %s91, %s107
    %p109 = scmp.eq.s32.totalorder %s15, 0
    %p110 = por %p108, %p109
    %p111 = scmp.le.s32.totalorder 1, %s9
    %p112 = scmp.lt.s32.totalorder %s9, 3
    %p113 = pnand %p111, %p112
    %p114 = pneg %p113
    // Predicated region
    $region9: #{rsab_forward.23} parent=5 // pred_check
      _
    $region10: #{rsab_forward.23} parent=5 // pred_check_branch
      %116 = sbr.rel (%p113) target = $region12
    $region11: #{rsab_forward.23} parent=5 // pred_region
      %s117 = ssub.s32 %s9, 1
      // Predicated region
      $region13: #{rsab_forward.23} parent=11 // pred_check
        %p118 = pneg %p56
      $region14: #{rsab_forward.23} parent=11 // pred_check_branch
        %120 = sbr.rel (%p118) target = $region16
      $region15: #{rsab_forward.23} parent=11 // pred_region
        _
      $region16: #{rsab_forward.23} parent=11 // pred_fallthru
        _
      // Predicated region
      $region17: #{rsab_forward.23} parent=11 // pred_check
        %p121 = pneg %p77
      $region18: #{rsab_forward.23} parent=11 // pred_check_branch
        %123 = sbr.rel (%p121) target = $region20
      $region19: #{rsab_forward.23} parent=11 // pred_region
        _
      $region20: #{rsab_forward.23} parent=11 // pred_fallthru
        _
    $region12: #{rsab_forward.23} parent=5 // pred_fallthru
      _
    %p124 = scmp.lt.s32.totalorder %s9, 2
    // Predicated region
    $region21: #{rsab_forward.23} parent=5 // pred_check
      %p125 = pneg %p124
    $region22: #{rsab_forward.23} parent=5 // pred_check_branch
      %127 = sbr.rel (%p125) target = $region24
    $region23: #{rsab_forward.23} parent=5 // pred_region
      // Predicated region
      $region25: #{rsab_forward.23} parent=23 // pred_check
        %p128 = pneg %p29
      $region26: #{rsab_forward.23} parent=23 // pred_check_branch
        %130 = sbr.rel (%p128) target = $region28
      $region27: #{rsab_forward.23} parent=23 // pred_region
        %s131 = smul.u32 8, %s9
        %p132 = scmp.lt.s32.totalorder %s131, 15
        %s133 = scalar_select %p132, %s131, 15
        %s134 = smul.addr %s133, 8
        %s135 = scalar_lea.vmem %s0, %s134
        %s136 = smul.u32 8, %s9
      $region28: #{rsab_forward.23} parent=23 // pred_fallthru
        _
    $region24: #{rsab_forward.23} parent=5 // pred_fallthru
      _
    %p137 = scmp.le.s32.totalorder 1, %s9
    %p138 = scmp.lt.s32.totalorder %s9, 3
    %p139 = pnand %p137, %p138
    %p140 = pneg %p139
    // Predicated region
    $region29: #{rsab_forward.23} parent=5 // pred_check
      _
    $region30: #{rsab_forward.23} parent=5 // pred_check_branch
      %142 = sbr.rel (%p139) target = $region32
    $region31: #{rsab_forward.23} parent=5 // pred_region
      %s143 = ssub.s32 %s9, 1
      %s144 = smul.u32 8, %s14
      %p145 = scmp.lt.s32.totalorder %s144, 15
      %s146 = scalar_select %p145, %s144, 15
      %s147 = smul.addr %s146, 8
      %s148 = scalar_lea.vmem %s0, %s147
      %p149 = pneg %p35
      %p150 = pneg %p32
      %p151 = pneg %p56
      %p152 = pneg %p53
      %p153 = pneg %p77
      %p154 = pneg %p74
      %p155 = pneg %p103
      %p156 = pneg %p100
      %s157 = smul.u32 8, %s14
      %p158 = scmp.lt.s32.totalorder %s157, 15
      %s159 = scalar_select %p158, %s157, 15
      %s160 = smul.addr %s159, 8
      %s161 = scalar_lea.vmem %s3, %s160
      %s162 = smul.u32 8, %s14
      %p163 = scmp.lt.s32.totalorder %s162, 15
      %s164 = scalar_select %p163, %s162, 15
      %s165 = smul.addr %s164, 8
      %s166 = scalar_lea.vmem %s0, %s165
      %s167 = smul.u32 8, %s14
      %s168 = smul.u32 8, %s14
      %p169 = scmp.lt.s32.totalorder %s168, 15
      %s170 = scalar_select %p169, %s168, 15
      %s171 = smul.addr %s170, 8
      %s172 = scalar_lea.vmem %s3, %s171
      %s173 = smul.u32 8, %s14
      %v174 = vld [vmem:[%s166] sm:$0xff]
      %v175 = vld [vmem:[%s166 + $0x8] sm:$0xff]
      %v176 = vld [vmem:[%s166 + $0x10] sm:$0xff]
      %v177 = vld [vmem:[%s166 + $0x18] sm:$0xff]
      %v178 = vld [vmem:[%s166 + $0x20] sm:$0xff]
      %v179 = vld [vmem:[%s166 + $0x28] sm:$0xff]
      %v180 = vld [vmem:[%s166 + $0x30] sm:$0xff]
      %v181 = vld [vmem:[%s166 + $0x38] sm:$0xff]
      %v182 = vld [vmem:[%s1] sm:$0xff]
      %v183 = vld [vmem:[%s2] sm:$0x1]
      %v185 = vlaneseq
      %v186 = vshrl.u32 %v185, 7
      %v187 = vsub.s32 0, %v186
      %v188 = vrot.slane %v183, %v187
      %vm190 = vcmask 64512
      %v192 = vsel %vm190, %v174, 0
      %v195 = vsel %vm190, %v175, 0
      %v198 = vsel %vm190, %v176, 0
      %v201 = vsel %vm190, %v177, 0
      %v204 = vsel %vm190, %v178, 0
      %v207 = vsel %vm190, %v179, 0
      %v210 = vsel %vm190, %v180, 0
      %v213 = vsel %vm190, %v181, 0
      %215 = vmatprep.subr.mxu0 0.0
      %216 = vmatpush1.msra.mxu0 0.0
      %217 = vmatprep.subr.mxu0 0.0
      %218 = vmatpush1.msra.mxu0 0.0
      %219 = vmatprep.subr.mxu0 0.0
      %220 = vmatpush1.msra.mxu0 0.0
      %221 = vmatprep.subr.mxu0 0.0
      %222 = vmatpush1.msra.mxu0 0.0
      %223 = vmatprep.subr.mxu0 0.0
      %224 = vmatpush1.msra.mxu0 0.0
      %225 = vmatprep.subr.mxu0 0.0
      %226 = vmatpush1.msra.mxu0 0.0
      %227 = vmatprep.subr.mxu0 0.0
      %228 = vmatpush1.msra.mxu0 0.0
      %229 = vmatprep.subr.mxu0 0.0
      %230 = vmatpush1.msra.mxu0 0.0
      %231 = vmatprep.subr.mxu0 0.0
      %232 = vmatpush1.msra.mxu0 0.0
      %233 = vmatprep.subr.mxu0 0.0
      %234 = vmatpush1.msra.mxu0 0.0
      %235 = vmatprep.subr.mxu0 0.0
      %236 = vmatpush1.msra.mxu0 0.0
      %237 = vmatprep.subr.mxu0 0.0
      %238 = vmatpush1.msra.mxu0 0.0
      %239 = vmatprep.subr.mxu0 0.0
      %240 = vmatpush1.msra.mxu0 0.0
      %241 = vmatprep.subr.mxu0 0.0
      %242 = vmatpush1.msra.mxu0 0.0
      %243 = vmatprep.subr.mxu0 0.0
      %244 = vmatpush1.msra.mxu0 0.0
      %245 = vmatprep.subr.mxu0 0.0
      %246 = vmatpush1.msra.mxu0 %v182
      %247 = vmatprep.subr.mxu0 0.0
      %248 = vmatpush2.msra.mxu0 0.0
      %249 = vmatprep.subr.mxu0 0.0
      %250 = vmatpush2.msra.mxu0 0.0
      %251 = vmatprep.subr.mxu0 0.0
      %252 = vmatpush2.msra.mxu0 0.0
      %253 = vmatprep.subr.mxu0 0.0
      %254 = vmatpush2.msra.mxu0 0.0
      %255 = vmatprep.subr.mxu0 0.0
      %256 = vmatpush2.msra.mxu0 0.0
      %257 = vmatprep.subr.mxu0 0.0
      %258 = vmatpush2.msra.mxu0 0.0
      %259 = vmatprep.subr.mxu0 0.0
      %260 = vmatpush2.msra.mxu0 0.0
      %261 = vmatprep.subr.mxu0 0.0
      %262 = vmatpush2.msra.mxu0 0.0
      %263 = vmatprep.subr.mxu0 0.0
      %264 = vmatpush2.msra.mxu0 0.0
      %265 = vmatprep.subr.mxu0 0.0
      %266 = vmatpush2.msra.mxu0 0.0
      %267 = vmatprep.subr.mxu0 0.0
      %268 = vmatpush2.msra.mxu0 0.0
      %269 = vmatprep.subr.mxu0 0.0
      %270 = vmatpush2.msra.mxu0 0.0
      %271 = vmatprep.subr.mxu0 0.0
      %272 = vmatpush2.msra.mxu0 0.0
      %273 = vmatprep.subr.mxu0 0.0
      %274 = vmatpush2.msra.mxu0 0.0
      %275 = vmatprep.subr.mxu0 0.0
      %276 = vmatpush2.msra.mxu0 0.0
      %277 = vmatprep.subr.mxu0 0.0
      %278 = vmatpush2.msra.mxu0 0.0
      %279 = vmatprep.mubr.f32.mxu0 0.0
      %280 = vmatmul.mubr.f32.gmra.mxu0 %v192
      %v281 = vpop.f32.mrf.mxu0
      %v282 = vadd.f32 %v188, %v281
      %v283 = vpop.f32.mrf.mxu0
      %284 = vmatprep.mubr.f32.mxu0 0.0
      %285 = vmatmul.mubr.f32.gmra.mxu0 %v195
      %v286 = vpop.f32.mrf.mxu0
      %v287 = vadd.f32 %v188, %v286
      %v288 = vpop.f32.mrf.mxu0
      %289 = vmatprep.mubr.f32.mxu0 0.0
      %290 = vmatmul.mubr.f32.gmra.mxu0 %v198
      %v291 = vpop.f32.mrf.mxu0
      %v292 = vadd.f32 %v188, %v291
      %v293 = vpop.f32.mrf.mxu0
      %294 = vmatprep.mubr.f32.mxu0 0.0
      %295 = vmatmul.mubr.f32.gmra.mxu0 %v201
      %v296 = vpop.f32.mrf.mxu0
      %v297 = vadd.f32 %v188, %v296
      %v298 = vpop.f32.mrf.mxu0
      %299 = vmatprep.mubr.f32.mxu0 0.0
      %300 = vmatmul.mubr.f32.gmra.mxu0 %v204
      %v301 = vpop.f32.mrf.mxu0
      %v302 = vadd.f32 %v188, %v301
      %v303 = vpop.f32.mrf.mxu0
      %304 = vmatprep.mubr.f32.mxu0 0.0
      %305 = vmatmul.mubr.f32.gmra.mxu0 %v207
      %v306 = vpop.f32.mrf.mxu0
      %v307 = vadd.f32 %v188, %v306
      %v308 = vpop.f32.mrf.mxu0
      %309 = vmatprep.mubr.f32.mxu0 0.0
      %310 = vmatmul.mubr.f32.gmra.mxu0 %v210
      %v311 = vpop.f32.mrf.mxu0
      %v312 = vadd.f32 %v188, %v311
      %v313 = vpop.f32.mrf.mxu0
      %314 = vmatprep.mubr.f32.mxu0 0.0
      %315 = vmatmul.mubr.f32.gmra.mxu0 %v213
      %v316 = vpop.f32.mrf.mxu0
      %v317 = vadd.f32 %v188, %v316
      %v318 = vpop.f32.mrf.mxu0
      %319 = vdwg.mxu0
      %v320 = vadd.f32 %v282, %v174
      %v321 = vadd.f32 %v287, %v175
      %v322 = vadd.f32 %v292, %v176
      %v323 = vadd.f32 %v297, %v177
      %v324 = vadd.f32 %v302, %v178
      %v325 = vadd.f32 %v307, %v179
      %v326 = vadd.f32 %v312, %v180
      %v327 = vadd.f32 %v317, %v181
      %328 = vst.msk [vmem:[%s172] sm:$0xff] %vm190, %v320
      %329 = vst.msk [vmem:[%s172 + $0x8] sm:$0xff] %vm190, %v321
      %330 = vst.msk [vmem:[%s172 + $0x10] sm:$0xff] %vm190, %v322
      %331 = vst.msk [vmem:[%s172 + $0x18] sm:$0xff] %vm190, %v323
      %332 = vst.msk [vmem:[%s172 + $0x20] sm:$0xff] %vm190, %v324
      %333 = vst.msk [vmem:[%s172 + $0x28] sm:$0xff] %vm190, %v325
      %334 = vst.msk [vmem:[%s172 + $0x30] sm:$0xff] %vm190, %v326
      %335 = vst.msk [vmem:[%s172 + $0x38] sm:$0xff] %vm190, %v327
      %s336 = smul.u32 8, %s14
      %p337 = scmp.lt.s32.totalorder %s336, 15
      %s338 = scalar_select %p337, %s336, 15
      %s339 = smul.addr %s338, 8
      %s340 = scalar_lea.vmem %s3, %s339
      // Predicated region
      $region33: #{rsab_forward.23} parent=31 // pred_check
        %p341 = pneg %p100
      $region34: #{rsab_forward.23} parent=31 // pred_check_branch
        %343 = sbr.rel (%p341) target = $region36
      $region35: #{rsab_forward.23} parent=31 // pred_region
        %s344 = smul.u32 8, %s14
      $region36: #{rsab_forward.23} parent=31 // pred_fallthru
        _
    $region32: #{rsab_forward.23} parent=5 // pred_fallthru
      _
    %p345 = scmp.le.s32.totalorder 2, %s9
    // Predicated region
    $region37: #{rsab_forward.23} parent=5 // pred_check
      %p346 = pneg %p345
    $region38: #{rsab_forward.23} parent=5 // pred_check_branch
      %348 = sbr.rel (%p346) target = $region40
    $region39: #{rsab_forward.23} parent=5 // pred_region
      %s349 = ssub.s32 %s9, 2
      // Predicated region
      $region41: #{rsab_forward.23} parent=39 // pred_check
        %p350 = pneg %p106
      $region42: #{rsab_forward.23} parent=39 // pred_check_branch
        %352 = sbr.rel (%p350) target = $region44
      $region43: #{rsab_forward.23} parent=39 // pred_region
        %s353 = smul.u32 8, %s15
        %p354 = scmp.lt.s32.totalorder %s353, 15
        %s355 = scalar_select %p354, %s353, 15
        %s356 = smul.addr %s355, 8
        %s357 = scalar_lea.vmem %s3, %s356
      $region44: #{rsab_forward.23} parent=39 // pred_fallthru
        _
    $region40: #{rsab_forward.23} parent=5 // pred_fallthru
      _
  $region6: #{rsab_forward.23} parent=0 // loop_footer
    %s13 = sadd.s32 1, %s9
  $region7: #{rsab_forward.23} parent=0 // loop_footer_branch
    %8 = sbr.rel target = $region3
  $region8: #{rsab_forward.23} parent=0 // loop_exit
    _

// kernel: rsab_forward.19
$region0: #{rsab_forward.19}
  #allocation0 [shape = 'u32[]', space=smem, size = 0x4, offset = 0x4, fixed_abs, tag = 'smem constant byte address 0x4 - core index']
  #allocation1 [shape = 'u32[144,128]{1,0:T(1,128)}', space=vmem, size = 0x12000, scoped, tag = 'internal scratch']
  %s0 = inlined_call_operand.vmem [shape: f32[4,4,2,4,24], index: 0, kind: input, shape index: {}]
  %s1 = inlined_call_operand.vmem [shape: f32[4,4,2,4,8], index: 1, kind: output, shape index: {}]
  %s2 = sld [smem:[#allocation0]]
  $region115: #{rsab_forward.19} parent=0
    _
  %s4 = ssub.s32 1, %s2
  %s5 = scalar_select 0, %s4, %s2
  $region1: #{rsab_forward.19} parent=0
    #allocation2 [shape = 'u8[16384]{0}', space=vmem, size = 0x4000, scoped, tag = 'input window, operand 0']
    #allocation3 [shape = 'u8[16384]{0}', space=vmem, size = 0x4000, scoped, tag = 'output window, operand 0']
    loop: start=0, step=1, limit=10
    $region2: #{rsab_forward.19} parent=1 // loop_pre_header
      _
    $region3: #{rsab_forward.19} parent=1 // loop_header
      %s7 = sphi 0, %s11
      %p8 = scmp.ge.s32.totalorder %s7, 10
      %s14 = sphi 0, %s26
      %s15 = sphi 0, %s22
      %s16 = sphi 0, %s14
      %s17 = sphi 0, %s15
      %s18 = sphi 0, %s16
      %s19 = sphi 0, %s17
      %s31 = sphi 0, %s33
      %s34 = sphi 0, %s31
      %s35 = sphi 0, %s34
      %s51 = sphi 0, %s35
      %s59 = sphi 0, %s61
      %s62 = sphi 0, %s59
      %s63 = sphi 0, %s62
      %s79 = sphi 0, %s63
    $region4: #{rsab_forward.19} parent=1 // loop_header_branch
      %10 = sbr.rel (%p8) target = $region8
    $region5: #{rsab_forward.19} parent=1 // loop_body
      %s12 = ssub.s32 %s7, 1
      %s13 = ssub.s32 %s7, 2
      %s20 = sadd.s32 1, %s15
      %p21 = scmp.ge.s32.totalorder %s20, 2
      %s22 = scalar_select %p21, 0, %s20
      %s23 = sadd.s32 1, %s14
      %s24 = scalar_select %p21, %s23, %s14
      %p25 = scmp.ge.s32.totalorder %s24, 4
      %s26 = scalar_select %p25, 0, %s24
      %s27 = ssub.s32 %s14, %s26
      %s28 = ssub.s32 %s15, %s22
      %s29 = sor.u32 %s27, %s28
      %p30 = scmp.eq.s32.totalorder %s29, 0
      %s32 = sadd.s32 %s31, 1
      %s33 = scalar_select %p30, %s31, %s32
      %p36 = pneg %p30
      %p37 = scmp.eq.s32.totalorder %s7, 7
      %p38 = por %p36, %p37
      %p39 = scmp.ne.s32.totalorder %s31, %s34
      %p40 = scmp.eq.s32.totalorder %s7, 0
      %p41 = por %p39, %p40
      %p42 = scmp.ne.s32.totalorder %s31, %s34
      %p43 = scmp.eq.s32.totalorder %s12, 7
      %p44 = por %p42, %p43
      %p45 = scmp.ne.s32.totalorder %s34, %s35
      %p46 = scmp.eq.s32.totalorder %s12, 0
      %p47 = por %p45, %p46
      %p48 = scmp.ne.s32.totalorder %s34, %s35
      %p49 = scmp.eq.s32.totalorder %s13, 7
      %p50 = por %p48, %p49
      %p52 = scmp.ne.s32.totalorder %s35, %s51
      %p53 = scmp.eq.s32.totalorder %s13, 0
      %p54 = por %p52, %p53
      %s55 = ssub.s32 %s14, %s26
      %s56 = ssub.s32 %s15, %s22
      %s57 = sor.u32 %s55, %s56
      %p58 = scmp.eq.s32.totalorder %s57, 0
      %s60 = sadd.s32 %s59, 1
      %s61 = scalar_select %p58, %s59, %s60
      %p64 = pneg %p58
      %p65 = scmp.eq.s32.totalorder %s7, 7
      %p66 = por %p64, %p65
      %p67 = scmp.ne.s32.totalorder %s59, %s62
      %p68 = scmp.eq.s32.totalorder %s7, 0
      %p69 = por %p67, %p68
      %p70 = scmp.ne.s32.totalorder %s59, %s62
      %p71 = scmp.eq.s32.totalorder %s12, 7
      %p72 = por %p70, %p71
      %p73 = scmp.ne.s32.totalorder %s62, %s63
      %p74 = scmp.eq.s32.totalorder %s12, 0
      %p75 = por %p73, %p74
      %p76 = scmp.ne.s32.totalorder %s62, %s63
      %p77 = scmp.eq.s32.totalorder %s13, 7
      %p78 = por %p76, %p77
      %p80 = scmp.ne.s32.totalorder %s63, %s79
      %p81 = scmp.eq.s32.totalorder %s13, 0
      %p82 = por %p80, %p81
      %p83 = scmp.le.s32.totalorder 1, %s7
      %p84 = scmp.lt.s32.totalorder %s7, 9
      %p85 = pnand %p83, %p84
      %p86 = pneg %p85
      // Predicated region
      $region9: #{rsab_forward.19} parent=5 // pred_check
        _
      $region10: #{rsab_forward.19} parent=5 // pred_check_branch
        %88 = sbr.rel (%p85) target = $region12
      $region11: #{rsab_forward.19} parent=5 // pred_region
        %s89 = ssub.s32 %s7, 1
      $region12: #{rsab_forward.19} parent=5 // pred_fallthru
        _
      %p90 = scmp.lt.s32.totalorder %s7, 8
      // Predicated region
      $region13: #{rsab_forward.19} parent=5 // pred_check
        %p91 = pneg %p90
      $region14: #{rsab_forward.19} parent=5 // pred_check_branch
        %93 = sbr.rel (%p91) target = $region16
      $region15: #{rsab_forward.19} parent=5 // pred_region
        // Predicated region
        $region17: #{rsab_forward.19} parent=15 // pred_check
          %p94 = pneg %p41
        $region18: #{rsab_forward.19} parent=15 // pred_check_branch
          %96 = sbr.rel (%p94) target = $region20
        $region19: #{rsab_forward.19} parent=15 // pred_region
          %s97 = sand.u32 %s31, 1
          %s98 = sand.u32 %s31, 1
          %s99 = smul.addr %s98, 16
          %s100 = scalar_lea.vmem [#allocation2], %s99
          %s101 = smul.addr %s14, 8
          %s102 = sadd.s32 %s15, %s101
          %s103 = smul.addr %s102, 4
          %s104 = scalar_lea.vmem %s0, %s103
          // Predicated region
          $region21: #{rsab_forward.19} parent=19 // pred_check
            _
          $region22: #{rsab_forward.19} parent=19 // pred_check_branch
            %106 = sbr.rel (0) target = $region24
          $region23: #{rsab_forward.19} parent=19 // pred_region
            // Predicated region
            $region25: #{rsab_forward.19} parent=23 // pred_check
              _
            $region26: #{rsab_forward.19} parent=23 // pred_check_branch
              %108 = sbr.rel target = $region28
            $region27: #{rsab_forward.19} parent=23 // pred_region
              // Predicated region
              $region40: #{rsab_forward.19} parent=27 // pred_check
                _
              $region41: #{rsab_forward.19} parent=27 // pred_check_branch
                %130 = sbr.rel (0) target = $region43
              $region42: #{rsab_forward.19} parent=27 // pred_region
                loop: start=0, step=1, limit=1
                $region44: #{rsab_forward.19} parent=42 // loop_pre_header
                  _
                $region45: #{rsab_forward.19} parent=42 // loop_header
                  %s132 = sphi 0, %s136
                  %p133 = scmp.ge.s32.totalorder %s132, 1
                  %s137 = sphi %s104, %s104
                  %s138 = sphi %s100, %s100
                $region46: #{rsab_forward.19} parent=42 // loop_header_branch
                  %135 = sbr.rel (%p133) target = $region50
                $region47: #{rsab_forward.19} parent=42 // loop_body
                  _
                $region48: #{rsab_forward.19} parent=42 // loop_footer
                  %s136 = sadd.s32 1, %s132
                $region49: #{rsab_forward.19} parent=42 // loop_footer_branch
                  %131 = sbr.rel target = $region45
                $region50: #{rsab_forward.19} parent=42 // loop_exit
                  _
                %s140 = ssub.s32 16, 1
                loop: start=0, step=1, limit=1
                $region51: #{rsab_forward.19} parent=42 // loop_pre_header
                  _
                $region52: #{rsab_forward.19} parent=42 // loop_header
                  %s142 = sphi 0, %s146
                  %p143 = scmp.ge.s32.totalorder %s142, 1
                  %s147 = sphi %s104, %s104
                  %s148 = sphi %s100, %s100
                $region53: #{rsab_forward.19} parent=42 // loop_header_branch
                  %145 = sbr.rel (%p143) target = $region57
                $region54: #{rsab_forward.19} parent=42 // loop_body
                  %v149 = vld [vmem:[%s147] sm:%s140]
                  %150 = vst [vmem:[%s148] sm:%s140] %v149
                  %v151 = vld [vmem:[%s147 + $0x8] sm:%s140]
                  %152 = vst [vmem:[%s148 + $0x4] sm:%s140] %v151
                  %v153 = vld [vmem:[%s147 + $0x10] sm:%s140]
                  %154 = vst [vmem:[%s148 + $0x8] sm:%s140] %v153
                  %v155 = vld [vmem:[%s147 + $0x18] sm:%s140]
                  %156 = vst [vmem:[%s148 + $0xc] sm:%s140] %v155
                $region55: #{rsab_forward.19} parent=42 // loop_footer
                  %s146 = sadd.s32 1, %s142
                $region56: #{rsab_forward.19} parent=42 // loop_footer_branch
                  %141 = sbr.rel target = $region52
                $region57: #{rsab_forward.19} parent=42 // loop_exit
                  _
              $region43: #{rsab_forward.19} parent=27 // pred_fallthru
                _
            $region28: #{rsab_forward.19} parent=23 // pred_fallthru
              _
            // Predicated region
            $region29: #{rsab_forward.19} parent=23 // pred_check
              _
            $region30: #{rsab_forward.19} parent=23 // pred_check_branch
              %110 = sbr.rel (0) target = $region32
            $region31: #{rsab_forward.19} parent=23 // pred_region
              %s112 = ssub.s32 16, 1
              loop: start=0, step=1, limit=1
              $region33: #{rsab_forward.19} parent=31 // loop_pre_header
                _
              $region34: #{rsab_forward.19} parent=31 // loop_header
                %s114 = sphi 0, %s118
                %p115 = scmp.ge.s32.totalorder %s114, 1
                %s119 = sphi %s104, %s104
                %s120 = sphi %s100, %s100
              $region35: #{rsab_forward.19} parent=31 // loop_header_branch
                %117 = sbr.rel (%p115) target = $region39
              $region36: #{rsab_forward.19} parent=31 // loop_body
                %v121 = vld [vmem:[%s119] sm:%s112]
                %122 = vst [vmem:[%s120] sm:%s112] %v121
                %v123 = vld [vmem:[%s119 + $0x8] sm:%s112]
                %124 = vst [vmem:[%s120 + $0x4] sm:%s112] %v123
                %v125 = vld [vmem:[%s119 + $0x10] sm:%s112]
                %126 = vst [vmem:[%s120 + $0x8] sm:%s112] %v125
                %v127 = vld [vmem:[%s119 + $0x18] sm:%s112]
                %128 = vst [vmem:[%s120 + $0xc] sm:%s112] %v127
              $region37: #{rsab_forward.19} parent=31 // loop_footer
                %s118 = sadd.s32 1, %s114
              $region38: #{rsab_forward.19} parent=31 // loop_footer_branch
                %113 = sbr.rel target = $region34
              $region39: #{rsab_forward.19} parent=31 // loop_exit
                _
            $region32: #{rsab_forward.19} parent=23 // pred_fallthru
              _
          $region24: #{rsab_forward.19} parent=19 // pred_fallthru
            _
          %157 = vnop
        $region20: #{rsab_forward.19} parent=15 // pred_fallthru
          _
      $region16: #{rsab_forward.19} parent=5 // pred_fallthru
        _
      %p158 = scmp.le.s32.totalorder 1, %s7
      %p159 = scmp.lt.s32.totalorder %s7, 9
      %p160 = pnand %p158, %p159
      %p161 = pneg %p160
      // Predicated region
      $region58: #{rsab_forward.19} parent=5 // pred_check
        _
      $region59: #{rsab_forward.19} parent=5 // pred_check_branch
        %163 = sbr.rel (%p160) target = $region61
      $region60: #{rsab_forward.19} parent=5 // pred_region
        %s164 = ssub.s32 %s7, 1
        %s165 = sand.u32 %s34, 1
        %s166 = sand.u32 %s34, 1
        %s167 = smul.addr %s166, 16
        %s168 = scalar_lea.vmem [#allocation2], %s167
        // Predicated region
        $region62: #{rsab_forward.19} parent=60 // pred_check
          %p169 = pneg %p47
        $region63: #{rsab_forward.19} parent=60 // pred_check_branch
          %171 = sbr.rel (%p169) target = $region65
        $region64: #{rsab_forward.19} parent=60 // pred_region
          _
        $region65: #{rsab_forward.19} parent=60 // pred_fallthru
          _
        %s172 = sand.u32 %s34, 1
        %s173 = sand.u32 %s34, 1
        %s174 = smul.addr %s173, 16
        %s175 = scalar_lea.vmem [#allocation2], %s174
        %p176 = pneg %p47
        %p177 = pneg %p44
        %p178 = pneg %p75
        %p179 = pneg %p72
        %s180 = sand.u32 %s62, 1
        %s181 = sand.u32 %s62, 1
        %s182 = smul.addr %s181, 16
        %s183 = scalar_lea.vmem [#allocation3], %s182
        %v184 = vld [vmem:[%s168] sm:$0xf]
        %v185 = vld [vmem:[%s168 + $0x4] sm:$0xf]
        %v186 = vld [vmem:[%s168 + $0x8] sm:$0xf]
        %v187 = vld [vmem:[%s168 + $0xc] sm:$0xf]
        %v192 = vcombine.low %v184, %v185
        %v193 = vcombine.low %v186, %v187
        %194 = vrot.lane.b32.xlu0 %v192, 120
        %v195 = vpop.permute.xlu0 %194
        %196 = vrot.lane.b32.xlu0 %v193, 120
        %v197 = vpop.permute.xlu0 %196
        %vm198 = vcmask 31744
        %v199 = vsel %vm198, %v192, 0
        %v201 = vsel %vm198, %v193, 0
        %v203 = vsel %vm198, %v195, 0
        %v205 = vsel %vm198, %v197, 0
        %207 = vmatprep.subr.mxu0 0.0
        %208 = vmatpush1.xpose.msra.mxu0 0.0
        %209 = vmatprep.subr.mxu0 0.0
        %210 = vmatpush1.xpose.msra.mxu0 0.0
        %211 = vmatprep.subr.mxu0 0.0
        %212 = vmatpush1.xpose.msra.mxu0 0.0
        %213 = vmatprep.subr.mxu0 0.0
        %214 = vmatpush1.xpose.msra.mxu0 0.0
        %215 = vmatprep.subr.mxu0 0.0
        %216 = vmatpush1.xpose.msra.mxu0 0.0
        %217 = vmatprep.subr.mxu0 0.0
        %218 = vmatpush1.xpose.msra.mxu0 0.0
        %219 = vmatprep.subr.mxu0 0.0
        %220 = vmatpush1.xpose.msra.mxu0 0.0
        %221 = vmatprep.subr.mxu0 0.0
        %222 = vmatpush1.xpose.msra.mxu0 0.0
        %223 = vmatprep.subr.mxu0 0.0
        %224 = vmatpush1.xpose.msra.mxu0 0.0
        %225 = vmatprep.subr.mxu0 0.0
        %226 = vmatpush1.xpose.msra.mxu0 0.0
        %227 = vmatprep.subr.mxu0 0.0
        %228 = vmatpush1.xpose.msra.mxu0 0.0
        %229 = vmatprep.subr.mxu0 0.0
        %230 = vmatpush1.xpose.msra.mxu0 0.0
        %231 = vmatprep.subr.mxu0 0.0
        %232 = vmatpush1.xpose.msra.mxu0 0.0
        %233 = vmatprep.subr.mxu0 0.0
        %234 = vmatpush1.xpose.msra.mxu0 0.0
        %235 = vmatprep.subr.mxu0 0.0
        %236 = vmatpush1.xpose.msra.mxu0 %v205
        %237 = vmatprep.subr.mxu0 0.0
        %238 = vmatpush1.xpose.msra.mxu0 %v203
        %239 = vmatprep.subr.mxu0 0.0
        %240 = vmatpush2.xpose.msra.mxu0 0.0
        %241 = vmatprep.subr.mxu0 0.0
        %242 = vmatpush2.xpose.msra.mxu0 0.0
        %243 = vmatprep.subr.mxu0 0.0
        %244 = vmatpush2.xpose.msra.mxu0 0.0
        %245 = vmatprep.subr.mxu0 0.0
        %246 = vmatpush2.xpose.msra.mxu0 0.0
        %247 = vmatprep.subr.mxu0 0.0
        %248 = vmatpush2.xpose.msra.mxu0 0.0
        %249 = vmatprep.subr.mxu0 0.0
        %250 = vmatpush2.xpose.msra.mxu0 0.0
        %251 = vmatprep.subr.mxu0 0.0
        %252 = vmatpush2.xpose.msra.mxu0 0.0
        %253 = vmatprep.subr.mxu0 0.0
        %254 = vmatpush2.xpose.msra.mxu0 0.0
        %255 = vmatprep.subr.mxu0 0.0
        %256 = vmatpush2.xpose.msra.mxu0 0.0
        %257 = vmatprep.subr.mxu0 0.0
        %258 = vmatpush2.xpose.msra.mxu0 0.0
        %259 = vmatprep.subr.mxu0 0.0
        %260 = vmatpush2.xpose.msra.mxu0 0.0
        %261 = vmatprep.subr.mxu0 0.0
        %262 = vmatpush2.xpose.msra.mxu0 0.0
        %263 = vmatprep.subr.mxu0 0.0
        %264 = vmatpush2.xpose.msra.mxu0 0.0
        %265 = vmatprep.subr.mxu0 0.0
        %266 = vmatpush2.xpose.msra.mxu0 0.0
        %267 = vmatprep.subr.mxu0 0.0
        %268 = vmatpush2.xpose.msra.mxu0 0.0
        %269 = vmatprep.subr.mxu0 0.0
        %270 = vmatpush2.xpose.msra.mxu0 0.0
        %271 = vmatprep.mubr.f32.mxu0 0.0
        %272 = vmatmul.mubr.f32.gmra.mxu0 %v199
        %v273 = vpop.f32.mrf.mxu0
        %v274 = vadd.f32 0.0, %v273
        %v275 = vpop.f32.mrf.mxu0
        %276 = vmatprep.mubr.f32.mxu0 0.0
        %277 = vmatmul.mubr.f32.gmra.mxu0 %v201
        %v278 = vpop.f32.mrf.mxu0
        %v279 = vadd.f32 0.0, %v278
        %v280 = vpop.f32.mrf.mxu0
        %281 = vdwg.mxu0
        %v282 = vmul.f32 %v274, 0.5
        %v283 = vmul.f32 %v279, 0.5
        %vm284 = vcmask 130048
        %v285 = vsel %vm284, %v282, -inf
        %286 = vmax.xlane.f32.xlu0 %v285
        %v287 = vpop.xlane.xlu0 %286
        %v288 = vsel %vm284, %v283, -inf
        %289 = vmax.xlane.f32.xlu0 %v288
        %v290 = vpop.xlane.xlu0 %289
        %v291 = vsub.f32 %v282, %v287
        %v292 = vsub.f32 %v283, %v290
        %v293 = vmul.f32 %v291, 1.442695
        %v294 = vpow.pop %v293
        %v295 = vmul.f32 %v292, 1.442695
        %v296 = vpow.pop %v295
        %v297 = vsel %vm284, %v294, 0.0
        %298 = vadd.xlane.f32.xlu0 %v297
        %v299 = vpop.xlane.xlu0 %298
        %v300 = vsel %vm284, %v296, 0.0
        %301 = vadd.xlane.f32.xlu0 %v300
        %v302 = vpop.xlane.xlu0 %301
        %v303 = vrcp.pop %v299
        %v304 = vrcp.pop %v302
        %v305 = vmul.f32 %v294, %v303
        %v306 = vmul.f32 %v296, %v304
        %307 = vrot.lane.b32.xlu0 %v192, 112
        %v308 = vpop.permute.xlu0 %307
        %309 = vrot.lane.b32.xlu0 %v193, 112
        %v310 = vpop.permute.xlu0 %309
        %v314 = vsel %vm284, %v305, 0
        %v317 = vsel %vm284, %v306, 0
        %319 = vmatprep.subr.mxu0 0.0
        %320 = vmatpush1.msra.mxu0 0.0
        %321 = vmatprep.subr.mxu0 0.0
        %322 = vmatpush1.msra.mxu0 0.0
        %323 = vmatprep.subr.mxu0 0.0
        %324 = vmatpush1.msra.mxu0 0.0
        %325 = vmatprep.subr.mxu0 0.0
        %326 = vmatpush1.msra.mxu0 0.0
        %327 = vmatprep.subr.mxu0 0.0
        %328 = vmatpush1.msra.mxu0 0.0
        %329 = vmatprep.subr.mxu0 0.0
        %330 = vmatpush1.msra.mxu0 0.0
        %331 = vmatprep.subr.mxu0 0.0
        %332 = vmatpush1.msra.mxu0 0.0
        %333 = vmatprep.subr.mxu0 0.0
        %334 = vmatpush1.msra.mxu0 0.0
        %335 = vmatprep.subr.mxu0 0.0
        %336 = vmatpush1.msra.mxu0 0.0
        %337 = vmatprep.subr.mxu0 0.0
        %338 = vmatpush1.msra.mxu0 0.0
        %339 = vmatprep.subr.mxu0 0.0
        %340 = vmatpush1.msra.mxu0 0.0
        %341 = vmatprep.subr.mxu0 0.0
        %342 = vmatpush1.msra.mxu0 0.0
        %343 = vmatprep.subr.mxu0 0.0
        %344 = vmatpush1.msra.mxu0 0.0
        %345 = vmatprep.subr.mxu0 0.0
        %346 = vmatpush1.msra.mxu0 0.0
        %347 = vmatprep.subr.mxu0 0.0
        %348 = vmatpush1.msra.mxu0 %v310
        %349 = vmatprep.subr.mxu0 0.0
        %350 = vmatpush1.msra.mxu0 %v308
        %351 = vmatprep.subr.mxu0 0.0
        %352 = vmatpush2.msra.mxu0 0.0
        %353 = vmatprep.subr.mxu0 0.0
        %354 = vmatpush2.msra.mxu0 0.0
        %355 = vmatprep.subr.mxu0 0.0
        %356 = vmatpush2.msra.mxu0 0.0
        %357 = vmatprep.subr.mxu0 0.0
        %358 = vmatpush2.msra.mxu0 0.0
        %359 = vmatprep.subr.mxu0 0.0
        %360 = vmatpush2.msra.mxu0 0.0
        %361 = vmatprep.subr.mxu0 0.0
        %362 = vmatpush2.msra.mxu0 0.0
        %363 = vmatprep.subr.mxu0 0.0
        %364 = vmatpush2.msra.mxu0 0.0
        %365 = vmatprep.subr.mxu0 0.0
        %366 = vmatpush2.msra.mxu0 0.0
        %367 = vmatprep.subr.mxu0 0.0
        %368 = vmatpush2.msra.mxu0 0.0
        %369 = vmatprep.subr.mxu0 0.0
        %370 = vmatpush2.msra.mxu0 0.0
        %371 = vmatprep.subr.mxu0 0.0
        %372 = vmatpush2.msra.mxu0 0.0
        %373 = vmatprep.subr.mxu0 0.0
        %374 = vmatpush2.msra.mxu0 0.0
        %375 = vmatprep.subr.mxu0 0.0
        %376 = vmatpush2.msra.mxu0 0.0
        %377 = vmatprep.subr.mxu0 0.0
        %378 = vmatpush2.msra.mxu0 0.0
        %379 = vmatprep.subr.mxu0 0.0
        %380 = vmatpush2.msra.mxu0 0.0
        %381 = vmatprep.subr.mxu0 0.0
        %382 = vmatpush2.msra.mxu0 0.0
        %383 = vmatprep.mubr.f32.mxu0 0.0
        %384 = vmatmul.mubr.f32.gmra.mxu0 %v314
        %v385 = vpop.f32.mrf.mxu0
        %v386 = vadd.f32 0.0, %v385
        %v387 = vpop.f32.mrf.mxu0
        %388 = vmatprep.mubr.f32.mxu0 0.0
        %389 = vmatmul.mubr.f32.gmra.mxu0 %v317
        %v390 = vpop.f32.mrf.mxu0
        %v391 = vadd.f32 0.0, %v390
        %v392 = vpop.f32.mrf.mxu0
        %393 = vdwg.mxu0
        %394 = vrot.lane.b32.xlu0 %v192, 124
        %v395 = vpop.permute.xlu0 %394
        %396 = vrot.lane.b32.xlu0 %v193, 124
        %v397 = vpop.permute.xlu0 %396
        %398 = vrot.lane.b32.xlu0 %v192, 116
        %v399 = vpop.permute.xlu0 %398
        %400 = vrot.lane.b32.xlu0 %v193, 116
        %v401 = vpop.permute.xlu0 %400
        %v402 = vsel %vm198, %v395, 0
        %v404 = vsel %vm198, %v397, 0
        %v406 = vsel %vm198, %v399, 0
        %v408 = vsel %vm198, %v401, 0
        %410 = vmatprep.subr.mxu0 0.0
        %411 = vmatpush1.xpose.msra.mxu0 0.0
        %412 = vmatprep.subr.mxu0 0.0
        %413 = vmatpush1.xpose.msra.mxu0 0.0
        %414 = vmatprep.subr.mxu0 0.0
        %415 = vmatpush1.xpose.msra.mxu0 0.0
        %416 = vmatprep.subr.mxu0 0.0
        %417 = vmatpush1.xpose.msra.mxu0 0.0
        %418 = vmatprep.subr.mxu0 0.0
        %419 = vmatpush1.xpose.msra.mxu0 0.0
        %420 = vmatprep.subr.mxu0 0.0
        %421 = vmatpush1.xpose.msra.mxu0 0.0
        %422 = vmatprep.subr.mxu0 0.0
        %423 = vmatpush1.xpose.msra.mxu0 0.0
        %424 = vmatprep.subr.mxu0 0.0
        %425 = vmatpush1.xpose.msra.mxu0 0.0
        %426 = vmatprep.subr.mxu0 0.0
        %427 = vmatpush1.xpose.msra.mxu0 0.0
        %428 = vmatprep.subr.mxu0 0.0
        %429 = vmatpush1.xpose.msra.mxu0 0.0
        %430 = vmatprep.subr.mxu0 0.0
        %431 = vmatpush1.xpose.msra.mxu0 0.0
        %432 = vmatprep.subr.mxu0 0.0
        %433 = vmatpush1.xpose.msra.mxu0 0.0
        %434 = vmatprep.subr.mxu0 0.0
        %435 = vmatpush1.xpose.msra.mxu0 0.0
        %436 = vmatprep.subr.mxu0 0.0
        %437 = vmatpush1.xpose.msra.mxu0 0.0
        %438 = vmatprep.subr.mxu0 0.0
        %439 = vmatpush1.xpose.msra.mxu0 %v408
        %440 = vmatprep.subr.mxu0 0.0
        %441 = vmatpush1.xpose.msra.mxu0 %v406
        %442 = vmatprep.subr.mxu0 0.0
        %443 = vmatpush2.xpose.msra.mxu0 0.0
        %444 = vmatprep.subr.mxu0 0.0
        %445 = vmatpush2.xpose.msra.mxu0 0.0
        %446 = vmatprep.subr.mxu0 0.0
        %447 = vmatpush2.xpose.msra.mxu0 0.0
        %448 = vmatprep.subr.mxu0 0.0
        %449 = vmatpush2.xpose.msra.mxu0 0.0
        %450 = vmatprep.subr.mxu0 0.0
        %451 = vmatpush2.xpose.msra.mxu0 0.0
        %452 = vmatprep.subr.mxu0 0.0
        %453 = vmatpush2.xpose.msra.mxu0 0.0
        %454 = vmatprep.subr.mxu0 0.0
        %455 = vmatpush2.xpose.msra.mxu0 0.0
        %456 = vmatprep.subr.mxu0 0.0
        %457 = vmatpush2.xpose.msra.mxu0 0.0
        %458 = vmatprep.subr.mxu0 0.0
        %459 = vmatpush2.xpose.msra.mxu0 0.0
        %460 = vmatprep.subr.mxu0 0.0
        %461 = vmatpush2.xpose.msra.mxu0 0.0
        %462 = vmatprep.subr.mxu0 0.0
        %463 = vmatpush2.xpose.msra.mxu0 0.0
        %464 = vmatprep.subr.mxu0 0.0
        %465 = vmatpush2.xpose.msra.mxu0 0.0
        %466 = vmatprep.subr.mxu0 0.0
        %467 = vmatpush2.xpose.msra.mxu0 0.0
        %468 = vmatprep.subr.mxu0 0.0
        %469 = vmatpush2.xpose.msra.mxu0 0.0
        %470 = vmatprep.subr.mxu0 0.0
        %471 = vmatpush2.xpose.msra.mxu0 0.0
        %472 = vmatprep.subr.mxu0 0.0
        %473 = vmatpush2.xpose.msra.mxu0 0.0
        %474 = vmatprep.mubr.f32.mxu0 0.0
        %475 = vmatmul.mubr.f32.gmra.mxu0 %v402
        %v476 = vpop.f32.mrf.mxu0
        %v477 = vadd.f32 0.0, %v476
        %v478 = vpop.f32.mrf.mxu0
        %479 = vmatprep.mubr.f32.mxu0 0.0
        %480 = vmatmul.mubr.f32.gmra.mxu0 %v404
        %v481 = vpop.f32.mrf.mxu0
        %v482 = vadd.f32 0.0, %v481
        %v483 = vpop.f32.mrf.mxu0
        %484 = vdwg.mxu0
        %v485 = vmul.f32 %v477, 0.5
        %v486 = vmul.f32 %v482, 0.5
        %v487 = vsel %vm284, %v485, -inf
        %488 = vmax.xlane.f32.xlu0 %v487
        %v489 = vpop.xlane.xlu0 %488
        %v490 = vsel %vm284, %v486, -inf
        %491 = vmax.xlane.f32.xlu0 %v490
        %v492 = vpop.xlane.xlu0 %491
        %v493 = vsub.f32 %v485, %v489
        %v494 = vsub.f32 %v486, %v492
        %v495 = vmul.f32 %v493, 1.442695
        %v496 = vpow.pop %v495
        %v497 = vmul.f32 %v494, 1.442695
        %v498 = vpow.pop %v497
        %v499 = vsel %vm284, %v496, 0.0
        %500 = vadd.xlane.f32.xlu0 %v499
        %v501 = vpop.xlane.xlu0 %500
        %v502 = vsel %vm284, %v498, 0.0
        %503 = vadd.xlane.f32.xlu0 %v502
        %v504 = vpop.xlane.xlu0 %503
        %v505 = vrcp.pop %v501
        %v506 = vrcp.pop %v504
        %v507 = vmul.f32 %v496, %v505
        %v508 = vmul.f32 %v498, %v506
        %509 = vrot.lane.b32.xlu0 %v192, 108
        %v510 = vpop.permute.xlu0 %509
        %511 = vrot.lane.b32.xlu0 %v193, 108
        %v512 = vpop.permute.xlu0 %511
        %v516 = vsel %vm284, %v507, 0
        %v519 = vsel %vm284, %v508, 0
        %521 = vmatprep.subr.mxu0 0.0
        %522 = vmatpush1.msra.mxu0 0.0
        %523 = vmatprep.subr.mxu0 0.0
        %524 = vmatpush1.msra.mxu0 0.0
        %525 = vmatprep.subr.mxu0 0.0
        %526 = vmatpush1.msra.mxu0 0.0
        %527 = vmatprep.subr.mxu0 0.0
        %528 = vmatpush1.msra.mxu0 0.0
        %529 = vmatprep.subr.mxu0 0.0
        %530 = vmatpush1.msra.mxu0 0.0
        %531 = vmatprep.subr.mxu0 0.0
        %532 = vmatpush1.msra.mxu0 0.0
        %533 = vmatprep.subr.mxu0 0.0
        %534 = vmatpush1.msra.mxu0 0.0
        %535 = vmatprep.subr.mxu0 0.0
        %536 = vmatpush1.msra.mxu0 0.0
        %537 = vmatprep.subr.mxu0 0.0
        %538 = vmatpush1.msra.mxu0 0.0
        %539 = vmatprep.subr.mxu0 0.0
        %540 = vmatpush1.msra.mxu0 0.0
        %541 = vmatprep.subr.mxu0 0.0
        %542 = vmatpush1.msra.mxu0 0.0
        %543 = vmatprep.subr.mxu0 0.0
        %544 = vmatpush1.msra.mxu0 0.0
        %545 = vmatprep.subr.mxu0 0.0
        %546 = vmatpush1.msra.mxu0 0.0
        %547 = vmatprep.subr.mxu0 0.0
        %548 = vmatpush1.msra.mxu0 0.0
        %549 = vmatprep.subr.mxu0 0.0
        %550 = vmatpush1.msra.mxu0 %v512
        %551 = vmatprep.subr.mxu0 0.0
        %552 = vmatpush1.msra.mxu0 %v510
        %553 = vmatprep.subr.mxu0 0.0
        %554 = vmatpush2.msra.mxu0 0.0
        %555 = vmatprep.subr.mxu0 0.0
        %556 = vmatpush2.msra.mxu0 0.0
        %557 = vmatprep.subr.mxu0 0.0
        %558 = vmatpush2.msra.mxu0 0.0
        %559 = vmatprep.subr.mxu0 0.0
        %560 = vmatpush2.msra.mxu0 0.0
        %561 = vmatprep.subr.mxu0 0.0
        %562 = vmatpush2.msra.mxu0 0.0
        %563 = vmatprep.subr.mxu0 0.0
        %564 = vmatpush2.msra.mxu0 0.0
        %565 = vmatprep.subr.mxu0 0.0
        %566 = vmatpush2.msra.mxu0 0.0
        %567 = vmatprep.subr.mxu0 0.0
        %568 = vmatpush2.msra.mxu0 0.0
        %569 = vmatprep.subr.mxu0 0.0
        %570 = vmatpush2.msra.mxu0 0.0
        %571 = vmatprep.subr.mxu0 0.0
        %572 = vmatpush2.msra.mxu0 0.0
        %573 = vmatprep.subr.mxu0 0.0
        %574 = vmatpush2.msra.mxu0 0.0
        %575 = vmatprep.subr.mxu0 0.0
        %576 = vmatpush2.msra.mxu0 0.0
        %577 = vmatprep.subr.mxu0 0.0
        %578 = vmatpush2.msra.mxu0 0.0
        %579 = vmatprep.subr.mxu0 0.0
        %580 = vmatpush2.msra.mxu0 0.0
        %581 = vmatprep.subr.mxu0 0.0
        %582 = vmatpush2.msra.mxu0 0.0
        %583 = vmatprep.subr.mxu0 0.0
        %584 = vmatpush2.msra.mxu0 0.0
        %585 = vmatprep.mubr.f32.mxu0 0.0
        %586 = vmatmul.mubr.f32.gmra.mxu0 %v516
        %v587 = vpop.f32.mrf.mxu0
        %v588 = vadd.f32 0.0, %v587
        %v589 = vpop.f32.mrf.mxu0
        %590 = vmatprep.mubr.f32.mxu0 0.0
        %591 = vmatmul.mubr.f32.gmra.mxu0 %v519
        %v592 = vpop.f32.mrf.mxu0
        %v593 = vadd.f32 0.0, %v592
        %v594 = vpop.f32.mrf.mxu0
        %595 = vdwg.mxu0
        %598 = vrot.lane.b32.xlu0 %v588, 4
        %v599 = vpop.permute.xlu0 %598
        %600 = vrot.lane.b32.xlu0 %v593, 4
        %v601 = vpop.permute.xlu0 %600
        %v604 = vsel %vm198, %v386, %v599
        %v605 = vsel %vm198, %v391, %v601
        %v608 = vcombine.high %v604, %v604
        %v609 = vcombine.high %v605, %v605
        %vm612 = vcmask 60416
        %613 = vst.msk [vmem:[%s183] sm:$0xf] %vm612, %v604
        %614 = vst.msk [vmem:[%s183 + $0x4] sm:$0xf] %vm612, %v608
        %615 = vst.msk [vmem:[%s183 + $0x8] sm:$0xf] %vm612, %v605
        %616 = vst.msk [vmem:[%s183 + $0xc] sm:$0xf] %vm612, %v609
        %s617 = sand.u32 %s62, 1
        %s618 = sand.u32 %s62, 1
        %s619 = smul.addr %s618, 16
        %s620 = scalar_lea.vmem [#allocation3], %s619
        // Predicated region
        $region66: #{rsab_forward.19} parent=60 // pred_check
          %p621 = pneg %p72
        $region67: #{rsab_forward.19} parent=60 // pred_check_branch
          %623 = sbr.rel (%p621) target = $region69
        $region68: #{rsab_forward.19} parent=60 // pred_region
          %s624 = smul.addr %s16, 8
          %s625 = sadd.s32 %s17, %s624
          %s626 = smul.addr %s625, 4
          %s627 = scalar_lea.vmem %s1, %s626
          // Predicated region
          $region70: #{rsab_forward.19} parent=68 // pred_check
            _
          $region71: #{rsab_forward.19} parent=68 // pred_check_branch
            %629 = sbr.rel (0) target = $region73
          $region72: #{rsab_forward.19} parent=68 // pred_region
            // Predicated region
            $region74: #{rsab_forward.19} parent=72 // pred_check
              _
            $region75: #{rsab_forward.19} parent=72 // pred_check_branch
              %631 = sbr.rel target = $region77
            $region76: #{rsab_forward.19} parent=72 // pred_region
              // Predicated region
              $region89: #{rsab_forward.19} parent=76 // pred_check
                _
              $region90: #{rsab_forward.19} parent=76 // pred_check_branch
                %653 = sbr.rel (0) target = $region92
              $region91: #{rsab_forward.19} parent=76 // pred_region
                loop: start=0, step=1, limit=1
                $region93: #{rsab_forward.19} parent=91 // loop_pre_header
                  _
                $region94: #{rsab_forward.19} parent=91 // loop_header
                  %s655 = sphi 0, %s659
                  %p656 = scmp.ge.s32.totalorder %s655, 1
                  %s660 = sphi %s620, %s620
                  %s661 = sphi %s627, %s627
                $region95: #{rsab_forward.19} parent=91 // loop_header_branch
                  %658 = sbr.rel (%p656) target = $region99
                $region96: #{rsab_forward.19} parent=91 // loop_body
                  _
                $region97: #{rsab_forward.19} parent=91 // loop_footer
                  %s659 = sadd.s32 1, %s655
                $region98: #{rsab_forward.19} parent=91 // loop_footer_branch
                  %654 = sbr.rel target = $region94
                $region99: #{rsab_forward.19} parent=91 // loop_exit
                  _
                %s663 = ssub.s32 16, 1
                loop: start=0, step=1, limit=1
                $region100: #{rsab_forward.19} parent=91 // loop_pre_header
                  _
                $region101: #{rsab_forward.19} parent=91 // loop_header
                  %s665 = sphi 0, %s669
                  %p666 = scmp.ge.s32.totalorder %s665, 1
                  %s670 = sphi %s620, %s620
                  %s671 = sphi %s627, %s627
                $region102: #{rsab_forward.19} parent=91 // loop_header_branch
                  %668 = sbr.rel (%p666) target = $region106
                $region103: #{rsab_forward.19} parent=91 // loop_body
                  %v672 = vld [vmem:[%s670] sm:%s663]
                  %673 = vst [vmem:[%s671] sm:%s663] %v672
                  %v674 = vld [vmem:[%s670 + $0x4] sm:%s663]
                  %675 = vst [vmem:[%s671 + $0x8] sm:%s663] %v674
                  %v676 = vld [vmem:[%s670 + $0x8] sm:%s663]
                  %677 = vst [vmem:[%s671 + $0x10] sm:%s663] %v676
                  %v678 = vld [vmem:[%s670 + $0xc] sm:%s663]
                  %679 = vst [vmem:[%s671 + $0x18] sm:%s663] %v678
                $region104: #{rsab_forward.19} parent=91 // loop_footer
                  %s669 = sadd.s32 1, %s665
                $region105: #{rsab_forward.19} parent=91 // loop_footer_branch
                  %664 = sbr.rel target = $region101
                $region106: #{rsab_forward.19} parent=91 // loop_exit
                  _
              $region92: #{rsab_forward.19} parent=76 // pred_fallthru
                _
            $region77: #{rsab_forward.19} parent=72 // pred_fallthru
              _
            // Predicated region
            $region78: #{rsab_forward.19} parent=72 // pred_check
              _
            $region79: #{rsab_forward.19} parent=72 // pred_check_branch
              %633 = sbr.rel (0) target = $region81
            $region80: #{rsab_forward.19} parent=72 // pred_region
              %s635 = ssub.s32 16, 1
              loop: start=0, step=1, limit=1
              $region82: #{rsab_forward.19} parent=80 // loop_pre_header
                _
              $region83: #{rsab_forward.19} parent=80 // loop_header
                %s637 = sphi 0, %s641
                %p638 = scmp.ge.s32.totalorder %s637, 1
                %s642 = sphi %s620, %s620
                %s643 = sphi %s627, %s627
              $region84: #{rsab_forward.19} parent=80 // loop_header_branch
                %640 = sbr.rel (%p638) target = $region88
              $region85: #{rsab_forward.19} parent=80 // loop_body
                %v644 = vld [vmem:[%s642] sm:%s635]
                %645 = vst [vmem:[%s643] sm:%s635] %v644
                %v646 = vld [vmem:[%s642 + $0x4] sm:%s635]
                %647 = vst [vmem:[%s643 + $0x8] sm:%s635] %v646
                %v648 = vld [vmem:[%s642 + $0x8] sm:%s635]
                %649 = vst [vmem:[%s643 + $0x10] sm:%s635] %v648
                %v650 = vld [vmem:[%s642 + $0xc] sm:%s635]
                %651 = vst [vmem:[%s643 + $0x18] sm:%s635] %v650
              $region86: #{rsab_forward.19} parent=80 // loop_footer
                %s641 = sadd.s32 1, %s637
              $region87: #{rsab_forward.19} parent=80 // loop_footer_branch
                %636 = sbr.rel target = $region83
              $region88: #{rsab_forward.19} parent=80 // loop_exit
                _
            $region81: #{rsab_forward.19} parent=72 // pred_fallthru
              _
          $region73: #{rsab_forward.19} parent=68 // pred_fallthru
            _
          %680 = vnop
        $region69: #{rsab_forward.19} parent=60 // pred_fallthru
          _
      $region61: #{rsab_forward.19} parent=5 // pred_fallthru
        _
      %p681 = scmp.le.s32.totalorder 2, %s7
      // Predicated region
      $region107: #{rsab_forward.19} parent=5 // pred_check
        %p682 = pneg %p681
      $region108: #{rsab_forward.19} parent=5 // pred_check_branch
        %684 = sbr.rel (%p682) target = $region110
      $region109: #{rsab_forward.19} parent=5 // pred_region
        %s685 = ssub.s32 %s7, 2
        // Predicated region
        $region111: #{rsab_forward.19} parent=109 // pred_check
          %p686 = pneg %p78
        $region112: #{rsab_forward.19} parent=109 // pred_check_branch
          %688 = sbr.rel (%p686) target = $region114
        $region113: #{rsab_forward.19} parent=109 // pred_region
          %s689 = sand.u32 %s63, 1
          %s690 = sand.u32 %s63, 1
          %s691 = smul.addr %s690, 16
          %s692 = scalar_lea.vmem [#allocation3], %s691
        $region114: #{rsab_forward.19} parent=109 // pred_fallthru
          _
      $region110: #{rsab_forward.19} parent=5 // pred_fallthru
        _
    $region6: #{rsab_forward.19} parent=1 // loop_footer
      %s11 = sadd.s32 1, %s7
    $region7: #{rsab_forward.19} parent=1 // loop_footer_branch
      %6 = sbr.rel target = $region3
    $region8: #{rsab_forward.19} parent=1 // loop_exit
      _

// kernel: rsab_forward.17
$region0: #{rsab_forward.17}
  #allocation0 [shape = 'u32[]', space=smem, size = 0x4, offset = 0x4, fixed_abs, tag = 'smem constant byte address 0x4 - core index']
  #allocation1 [shape = 'u32[144,128]{1,0:T(1,128)}', space=vmem, size = 0x12000, scoped, tag = 'internal scratch']
  %s0 = inlined_call_operand.vmem [shape: f32[2,160,8], index: 0, kind: input, shape index: {}, may-alias: {0,1}]
  %s1 = inlined_call_operand.vmem [shape: f32[2,160,8], index: 1, kind: input, shape index: {}, may-alias: {0,1}]
  %s2 = inlined_call_operand.vmem [shape: f32[72,16], index: 2, kind: input, shape index: {}]
  %s3 = inlined_call_operand.vmem [shape: f32[1,16], index: 3, kind: input, shape index: {}]
  %s4 = inlined_call_operand.vmem [shape: f32[16,8], index: 4, kind: input, shape index: {}]
  %s5 = inlined_call_operand.vmem [shape: f32[1,8], index: 5, kind: input, shape index: {}]
  %s6 = inlined_call_operand.vmem [shape: f32[2,64,8], index: 6, kind: input, shape index: {}]
  %s7 = inlined_call_operand.vmem [shape: f32[2,64,8], index: 7, kind: output, shape index: {}]
  %s8 = sld [smem:[#allocation0]]
  $region61: #{rsab_forward.17} parent=0
    _
  %s10 = ssub.s32 1, %s8
  %s11 = scalar_select 0, %s10, %s8
  loop: start=0, step=1, limit=4
  $region2: #{rsab_forward.17} parent=0 // loop_pre_header
    _
  $region3: #{rsab_forward.17} parent=0 // loop_header
    %s13 = sphi 0, %s17
    %p14 = scmp.ge.s32.totalorder %s13, 4
    %s20 = sphi 0, %s32
    %s21 = sphi 0, %s28
    %s22 = sphi 0, %s20
    %s23 = sphi 0, %s21
    %s24 = sphi 0, %s22
    %s25 = sphi 0, %s23
    %s37 = sphi 0, %s39
    %s40 = sphi 0, %s37
    %s41 = sphi 0, %s40
    %s57 = sphi 0, %s41
    %s67 = sphi 0, %s69
    %s70 = sphi 0, %s67
    %s71 = sphi 0, %s70
    %s87 = sphi 0, %s71
    %s91 = sphi 0, %s91
    %s93 = sphi 0, %s91
    %s94 = sphi 0, %s93
    %s108 = sphi 0, %s94
    %s112 = sphi 0, %s112
    %s114 = sphi 0, %s112
    %s115 = sphi 0, %s114
    %s129 = sphi 0, %s115
    %s133 = sphi 0, %s133
    %s135 = sphi 0, %s133
    %s136 = sphi 0, %s135
    %s150 = sphi 0, %s136
    %s154 = sphi 0, %s154
    %s156 = sphi 0, %s154
    %s157 = sphi 0, %s156
    %s171 = sphi 0, %s157
    %s179 = sphi 0, %s181
    %s182 = sphi 0, %s179
    %s183 = sphi 0, %s182
    %s199 = sphi 0, %s183
    %s207 = sphi 0, %s209
    %s210 = sphi 0, %s207
    %s211 = sphi 0, %s210
    %s227 = sphi 0, %s211
  $region4: #{rsab_forward.17} parent=0 // loop_header_branch
    %16 = sbr.rel (%p14) target = $region8
  $region5: #{rsab_forward.17} parent=0 // loop_body
    %s18 = ssub.s32 %s13, 1
    %s19 = ssub.s32 %s13, 2
    %s26 = sadd.s32 1, %s21
    %p27 = scmp.ge.s32.totalorder %s26, 1
    %s28 = scalar_select %p27, 0, %s26
    %s29 = sadd.s32 1, %s20
    %s30 = scalar_select %p27, %s29, %s20
    %p31 = scmp.ge.s32.totalorder %s30, 2
    %s32 = scalar_select %p31, 0, %s30
    %s33 = ssub.s32 %s20, %s32
    %s34 = ssub.s32 %s21, %s28
    %s35 = sor.u32 %s33, %s34
    %p36 = scmp.eq.s32.totalorder %s35, 0
    %s38 = sadd.s32 %s37, 1
    %s39 = scalar_select %p36, %s37, %s38
    %p42 = pneg %p36
    %p43 = scmp.eq.s32.totalorder %s13, 1
    %p44 = por %p42, %p43
    %p45 = scmp.ne.s32.totalorder %s37, %s40
    %p46 = scmp.eq.s32.totalorder %s13, 0
    %p47 = por %p45, %p46
    %p48 = scmp.ne.s32.totalorder %s37, %s40
    %p49 = scmp.eq.s32.totalorder %s18, 1
    %p50 = por %p48, %p49
    %p51 = scmp.ne.s32.totalorder %s40, %s41
    %p52 = scmp.eq.s32.totalorder %s18, 0
    %p53 = por %p51, %p52
    %p54 = scmp.ne.s32.totalorder %s40, %s41
    %p55 = scmp.eq.s32.totalorder %s19, 1
    %p56 = por %p54, %p55
    %p58 = scmp.ne.s32.totalorder %s41, %s57
    %p59 = scmp.eq.s32.totalorder %s19, 0
    %p60 = por %p58, %p59
    %s61 = sadd.s32 %s21, 1
    %s62 = sadd.s32 %s28, 1
    %s63 = ssub.s32 %s20, %s32
    %s64 = ssub.s32 %s61, %s62
    %s65 = sor.u32 %s63, %s64
    %p66 = scmp.eq.s32.totalorder %s65, 0
    %s68 = sadd.s32 %s67, 1
    %s69 = scalar_select %p66, %s67, %s68
    %p72 = pneg %p66
    %p73 = scmp.eq.s32.totalorder %s13, 1
    %p74 = por %p72, %p73
    %p75 = scmp.ne.s32.totalorder %s67, %s70
    %p76 = scmp.eq.s32.totalorder %s13, 0
    %p77 = por %p75, %p76
    %p78 = scmp.ne.s32.totalorder %s67, %s70
    %p79 = scmp.eq.s32.totalorder %s18, 1
    %p80 = por %p78, %p79
    %p81 = scmp.ne.s32.totalorder %s70, %s71
    %p82 = scmp.eq.s32.totalorder %s18, 0
    %p83 = por %p81, %p82
    %p84 = scmp.ne.s32.totalorder %s70, %s71
    %p85 = scmp.eq.s32.totalorder %s19, 1
    %p86 = por %p84, %p85
    %p88 = scmp.ne.s32.totalorder %s71, %s87
    %p89 = scmp.eq.s32.totalorder %s19, 0
    %p90 = por %p88, %p89
    %s92 = sadd.s32 %s91, 1
    %p95 = scmp.eq.s32.totalorder %s13, 1
    %p96 = scmp.ne.s32.totalorder %s91, %s93
    %p97 = scmp.eq.s32.totalorder %s13, 0
    %p98 = por %p96, %p97
    %p99 = scmp.ne.s32.totalorder %s91, %s93
    %p100 = scmp.eq.s32.totalorder %s18, 1
    %p101 = por %p99, %p100
    %p102 = scmp.ne.s32.totalorder %s93, %s94
    %p103 = scmp.eq.s32.totalorder %s18, 0
    %p104 = por %p102, %p103
    %p105 = scmp.ne.s32.totalorder %s93, %s94
    %p106 = scmp.eq.s32.totalorder %s19, 1
    %p107 = por %p105, %p106
    %p109 = scmp.ne.s32.totalorder %s94, %s108
    %p110 = scmp.eq.s32.totalorder %s19, 0
    %p111 = por %p109, %p110
    %s113 = sadd.s32 %s112, 1
    %p116 = scmp.eq.s32.totalorder %s13, 1
    %p117 = scmp.ne.s32.totalorder %s112, %s114
    %p118 = scmp.eq.s32.totalorder %s13, 0
    %p119 = por %p117, %p118
    %p120 = scmp.ne.s32.totalorder %s112, %s114
    %p121 = scmp.eq.s32.totalorder %s18, 1
    %p122 = por %p120, %p121
    %p123 = scmp.ne.s32.totalorder %s114, %s115
    %p124 = scmp.eq.s32.totalorder %s18, 0
    %p125 = por %p123, %p124
    %p126 = scmp.ne.s32.totalorder %s114, %s115
    %p127 = scmp.eq.s32.totalorder %s19, 1
    %p128 = por %p126, %p127
    %p130 = scmp.ne.s32.totalorder %s115, %s129
    %p131 = scmp.eq.s32.totalorder %s19, 0
    %p132 = por %p130, %p131
    %s134 = sadd.s32 %s133, 1
    %p137 = scmp.eq.s32.totalorder %s13, 1
    %p138 = scmp.ne.s32.totalorder %s133, %s135
    %p139 = scmp.eq.s32.totalorder %s13, 0
    %p140 = por %p138, %p139
    %p141 = scmp.ne.s32.totalorder %s133, %s135
    %p142 = scmp.eq.s32.totalorder %s18, 1
    %p143 = por %p141, %p142
    %p144 = scmp.ne.s32.totalorder %s135, %s136
    %p145 = scmp.eq.s32.totalorder %s18, 0
    %p146 = por %p144, %p145
    %p147 = scmp.ne.s32.totalorder %s135, %s136
    %p148 = scmp.eq.s32.totalorder %s19, 1
    %p149 = por %p147, %p148
    %p151 = scmp.ne.s32.totalorder %s136, %s150
    %p152 = scmp.eq.s32.totalorder %s19, 0
    %p153 = por %p151, %p152
    %s155 = sadd.s32 %s154, 1
    %p158 = scmp.eq.s32.totalorder %s13, 1
    %p159 = scmp.ne.s32.totalorder %s154, %s156
    %p160 = scmp.eq.s32.totalorder %s13, 0
    %p161 = por %p159, %p160
    %p162 = scmp.ne.s32.totalorder %s154, %s156
    %p163 = scmp.eq.s32.totalorder %s18, 1
    %p164 = por %p162, %p163
    %p165 = scmp.ne.s32.totalorder %s156, %s157
    %p166 = scmp.eq.s32.totalorder %s18, 0
    %p167 = por %p165, %p166
    %p168 = scmp.ne.s32.totalorder %s156, %s157
    %p169 = scmp.eq.s32.totalorder %s19, 1
    %p170 = por %p168, %p169
    %p172 = scmp.ne.s32.totalorder %s157, %s171
    %p173 = scmp.eq.s32.totalorder %s19, 0
    %p174 = por %p172, %p173
    %s175 = ssub.s32 %s20, %s32
    %s176 = ssub.s32 %s21, %s28
    %s177 = sor.u32 %s175, %s176
    %p178 = scmp.eq.s32.totalorder %s177, 0
    %s180 = sadd.s32 %s179, 1
    %s181 = scalar_select %p178, %s179, %s180
    %p184 = pneg %p178
    %p185 = scmp.eq.s32.totalorder %s13, 1
    %p186 = por %p184, %p185
    %p187 = scmp.ne.s32.totalorder %s179, %s182
    %p188 = scmp.eq.s32.totalorder %s13, 0
    %p189 = por %p187, %p188
    %p190 = scmp.ne.s32.totalorder %s179, %s182
    %p191 = scmp.eq.s32.totalorder %s18, 1
    %p192 = por %p190, %p191
    %p193 = scmp.ne.s32.totalorder %s182, %s183
    %p194 = scmp.eq.s32.totalorder %s18, 0
    %p195 = por %p193, %p194
    %p196 = scmp.ne.s32.totalorder %s182, %s183
    %p197 = scmp.eq.s32.totalorder %s19, 1
    %p198 = por %p196, %p197
    %p200 = scmp.ne.s32.totalorder %s183, %s199
    %p201 = scmp.eq.s32.totalorder %s19, 0
    %p202 = por %p200, %p201
    %s203 = ssub.s32 %s20, %s32
    %s204 = ssub.s32 %s21, %s28
    %s205 = sor.u32 %s203, %s204
    %p206 = scmp.eq.s32.totalorder %s205, 0
    %s208 = sadd.s32 %s207, 1
    %s209 = scalar_select %p206, %s207, %s208
    %p212 = pneg %p206
    %p213 = scmp.eq.s32.totalorder %s13, 1
    %p214 = por %p212, %p213
    %p215 = scmp.ne.s32.totalorder %s207, %s210
    %p216 = scmp.eq.s32.totalorder %s13, 0
    %p217 = por %p215, %p216
    %p218 = scmp.ne.s32.totalorder %s207, %s210
    %p219 = scmp.eq.s32.totalorder %s18, 1
    %p220 = por %p218, %p219
    %p221 = scmp.ne.s32.totalorder %s210, %s211
    %p222 = scmp.eq.s32.totalorder %s18, 0
    %p223 = por %p221, %p222
    %p224 = scmp.ne.s32.totalorder %s210, %s211
    %p225 = scmp.eq.s32.totalorder %s19, 1
    %p226 = por %p224, %p225
    %p228 = scmp.ne.s32.totalorder %s211, %s227
    %p229 = scmp.eq.s32.totalorder %s19, 0
    %p230 = por %p228, %p229
    %p231 = scmp.le.s32.totalorder 1, %s13
    %p232 = scmp.lt.s32.totalorder %s13, 3
    %p233 = pnand %p231, %p232
    %p234 = pneg %p233
    // Predicated region
    $region9: #{rsab_forward.17} parent=5 // pred_check
      _
    $region10: #{rsab_forward.17} parent=5 // pred_check_branch
      %236 = sbr.rel (%p233) target = $region12
    $region11: #{rsab_forward.17} parent=5 // pred_region
      %s237 = ssub.s32 %s13, 1
      // Predicated region
      $region13: #{rsab_forward.17} parent=11 // pred_check
        %p238 = pneg %p104
      $region14: #{rsab_forward.17} parent=11 // pred_check_branch
        %240 = sbr.rel (%p238) target = $region16
      $region15: #{rsab_forward.17} parent=11 // pred_region
        _
      $region16: #{rsab_forward.17} parent=11 // pred_fallthru
        _
      // Predicated region
      $region17: #{rsab_forward.17} parent=11 // pred_check
        %p241 = pneg %p125
      $region18: #{rsab_forward.17} parent=11 // pred_check_branch
        %243 = sbr.rel (%p241) target = $region20
      $region19: #{rsab_forward.17} parent=11 // pred_region
        _
      $region20: #{rsab_forward.17} parent=11 // pred_fallthru
        _
      // Predicated region
      $region21: #{rsab_forward.17} parent=11 // pred_check
        %p244 = pneg %p146
      $region22: #{rsab_forward.17} parent=11 // pred_check_branch
        %246 = sbr.rel (%p244) target = $region24
      $region23: #{rsab_forward.17} parent=11 // pred_region
        _
      $region24: #{rsab_forward.17} parent=11 // pred_fallthru
        _
      // Predicated region
      $region25: #{rsab_forward.17} parent=11 // pred_check
        %p247 = pneg %p167
      $region26: #{rsab_forward.17} parent=11 // pred_check_branch
        %249 = sbr.rel (%p247) target = $region28
      $region27: #{rsab_forward.17} parent=11 // pred_region
        _
      $region28: #{rsab_forward.17} parent=11 // pred_fallthru
        _
    $region12: #{rsab_forward.17} parent=5 // pred_fallthru
      _
    %p250 = scmp.lt.s32.totalorder %s13, 2
    // Predicated region
    $region29: #{rsab_forward.17} parent=5 // pred_check
      %p251 = pneg %p250
    $region30: #{rsab_forward.17} parent=5 // pred_check_branch
      %253 = sbr.rel (%p251) target = $region32
    $region31: #{rsab_forward.17} parent=5 // pred_region
      // Predicated region
      $region33: #{rsab_forward.17} parent=31 // pred_check
        %p254 = pneg %p47
      $region34: #{rsab_forward.17} parent=31 // pred_check_branch
        %256 = sbr.rel (%p254) target = $region36
      $region35: #{rsab_forward.17} parent=31 // pred_region
        %s257 = smul.u32 10, %s21
        %p258 = scmp.lt.s32.totalorder %s20, 1
        %s259 = scalar_select %p258, %s20, 1
        %p260 = scmp.lt.s32.totalorder %s257, 19
        %s261 = scalar_select %p260, %s257, 19
        %s262 = smul.addr %s259, 20
        %s263 = sadd.s32 %s261, %s262
        %s264 = smul.addr %s263, 8
        %s265 = scalar_lea.vmem %s0, %s264
        %s266 = smul.u32 10, %s21
      $region36: #{rsab_forward.17} parent=31 // pred_fallthru
        _
      // Predicated region
      $region37: #{rsab_forward.17} parent=31 // pred_check
        %p267 = pneg %p77
      $region38: #{rsab_forward.17} parent=31 // pred_check_branch
        %269 = sbr.rel (%p267) target = $region40
      $region39: #{rsab_forward.17} parent=31 // pred_region
        %s270 = sadd.s32 %s21, 1
        %s271 = smul.u32 10, %s270
        %p272 = scmp.lt.s32.totalorder %s20, 1
        %s273 = scalar_select %p272, %s20, 1
        %p274 = scmp.lt.s32.totalorder %s271, 19
        %s275 = scalar_select %p274, %s271, 19
        %s276 = smul.addr %s273, 20
        %s277 = sadd.s32 %s275, %s276
        %s278 = smul.addr %s277, 8
        %s279 = scalar_lea.vmem %s1, %s278
        %s280 = sadd.s32 %s21, 1
        %s281 = smul.u32 10, %s280
      $region40: #{rsab_forward.17} parent=31 // pred_fallthru
        _
      // Predicated region
      $region41: #{rsab_forward.17} parent=31 // pred_check
        %p282 = pneg %p189
      $region42: #{rsab_forward.17} parent=31 // pred_check_branch
        %284 = sbr.rel (%p282) target = $region44
      $region43: #{rsab_forward.17} parent=31 // pred_region
        %s285 = smul.u32 8, %s21
        %p286 = scmp.lt.s32.totalorder %s20, 1
        %s287 = scalar_select %p286, %s20, 1
        %p288 = scmp.lt.s32.totalorder %s285, 7
        %s289 = scalar_select %p288, %s285, 7
        %s290 = smul.addr %s287, 8
        %s291 = sadd.s32 %s289, %s290
        %s292 = smul.addr %s291, 8
        %s293 = scalar_lea.vmem %s6, %s292
        %s294 = smul.u32 8, %s21
      $region44: #{rsab_forward.17} parent=31 // pred_fallthru
        _
    $region32: #{rsab_forward.17} parent=5 // pred_fallthru
      _
    %p295 = scmp.le.s32.totalorder 1, %s13
    %p296 = scmp.lt.s32.totalorder %s13, 3
    %p297 = pnand %p295, %p296
    %p298 = pneg %p297
    // Predicated region
    $region45: #{rsab_forward.17} parent=5 // pred_check
      _
    $region46: #{rsab_forward.17} parent=5 // pred_check_branch
      %300 = sbr.rel (%p297) target = $region48
    $region47: #{rsab_forward.17} parent=5 // pred_region
      %s301 = ssub.s32 %s13, 1
      %s302 = smul.u32 10, %s23
      %p303 = scmp.lt.s32.totalorder %s22, 1
      %s304 = scalar_select %p303, %s22, 1
      %p305 = scmp.lt.s32.totalorder %s302, 19
      %s306 = scalar_select %p305, %s302, 19
      %s307 = smul.addr %s304, 20
      %s308 = sadd.s32 %s306, %s307
      %s309 = smul.addr %s308, 8
      %s310 = scalar_lea.vmem %s0, %s309
      %p311 = pneg %p53
      %p312 = pneg %p50
      %s313 = sadd.s32 %s23, 1
      %s314 = smul.u32 10, %s313
      %p315 = scmp.lt.s32.totalorder %s22, 1
      %s316 = scalar_select %p315, %s22, 1
      %p317 = scmp.lt.s32.totalorder %s314, 19
      %s318 = scalar_select %p317, %s314, 19
      %s319 = smul.addr %s316, 20
      %s320 = sadd.s32 %s318, %s319
      %s321 = smul.addr %s320, 8
      %s322 = scalar_lea.vmem %s1, %s321
      %p323 = pneg %p83
      %p324 = pneg %p80
      %p325 = pneg %p104
      %p326 = pneg %p101
      %p327 = pneg %p125
      %p328 = pneg %p122
      %p329 = pneg %p146
      %p330 = pneg %p143
      %p331 = pneg %p167
      %p332 = pneg %p164
      %s333 = smul.u32 8, %s23
      %p334 = scmp.lt.s32.totalorder %s22, 1
      %s335 = scalar_select %p334, %s22, 1
      %p336 = scmp.lt.s32.totalorder %s333, 7
      %s337 = scalar_select %p336, %s333, 7
      %s338 = smul.addr %s335, 8
      %s339 = sadd.s32 %s337, %s338
      %s340 = smul.addr %s339, 8
      %s341 = scalar_lea.vmem %s6, %s340
      %p342 = pneg %p195
      %p343 = pneg %p192
      %p344 = pneg %p223
      %p345 = pneg %p220
      %s346 = smul.u32 8, %s23
      %p347 = scmp.lt.s32.totalorder %s22, 1
      %s348 = scalar_select %p347, %s22, 1
      %p349 = scmp.lt.s32.totalorder %s346, 7
      %s350 = scalar_select %p349, %s346, 7
      %s351 = smul.addr %s348, 8
      %s352 = sadd.s32 %s350, %s351
      %s353 = smul.addr %s352, 8
      %s354 = scalar_lea.vmem %s7, %s353
      %s355 = smul.u32 10, %s23
      %p356 = scmp.lt.s32.totalorder %s22, 1
      %s357 = scalar_select %p356, %s22, 1
      %p358 = scmp.lt.s32.totalorder %s355, 19
      %s359 = scalar_select %p358, %s355, 19
      %s360 = smul.addr %s357, 20
      %s361 = sadd.s32 %s359, %s360
      %s362 = smul.addr %s361, 8
      %s363 = scalar_lea.vmem %s0, %s362
      %s364 = smul.u32 10, %s23
      %s365 = sadd.s32 %s23, 1
      %s366 = smul.u32 10, %s365
      %p367 = scmp.lt.s32.totalorder %s22, 1
      %s368 = scalar_select %p367, %s22, 1
      %p369 = scmp.lt.s32.totalorder %s366, 19
      %s370 = scalar_select %p369, %s366, 19
      %s371 = smul.addr %s368, 20
      %s372 = sadd.s32 %s370, %s371
      %s373 = smul.addr %s372, 8
      %s374 = scalar_lea.vmem %s1, %s373
      %s375 = sadd.s32 %s23, 1
      %s376 = smul.u32 10, %s375
      %s377 = smul.u32 8, %s23
      %p378 = scmp.lt.s32.totalorder %s22, 1
      %s379 = scalar_select %p378, %s22, 1
      %p380 = scmp.lt.s32.totalorder %s377, 7
      %s381 = scalar_select %p380, %s377, 7
      %s382 = smul.addr %s379, 8
      %s383 = sadd.s32 %s381, %s382
      %s384 = smul.addr %s383, 8
      %s385 = scalar_lea.vmem %s6, %s384
      %s386 = smul.u32 8, %s23
      %s387 = smul.u32 8, %s23
      %p388 = scmp.lt.s32.totalorder %s22, 1
      %s389 = scalar_select %p388, %s22, 1
      %p390 = scmp.lt.s32.totalorder %s387, 7
      %s391 = scalar_select %p390, %s387, 7
      %s392 = smul.addr %s389, 8
      %s393 = sadd.s32 %s391, %s392
      %s394 = smul.addr %s393, 8
      %s395 = scalar_lea.vmem %s7, %s394
      %s396 = smul.u32 8, %s23
      %v397 = vld [vmem:[%s363] sm:$0xff]
      %v398 = vld [vmem:[%s363 + $0x8] sm:$0xff]
      %v399 = vld [vmem:[%s363 + $0x10] sm:$0xff]
      %v400 = vld [vmem:[%s363 + $0x18] sm:$0xff]
      %v401 = vld [vmem:[%s363 + $0x20] sm:$0xff]
      %v402 = vld [vmem:[%s363 + $0x28] sm:$0xff]
      %v403 = vld [vmem:[%s363 + $0x30] sm:$0xff]
      %v404 = vld [vmem:[%s363 + $0x38] sm:$0xff]
      %v405 = vld [vmem:[%s363 + $0x40] sm:$0xff]
      %v406 = vld [vmem:[%s363 + $0x48] sm:$0xff]
      %v407 = vld [vmem:[%s374] sm:$0xff]
      %v408 = vld [vmem:[%s374 + $0x8] sm:$0xff]
      %v409 = vld [vmem:[%s374 + $0x10] sm:$0xff]
      %vm421 = vcmask 1046528
      %v422 = vrot.slane %v397, 1
      %v423 = vrot.slane %v398, 1
      %v424 = vsel %vm421, %v422, %v423
      %v425 = vrot.slane %v399, 1
      %v426 = vsel %vm421, %v423, %v425
      %v427 = vrot.slane %v400, 1
      %v428 = vsel %vm421, %v425, %v427
      %v429 = vrot.slane %v401, 1
      %v430 = vsel %vm421, %v427, %v429
      %v431 = vrot.slane %v402, 1
      %v432 = vsel %vm421, %v429, %v431
      %v433 = vrot.slane %v403, 1
      %v434 = vsel %vm421, %v431, %v433
      %v435 = vrot.slane %v404, 1
      %v436 = vsel %vm421, %v433, %v435
      %v437 = vrot.slane %v405, 1
      %v438 = vsel %vm421, %v435, %v437
      %v439 = vrot.slane %v406, 1
      %v440 = vsel %vm421, %v437, %v439
      %v441 = vrot.slane %v407, 1
      %v442 = vsel %vm421, %v439, %v441
      %443 = vrot.lane.b32.xlu0 %v424, 8
      %v444 = vpop.permute.xlu0 %443
      %445 = vrot.lane.b32.xlu0 %v426, 8
      %v446 = vpop.permute.xlu0 %445
      %447 = vrot.lane.b32.xlu0 %v428, 8
      %v448 = vpop.permute.xlu0 %447
      %449 = vrot.lane.b32.xlu0 %v430, 8
      %v450 = vpop.permute.xlu0 %449
      %451 = vrot.lane.b32.xlu0 %v432, 8
      %v452 = vpop.permute.xlu0 %451
      %453 = vrot.lane.b32.xlu0 %v434, 8
      %v454 = vpop.permute.xlu0 %453
      %455 = vrot.lane.b32.xlu0 %v436, 8
      %v456 = vpop.permute.xlu0 %455
      %457 = vrot.lane.b32.xlu0 %v438, 8
      %v458 = vpop.permute.xlu0 %457
      %459 = vrot.lane.b32.xlu0 %v440, 8
      %v460 = vpop.permute.xlu0 %459
      %461 = vrot.lane.b32.xlu0 %v442, 8
      %v462 = vpop.permute.xlu0 %461
      %vm473 = vcmask 1045504
      %v474 = vrot.slane %v397, 2
      %v475 = vrot.slane %v398, 2
      %v476 = vsel %vm473, %v474, %v475
      %v477 = vrot.slane %v399, 2
      %v478 = vsel %vm473, %v475, %v477
      %v479 = vrot.slane %v400, 2
      %v480 = vsel %vm473, %v477, %v479
      %v481 = vrot.slane %v401, 2
      %v482 = vsel %vm473, %v479, %v481
      %v483 = vrot.slane %v402, 2
      %v484 = vsel %vm473, %v481, %v483
      %v485 = vrot.slane %v403, 2
      %v486 = vsel %vm473, %v483, %v485
      %v487 = vrot.slane %v404, 2
      %v488 = vsel %vm473, %v485, %v487
      %v489 = vrot.slane %v405, 2
      %v490 = vsel %vm473, %v487, %v489
      %v491 = vrot.slane %v406, 2
      %v492 = vsel %vm473, %v489, %v491
      %v493 = vrot.slane %v407, 2
      %v494 = vsel %vm473, %v491, %v493
      %495 = vrot.lane.b32.xlu0 %v476, 16
      %v496 = vpop.permute.xlu0 %495
      %497 = vrot.lane.b32.xlu0 %v478, 16
      %v498 = vpop.permute.xlu0 %497
      %499 = vrot.lane.b32.xlu0 %v480, 16
      %v500 = vpop.permute.xlu0 %499
      %501 = vrot.lane.b32.xlu0 %v482, 16
      %v502 = vpop.permute.xlu0 %501
      %503 = vrot.lane.b32.xlu0 %v484, 16
      %v504 = vpop.permute.xlu0 %503
      %505 = vrot.lane.b32.xlu0 %v486, 16
      %v506 = vpop.permute.xlu0 %505
      %507 = vrot.lane.b32.xlu0 %v488, 16
      %v508 = vpop.permute.xlu0 %507
      %509 = vrot.lane.b32.xlu0 %v490, 16
      %v510 = vpop.permute.xlu0 %509
      %511 = vrot.lane.b32.xlu0 %v492, 16
      %v512 = vpop.permute.xlu0 %511
      %513 = vrot.lane.b32.xlu0 %v494, 16
      %v514 = vpop.permute.xlu0 %513
      %v526 = vrot.slane %v408, 2
      %v527 = vsel %vm473, %v493, %v526
      %528 = vrot.lane.b32.xlu0 %v478, 24
      %v529 = vpop.permute.xlu0 %528
      %530 = vrot.lane.b32.xlu0 %v480, 24
      %v531 = vpop.permute.xlu0 %530
      %532 = vrot.lane.b32.xlu0 %v482, 24
      %v533 = vpop.permute.xlu0 %532
      %534 = vrot.lane.b32.xlu0 %v484, 24
      %v535 = vpop.permute.xlu0 %534
      %536 = vrot.lane.b32.xlu0 %v486, 24
      %v537 = vpop.permute.xlu0 %536
      %538 = vrot.lane.b32.xlu0 %v488, 24
      %v539 = vpop.permute.xlu0 %538
      %540 = vrot.lane.b32.xlu0 %v490, 24
      %v541 = vpop.permute.xlu0 %540
      %542 = vrot.lane.b32.xlu0 %v492, 24
      %v543 = vpop.permute.xlu0 %542
      %544 = vrot.lane.b32.xlu0 %v494, 24
      %v545 = vpop.permute.xlu0 %544
      %546 = vrot.lane.b32.xlu0 %v527, 24
      %v547 = vpop.permute.xlu0 %546
      %vm558 = vcmask 1044480
      %v559 = vrot.slane %v398, 3
      %v560 = vrot.slane %v399, 3
      %v561 = vsel %vm558, %v559, %v560
      %v562 = vrot.slane %v400, 3
      %v563 = vsel %vm558, %v560, %v562
      %v564 = vrot.slane %v401, 3
      %v565 = vsel %vm558, %v562, %v564
      %v566 = vrot.slane %v402, 3
      %v567 = vsel %vm558, %v564, %v566
      %v568 = vrot.slane %v403, 3
      %v569 = vsel %vm558, %v566, %v568
      %v570 = vrot.slane %v404, 3
      %v571 = vsel %vm558, %v568, %v570
      %v572 = vrot.slane %v405, 3
      %v573 = vsel %vm558, %v570, %v572
      %v574 = vrot.slane %v406, 3
      %v575 = vsel %vm558, %v572, %v574
      %v576 = vrot.slane %v407, 3
      %v577 = vsel %vm558, %v574, %v576
      %v578 = vrot.slane %v408, 3
      %v579 = vsel %vm558, %v576, %v578
      %580 = vrot.lane.b32.xlu0 %v561, 32
      %v581 = vpop.permute.xlu0 %580
      %582 = vrot.lane.b32.xlu0 %v563, 32
      %v583 = vpop.permute.xlu0 %582
      %584 = vrot.lane.b32.xlu0 %v565, 32
      %v585 = vpop.permute.xlu0 %584
      %586 = vrot.lane.b32.xlu0 %v567, 32
      %v587 = vpop.permute.xlu0 %586
      %588 = vrot.lane.b32.xlu0 %v569, 32
      %v589 = vpop.permute.xlu0 %588
      %590 = vrot.lane.b32.xlu0 %v571, 32
      %v591 = vpop.permute.xlu0 %590
      %592 = vrot.lane.b32.xlu0 %v573, 32
      %v593 = vpop.permute.xlu0 %592
      %594 = vrot.lane.b32.xlu0 %v575, 32
      %v595 = vpop.permute.xlu0 %594
      %596 = vrot.lane.b32.xlu0 %v577, 32
      %v597 = vpop.permute.xlu0 %596
      %598 = vrot.lane.b32.xlu0 %v579, 32
      %v599 = vpop.permute.xlu0 %598
      %vm610 = vcmask 1043456
      %v611 = vrot.slane %v398, 4
      %v612 = vrot.slane %v399, 4
      %v613 = vsel %vm610, %v611, %v612
      %v614 = vrot.slane %v400, 4
      %v615 = vsel %vm610, %v612, %v614
      %v616 = vrot.slane %v401, 4
      %v617 = vsel %vm610, %v614, %v616
      %v618 = vrot.slane %v402, 4
      %v619 = vsel %vm610, %v616, %v618
      %v620 = vrot.slane %v403, 4
      %v621 = vsel %vm610, %v618, %v620
      %v622 = vrot.slane %v404, 4
      %v623 = vsel %vm610, %v620, %v622
      %v624 = vrot.slane %v405, 4
      %v625 = vsel %vm610, %v622, %v624
      %v626 = vrot.slane %v406, 4
      %v627 = vsel %vm610, %v624, %v626
      %v628 = vrot.slane %v407, 4
      %v629 = vsel %vm610, %v626, %v628
      %v630 = vrot.slane %v408, 4
      %v631 = vsel %vm610, %v628, %v630
      %632 = vrot.lane.b32.xlu0 %v613, 40
      %v633 = vpop.permute.xlu0 %632
      %634 = vrot.lane.b32.xlu0 %v615, 40
      %v635 = vpop.permute.xlu0 %634
      %636 = vrot.lane.b32.xlu0 %v617, 40
      %v637 = vpop.permute.xlu0 %636
      %638 = vrot.lane.b32.xlu0 %v619, 40
      %v639 = vpop.permute.xlu0 %638
      %640 = vrot.lane.b32.xlu0 %v621, 40
      %v641 = vpop.permute.xlu0 %640
      %642 = vrot.lane.b32.xlu0 %v623, 40
      %v643 = vpop.permute.xlu0 %642
      %644 = vrot.lane.b32.xlu0 %v625, 40
      %v645 = vpop.permute.xlu0 %644
      %646 = vrot.lane.b32.xlu0 %v627, 40
      %v647 = vpop.permute.xlu0 %646
      %648 = vrot.lane.b32.xlu0 %v629, 40
      %v649 = vpop.permute.xlu0 %648
      %650 = vrot.lane.b32.xlu0 %v631, 40
      %v651 = vpop.permute.xlu0 %650
      %v663 = vrot.slane %v409, 4
      %v664 = vsel %vm610, %v630, %v663
      %665 = vrot.lane.b32.xlu0 %v615, 48
      %v666 = vpop.permute.xlu0 %665
      %667 = vrot.lane.b32.xlu0 %v617, 48
      %v668 = vpop.permute.xlu0 %667
      %669 = vrot.lane.b32.xlu0 %v619, 48
      %v670 = vpop.permute.xlu0 %669
      %671 = vrot.lane.b32.xlu0 %v621, 48
      %v672 = vpop.permute.xlu0 %671
      %673 = vrot.lane.b32.xlu0 %v623, 48
      %v674 = vpop.permute.xlu0 %673
      %675 = vrot.lane.b32.xlu0 %v625, 48
      %v676 = vpop.permute.xlu0 %675
      %677 = vrot.lane.b32.xlu0 %v627, 48
      %v678 = vpop.permute.xlu0 %677
      %679 = vrot.lane.b32.xlu0 %v629, 48
      %v680 = vpop.permute.xlu0 %679
      %681 = vrot.lane.b32.xlu0 %v631, 48
      %v682 = vpop.permute.xlu0 %681
      %683 = vrot.lane.b32.xlu0 %v664, 48
      %v684 = vpop.permute.xlu0 %683
      %vm695 = vcmask 1042432
      %v696 = vrot.slane %v399, 5
      %v697 = vrot.slane %v400, 5
      %v698 = vsel %vm695, %v696, %v697
      %v699 = vrot.slane %v401, 5
      %v700 = vsel %vm695, %v697, %v699
      %v701 = vrot.slane %v402, 5
      %v702 = vsel %vm695, %v699, %v701
      %v703 = vrot.slane %v403, 5
      %v704 = vsel %vm695, %v701, %v703
      %v705 = vrot.slane %v404, 5
      %v706 = vsel %vm695, %v703, %v705
      %v707 = vrot.slane %v405, 5
      %v708 = vsel %vm695, %v705, %v707
      %v709 = vrot.slane %v406, 5
      %v710 = vsel %vm695, %v707, %v709
      %v711 = vrot.slane %v407, 5
      %v712 = vsel %vm695, %v709, %v711
      %v713 = vrot.slane %v408, 5
      %v714 = vsel %vm695, %v711, %v713
      %v715 = vrot.slane %v409, 5
      %v716 = vsel %vm695, %v713, %v715
      %717 = vrot.lane.b32.xlu0 %v698, 56
      %v718 = vpop.permute.xlu0 %717
      %719 = vrot.lane.b32.xlu0 %v700, 56
      %v720 = vpop.permute.xlu0 %719
      %721 = vrot.lane.b32.xlu0 %v702, 56
      %v722 = vpop.permute.xlu0 %721
      %723 = vrot.lane.b32.xlu0 %v704, 56
      %v724 = vpop.permute.xlu0 %723
      %725 = vrot.lane.b32.xlu0 %v706, 56
      %v726 = vpop.permute.xlu0 %725
      %727 = vrot.lane.b32.xlu0 %v708, 56
      %v728 = vpop.permute.xlu0 %727
      %729 = vrot.lane.b32.xlu0 %v710, 56
      %v730 = vpop.permute.xlu0 %729
      %731 = vrot.lane.b32.xlu0 %v712, 56
      %v732 = vpop.permute.xlu0 %731
      %733 = vrot.lane.b32.xlu0 %v714, 56
      %v734 = vpop.permute.xlu0 %733
      %735 = vrot.lane.b32.xlu0 %v716, 56
      %v736 = vpop.permute.xlu0 %735
      %vm747 = vcmask 1041408
      %v748 = vrot.slane %v399, 6
      %v749 = vrot.slane %v400, 6
      %v750 = vsel %vm747, %v748, %v749
      %v751 = vrot.slane %v401, 6
      %v752 = vsel %vm747, %v749, %v751
      %v753 = vrot.slane %v402, 6
      %v754 = vsel %vm747, %v751, %v753
      %v755 = vrot.slane %v403, 6
      %v756 = vsel %vm747, %v753, %v755
      %v757 = vrot.slane %v404, 6
      %v758 = vsel %vm747, %v755, %v757
      %v759 = vrot.slane %v405, 6
      %v760 = vsel %vm747, %v757, %v759
      %v761 = vrot.slane %v406, 6
      %v762 = vsel %vm747, %v759, %v761
      %v763 = vrot.slane %v407, 6
      %v764 = vsel %vm747, %v761, %v763
      %v765 = vrot.slane %v408, 6
      %v766 = vsel %vm747, %v763, %v765
      %v767 = vrot.slane %v409, 6
      %v768 = vsel %vm747, %v765, %v767
      %769 = vrot.lane.b32.xlu0 %v750, 64
      %v770 = vpop.permute.xlu0 %769
      %771 = vrot.lane.b32.xlu0 %v752, 64
      %v772 = vpop.permute.xlu0 %771
      %773 = vrot.lane.b32.xlu0 %v754, 64
      %v774 = vpop.permute.xlu0 %773
      %775 = vrot.lane.b32.xlu0 %v756, 64
      %v776 = vpop.permute.xlu0 %775
      %777 = vrot.lane.b32.xlu0 %v758, 64
      %v778 = vpop.permute.xlu0 %777
      %779 = vrot.lane.b32.xlu0 %v760, 64
      %v780 = vpop.permute.xlu0 %779
      %781 = vrot.lane.b32.xlu0 %v762, 64
      %v782 = vpop.permute.xlu0 %781
      %783 = vrot.lane.b32.xlu0 %v764, 64
      %v784 = vpop.permute.xlu0 %783
      %785 = vrot.lane.b32.xlu0 %v766, 64
      %v786 = vpop.permute.xlu0 %785
      %787 = vrot.lane.b32.xlu0 %v768, 64
      %v788 = vpop.permute.xlu0 %787
      %vm799 = vcmask 64512
      %v800 = vsel %vm799, %v397, %v444
      %v801 = vsel %vm799, %v398, %v446
      %v802 = vsel %vm799, %v399, %v448
      %v803 = vsel %vm799, %v400, %v450
      %v804 = vsel %vm799, %v401, %v452
      %v805 = vsel %vm799, %v402, %v454
      %v806 = vsel %vm799, %v403, %v456
      %v807 = vsel %vm799, %v404, %v458
      %v808 = vsel %vm799, %v405, %v460
      %v809 = vsel %vm799, %v406, %v462
      %vm810 = vcmask 130048
      %v811 = vsel %vm810, %v800, %v496
      %v812 = vsel %vm810, %v801, %v498
      %v813 = vsel %vm810, %v802, %v500
      %v814 = vsel %vm810, %v803, %v502
      %v815 = vsel %vm810, %v804, %v504
      %v816 = vsel %vm810, %v805, %v506
      %v817 = vsel %vm810, %v806, %v508
      %v818 = vsel %vm810, %v807, %v510
      %v819 = vsel %vm810, %v808, %v512
      %v820 = vsel %vm810, %v809, %v514
      %vm821 = vcmask 195584
      %v822 = vsel %vm821, %v811, %v529
      %v823 = vsel %vm821, %v812, %v531
      %v824 = vsel %vm821, %v813, %v533
      %v825 = vsel %vm821, %v814, %v535
      %v826 = vsel %vm821, %v815, %v537
      %v827 = vsel %vm821, %v816, %v539
      %v828 = vsel %vm821, %v817, %v541
      %v829 = vsel %vm821, %v818, %v543
      %v830 = vsel %vm821, %v819, %v545
      %v831 = vsel %vm821, %v820, %v547
      %vm832 = vcmask 261120
      %v833 = vsel %vm832, %v822, %v581
      %v834 = vsel %vm832, %v823, %v583
      %v835 = vsel %vm832, %v824, %v585
      %v836 = vsel %vm832, %v825, %v587
      %v837 = vsel %vm832, %v826, %v589
      %v838 = vsel %vm832, %v827, %v591
      %v839 = vsel %vm832, %v828, %v593
      %v840 = vsel %vm832, %v829, %v595
      %v841 = vsel %vm832, %v830, %v597
      %v842 = vsel %vm832, %v831, %v599
      %vm843 = vcmask 326656
      %v844 = vsel %vm843, %v833, %v633
      %v845 = vsel %vm843, %v834, %v635
      %v846 = vsel %vm843, %v835, %v637
      %v847 = vsel %vm843, %v836, %v639
      %v848 = vsel %vm843, %v837, %v641
      %v849 = vsel %vm843, %v838, %v643
      %v850 = vsel %vm843, %v839, %v645
      %v851 = vsel %vm843, %v840, %v647
      %v852 = vsel %vm843, %v841, %v649
      %v853 = vsel %vm843, %v842, %v651
      %vm854 = vcmask 392192
      %v855 = vsel %vm854, %v844, %v666
      %v856 = vsel %vm854, %v845, %v668
      %v857 = vsel %vm854, %v846, %v670
      %v858 = vsel %vm854, %v847, %v672
      %v859 = vsel %vm854, %v848, %v674
      %v860 = vsel %vm854, %v849, %v676
      %v861 = vsel %vm854, %v850, %v678
      %v862 = vsel %vm854, %v851, %v680
      %v863 = vsel %vm854, %v852, %v682
      %v864 = vsel %vm854, %v853, %v684
      %vm865 = vcmask 457728
      %v866 = vsel %vm865, %v855, %v718
      %v867 = vsel %vm865, %v856, %v720
      %v868 = vsel %vm865, %v857, %v722
      %v869 = vsel %vm865, %v858, %v724
      %v870 = vsel %vm865, %v859, %v726
      %v871 = vsel %vm865, %v860, %v728
      %v872 = vsel %vm865, %v861, %v730
      %v873 = vsel %vm865, %v862, %v732
      %v874 = vsel %vm865, %v863, %v734
      %v875 = vsel %vm865, %v864, %v736
      %vm876 = vcmask 523264
      %v877 = vsel %vm876, %v866, %v770
      %v878 = vsel %vm876, %v867, %v772
      %v879 = vsel %vm876, %v868, %v774
      %v880 = vsel %vm876, %v869, %v776
      %v881 = vsel %vm876, %v870, %v778
      %v882 = vsel %vm876, %v871, %v780
      %v883 = vsel %vm876, %v872, %v782
      %v884 = vsel %vm876, %v873, %v784
      %v885 = vsel %vm876, %v874, %v786
      %v886 = vsel %vm876, %v875, %v788
      %v887 = vld [vmem:[%s2] sm:$0xff]
      %v888 = vld [vmem:[%s2 + $0x8] sm:$0xff]
      %v889 = vld [vmem:[%s2 + $0x10] sm:$0xff]
      %v890 = vld [vmem:[%s2 + $0x18] sm:$0xff]
      %v891 = vld [vmem:[%s2 + $0x20] sm:$0xff]
      %v892 = vld [vmem:[%s2 + $0x28] sm:$0xff]
      %v893 = vld [vmem:[%s2 + $0x30] sm:$0xff]
      %v894 = vld [vmem:[%s2 + $0x38] sm:$0xff]
      %v895 = vld [vmem:[%s2 + $0x40] sm:$0xff]
      %vm896 = vcmask 588800
      %v898 = vsel %vm896, %v877, 0
      %v901 = vsel %vm896, %v878, 0
      %v904 = vsel %vm896, %v879, 0
      %v907 = vsel %vm896, %v880, 0
      %v910 = vsel %vm896, %v881, 0
      %v913 = vsel %vm896, %v882, 0
      %v916 = vsel %vm896, %v883, 0
      %v919 = vsel %vm896, %v884, 0
      %v922 = vsel %vm896, %v885, 0
      %v925 = vsel %vm896, %v886, 0
      %927 = vmatprep.subr.mxu0 0.0
      %928 = vmatpush1.msra.mxu0 0.0
      %929 = vmatprep.subr.mxu0 0.0
      %930 = vmatpush1.msra.mxu0 0.0
      %931 = vmatprep.subr.mxu0 0.0
      %932 = vmatpush1.msra.mxu0 0.0
      %933 = vmatprep.subr.mxu0 0.0
      %934 = vmatpush1.msra.mxu0 0.0
      %935 = vmatprep.subr.mxu0 0.0
      %936 = vmatpush1.msra.mxu0 0.0
      %937 = vmatprep.subr.mxu0 0.0
      %938 = vmatpush1.msra.mxu0 0.0
      %939 = vmatprep.subr.mxu0 0.0
      %940 = vmatpush1.msra.mxu0 0.0
      %941 = vmatprep.subr.mxu0 0.0
      %942 = vmatpush1.msra.mxu0 %v895
      %943 = vmatprep.subr.mxu0 0.0
      %944 = vmatpush1.msra.mxu0 %v894
      %945 = vmatprep.subr.mxu0 0.0
      %946 = vmatpush1.msra.mxu0 %v893
      %947 = vmatprep.subr.mxu0 0.0
      %948 = vmatpush1.msra.mxu0 %v892
      %949 = vmatprep.subr.mxu0 0.0
      %950 = vmatpush1.msra.mxu0 %v891
      %951 = vmatprep.subr.mxu0 0.0
      %952 = vmatpush1.msra.mxu0 %v890
      %953 = vmatprep.subr.mxu0 0.0
      %954 = vmatpush1.msra.mxu0 %v889
      %955 = vmatprep.subr.mxu0 0.0
      %956 = vmatpush1.msra.mxu0 %v888
      %957 = vmatprep.subr.mxu0 0.0
      %958 = vmatpush1.msra.mxu0 %v887
      %959 = vmatprep.subr.mxu0 0.0
      %960 = vmatpush2.msra.mxu0 0.0
      %961 = vmatprep.subr.mxu0 0.0
      %962 = vmatpush2.msra.mxu0 0.0
      %963 = vmatprep.subr.mxu0 0.0
      %964 = vmatpush2.msra.mxu0 0.0
      %965 = vmatprep.subr.mxu0 0.0
      %966 = vmatpush2.msra.mxu0 0.0
      %967 = vmatprep.subr.mxu0 0.0
      %968 = vmatpush2.msra.mxu0 0.0
      %969 = vmatprep.subr.mxu0 0.0
      %970 = vmatpush2.msra.mxu0 0.0
      %971 = vmatprep.subr.mxu0 0.0
      %972 = vmatpush2.msra.mxu0 0.0
      %973 = vmatprep.subr.mxu0 0.0
      %974 = vmatpush2.msra.mxu0 0.0
      %975 = vmatprep.subr.mxu0 0.0
      %976 = vmatpush2.msra.mxu0 0.0
      %977 = vmatprep.subr.mxu0 0.0
      %978 = vmatpush2.msra.mxu0 0.0
      %979 = vmatprep.subr.mxu0 0.0
      %980 = vmatpush2.msra.mxu0 0.0
      %981 = vmatprep.subr.mxu0 0.0
      %982 = vmatpush2.msra.mxu0 0.0
      %983 = vmatprep.subr.mxu0 0.0
      %984 = vmatpush2.msra.mxu0 0.0
      %985 = vmatprep.subr.mxu0 0.0
      %986 = vmatpush2.msra.mxu0 0.0
      %987 = vmatprep.subr.mxu0 0.0
      %988 = vmatpush2.msra.mxu0 0.0
      %989 = vmatprep.subr.mxu0 0.0
      %990 = vmatpush2.msra.mxu0 0.0
      %991 = vmatprep.mubr.f32.mxu0 0.0
      %992 = vmatmul.mubr.f32.gmra.mxu0 %v898
      %v993 = vpop.f32.mrf.mxu0
      %v994 = vadd.f32 0.0, %v993
      %v995 = vpop.f32.mrf.mxu0
      %996 = vmatprep.mubr.f32.mxu0 0.0
      %997 = vmatmul.mubr.f32.gmra.mxu0 %v901
      %v998 = vpop.f32.mrf.mxu0
      %v999 = vadd.f32 0.0, %v998
      %v1000 = vpop.f32.mrf.mxu0
      %1001 = vmatprep.mubr.f32.mxu0 0.0
      %1002 = vmatmul.mubr.f32.gmra.mxu0 %v904
      %v1003 = vpop.f32.mrf.mxu0
      %v1004 = vadd.f32 0.0, %v1003
      %v1005 = vpop.f32.mrf.mxu0
      %1006 = vmatprep.mubr.f32.mxu0 0.0
      %1007 = vmatmul.mubr.f32.gmra.mxu0 %v907
      %v1008 = vpop.f32.mrf.mxu0
      %v1009 = vadd.f32 0.0, %v1008
      %v1010 = vpop.f32.mrf.mxu0
      %1011 = vmatprep.mubr.f32.mxu0 0.0
      %1012 = vmatmul.mubr.f32.gmra.mxu0 %v910
      %v1013 = vpop.f32.mrf.mxu0
      %v1014 = vadd.f32 0.0, %v1013
      %v1015 = vpop.f32.mrf.mxu0
      %1016 = vmatprep.mubr.f32.mxu0 0.0
      %1017 = vmatmul.mubr.f32.gmra.mxu0 %v913
      %v1018 = vpop.f32.mrf.mxu0
      %v1019 = vadd.f32 0.0, %v1018
      %v1020 = vpop.f32.mrf.mxu0
      %1021 = vmatprep.mubr.f32.mxu0 0.0
      %1022 = vmatmul.mubr.f32.gmra.mxu0 %v916
      %v1023 = vpop.f32.mrf.mxu0
      %v1024 = vadd.f32 0.0, %v1023
      %v1025 = vpop.f32.mrf.mxu0
      %1026 = vmatprep.mubr.f32.mxu0 0.0
      %1027 = vmatmul.mubr.f32.gmra.mxu0 %v919
      %v1028 = vpop.f32.mrf.mxu0
      %v1029 = vadd.f32 0.0, %v1028
      %v1030 = vpop.f32.mrf.mxu0
      %1031 = vmatprep.mubr.f32.mxu0 0.0
      %1032 = vmatmul.mubr.f32.gmra.mxu0 %v922
      %v1033 = vpop.f32.mrf.mxu0
      %v1034 = vadd.f32 0.0, %v1033
      %v1035 = vpop.f32.mrf.mxu0
      %1036 = vmatprep.mubr.f32.mxu0 0.0
      %1037 = vmatmul.mubr.f32.gmra.mxu0 %v925
      %v1038 = vpop.f32.mrf.mxu0
      %v1039 = vadd.f32 0.0, %v1038
      %v1040 = vpop.f32.mrf.mxu0
      %1041 = vdwg.mxu0
      %v1052 = vcombine.high %v994, %v994
      %v1054 = vunpack.c.l.s4 1983009808
      %v1055 = vunpack.c.0.s8 %v1054
      %v1056 = vlaneseq
      %v1057 = vshrl.u32 %v1056, 7
      %v1058 = vsub.s32 %v1055, %v1057
      %v1059 = vrot.slane %v994, %v1058
      %v1061 = vunpack.c.l.s4 1983009808
      %v1062 = vunpack.c.0.s8 %v1061
      %v1063 = vlaneseq
      %v1064 = vshrl.u32 %v1063, 7
      %v1065 = vsub.s32 %v1062, %v1064
      %v1066 = vrot.slane %v1052, %v1065
      %v1067 = vcombine.high %v1059, %v1059
      %v1068 = vcombine.high %v1066, %v1066
      %v1069 = vcombine.high %v999, %v999
      %v1071 = vunpack.c.l.s4 1983009808
      %v1072 = vunpack.c.0.s8 %v1071
      %v1073 = vlaneseq
      %v1074 = vshrl.u32 %v1073, 7
      %v1075 = vsub.s32 %v1072, %v1074
      %v1076 = vrot.slane %v999, %v1075
      %v1078 = vunpack.c.l.s4 1983009808
      %v1079 = vunpack.c.0.s8 %v1078
      %v1080 = vlaneseq
      %v1081 = vshrl.u32 %v1080, 7
      %v1082 = vsub.s32 %v1079, %v1081
      %v1083 = vrot.slane %v1069, %v1082
      %v1084 = vcombine.high %v1076, %v1076
      %v1085 = vcombine.high %v1083, %v1083
      %v1086 = vcombine.high %v1004, %v1004
      %v1088 = vunpack.c.l.s4 1983009808
      %v1089 = vunpack.c.0.s8 %v1088
      %v1090 = vlaneseq
      %v1091 = vshrl.u32 %v1090, 7
      %v1092 = vsub.s32 %v1089, %v1091
      %v1093 = vrot.slane %v1004, %v1092
      %v1095 = vunpack.c.l.s4 1983009808
      %v1096 = vunpack.c.0.s8 %v1095
      %v1097 = vlaneseq
      %v1098 = vshrl.u32 %v1097, 7
      %v1099 = vsub.s32 %v1096, %v1098
      %v1100 = vrot.slane %v1086, %v1099
      %v1101 = vcombine.high %v1100, %v1100
      %v1102 = vcombine.high %v1009, %v1009
      %v1104 = vunpack.c.l.s4 1983009808
      %v1105 = vunpack.c.0.s8 %v1104
      %v1106 = vlaneseq
      %v1107 = vshrl.u32 %v1106, 7
      %v1108 = vsub.s32 %v1105, %v1107
      %v1109 = vrot.slane %v1009, %v1108
      %v1111 = vunpack.c.l.s4 1983009808
      %v1112 = vunpack.c.0.s8 %v1111
      %v1113 = vlaneseq
      %v1114 = vshrl.u32 %v1113, 7
      %v1115 = vsub.s32 %v1112, %v1114
      %v1116 = vrot.slane %v1102, %v1115
      %v1117 = vcombine.high %v1109, %v1109
      %v1118 = vcombine.high %v1116, %v1116
      %v1119 = vcombine.high %v1014, %v1014
      %v1121 = vunpack.c.l.s4 1983009808
      %v1122 = vunpack.c.0.s8 %v1121
      %v1123 = vlaneseq
      %v1124 = vshrl.u32 %v1123, 7
      %v1125 = vsub.s32 %v1122, %v1124
      %v1126 = vrot.slane %v1014, %v1125
      %v1128 = vunpack.c.l.s4 1983009808
      %v1129 = vunpack.c.0.s8 %v1128
      %v1130 = vlaneseq
      %v1131 = vshrl.u32 %v1130, 7
      %v1132 = vsub.s32 %v1129, %v1131
      %v1133 = vrot.slane %v1119, %v1132
      %v1134 = vcombine.high %v1126, %v1126
      %v1135 = vcombine.high %v1019, %v1019
      %v1137 = vunpack.c.l.s4 1983009808
      %v1138 = vunpack.c.0.s8 %v1137
      %v1139 = vlaneseq
      %v1140 = vshrl.u32 %v1139, 7
      %v1141 = vsub.s32 %v1138, %v1140
      %v1142 = vrot.slane %v1019, %v1141
      %v1144 = vunpack.c.l.s4 1983009808
      %v1145 = vunpack.c.0.s8 %v1144
      %v1146 = vlaneseq
      %v1147 = vshrl.u32 %v1146, 7
      %v1148 = vsub.s32 %v1145, %v1147
      %v1149 = vrot.slane %v1135, %v1148
      %v1150 = vcombine.high %v1142, %v1142
      %v1151 = vcombine.high %v1149, %v1149
      %v1152 = vcombine.high %v1024, %v1024
      %v1154 = vunpack.c.l.s4 1983009808
      %v1155 = vunpack.c.0.s8 %v1154
      %v1156 = vlaneseq
      %v1157 = vshrl.u32 %v1156, 7
      %v1158 = vsub.s32 %v1155, %v1157
      %v1159 = vrot.slane %v1024, %v1158
      %v1161 = vunpack.c.l.s4 1983009808
      %v1162 = vunpack.c.0.s8 %v1161
      %v1163 = vlaneseq
      %v1164 = vshrl.u32 %v1163, 7
      %v1165 = vsub.s32 %v1162, %v1164
      %v1166 = vrot.slane %v1152, %v1165
      %v1167 = vcombine.high %v1159, %v1159
      %v1168 = vcombine.high %v1166, %v1166
      %v1169 = vcombine.high %v1029, %v1029
      %v1171 = vunpack.c.l.s4 1983009808
      %v1172 = vunpack.c.0.s8 %v1171
      %v1173 = vlaneseq
      %v1174 = vshrl.u32 %v1173, 7
      %v1175 = vsub.s32 %v1172, %v1174
      %v1176 = vrot.slane %v1029, %v1175
      %v1178 = vunpack.c.l.s4 1983009808
      %v1179 = vunpack.c.0.s8 %v1178
      %v1180 = vlaneseq
      %v1181 = vshrl.u32 %v1180, 7
      %v1182 = vsub.s32 %v1179, %v1181
      %v1183 = vrot.slane %v1169, %v1182
      %v1184 = vcombine.high %v1183, %v1183
      %v1185 = vcombine.high %v1034, %v1034
      %v1187 = vunpack.c.l.s4 1983009808
      %v1188 = vunpack.c.0.s8 %v1187
      %v1189 = vlaneseq
      %v1190 = vshrl.u32 %v1189, 7
      %v1191 = vsub.s32 %v1188, %v1190
      %v1192 = vrot.slane %v1034, %v1191
      %v1194 = vunpack.c.l.s4 1983009808
      %v1195 = vunpack.c.0.s8 %v1194
      %v1196 = vlaneseq
      %v1197 = vshrl.u32 %v1196, 7
      %v1198 = vsub.s32 %v1195, %v1197
      %v1199 = vrot.slane %v1185, %v1198
      %v1200 = vcombine.high %v1192, %v1192
      %v1201 = vcombine.high %v1199, %v1199
      %v1202 = vcombine.high %v1039, %v1039
      %v1204 = vunpack.c.l.s4 1983009808
      %v1205 = vunpack.c.0.s8 %v1204
      %v1206 = vlaneseq
      %v1207 = vshrl.u32 %v1206, 7
      %v1208 = vsub.s32 %v1205, %v1207
      %v1209 = vrot.slane %v1039, %v1208
      %v1211 = vunpack.c.l.s4 1983009808
      %v1212 = vunpack.c.0.s8 %v1211
      %v1213 = vlaneseq
      %v1214 = vshrl.u32 %v1213, 7
      %v1215 = vsub.s32 %v1212, %v1214
      %v1216 = vrot.slane %v1202, %v1215
      %v1217 = vcombine.high %v1209, %v1209
      %v1250 = vld [vmem:[%s3] sm:$0x1]
      %v1252 = vlaneseq
      %v1253 = vshrl.u32 %v1252, 7
      %v1254 = vsub.s32 0, %v1253
      %v1255 = vrot.slane %v1250, %v1254
      %v1256 = vcombine.high %v1255, %v1255
      %v1258 = vunpack.c.l.s4 1983009808
      %v1259 = vunpack.c.0.s8 %v1258
      %v1260 = vlaneseq
      %v1261 = vshrl.u32 %v1260, 7
      %v1262 = vsub.s32 %v1259, %v1261
      %v1263 = vrot.slane %v1255, %v1262
      %v1265 = vunpack.c.l.s4 1983009808
      %v1266 = vunpack.c.0.s8 %v1265
      %v1267 = vlaneseq
      %v1268 = vshrl.u32 %v1267, 7
      %v1269 = vsub.s32 %v1266, %v1268
      %v1270 = vrot.slane %v1256, %v1269
      %v1271 = vcombine.high %v1263, %v1263
      %v1272 = vcombine.high %v1270, %v1270
      %v1277 = vadd.f32 %v1059, %v1263
      %v1278 = vadd.f32 %v1067, %v1271
      %v1279 = vadd.f32 %v1066, %v1270
      %v1280 = vadd.f32 %v1068, %v1272
      %v1281 = vadd.f32 %v1084, %v1263
      %v1282 = vadd.f32 %v1083, %v1271
      %v1283 = vadd.f32 %v1085, %v1270
      %v1284 = vadd.f32 %v1093, %v1272
      %v1285 = vadd.f32 %v1100, %v1263
      %v1286 = vadd.f32 %v1101, %v1271
      %v1287 = vadd.f32 %v1109, %v1270
      %v1288 = vadd.f32 %v1117, %v1272
      %v1289 = vadd.f32 %v1118, %v1263
      %v1290 = vadd.f32 %v1126, %v1271
      %v1291 = vadd.f32 %v1134, %v1270
      %v1292 = vadd.f32 %v1133, %v1272
      %v1293 = vadd.f32 %v1142, %v1263
      %v1294 = vadd.f32 %v1150, %v1271
      %v1295 = vadd.f32 %v1149, %v1270
      %v1296 = vadd.f32 %v1151, %v1272
      %v1297 = vadd.f32 %v1167, %v1263
      %v1298 = vadd.f32 %v1166, %v1271
      %v1299 = vadd.f32 %v1168, %v1270
      %v1300 = vadd.f32 %v1176, %v1272
      %v1301 = vadd.f32 %v1183, %v1263
      %v1302 = vadd.f32 %v1184, %v1271
      %v1303 = vadd.f32 %v1192, %v1270
      %v1304 = vadd.f32 %v1200, %v1272
      %v1305 = vadd.f32 %v1201, %v1263
      %v1306 = vadd.f32 %v1209, %v1271
      %v1307 = vadd.f32 %v1217, %v1270
      %v1308 = vadd.f32 %v1216, %v1272
      %v1309 = vmul.f32 %v1277, 0.5
      %v1310 = vmul.f32 %v1278, 0.5
      %v1311 = vmul.f32 %v1279, 0.5
      %v1312 = vmul.f32 %v1280, 0.5
      %v1313 = vmul.f32 %v1281, 0.5
      %v1314 = vmul.f32 %v1282, 0.5
      %v1315 = vmul.f32 %v1283, 0.5
      %v1316 = vmul.f32 %v1284, 0.5
      %v1317 = vmul.f32 %v1285, 0.5
      %v1318 = vmul.f32 %v1286, 0.5
      %v1319 = vmul.f32 %v1287, 0.5
      %v1320 = vmul.f32 %v1288, 0.5
      %v1321 = vmul.f32 %v1289, 0.5
      %v1322 = vmul.f32 %v1290, 0.5
      %v1323 = vmul.f32 %v1291, 0.5
      %v1324 = vmul.f32 %v1292, 0.5
      %v1325 = vmul.f32 %v1293, 0.5
      %v1326 = vmul.f32 %v1294, 0.5
      %v1327 = vmul.f32 %v1295, 0.5
      %v1328 = vmul.f32 %v1296, 0.5
      %v1329 = vmul.f32 %v1297, 0.5
      %v1330 = vmul.f32 %v1298, 0.5
      %v1331 = vmul.f32 %v1299, 0.5
      %v1332 = vmul.f32 %v1300, 0.5
      %v1333 = vmul.f32 %v1301, 0.5
      %v1334 = vmul.f32 %v1302, 0.5
      %v1335 = vmul.f32 %v1303, 0.5
      %v1336 = vmul.f32 %v1304, 0.5
      %v1337 = vmul.f32 %v1305, 0.5
      %v1338 = vmul.f32 %v1306, 0.5
      %v1339 = vmul.f32 %v1307, 0.5
      %v1340 = vmul.f32 %v1308, 0.5
      %v1341 = vmul.f32 %v1277, 0.70710677
      %v1342 = vmul.f32 %v1278, 0.70710677
      %v1343 = vmul.f32 %v1279, 0.70710677
      %v1344 = vmul.f32 %v1280, 0.70710677
      %v1345 = vmul.f32 %v1281, 0.70710677
      %v1346 = vmul.f32 %v1282, 0.70710677
      %v1347 = vmul.f32 %v1283, 0.70710677
      %v1348 = vmul.f32 %v1284, 0.70710677
      %v1349 = vmul.f32 %v1285, 0.70710677
      %v1350 = vmul.f32 %v1286, 0.70710677
      %v1351 = vmul.f32 %v1287, 0.70710677
      %v1352 = vmul.f32 %v1288, 0.70710677
      %v1353 = vmul.f32 %v1289, 0.70710677
      %v1354 = vmul.f32 %v1290, 0.70710677
      %v1355 = vmul.f32 %v1291, 0.70710677
      %v1356 = vmul.f32 %v1292, 0.70710677
      %v1357 = vmul.f32 %v1293, 0.70710677
      %v1358 = vmul.f32 %v1294, 0.70710677
      %v1359 = vmul.f32 %v1295, 0.70710677
      %v1360 = vmul.f32 %v1296, 0.70710677
      %v1361 = vmul.f32 %v1297, 0.70710677
      %v1362 = vmul.f32 %v1298, 0.70710677
      %v1363 = vmul.f32 %v1299, 0.70710677
      %v1364 = vmul.f32 %v1300, 0.70710677
      %v1365 = vmul.f32 %v1301, 0.70710677
      %v1366 = vmul.f32 %v1302, 0.70710677
      %v1367 = vmul.f32 %v1303, 0.70710677
      %v1368 = vmul.f32 %v1304, 0.70710677
      %v1369 = vmul.f32 %v1305, 0.70710677
      %v1370 = vmul.f32 %v1306, 0.70710677
      %v1371 = vmul.f32 %v1307, 0.70710677
      %v1372 = vmul.f32 %v1308, 0.70710677
      %v1373 = vand.u32 2147483647, %v1341
      %v1374 = vand.u32 2147483647, %v1342
      %v1375 = vand.u32 2147483647, %v1343
      %v1376 = vand.u32 2147483647, %v1344
      %v1377 = vand.u32 2147483647, %v1345
      %v1378 = vand.u32 2147483647, %v1346
      %v1379 = vand.u32 2147483647, %v1347
      %v1380 = vand.u32 2147483647, %v1348
      %v1381 = vand.u32 2147483647, %v1349
      %v1382 = vand.u32 2147483647, %v1350
      %v1383 = vand.u32 2147483647, %v1351
      %v1384 = vand.u32 2147483647, %v1352
      %v1385 = vand.u32 2147483647, %v1353
      %v1386 = vand.u32 2147483647, %v1354
      %v1387 = vand.u32 2147483647, %v1355
      %v1388 = vand.u32 2147483647, %v1356
      %v1389 = vand.u32 2147483647, %v1357
      %v1390 = vand.u32 2147483647, %v1358
      %v1391 = vand.u32 2147483647, %v1359
      %v1392 = vand.u32 2147483647, %v1360
      %v1393 = vand.u32 2147483647, %v1361
      %v1394 = vand.u32 2147483647, %v1362
      %v1395 = vand.u32 2147483647, %v1363
      %v1396 = vand.u32 2147483647, %v1364
      %v1397 = vand.u32 2147483647, %v1365
      %v1398 = vand.u32 2147483647, %v1366
      %v1399 = vand.u32 2147483647, %v1367
      %v1400 = vand.u32 2147483647, %v1368
      %v1401 = vand.u32 2147483647, %v1369
      %v1402 = vand.u32 2147483647, %v1370
      %v1403 = vand.u32 2147483647, %v1371
      %v1404 = vand.u32 2147483647, %v1372
      %v1405 = vmul.f32 %v1373, 0.3275911
      %v1406 = vmul.f32 %v1374, 0.3275911
      %v1407 = vmul.f32 %v1375, 0.3275911
      %v1408 = vmul.f32 %v1376, 0.3275911
      %v1409 = vmul.f32 %v1377, 0.3275911
      %v1410 = vmul.f32 %v1378, 0.3275911
      %v1411 = vmul.f32 %v1379, 0.3275911
      %v1412 = vmul.f32 %v1380, 0.3275911
      %v1413 = vmul.f32 %v1381, 0.3275911
      %v1414 = vmul.f32 %v1382, 0.3275911
      %v1415 = vmul.f32 %v1383, 0.3275911
      %v1416 = vmul.f32 %v1384, 0.3275911
      %v1417 = vmul.f32 %v1385, 0.3275911
      %v1418 = vmul.f32 %v1386, 0.3275911
      %v1419 = vmul.f32 %v1387, 0.3275911
      %v1420 = vmul.f32 %v1388, 0.3275911
      %v1421 = vmul.f32 %v1389, 0.3275911
      %v1422 = vmul.f32 %v1390, 0.3275911
      %v1423 = vmul.f32 %v1391, 0.3275911
      %v1424 = vmul.f32 %v1392, 0.3275911
      %v1425 = vmul.f32 %v1393, 0.3275911
      %v1426 = vmul.f32 %v1394, 0.3275911
      %v1427 = vmul.f32 %v1395, 0.3275911
      %v1428 = vmul.f32 %v1396, 0.3275911
      %v1429 = vmul.f32 %v1397, 0.3275911
      %v1430 = vmul.f32 %v1398, 0.3275911
      %v1431 = vmul.f32 %v1399, 0.3275911
      %v1432 = vmul.f32 %v1400, 0.3275911
      %v1433 = vmul.f32 %v1401, 0.3275911
      %v1434 = vmul.f32 %v1402, 0.3275911
      %v1435 = vmul.f32 %v1403, 0.3275911
      %v1436 = vmul.f32 %v1404, 0.3275911
      %v1437 = vadd.f32 %v1405, 1.0
      %v1438 = vadd.f32 %v1406, 1.0
      %v1439 = vadd.f32 %v1407, 1.0
      %v1440 = vadd.f32 %v1408, 1.0
      %v1441 = vadd.f32 %v1409, 1.0
      %v1442 = vadd.f32 %v1410, 1.0
      %v1443 = vadd.f32 %v1411, 1.0
      %v1444 = vadd.f32 %v1412, 1.0
      %v1445 = vadd.f32 %v1413, 1.0
      %v1446 = vadd.f32 %v1414, 1.0
      %v1447 = vadd.f32 %v1415, 1.0
      %v1448 = vadd.f32 %v1416, 1.0
      %v1449 = vadd.f32 %v1417, 1.0
      %v1450 = vadd.f32 %v1418, 1.0
      %v1451 = vadd.f32 %v1419, 1.0
      %v1452 = vadd.f32 %v1420, 1.0
      %v1453 = vadd.f32 %v1421, 1.0
      %v1454 = vadd.f32 %v1422, 1.0
      %v1455 = vadd.f32 %v1423, 1.0
      %v1456 = vadd.f32 %v1424, 1.0
      %v1457 = vadd.f32 %v1425, 1.0
      %v1458 = vadd.f32 %v1426, 1.0
      %v1459 = vadd.f32 %v1427, 1.0
      %v1460 = vadd.f32 %v1428, 1.0
      %v1461 = vadd.f32 %v1429, 1.0
      %v1462 = vadd.f32 %v1430, 1.0
      %v1463 = vadd.f32 %v1431, 1.0
      %v1464 = vadd.f32 %v1432, 1.0
      %v1465 = vadd.f32 %v1433, 1.0
      %v1466 = vadd.f32 %v1434, 1.0
      %v1467 = vadd.f32 %v1435, 1.0
      %v1468 = vadd.f32 %v1436, 1.0
      %v1469 = vrcp.pop %v1437
      %v1470 = vmul.f32 1.0, %v1469
      %v1471 = vrcp.pop %v1438
      %v1472 = vmul.f32 1.0, %v1471
      %v1473 = vrcp.pop %v1439
      %v1474 = vmul.f32 1.0, %v1473
      %v1475 = vrcp.pop %v1440
      %v1476 = vmul.f32 1.0, %v1475
      %v1477 = vrcp.pop %v1441
      %v1478 = vmul.f32 1.0, %v1477
      %v1479 = vrcp.pop %v1442
      %v1480 = vmul.f32 1.0, %v1479
      %v1481 = vrcp.pop %v1443
      %v1482 = vmul.f32 1.0, %v1481
      %v1483 = vrcp.pop %v1444
      %v1484 = vmul.f32 1.0, %v1483
      %v1485 = vrcp.pop %v1445
      %v1486 = vmul.f32 1.0, %v1485
      %v1487 = vrcp.pop %v1446
      %v1488 = vmul.f32 1.0, %v1487
      %v1489 = vrcp.pop %v1447
      %v1490 = vmul.f32 1.0, %v1489
      %v1491 = vrcp.pop %v1448
      %v1492 = vmul.f32 1.0, %v1491
      %v1493 = vrcp.pop %v1449
      %v1494 = vmul.f32 1.0, %v1493
      %v1495 = vrcp.pop %v1450
      %v1496 = vmul.f32 1.0, %v1495
      %v1497 = vrcp.pop %v1451
      %v1498 = vmul.f32 1.0, %v1497
      %v1499 = vrcp.pop %v1452
      %v1500 = vmul.f32 1.0, %v1499
      %v1501 = vrcp.pop %v1453
      %v1502 = vmul.f32 1.0, %v1501
      %v1503 = vrcp.pop %v1454
      %v1504 = vmul.f32 1.0, %v1503
      %v1505 = vrcp.pop %v1455
      %v1506 = vmul.f32 1.0, %v1505
      %v1507 = vrcp.pop %v1456
      %v1508 = vmul.f32 1.0, %v1507
      %v1509 = vrcp.pop %v1457
      %v1510 = vmul.f32 1.0, %v1509
      %v1511 = vrcp.pop %v1458
      %v1512 = vmul.f32 1.0, %v1511
      %v1513 = vrcp.pop %v1459
      %v1514 = vmul.f32 1.0, %v1513
      %v1515 = vrcp.pop %v1460
      %v1516 = vmul.f32 1.0, %v1515
      %v1517 = vrcp.pop %v1461
      %v1518 = vmul.f32 1.0, %v1517
      %v1519 = vrcp.pop %v1462
      %v1520 = vmul.f32 1.0, %v1519
      %v1521 = vrcp.pop %v1463
      %v1522 = vmul.f32 1.0, %v1521
      %v1523 = vrcp.pop %v1464
      %v1524 = vmul.f32 1.0, %v1523
      %v1525 = vrcp.pop %v1465
      %v1526 = vmul.f32 1.0, %v1525
      %v1527 = vrcp.pop %v1466
      %v1528 = vmul.f32 1.0, %v1527
      %v1529 = vrcp.pop %v1467
      %v1530 = vmul.f32 1.0, %v1529
      %v1531 = vrcp.pop %v1468
      %v1532 = vmul.f32 1.0, %v1531
      %v1533 = vmul.f32 %v1470, 1.0614054
      %v1534 = vmul.f32 %v1472, 1.0614054
      %v1535 = vmul.f32 %v1474, 1.0614054
      %v1536 = vmul.f32 %v1476, 1.0614054
      %v1537 = vmul.f32 %v1478, 1.0614054
      %v1538 = vmul.f32 %v1480, 1.0614054
      %v1539 = vmul.f32 %v1482, 1.0614054
      %v1540 = vmul.f32 %v1484, 1.0614054
      %v1541 = vmul.f32 %v1486, 1.0614054
      %v1542 = vmul.f32 %v1488, 1.0614054
      %v1543 = vmul.f32 %v1490, 1.0614054
      %v1544 = vmul.f32 %v1492, 1.0614054
      %v1545 = vmul.f32 %v1494, 1.0614054
      %v1546 = vmul.f32 %v1496, 1.0614054
      %v1547 = vmul.f32 %v1498, 1.0614054
      %v1548 = vmul.f32 %v1500, 1.0614054
      %v1549 = vmul.f32 %v1502, 1.0614054
      %v1550 = vmul.f32 %v1504, 1.0614054
      %v1551 = vmul.f32 %v1506, 1.0614054
      %v1552 = vmul.f32 %v1508, 1.0614054
      %v1553 = vmul.f32 %v1510, 1.0614054
      %v1554 = vmul.f32 %v1512, 1.0614054
      %v1555 = vmul.f32 %v1514, 1.0614054
      %v1556 = vmul.f32 %v1516, 1.0614054
      %v1557 = vmul.f32 %v1518, 1.0614054
      %v1558 = vmul.f32 %v1520, 1.0614054
      %v1559 = vmul.f32 %v1522, 1.0614054
      %v1560 = vmul.f32 %v1524, 1.0614054
      %v1561 = vmul.f32 %v1526, 1.0614054
      %v1562 = vmul.f32 %v1528, 1.0614054
      %v1563 = vmul.f32 %v1530, 1.0614054
      %v1564 = vmul.f32 %v1532, 1.0614054
      %v1565 = vadd.f32 %v1533, -1.4531521
      %v1566 = vadd.f32 %v1534, -1.4531521
      %v1567 = vadd.f32 %v1535, -1.4531521
      %v1568 = vadd.f32 %v1536, -1.4531521
      %v1569 = vadd.f32 %v1537, -1.4531521
      %v1570 = vadd.f32 %v1538, -1.4531521
      %v1571 = vadd.f32 %v1539, -1.4531521
      %v1572 = vadd.f32 %v1540, -1.4531521
      %v1573 = vadd.f32 %v1541, -1.4531521
      %v1574 = vadd.f32 %v1542, -1.4531521
      %v1575 = vadd.f32 %v1543, -1.4531521
      %v1576 = vadd.f32 %v1544, -1.4531521
      %v1577 = vadd.f32 %v1545, -1.4531521
      %v1578 = vadd.f32 %v1546, -1.4531521
      %v1579 = vadd.f32 %v1547, -1.4531521
      %v1580 = vadd.f32 %v1548, -1.4531521
      %v1581 = vadd.f32 %v1549, -1.4531521
      %v1582 = vadd.f32 %v1550, -1.4531521
      %v1583 = vadd.f32 %v1551, -1.4531521
      %v1584 = vadd.f32 %v1552, -1.4531521
      %v1585 = vadd.f32 %v1553, -1.4531521
      %v1586 = vadd.f32 %v1554, -1.4531521
      %v1587 = vadd.f32 %v1555, -1.4531521
      %v1588 = vadd.f32 %v1556, -1.4531521
      %v1589 = vadd.f32 %v1557, -1.4531521
      %v1590 = vadd.f32 %v1558, -1.4531521
      %v1591 = vadd.f32 %v1559, -1.4531521
      %v1592 = vadd.f32 %v1560, -1.4531521
      %v1593 = vadd.f32 %v1561, -1.4531521
      %v1594 = vadd.f32 %v1562, -1.4531521
      %v1595 = vadd.f32 %v1563, -1.4531521
      %v1596 = vadd.f32 %v1564, -1.4531521
      %v1597 = vmul.f32 %v1565, %v1470
      %v1598 = vmul.f32 %v1566, %v1472
      %v1599 = vmul.f32 %v1567, %v1474
      %v1600 = vmul.f32 %v1568, %v1476
      %v1601 = vmul.f32 %v1569, %v1478
      %v1602 = vmul.f32 %v1570, %v1480
      %v1603 = vmul.f32 %v1571, %v1482
      %v1604 = vmul.f32 %v1572, %v1484
      %v1605 = vmul.f32 %v1573, %v1486
      %v1606 = vmul.f32 %v1574, %v1488
      %v1607 = vmul.f32 %v1575, %v1490
      %v1608 = vmul.f32 %v1576, %v1492
      %v1609 = vmul.f32 %v1577, %v1494
      %v1610 = vmul.f32 %v1578, %v1496
      %v1611 = vmul.f32 %v1579, %v1498
      %v1612 = vmul.f32 %v1580, %v1500
      %v1613 = vmul.f32 %v1581, %v1502
      %v1614 = vmul.f32 %v1582, %v1504
      %v1615 = vmul.f32 %v1583, %v1506
      %v1616 = vmul.f32 %v1584, %v1508
      %v1617 = vmul.f32 %v1585, %v1510
      %v1618 = vmul.f32 %v1586, %v1512
      %v1619 = vmul.f32 %v1587, %v1514
      %v1620 = vmul.f32 %v1588, %v1516
      %v1621 = vmul.f32 %v1589, %v1518
      %v1622 = vmul.f32 %v1590, %v1520
      %v1623 = vmul.f32 %v1591, %v1522
      %v1624 = vmul.f32 %v1592, %v1524
      %v1625 = vmul.f32 %v1593, %v1526
      %v1626 = vmul.f32 %v1594, %v1528
      %v1627 = vmul.f32 %v1595, %v1530
      %v1628 = vmul.f32 %v1596, %v1532
      %v1629 = vadd.f32 %v1597, 1.4214138
      %v1630 = vadd.f32 %v1598, 1.4214138
      %v1631 = vadd.f32 %v1599, 1.4214138
      %v1632 = vadd.f32 %v1600, 1.4214138
      %v1633 = vadd.f32 %v1601, 1.4214138
      %v1634 = vadd.f32 %v1602, 1.4214138
      %v1635 = vadd.f32 %v1603, 1.4214138
      %v1636 = vadd.f32 %v1604, 1.4214138
      %v1637 = vadd.f32 %v1605, 1.4214138
      %v1638 = vadd.f32 %v1606, 1.4214138
      %v1639 = vadd.f32 %v1607, 1.4214138
      %v1640 = vadd.f32 %v1608, 1.4214138
      %v1641 = vadd.f32 %v1609, 1.4214138
      %v1642 = vadd.f32 %v1610, 1.4214138
      %v1643 = vadd.f32 %v1611, 1.4214138
      %v1644 = vadd.f32 %v1612, 1.4214138
      %v1645 = vadd.f32 %v1613, 1.4214138
      %v1646 = vadd.f32 %v1614, 1.4214138
      %v1647 = vadd.f32 %v1615, 1.4214138
      %v1648 = vadd.f32 %v1616, 1.4214138
      %v1649 = vadd.f32 %v1617, 1.4214138
      %v1650 = vadd.f32 %v1618, 1.4214138
      %v1651 = vadd.f32 %v1619, 1.4214138
      %v1652 = vadd.f32 %v1620, 1.4214138
      %v1653 = vadd.f32 %v1621, 1.4214138
      %v1654 = vadd.f32 %v1622, 1.4214138
      %v1655 = vadd.f32 %v1623, 1.4214138
      %v1656 = vadd.f32 %v1624, 1.4214138
      %v1657 = vadd.f32 %v1625, 1.4214138
      %v1658 = vadd.f32 %v1626, 1.4214138
      %v1659 = vadd.f32 %v1627, 1.4214138
      %v1660 = vadd.f32 %v1628, 1.4214138
      %v1661 = vmul.f32 %v1629, %v1470
      %v1662 = vmul.f32 %v1630, %v1472
      %v1663 = vmul.f32 %v1631, %v1474
      %v1664 = vmul.f32 %v1632, %v1476
      %v1665 = vmul.f32 %v1633, %v1478
      %v1666 = vmul.f32 %v1634, %v1480
      %v1667 = vmul.f32 %v1635, %v1482
      %v1668 = vmul.f32 %v1636, %v1484
      %v1669 = vmul.f32 %v1637, %v1486
      %v1670 = vmul.f32 %v1638, %v1488
      %v1671 = vmul.f32 %v1639, %v1490
      %v1672 = vmul.f32 %v1640, %v1492
      %v1673 = vmul.f32 %v1641, %v1494
      %v1674 = vmul.f32 %v1642, %v1496
      %v1675 = vmul.f32 %v1643, %v1498
      %v1676 = vmul.f32 %v1644, %v1500
      %v1677 = vmul.f32 %v1645, %v1502
      %v1678 = vmul.f32 %v1646, %v1504
      %v1679 = vmul.f32 %v1647, %v1506
      %v1680 = vmul.f32 %v1648, %v1508
      %v1681 = vmul.f32 %v1649, %v1510
      %v1682 = vmul.f32 %v1650, %v1512
      %v1683 = vmul.f32 %v1651, %v1514
      %v1684 = vmul.f32 %v1652, %v1516
      %v1685 = vmul.f32 %v1653, %v1518
      %v1686 = vmul.f32 %v1654, %v1520
      %v1687 = vmul.f32 %v1655, %v1522
      %v1688 = vmul.f32 %v1656, %v1524
      %v1689 = vmul.f32 %v1657, %v1526
      %v1690 = vmul.f32 %v1658, %v1528
      %v1691 = vmul.f32 %v1659, %v1530
      %v1692 = vmul.f32 %v1660, %v1532
      %v1693 = vadd.f32 %v1661, -0.28449672
      %v1694 = vadd.f32 %v1662, -0.28449672
      %v1695 = vadd.f32 %v1663, -0.28449672
      %v1696 = vadd.f32 %v1664, -0.28449672
      %v1697 = vadd.f32 %v1665, -0.28449672
      %v1698 = vadd.f32 %v1666, -0.28449672
      %v1699 = vadd.f32 %v1667, -0.28449672
      %v1700 = vadd.f32 %v1668, -0.28449672
      %v1701 = vadd.f32 %v1669, -0.28449672
      %v1702 = vadd.f32 %v1670, -0.28449672
      %v1703 = vadd.f32 %v1671, -0.28449672
      %v1704 = vadd.f32 %v1672, -0.28449672
      %v1705 = vadd.f32 %v1673, -0.28449672
      %v1706 = vadd.f32 %v1674, -0.28449672
      %v1707 = vadd.f32 %v1675, -0.28449672
      %v1708 = vadd.f32 %v1676, -0.28449672
      %v1709 = vadd.f32 %v1677, -0.28449672
      %v1710 = vadd.f32 %v1678, -0.28449672
      %v1711 = vadd.f32 %v1679, -0.28449672
      %v1712 = vadd.f32 %v1680, -0.28449672
      %v1713 = vadd.f32 %v1681, -0.28449672
      %v1714 = vadd.f32 %v1682, -0.28449672
      %v1715 = vadd.f32 %v1683, -0.28449672
      %v1716 = vadd.f32 %v1684, -0.28449672
      %v1717 = vadd.f32 %v1685, -0.28449672
      %v1718 = vadd.f32 %v1686, -0.28449672
      %v1719 = vadd.f32 %v1687, -0.28449672
      %v1720 = vadd.f32 %v1688, -0.28449672
      %v1721 = vadd.f32 %v1689, -0.28449672
      %v1722 = vadd.f32 %v1690, -0.28449672
      %v1723 = vadd.f32 %v1691, -0.28449672
      %v1724 = vadd.f32 %v1692, -0.28449672
      %v1725 = vmul.f32 %v1693, %v1470
      %v1726 = vmul.f32 %v1694, %v1472
      %v1727 = vmul.f32 %v1695, %v1474
      %v1728 = vmul.f32 %v1696, %v1476
      %v1729 = vmul.f32 %v1697, %v1478
      %v1730 = vmul.f32 %v1698, %v1480
      %v1731 = vmul.f32 %v1699, %v1482
      %v1732 = vmul.f32 %v1700, %v1484
      %v1733 = vmul.f32 %v1701, %v1486
      %v1734 = vmul.f32 %v1702, %v1488
      %v1735 = vmul.f32 %v1703, %v1490
      %v1736 = vmul.f32 %v1704, %v1492
      %v1737 = vmul.f32 %v1705, %v1494
      %v1738 = vmul.f32 %v1706, %v1496
      %v1739 = vmul.f32 %v1707, %v1498
      %v1740 = vmul.f32 %v1708, %v1500
      %v1741 = vmul.f32 %v1709, %v1502
      %v1742 = vmul.f32 %v1710, %v1504
      %v1743 = vmul.f32 %v1711, %v1506
      %v1744 = vmul.f32 %v1712, %v1508
      %v1745 = vmul.f32 %v1713, %v1510
      %v1746 = vmul.f32 %v1714, %v1512
      %v1747 = vmul.f32 %v1715, %v1514
      %v1748 = vmul.f32 %v1716, %v1516
      %v1749 = vmul.f32 %v1717, %v1518
      %v1750 = vmul.f32 %v1718, %v1520
      %v1751 = vmul.f32 %v1719, %v1522
      %v1752 = vmul.f32 %v1720, %v1524
      %v1753 = vmul.f32 %v1721, %v1526
      %v1754 = vmul.f32 %v1722, %v1528
      %v1755 = vmul.f32 %v1723, %v1530
      %v1756 = vmul.f32 %v1724, %v1532
      %v1757 = vadd.f32 %v1725, 0.2548296
      %v1758 = vadd.f32 %v1726, 0.2548296
      %v1759 = vadd.f32 %v1727, 0.2548296
      %v1760 = vadd.f32 %v1728, 0.2548296
      %v1761 = vadd.f32 %v1729, 0.2548296
      %v1762 = vadd.f32 %v1730, 0.2548296
      %v1763 = vadd.f32 %v1731, 0.2548296
      %v1764 = vadd.f32 %v1732, 0.2548296
      %v1765 = vadd.f32 %v1733, 0.2548296
      %v1766 = vadd.f32 %v1734, 0.2548296
      %v1767 = vadd.f32 %v1735, 0.2548296
      %v1768 = vadd.f32 %v1736, 0.2548296
      %v1769 = vadd.f32 %v1737, 0.2548296
      %v1770 = vadd.f32 %v1738, 0.2548296
      %v1771 = vadd.f32 %v1739, 0.2548296
      %v1772 = vadd.f32 %v1740, 0.2548296
      %v1773 = vadd.f32 %v1741, 0.2548296
      %v1774 = vadd.f32 %v1742, 0.2548296
      %v1775 = vadd.f32 %v1743, 0.2548296
      %v1776 = vadd.f32 %v1744, 0.2548296
      %v1777 = vadd.f32 %v1745, 0.2548296
      %v1778 = vadd.f32 %v1746, 0.2548296
      %v1779 = vadd.f32 %v1747, 0.2548296
      %v1780 = vadd.f32 %v1748, 0.2548296
      %v1781 = vadd.f32 %v1749, 0.2548296
      %v1782 = vadd.f32 %v1750, 0.2548296
      %v1783 = vadd.f32 %v1751, 0.2548296
      %v1784 = vadd.f32 %v1752, 0.2548296
      %v1785 = vadd.f32 %v1753, 0.2548296
      %v1786 = vadd.f32 %v1754, 0.2548296
      %v1787 = vadd.f32 %v1755, 0.2548296
      %v1788 = vadd.f32 %v1756, 0.2548296
      %v1789 = vmul.f32 %v1757, %v1470
      %v1790 = vmul.f32 %v1758, %v1472
      %v1791 = vmul.f32 %v1759, %v1474
      %v1792 = vmul.f32 %v1760, %v1476
      %v1793 = vmul.f32 %v1761, %v1478
      %v1794 = vmul.f32 %v1762, %v1480
      %v1795 = vmul.f32 %v1763, %v1482
      %v1796 = vmul.f32 %v1764, %v1484
      %v1797 = vmul.f32 %v1765, %v1486
      %v1798 = vmul.f32 %v1766, %v1488
      %v1799 = vmul.f32 %v1767, %v1490
      %v1800 = vmul.f32 %v1768, %v1492
      %v1801 = vmul.f32 %v1769, %v1494
      %v1802 = vmul.f32 %v1770, %v1496
      %v1803 = vmul.f32 %v1771, %v1498
      %v1804 = vmul.f32 %v1772, %v1500
      %v1805 = vmul.f32 %v1773, %v1502
      %v1806 = vmul.f32 %v1774, %v1504
      %v1807 = vmul.f32 %v1775, %v1506
      %v1808 = vmul.f32 %v1776, %v1508
      %v1809 = vmul.f32 %v1777, %v1510
      %v1810 = vmul.f32 %v1778, %v1512
      %v1811 = vmul.f32 %v1779, %v1514
      %v1812 = vmul.f32 %v1780, %v1516
      %v1813 = vmul.f32 %v1781, %v1518
      %v1814 = vmul.f32 %v1782, %v1520
      %v1815 = vmul.f32 %v1783, %v1522
      %v1816 = vmul.f32 %v1784, %v1524
      %v1817 = vmul.f32 %v1785, %v1526
      %v1818 = vmul.f32 %v1786, %v1528
      %v1819 = vmul.f32 %v1787, %v1530
      %v1820 = vmul.f32 %v1788, %v1532
      %v1821 = vsub.f32 0.0, %v1373
      %v1822 = vsub.f32 0.0, %v1374
      %v1823 = vsub.f32 0.0, %v1375
      %v1824 = vsub.f32 0.0, %v1376
      %v1825 = vsub.f32 0.0, %v1377
      %v1826 = vsub.f32 0.0, %v1378
      %v1827 = vsub.f32 0.0, %v1379
      %v1828 = vsub.f32 0.0, %v1380
      %v1829 = vsub.f32 0.0, %v1381
      %v1830 = vsub.f32 0.0, %v1382
      %v1831 = vsub.f32 0.0, %v1383
      %v1832 = vsub.f32 0.0, %v1384
      %v1833 = vsub.f32 0.0, %v1385
      %v1834 = vsub.f32 0.0, %v1386
      %v1835 = vsub.f32 0.0, %v1387
      %v1836 = vsub.f32 0.0, %v1388
      %v1837 = vsub.f32 0.0, %v1389
      %v1838 = vsub.f32 0.0, %v1390
      %v1839 = vsub.f32 0.0, %v1391
      %v1840 = vsub.f32 0.0, %v1392
      %v1841 = vsub.f32 0.0, %v1393
      %v1842 = vsub.f32 0.0, %v1394
      %v1843 = vsub.f32 0.0, %v1395
      %v1844 = vsub.f32 0.0, %v1396
      %v1845 = vsub.f32 0.0, %v1397
      %v1846 = vsub.f32 0.0, %v1398
      %v1847 = vsub.f32 0.0, %v1399
      %v1848 = vsub.f32 0.0, %v1400
      %v1849 = vsub.f32 0.0, %v1401
      %v1850 = vsub.f32 0.0, %v1402
      %v1851 = vsub.f32 0.0, %v1403
      %v1852 = vsub.f32 0.0, %v1404
      %v1853 = vmul.f32 %v1821, %v1373
      %v1854 = vmul.f32 %v1822, %v1374
      %v1855 = vmul.f32 %v1823, %v1375
      %v1856 = vmul.f32 %v1824, %v1376
      %v1857 = vmul.f32 %v1825, %v1377
      %v1858 = vmul.f32 %v1826, %v1378
      %v1859 = vmul.f32 %v1827, %v1379
      %v1860 = vmul.f32 %v1828, %v1380
      %v1861 = vmul.f32 %v1829, %v1381
      %v1862 = vmul.f32 %v1830, %v1382
      %v1863 = vmul.f32 %v1831, %v1383
      %v1864 = vmul.f32 %v1832, %v1384
      %v1865 = vmul.f32 %v1833, %v1385
      %v1866 = vmul.f32 %v1834, %v1386
      %v1867 = vmul.f32 %v1835, %v1387
      %v1868 = vmul.f32 %v1836, %v1388
      %v1869 = vmul.f32 %v1837, %v1389
      %v1870 = vmul.f32 %v1838, %v1390
      %v1871 = vmul.f32 %v1839, %v1391
      %v1872 = vmul.f32 %v1840, %v1392
      %v1873 = vmul.f32 %v1841, %v1393
      %v1874 = vmul.f32 %v1842, %v1394
      %v1875 = vmul.f32 %v1843, %v1395
      %v1876 = vmul.f32 %v1844, %v1396
      %v1877 = vmul.f32 %v1845, %v1397
      %v1878 = vmul.f32 %v1846, %v1398
      %v1879 = vmul.f32 %v1847, %v1399
      %v1880 = vmul.f32 %v1848, %v1400
      %v1881 = vmul.f32 %v1849, %v1401
      %v1882 = vmul.f32 %v1850, %v1402
      %v1883 = vmul.f32 %v1851, %v1403
      %v1884 = vmul.f32 %v1852, %v1404
      %v1885 = vmul.f32 %v1853, 1.442695
      %v1886 = vpow.pop %v1885
      %v1887 = vmul.f32 %v1854, 1.442695
      %v1888 = vpow.pop %v1887
      %v1889 = vmul.f32 %v1855, 1.442695
      %v1890 = vpow.pop %v1889
      %v1891 = vmul.f32 %v1856, 1.442695
      %v1892 = vpow.pop %v1891
      %v1893 = vmul.f32 %v1857, 1.442695
      %v1894 = vpow.pop %v1893
      %v1895 = vmul.f32 %v1858, 1.442695
      %v1896 = vpow.pop %v1895
      %v1897 = vmul.f32 %v1859, 1.442695
      %v1898 = vpow.pop %v1897
      %v1899 = vmul.f32 %v1860, 1.442695
      %v1900 = vpow.pop %v1899
      %v1901 = vmul.f32 %v1861, 1.442695
      %v1902 = vpow.pop %v1901
      %v1903 = vmul.f32 %v1862, 1.442695
      %v1904 = vpow.pop %v1903
      %v1905 = vmul.f32 %v1863, 1.442695
      %v1906 = vpow.pop %v1905
      %v1907 = vmul.f32 %v1864, 1.442695
      %v1908 = vpow.pop %v1907
      %v1909 = vmul.f32 %v1865, 1.442695
      %v1910 = vpow.pop %v1909
      %v1911 = vmul.f32 %v1866, 1.442695
      %v1912 = vpow.pop %v1911
      %v1913 = vmul.f32 %v1867, 1.442695
      %v1914 = vpow.pop %v1913
      %v1915 = vmul.f32 %v1868, 1.442695
      %v1916 = vpow.pop %v1915
      %v1917 = vmul.f32 %v1869, 1.442695
      %v1918 = vpow.pop %v1917
      %v1919 = vmul.f32 %v1870, 1.442695
      %v1920 = vpow.pop %v1919
      %v1921 = vmul.f32 %v1871, 1.442695
      %v1922 = vpow.pop %v1921
      %v1923 = vmul.f32 %v1872, 1.442695
      %v1924 = vpow.pop %v1923
      %v1925 = vmul.f32 %v1873, 1.442695
      %v1926 = vpow.pop %v1925
      %v1927 = vmul.f32 %v1874, 1.442695
      %v1928 = vpow.pop %v1927
      %v1929 = vmul.f32 %v1875, 1.442695
      %v1930 = vpow.pop %v1929
      %v1931 = vmul.f32 %v1876, 1.442695
      %v1932 = vpow.pop %v1931
      %v1933 = vmul.f32 %v1877, 1.442695
      %v1934 = vpow.pop %v1933
      %v1935 = vmul.f32 %v1878, 1.442695
      %v1936 = vpow.pop %v1935
      %v1937 = vmul.f32 %v1879, 1.442695
      %v1938 = vpow.pop %v1937
      %v1939 = vmul.f32 %v1880, 1.442695
      %v1940 = vpow.pop %v1939
      %v1941 = vmul.f32 %v1881, 1.442695
      %v1942 = vpow.pop %v1941
      %v1943 = vmul.f32 %v1882, 1.442695
      %v1944 = vpow.pop %v1943
      %v1945 = vmul.f32 %v1883, 1.442695
      %v1946 = vpow.pop %v1945
      %v1947 = vmul.f32 %v1884, 1.442695
      %v1948 = vpow.pop %v1947
      %v1949 = vmul.f32 %v1789, %v1886
      %v1950 = vmul.f32 %v1790, %v1888
      %v1951 = vmul.f32 %v1791, %v1890
      %v1952 = vmul.f32 %v1792, %v1892
      %v1953 = vmul.f32 %v1793, %v1894
      %v1954 = vmul.f32 %v1794, %v1896
      %v1955 = vmul.f32 %v1795, %v1898
      %v1956 = vmul.f32 %v1796, %v1900
      %v1957 = vmul.f32 %v1797, %v1902
      %v1958 = vmul.f32 %v1798, %v1904
      %v1959 = vmul.f32 %v1799, %v1906
      %v1960 = vmul.f32 %v1800, %v1908
      %v1961 = vmul.f32 %v1801, %v1910
      %v1962 = vmul.f32 %v1802, %v1912
      %v1963 = vmul.f32 %v1803, %v1914
      %v1964 = vmul.f32 %v1804, %v1916
      %v1965 = vmul.f32 %v1805, %v1918
      %v1966 = vmul.f32 %v1806, %v1920
      %v1967 = vmul.f32 %v1807, %v1922
      %v1968 = vmul.f32 %v1808, %v1924
      %v1969 = vmul.f32 %v1809, %v1926
      %v1970 = vmul.f32 %v1810, %v1928
      %v1971 = vmul.f32 %v1811, %v1930
      %v1972 = vmul.f32 %v1812, %v1932
      %v1973 = vmul.f32 %v1813, %v1934
      %v1974 = vmul.f32 %v1814, %v1936
      %v1975 = vmul.f32 %v1815, %v1938
      %v1976 = vmul.f32 %v1816, %v1940
      %v1977 = vmul.f32 %v1817, %v1942
      %v1978 = vmul.f32 %v1818, %v1944
      %v1979 = vmul.f32 %v1819, %v1946
      %v1980 = vmul.f32 %v1820, %v1948
      %v1981 = vsub.f32 1.0, %v1949
      %v1982 = vsub.f32 1.0, %v1950
      %v1983 = vsub.f32 1.0, %v1951
      %v1984 = vsub.f32 1.0, %v1952
      %v1985 = vsub.f32 1.0, %v1953
      %v1986 = vsub.f32 1.0, %v1954
      %v1987 = vsub.f32 1.0, %v1955
      %v1988 = vsub.f32 1.0, %v1956
      %v1989 = vsub.f32 1.0, %v1957
      %v1990 = vsub.f32 1.0, %v1958
      %v1991 = vsub.f32 1.0, %v1959
      %v1992 = vsub.f32 1.0, %v1960
      %v1993 = vsub.f32 1.0, %v1961
      %v1994 = vsub.f32 1.0, %v1962
      %v1995 = vsub.f32 1.0, %v1963
      %v1996 = vsub.f32 1.0, %v1964
      %v1997 = vsub.f32 1.0, %v1965
      %v1998 = vsub.f32 1.0, %v1966
      %v1999 = vsub.f32 1.0, %v1967
      %v2000 = vsub.f32 1.0, %v1968
      %v2001 = vsub.f32 1.0, %v1969
      %v2002 = vsub.f32 1.0, %v1970
      %v2003 = vsub.f32 1.0, %v1971
      %v2004 = vsub.f32 1.0, %v1972
      %v2005 = vsub.f32 1.0, %v1973
      %v2006 = vsub.f32 1.0, %v1974
      %v2007 = vsub.f32 1.0, %v1975
      %v2008 = vsub.f32 1.0, %v1976
      %v2009 = vsub.f32 1.0, %v1977
      %v2010 = vsub.f32 1.0, %v1978
      %v2011 = vsub.f32 1.0, %v1979
      %v2012 = vsub.f32 1.0, %v1980
      %vm2013 = vcmp.lt.f32.partialorder %v1341, 0.0
      %vm2014 = vcmp.lt.f32.partialorder %v1342, 0.0
      %vm2015 = vcmp.lt.f32.partialorder %v1343, 0.0
      %vm2016 = vcmp.lt.f32.partialorder %v1344, 0.0
      %vm2017 = vcmp.lt.f32.partialorder %v1345, 0.0
      %vm2018 = vcmp.lt.f32.partialorder %v1346, 0.0
      %vm2019 = vcmp.lt.f32.partialorder %v1347, 0.0
      %vm2020 = vcmp.lt.f32.partialorder %v1348, 0.0
      %vm2021 = vcmp.lt.f32.partialorder %v1349, 0.0
      %vm2022 = vcmp.lt.f32.partialorder %v1350, 0.0
      %vm2023 = vcmp.lt.f32.partialorder %v1351, 0.0
      %vm2024 = vcmp.lt.f32.partialorder %v1352, 0.0
      %vm2025 = vcmp.lt.f32.partialorder %v1353, 0.0
      %vm2026 = vcmp.lt.f32.partialorder %v1354, 0.0
      %vm2027 = vcmp.lt.f32.partialorder %v1355, 0.0
      %vm2028 = vcmp.lt.f32.partialorder %v1356, 0.0
      %vm2029 = vcmp.lt.f32.partialorder %v1357, 0.0
      %vm2030 = vcmp.lt.f32.partialorder %v1358, 0.0
      %vm2031 = vcmp.lt.f32.partialorder %v1359, 0.0
      %vm2032 = vcmp.lt.f32.partialorder %v1360, 0.0
      %vm2033 = vcmp.lt.f32.partialorder %v1361, 0.0
      %vm2034 = vcmp.lt.f32.partialorder %v1362, 0.0
      %vm2035 = vcmp.lt.f32.partialorder %v1363, 0.0
      %vm2036 = vcmp.lt.f32.partialorder %v1364, 0.0
      %vm2037 = vcmp.lt.f32.partialorder %v1365, 0.0
      %vm2038 = vcmp.lt.f32.partialorder %v1366, 0.0
      %vm2039 = vcmp.lt.f32.partialorder %v1367, 0.0
      %vm2040 = vcmp.lt.f32.partialorder %v1368, 0.0
      %vm2041 = vcmp.lt.f32.partialorder %v1369, 0.0
      %vm2042 = vcmp.lt.f32.partialorder %v1370, 0.0
      %vm2043 = vcmp.lt.f32.partialorder %v1371, 0.0
      %vm2044 = vcmp.lt.f32.partialorder %v1372, 0.0
      %v2045 = vsub.f32 0.0, %v1981
      %v2046 = vsub.f32 0.0, %v1982
      %v2047 = vsub.f32 0.0, %v1983
      %v2048 = vsub.f32 0.0, %v1984
      %v2049 = vsub.f32 0.0, %v1985
      %v2050 = vsub.f32 0.0, %v1986
      %v2051 = vsub.f32 0.0, %v1987
      %v2052 = vsub.f32 0.0, %v1988
      %v2053 = vsub.f32 0.0, %v1989
      %v2054 = vsub.f32 0.0, %v1990
      %v2055 = vsub.f32 0.0, %v1991
      %v2056 = vsub.f32 0.0, %v1992
      %v2057 = vsub.f32 0.0, %v1993
      %v2058 = vsub.f32 0.0, %v1994
      %v2059 = vsub.f32 0.0, %v1995
      %v2060 = vsub.f32 0.0, %v1996
      %v2061 = vsub.f32 0.0, %v1997
      %v2062 = vsub.f32 0.0, %v1998
      %v2063 = vsub.f32 0.0, %v1999
      %v2064 = vsub.f32 0.0, %v2000
      %v2065 = vsub.f32 0.0, %v2001
      %v2066 = vsub.f32 0.0, %v2002
      %v2067 = vsub.f32 0.0, %v2003
      %v2068 = vsub.f32 0.0, %v2004
      %v2069 = vsub.f32 0.0, %v2005
      %v2070 = vsub.f32 0.0, %v2006
      %v2071 = vsub.f32 0.0, %v2007
      %v2072 = vsub.f32 0.0, %v2008
      %v2073 = vsub.f32 0.0, %v2009
      %v2074 = vsub.f32 0.0, %v2010
      %v2075 = vsub.f32 0.0, %v2011
      %v2076 = vsub.f32 0.0, %v2012
      %v2077 = vsel %vm2013, %v2045, %v1981
      %v2078 = vsel %vm2014, %v2046, %v1982
      %v2079 = vsel %vm2015, %v2047, %v1983
      %v2080 = vsel %vm2016, %v2048, %v1984
      %v2081 = vsel %vm2017, %v2049, %v1985
      %v2082 = vsel %vm2018, %v2050, %v1986
      %v2083 = vsel %vm2019, %v2051, %v1987
      %v2084 = vsel %vm2020, %v2052, %v1988
      %v2085 = vsel %vm2021, %v2053, %v1989
      %v2086 = vsel %vm2022, %v2054, %v1990
      %v2087 = vsel %vm2023, %v2055, %v1991
      %v2088 = vsel %vm2024, %v2056, %v1992
      %v2089 = vsel %vm2025, %v2057, %v1993
      %v2090 = vsel %vm2026, %v2058, %v1994
      %v2091 = vsel %vm2027, %v2059, %v1995
      %v2092 = vsel %vm2028, %v2060, %v1996
      %v2093 = vsel %vm2029, %v2061, %v1997
      %v2094 = vsel %vm2030, %v2062, %v1998
      %v2095 = vsel %vm2031, %v2063, %v1999
      %v2096 = vsel %vm2032, %v2064, %v2000
      %v2097 = vsel %vm2033, %v2065, %v2001
      %v2098 = vsel %vm2034, %v2066, %v2002
      %v2099 = vsel %vm2035, %v2067, %v2003
      %v2100 = vsel %vm2036, %v2068, %v2004
      %v2101 = vsel %vm2037, %v2069, %v2005
      %v2102 = vsel %vm2038, %v2070, %v2006
      %v2103 = vsel %vm2039, %v2071, %v2007
      %v2104 = vsel %vm2040, %v2072, %v2008
      %v2105 = vsel %vm2041, %v2073, %v2009
      %v2106 = vsel %vm2042, %v2074, %v2010
      %v2107 = vsel %vm2043, %v2075, %v2011
      %v2108 = vsel %vm2044, %v2076, %v2012
      %v2109 = vadd.f32 %v2077, 1.0
      %v2110 = vadd.f32 %v2078, 1.0
      %v2111 = vadd.f32 %v2079, 1.0
      %v2112 = vadd.f32 %v2080, 1.0
      %v2113 = vadd.f32 %v2081, 1.0
      %v2114 = vadd.f32 %v2082, 1.0
      %v2115 = vadd.f32 %v2083, 1.0
      %v2116 = vadd.f32 %v2084, 1.0
      %v2117 = vadd.f32 %v2085, 1.0
      %v2118 = vadd.f32 %v2086, 1.0
      %v2119 = vadd.f32 %v2087, 1.0
      %v2120 = vadd.f32 %v2088, 1.0
      %v2121 = vadd.f32 %v2089, 1.0
      %v2122 = vadd.f32 %v2090, 1.0
      %v2123 = vadd.f32 %v2091, 1.0
      %v2124 = vadd.f32 %v2092, 1.0
      %v2125 = vadd.f32 %v2093, 1.0
      %v2126 = vadd.f32 %v2094, 1.0
      %v2127 = vadd.f32 %v2095, 1.0
      %v2128 = vadd.f32 %v2096, 1.0
      %v2129 = vadd.f32 %v2097, 1.0
      %v2130 = vadd.f32 %v2098, 1.0
      %v2131 = vadd.f32 %v2099, 1.0
      %v2132 = vadd.f32 %v2100, 1.0
      %v2133 = vadd.f32 %v2101, 1.0
      %v2134 = vadd.f32 %v2102, 1.0
      %v2135 = vadd.f32 %v2103, 1.0
      %v2136 = vadd.f32 %v2104, 1.0
      %v2137 = vadd.f32 %v2105, 1.0
      %v2138 = vadd.f32 %v2106, 1.0
      %v2139 = vadd.f32 %v2107, 1.0
      %v2140 = vadd.f32 %v2108, 1.0
      %v2141 = vmul.f32 %v1309, %v2109
      %v2142 = vmul.f32 %v1310, %v2110
      %v2143 = vmul.f32 %v1311, %v2111
      %v2144 = vmul.f32 %v1312, %v2112
      %v2145 = vmul.f32 %v1313, %v2113
      %v2146 = vmul.f32 %v1314, %v2114
      %v2147 = vmul.f32 %v1315, %v2115
      %v2148 = vmul.f32 %v1316, %v2116
      %v2149 = vmul.f32 %v1317, %v2117
      %v2150 = vmul.f32 %v1318, %v2118
      %v2151 = vmul.f32 %v1319, %v2119
      %v2152 = vmul.f32 %v1320, %v2120
      %v2153 = vmul.f32 %v1321, %v2121
      %v2154 = vmul.f32 %v1322, %v2122
      %v2155 = vmul.f32 %v1323, %v2123
      %v2156 = vmul.f32 %v1324, %v2124
      %v2157 = vmul.f32 %v1325, %v2125
      %v2158 = vmul.f32 %v1326, %v2126
      %v2159 = vmul.f32 %v1327, %v2127
      %v2160 = vmul.f32 %v1328, %v2128
      %v2161 = vmul.f32 %v1329, %v2129
      %v2162 = vmul.f32 %v1330, %v2130
      %v2163 = vmul.f32 %v1331, %v2131
      %v2164 = vmul.f32 %v1332, %v2132
      %v2165 = vmul.f32 %v1333, %v2133
      %v2166 = vmul.f32 %v1334, %v2134
      %v2167 = vmul.f32 %v1335, %v2135
      %v2168 = vmul.f32 %v1336, %v2136
      %v2169 = vmul.f32 %v1337, %v2137
      %v2170 = vmul.f32 %v1338, %v2138
      %v2171 = vmul.f32 %v1339, %v2139
      %v2172 = vmul.f32 %v1340, %v2140
      %v2173 = vld [vmem:[%s4] sm:$0xff]
      %v2174 = vld [vmem:[%s4 + $0x8] sm:$0xff]
      %v2175 = vld [vmem:[%s5] sm:$0x1]
      %v2177 = vlaneseq
      %v2178 = vshrl.u32 %v2177, 7
      %v2179 = vsub.s32 0, %v2178
      %v2180 = vrot.slane %v2175, %v2179
      %v2214 = vcombine.low %v2141, %v2142
      %v2215 = vcombine.low %v2143, %v2144
      %v2217 = vunpack.c.l.s4 1983009808
      %v2218 = vunpack.c.0.s8 %v2217
      %v2219 = vlaneseq
      %v2220 = vshrl.u32 %v2219, 7
      %v2221 = vsub.s32 %v2218, %v2220
      %v2222 = vrot.slane %v2214, %v2221
      %v2224 = vunpack.c.l.s4 1983009808
      %v2225 = vunpack.c.0.s8 %v2224
      %v2226 = vlaneseq
      %v2227 = vshrl.u32 %v2226, 7
      %v2228 = vsub.s32 %v2225, %v2227
      %v2229 = vrot.slane %v2215, %v2228
      %v2230 = vcombine.low %v2222, %v2229
      %v2231 = vcombine.low %v2145, %v2146
      %v2232 = vcombine.low %v2147, %v2148
      %v2234 = vunpack.c.l.s4 1983009808
      %v2235 = vunpack.c.0.s8 %v2234
      %v2236 = vlaneseq
      %v2237 = vshrl.u32 %v2236, 7
      %v2238 = vsub.s32 %v2235, %v2237
      %v2239 = vrot.slane %v2231, %v2238
      %v2241 = vunpack.c.l.s4 1983009808
      %v2242 = vunpack.c.0.s8 %v2241
      %v2243 = vlaneseq
      %v2244 = vshrl.u32 %v2243, 7
      %v2245 = vsub.s32 %v2242, %v2244
      %v2246 = vrot.slane %v2232, %v2245
      %v2247 = vcombine.low %v2239, %v2246
      %v2248 = vcombine.low %v2149, %v2150
      %v2249 = vcombine.low %v2151, %v2152
      %v2251 = vunpack.c.l.s4 1983009808
      %v2252 = vunpack.c.0.s8 %v2251
      %v2253 = vlaneseq
      %v2254 = vshrl.u32 %v2253, 7
      %v2255 = vsub.s32 %v2252, %v2254
      %v2256 = vrot.slane %v2248, %v2255
      %v2258 = vunpack.c.l.s4 1983009808
      %v2259 = vunpack.c.0.s8 %v2258
      %v2260 = vlaneseq
      %v2261 = vshrl.u32 %v2260, 7
      %v2262 = vsub.s32 %v2259, %v2261
      %v2263 = vrot.slane %v2249, %v2262
      %v2264 = vcombine.low %v2256, %v2263
      %v2265 = vcombine.low %v2153, %v2154
      %v2266 = vcombine.low %v2155, %v2156
      %v2268 = vunpack.c.l.s4 1983009808
      %v2269 = vunpack.c.0.s8 %v2268
      %v2270 = vlaneseq
      %v2271 = vshrl.u32 %v2270, 7
      %v2272 = vsub.s32 %v2269, %v2271
      %v2273 = vrot.slane %v2265, %v2272
      %v2275 = vunpack.c.l.s4 1983009808
      %v2276 = vunpack.c.0.s8 %v2275
      %v2277 = vlaneseq
      %v2278 = vshrl.u32 %v2277, 7
      %v2279 = vsub.s32 %v2276, %v2278
      %v2280 = vrot.slane %v2266, %v2279
      %v2281 = vcombine.low %v2273, %v2280
      %v2282 = vcombine.low %v2157, %v2158
      %v2283 = vcombine.low %v2159, %v2160
      %v2285 = vunpack.c.l.s4 1983009808
      %v2286 = vunpack.c.0.s8 %v2285
      %v2287 = vlaneseq
      %v2288 = vshrl.u32 %v2287, 7
      %v2289 = vsub.s32 %v2286, %v2288
      %v2290 = vrot.slane %v2282, %v2289
      %v2292 = vunpack.c.l.s4 1983009808
      %v2293 = vunpack.c.0.s8 %v2292
      %v2294 = vlaneseq
      %v2295 = vshrl.u32 %v2294, 7
      %v2296 = vsub.s32 %v2293, %v2295
      %v2297 = vrot.slane %v2283, %v2296
      %v2298 = vcombine.low %v2290, %v2297
      %v2299 = vcombine.low %v2161, %v2162
      %v2300 = vcombine.low %v2163, %v2164
      %v2302 = vunpack.c.l.s4 1983009808
      %v2303 = vunpack.c.0.s8 %v2302
      %v2304 = vlaneseq
      %v2305 = vshrl.u32 %v2304, 7
      %v2306 = vsub.s32 %v2303, %v2305
      %v2307 = vrot.slane %v2299, %v2306
      %v2309 = vunpack.c.l.s4 1983009808
      %v2310 = vunpack.c.0.s8 %v2309
      %v2311 = vlaneseq
      %v2312 = vshrl.u32 %v2311, 7
      %v2313 = vsub.s32 %v2310, %v2312
      %v2314 = vrot.slane %v2300, %v2313
      %v2315 = vcombine.low %v2307, %v2314
      %v2316 = vcombine.low %v2165, %v2166
      %v2317 = vcombine.low %v2167, %v2168
      %v2319 = vunpack.c.l.s4 1983009808
      %v2320 = vunpack.c.0.s8 %v2319
      %v2321 = vlaneseq
      %v2322 = vshrl.u32 %v2321, 7
      %v2323 = vsub.s32 %v2320, %v2322
      %v2324 = vrot.slane %v2316, %v2323
      %v2326 = vunpack.c.l.s4 1983009808
      %v2327 = vunpack.c.0.s8 %v2326
      %v2328 = vlaneseq
      %v2329 = vshrl.u32 %v2328, 7
      %v2330 = vsub.s32 %v2327, %v2329
      %v2331 = vrot.slane %v2317, %v2330
      %v2332 = vcombine.low %v2324, %v2331
      %v2333 = vcombine.low %v2169, %v2170
      %v2334 = vcombine.low %v2171, %v2172
      %v2336 = vunpack.c.l.s4 1983009808
      %v2337 = vunpack.c.0.s8 %v2336
      %v2338 = vlaneseq
      %v2339 = vshrl.u32 %v2338, 7
      %v2340 = vsub.s32 %v2337, %v2339
      %v2341 = vrot.slane %v2333, %v2340
      %v2343 = vunpack.c.l.s4 1983009808
      %v2344 = vunpack.c.0.s8 %v2343
      %v2345 = vlaneseq
      %v2346 = vshrl.u32 %v2345, 7
      %v2347 = vsub.s32 %v2344, %v2346
      %v2348 = vrot.slane %v2334, %v2347
      %v2349 = vcombine.low %v2341, %v2348
      %v2350 = vsel %vm810, %v2230, 0
      %v2352 = vsel %vm810, %v2247, 0
      %v2354 = vsel %vm810, %v2264, 0
      %v2356 = vsel %vm810, %v2281, 0
      %v2358 = vsel %vm810, %v2298, 0
      %v2360 = vsel %vm810, %v2315, 0
      %v2362 = vsel %vm810, %v2332, 0
      %v2364 = vsel %vm810, %v2349, 0
      %2366 = vmatprep.subr.mxu0 0.0
      %2367 = vmatpush1.msra.mxu0 0.0
      %2368 = vmatprep.subr.mxu0 0.0
      %2369 = vmatpush1.msra.mxu0 0.0
      %2370 = vmatprep.subr.mxu0 0.0
      %2371 = vmatpush1.msra.mxu0 0.0
      %2372 = vmatprep.subr.mxu0 0.0
      %2373 = vmatpush1.msra.mxu0 0.0
      %2374 = vmatprep.subr.mxu0 0.0
      %2375 = vmatpush1.msra.mxu0 0.0
      %2376 = vmatprep.subr.mxu0 0.0
      %2377 = vmatpush1.msra.mxu0 0.0
      %2378 = vmatprep.subr.mxu0 0.0
      %2379 = vmatpush1.msra.mxu0 0.0
      %2380 = vmatprep.subr.mxu0 0.0
      %2381 = vmatpush1.msra.mxu0 0.0
      %2382 = vmatprep.subr.mxu0 0.0
      %2383 = vmatpush1.msra.mxu0 0.0
      %2384 = vmatprep.subr.mxu0 0.0
      %2385 = vmatpush1.msra.mxu0 0.0
      %2386 = vmatprep.subr.mxu0 0.0
      %2387 = vmatpush1.msra.mxu0 0.0
      %2388 = vmatprep.subr.mxu0 0.0
      %2389 = vmatpush1.msra.mxu0 0.0
      %2390 = vmatprep.subr.mxu0 0.0
      %2391 = vmatpush1.msra.mxu0 0.0
      %2392 = vmatprep.subr.mxu0 0.0
      %2393 = vmatpush1.msra.mxu0 0.0
      %2394 = vmatprep.subr.mxu0 0.0
      %2395 = vmatpush1.msra.mxu0 %v2174
      %2396 = vmatprep.subr.mxu0 0.0
      %2397 = vmatpush1.msra.mxu0 %v2173
      %2398 = vmatprep.subr.mxu0 0.0
      %2399 = vmatpush2.msra.mxu0 0.0
      %2400 = vmatprep.subr.mxu0 0.0
      %2401 = vmatpush2.msra.mxu0 0.0
      %2402 = vmatprep.subr.mxu0 0.0
      %2403 = vmatpush2.msra.mxu0 0.0
      %2404 = vmatprep.subr.mxu0 0.0
      %2405 = vmatpush2.msra.mxu0 0.0
      %2406 = vmatprep.subr.mxu0 0.0
      %2407 = vmatpush2.msra.mxu0 0.0
      %2408 = vmatprep.subr.mxu0 0.0
      %2409 = vmatpush2.msra.mxu0 0.0
      %2410 = vmatprep.subr.mxu0 0.0
      %2411 = vmatpush2.msra.mxu0 0.0
      %2412 = vmatprep.subr.mxu0 0.0
      %2413 = vmatpush2.msra.mxu0 0.0
      %2414 = vmatprep.subr.mxu0 0.0
      %2415 = vmatpush2.msra.mxu0 0.0
      %2416 = vmatprep.subr.mxu0 0.0
      %2417 = vmatpush2.msra.mxu0 0.0
      %2418 = vmatprep.subr.mxu0 0.0
      %2419 = vmatpush2.msra.mxu0 0.0
      %2420 = vmatprep.subr.mxu0 0.0
      %2421 = vmatpush2.msra.mxu0 0.0
      %2422 = vmatprep.subr.mxu0 0.0
      %2423 = vmatpush2.msra.mxu0 0.0
      %2424 = vmatprep.subr.mxu0 0.0
      %2425 = vmatpush2.msra.mxu0 0.0
      %2426 = vmatprep.subr.mxu0 0.0
      %2427 = vmatpush2.msra.mxu0 0.0
      %2428 = vmatprep.subr.mxu0 0.0
      %2429 = vmatpush2.msra.mxu0 0.0
      %2430 = vmatprep.mubr.f32.mxu0 0.0
      %2431 = vmatmul.mubr.f32.gmra.mxu0 %v2350
      %v2432 = vpop.f32.mrf.mxu0
      %v2433 = vadd.f32 %v2180, %v2432
      %v2434 = vpop.f32.mrf.mxu0
      %2435 = vmatprep.mubr.f32.mxu0 0.0
      %2436 = vmatmul.mubr.f32.gmra.mxu0 %v2352
      %v2437 = vpop.f32.mrf.mxu0
      %v2438 = vadd.f32 %v2180, %v2437
      %v2439 = vpop.f32.mrf.mxu0
      %2440 = vmatprep.mubr.f32.mxu0 0.0
      %2441 = vmatmul.mubr.f32.gmra.mxu0 %v2354
      %v2442 = vpop.f32.mrf.mxu0
      %v2443 = vadd.f32 %v2180, %v2442
      %v2444 = vpop.f32.mrf.mxu0
      %2445 = vmatprep.mubr.f32.mxu0 0.0
      %2446 = vmatmul.mubr.f32.gmra.mxu0 %v2356
      %v2447 = vpop.f32.mrf.mxu0
      %v2448 = vadd.f32 %v2180, %v2447
      %v2449 = vpop.f32.mrf.mxu0
      %2450 = vmatprep.mubr.f32.mxu0 0.0
      %2451 = vmatmul.mubr.f32.gmra.mxu0 %v2358
      %v2452 = vpop.f32.mrf.mxu0
      %v2453 = vadd.f32 %v2180, %v2452
      %v2454 = vpop.f32.mrf.mxu0
      %2455 = vmatprep.mubr.f32.mxu0 0.0
      %2456 = vmatmul.mubr.f32.gmra.mxu0 %v2360
      %v2457 = vpop.f32.mrf.mxu0
      %v2458 = vadd.f32 %v2180, %v2457
      %v2459 = vpop.f32.mrf.mxu0
      %2460 = vmatprep.mubr.f32.mxu0 0.0
      %2461 = vmatmul.mubr.f32.gmra.mxu0 %v2362
      %v2462 = vpop.f32.mrf.mxu0
      %v2463 = vadd.f32 %v2180, %v2462
      %v2464 = vpop.f32.mrf.mxu0
      %2465 = vmatprep.mubr.f32.mxu0 0.0
      %2466 = vmatmul.mubr.f32.gmra.mxu0 %v2364
      %v2467 = vpop.f32.mrf.mxu0
      %v2468 = vadd.f32 %v2180, %v2467
      %v2469 = vpop.f32.mrf.mxu0
      %2470 = vdwg.mxu0
      %v2471 = vld [vmem:[%s385] sm:$0xff]
      %v2472 = vld [vmem:[%s385 + $0x8] sm:$0xff]
      %v2473 = vld [vmem:[%s385 + $0x10] sm:$0xff]
      %v2474 = vld [vmem:[%s385 + $0x18] sm:$0xff]
      %v2475 = vld [vmem:[%s385 + $0x20] sm:$0xff]
      %v2476 = vld [vmem:[%s385 + $0x28] sm:$0xff]
      %v2477 = vld [vmem:[%s385 + $0x30] sm:$0xff]
      %v2478 = vld [vmem:[%s385 + $0x38] sm:$0xff]
      %v2479 = vadd.f32 %v2433, %v2471
      %v2480 = vadd.f32 %v2438, %v2472
      %v2481 = vadd.f32 %v2443, %v2473
      %v2482 = vadd.f32 %v2448, %v2474
      %v2483 = vadd.f32 %v2453, %v2475
      %v2484 = vadd.f32 %v2458, %v2476
      %v2485 = vadd.f32 %v2463, %v2477
      %v2486 = vadd.f32 %v2468, %v2478
      %2487 = vst.msk [vmem:[%s395] sm:$0xff] %vm799, %v2479
      %2488 = vst.msk [vmem:[%s395 + $0x8] sm:$0xff] %vm799, %v2480
      %2489 = vst.msk [vmem:[%s395 + $0x10] sm:$0xff] %vm799, %v2481
      %2490 = vst.msk [vmem:[%s395 + $0x18] sm:$0xff] %vm799, %v2482
      %2491 = vst.msk [vmem:[%s395 + $0x20] sm:$0xff] %vm799, %v2483
      %2492 = vst.msk [vmem:[%s395 + $0x28] sm:$0xff] %vm799, %v2484
      %2493 = vst.msk [vmem:[%s395 + $0x30] sm:$0xff] %vm799, %v2485
      %2494 = vst.msk [vmem:[%s395 + $0x38] sm:$0xff] %vm799, %v2486
      %s2495 = smul.u32 8, %s23
      %p2496 = scmp.lt.s32.totalorder %s22, 1
      %s2497 = scalar_select %p2496, %s22, 1
      %p2498 = scmp.lt.s32.totalorder %s2495, 7
      %s2499 = scalar_select %p2498, %s2495, 7
      %s2500 = smul.addr %s2497, 8
      %s2501 = sadd.s32 %s2499, %s2500
      %s2502 = smul.addr %s2501, 8
      %s2503 = scalar_lea.vmem %s7, %s2502
      // Predicated region
      $region49: #{rsab_forward.17} parent=47 // pred_check
        %p2504 = pneg %p220
      $region50: #{rsab_forward.17} parent=47 // pred_check_branch
        %2506 = sbr.rel (%p2504) target = $region52
      $region51: #{rsab_forward.17} parent=47 // pred_region
        %s2507 = smul.u32 8, %s23
      $region52: #{rsab_forward.17} parent=47 // pred_fallthru
        _
    $region48: #{rsab_forward.17} parent=5 // pred_fallthru
      _
    %p2508 = scmp.le.s32.totalorder 2, %s13
    // Predicated region
    $region53: #{rsab_forward.17} parent=5 // pred_check
      %p2509 = pneg %p2508
    $region54: #{rsab_forward.17} parent=5 // pred_check_branch
      %2511 = sbr.rel (%p2509) target = $region56
    $region55: #{rsab_forward.17} parent=5 // pred_region
      %s2512 = ssub.s32 %s13, 2
      // Predicated region
      $region57: #{rsab_forward.17} parent=55 // pred_check
        %p2513 = pneg %p226
      $region58: #{rsab_forward.17} parent=55 // pred_check_branch
        %2515 = sbr.rel (%p2513) target = $region60
      $region59: #{rsab_forward.17} parent=55 // pred_region
        %s2516 = smul.u32 8, %s25
        %p2517 = scmp.lt.s32.totalorder %s24, 1
        %s2518 = scalar_select %p2517, %s24, 1
        %p2519 = scmp.lt.s32.totalorder %s2516, 7
        %s2520 = scalar_select %p2519, %s2516, 7
        %s2521 = smul.addr %s2518, 8
        %s2522 = sadd.s32 %s2520, %s2521
        %s2523 = smul.addr %s2522, 8
        %s2524 = scalar_lea.vmem %s7, %s2523
      $region60: #{rsab_forward.17} parent=55 // pred_fallthru
        _
    $region56: #{rsab_forward.17} parent=5 // pred_fallthru
      _
  $region6: #{rsab_forward.17} parent=0 // loop_footer
    %s17 = sadd.s32 1, %s13
  $region7: #{rsab_forward.17} parent=0 // loop_footer_branch
    %12 = sbr.rel target = $region3
  $region8: #{rsab_forward.17} parent=0 // loop_exit
    _

</llo_original>
